<compile_context>
chip_gen: v7x
topology: tpu7x:2x2x1
jax: 0.10.0
libtpu: 0.0.40
codegen_flags: <defaults>
</compile_context>

<pallas_src>
import jax
import jax.numpy as jnp
from jax.experimental import pallas as pl
from jax.experimental.pallas import tpu as pltpu

EPS = 1e-5  # nn.InstanceNorm2d default


def _round_up(v, m):
    return (v + m - 1) // m * m


def _write_reflect_pad(pad_ref, src):
    """Store ReflectionPad2d(1) of src (H, W, C) into the (H+3, Wpad, C) f32
    VMEM scratch (rows 0..H+1 x cols 0..W+1; filler cols / guard row untouched)."""
    H, W, _ = src.shape
    pad_ref[1:H + 1, 1:W + 1, :] = src                           # interior
    pad_ref[0:1, 1:W + 1, :] = src[1:2, :, :]                    # top row    (reflect row 1)
    pad_ref[H + 1:H + 2, 1:W + 1, :] = src[H - 2:H - 1, :, :]    # bottom row (reflect row H-2)
    # Column reflections read back from the slab so the corners come out right.
    pad_ref[:, 0:1, :] = pad_ref[:, 2:3, :]                      # left  col (reflect col 1)
    pad_ref[:, W + 1:W + 2, :] = pad_ref[:, W - 1:W, :]          # right col (reflect col W-2)


def _conv3x3_instnorm(pad_ref, w_ref, H, W):
    """3x3 VALID conv over the reflect-padded slab + InstanceNorm2d(affine=False).

    pad_ref: (H+3, Wpad, C) f32 padded slab, Wpad % 8 == 0 (extra cols / guard
             row hold zeros and only ever land in discarded accumulator rows).
    w_ref:   (9, Cin, Cout) bf16 conv weights, tap index k = 3*dy + dx.
    Returns the normalized conv output, shape (H, W, Cout), float32.
    """
    rows, Wpad, C = pad_ref.shape
    Cout = w_ref.shape[-1]
    M = H * Wpad  # accumulate every row of the valid dy-window; junk columns
                  # (x >= W) are sliced away once, after the 9 matmuls.
    flat = pad_ref[...].reshape(rows * Wpad, C)
    acc = jnp.zeros((M, Cout), dtype=jnp.float32)
    for dx in range(3):
        # One sublane-shifted view per dx (dx=0 aligned; dx=1,2 cost one relayout each).
        sdx = flat[dx:dx + M + 2 * Wpad, :]
        for dy in range(3):
            # dy offsets are multiples of Wpad (multiple of 8) -> aligned, free slices.
            op = sdx[dy * Wpad:dy * Wpad + M, :].astype(jnp.bfloat16)
            acc = acc + jnp.dot(op, w_ref[3 * dy + dx],
                                preferred_element_type=jnp.float32)
    # Extract the valid HxW window once, then per-channel InstanceNorm with a
    # two-pass (mean-subtracted) variance.
    y = acc.reshape(H, Wpad, Cout)[:, :W, :]
    mean = jnp.mean(y, axis=(0, 1), keepdims=True)
    cent = y - mean
    var = jnp.mean(cent * cent, axis=(0, 1), keepdims=True)
    return cent * jax.lax.rsqrt(var + EPS)


def _resnet_block_kernel(x_ref, w1_ref, w2_ref, out_ref, pad_ref):
    _, H, W, C = x_ref.shape
    rows, Wpad, _ = pad_ref.shape
    x = x_ref[0]                                                 # (H, W, C) f32

    # Zero the slab regions never written by the pad builder (alignment filler
    # columns and the guard row used by the dx-shifted views).
    if Wpad > W + 2:
        pad_ref[:, W + 2:, :] = jnp.zeros((rows, Wpad - (W + 2), C), jnp.float32)
    pad_ref[H + 2:, :, :] = jnp.zeros((rows - (H + 2), Wpad, C), jnp.float32)

    # stage 1: reflect-pad -> conv3x3 -> InstanceNorm -> ReLU      (all in VMEM)
    _write_reflect_pad(pad_ref, x)
    h1 = jnp.maximum(_conv3x3_instnorm(pad_ref, w1_ref, H, W), 0.0)

    # stage 2: reflect-pad (same scratch, ReLU'd h1) -> conv3x3 -> InstanceNorm
    _write_reflect_pad(pad_ref, h1)
    h2 = _conv3x3_instnorm(pad_ref, w2_ref, H, W)

    out_ref[0] = (x + h2).astype(out_ref.dtype)                  # residual add


def _vmem_estimate(H, W, C, Wpad):
    io_block = H * W * C * 4
    slab = (H + 3) * Wpad * C * 4
    weights = 9 * C * C * 2
    acc = H * Wpad * C * 4
    shifted = (H + 2) * Wpad * C * 4
    live_temps = 6 * io_block
    # in/out blocks double-buffered by the pipeline; both weight tensors x2 buffers.
    return 4 * io_block + 4 * weights + slab + acc + shifted + live_temps


def resnet_block_nhwc(x_nhwc, w1, w2):
    """x_nhwc: (B, H, W, C) float32; w1/w2: (3, 3, Cin, Cout) conv weights (HWIO).
    Conv biases are omitted: under InstanceNorm2d(affine=False) they are an
    exact no-op."""
    B, H, W, C = x_nhwc.shape
    assert H >= 2 and W >= 2, "ReflectionPad2d(1) needs H, W >= 2"
    Wpad = _round_up(W + 2, 8)            # sublane-aligned padded width

    w1r = w1.reshape(9, C, C).astype(jnp.bfloat16)
    w2r = w2.reshape(9, C, C).astype(jnp.bfloat16)

    vmem_limit = int(min(max(_vmem_estimate(H, W, C, Wpad) * 1.3,
                             32 * 1024 * 1024),
                         100 * 1024 * 1024))

    # TODO(synk): at pix2pixHD scale (C>=512, H,W>=64) add a Cout- or halo'd-H
    # tiling grid axis (two-pass InstanceNorm across tiles) so the per-step
    # working set fits v7x's 64 MiB VMEM and megacore gets a second parallel
    # axis when B is small; also single-buffer the constant weights
    # (pipeline_mode=pl.Buffered(1)) and, for C < 128, pack the 9 taps into the
    # contraction dim (im2col) to fill the 256x256 MXU.
    return pl.pallas_call(
        _resnet_block_kernel,
        out_shape=jax.ShapeDtypeStruct((B, H, W, C), jnp.float32),
        grid=(B,),
        in_specs=[
            pl.BlockSpec((1, H, W, C), lambda b: (b, 0, 0, 0)),
            pl.BlockSpec((9, C, C), lambda b: (0, 0, 0)),
            pl.BlockSpec((9, C, C), lambda b: (0, 0, 0)),
        ],
        out_specs=pl.BlockSpec((1, H, W, C), lambda b: (b, 0, 0, 0)),
        scratch_shapes=[pltpu.VMEM((H + 3, Wpad, C), jnp.float32)],
        compiler_params=pltpu.CompilerParams(
            dimension_semantics=("parallel",),
            vmem_limit_bytes=vmem_limit),
    )(x_nhwc.astype(jnp.float32), w1r, w2r)


@jax.jit
def resnet_block_forward(x_nchw, w1, w2):
    """PyTorch-interface wrapper: x (B, C, H, W) float32 -> (B, C, H, W).
    TODO(synk): keep the surrounding model NHWC end-to-end; these boundary
    transposes cost two extra full-tensor HBM passes each way."""
    x = jnp.transpose(x_nchw, (0, 2, 3, 1))
    out = resnet_block_nhwc(x, w1, w2)
    return jnp.transpose(out, (0, 3, 1, 2))


def _reference_forward(x_nchw, w1, b1, w2, b2):
    """Pure-JAX f32 reference (lax.conv, WITH conv bias) for validation."""
    x = jnp.transpose(x_nchw, (0, 2, 3, 1))

    def stage(h, w, b, relu):
        hp = jnp.pad(h, ((0, 0), (1, 1), (1, 1), (0, 0)), mode="reflect")
        y = jax.lax.conv_general_dilated(
            hp, w, window_strides=(1, 1), padding="VALID",
            dimension_numbers=("NHWC", "HWIO", "NHWC")) + b
        mean = jnp.mean(y, axis=(1, 2), keepdims=True)
        var = jnp.mean((y - mean) ** 2, axis=(1, 2), keepdims=True)
        y = (y - mean) * jax.lax.rsqrt(var + EPS)
        return jnp.maximum(y, 0.0) if relu else y

    h1 = stage(x, w1, b1, True)
    h2 = stage(h1, w2, b2, False)
    return jnp.transpose(x + h2, (0, 3, 1, 2))


def init_params(key, dim):
    """Deterministic synthetic Conv2d(dim, dim, 3) parameters, stored HWIO."""
    k1, k2, k3, k4 = jax.random.split(key, 4)
    fan_in = dim * 9
    bound = 1.0 / jnp.sqrt(fan_in)
    w1 = jax.random.uniform(k1, (3, 3, dim, dim), jnp.float32, -bound, bound)
    b1 = jax.random.uniform(k2, (dim,), jnp.float32, -bound, bound)
    w2 = jax.random.uniform(k3, (3, 3, dim, dim), jnp.float32, -bound, bound)
    b2 = jax.random.uniform(k4, (dim,), jnp.float32, -bound, bound)
    return w1, b1, w2, b2


if __name__ == "__main__":
    key = jax.random.PRNGKey(0)
    kx, kp = jax.random.split(key)

    B, dim, H, W = 2, 4, 16, 16
    x = jax.random.normal(kx, (B, dim, H, W), dtype=jnp.float32)
    w1, b1, w2, b2 = init_params(kp, dim)

    out = resnet_block_forward(x, w1, w2)        # kernel: bias is an exact no-op
    jax.block_until_ready(out)
    assert out.shape == (B, dim, H, W), out.shape

    # Validate against the pure-JAX f32 reference (which keeps the conv bias,
    # demonstrating the no-op); tolerance covers the bf16 MXU operands.
    ref = _reference_forward(x, w1, b1, w2, b2)
    max_err = float(jnp.max(jnp.abs(out - ref)))
    mean_err = float(jnp.mean(jnp.abs(out - ref)))
    assert max_err < 0.1 and mean_err < 2.5e-2, (max_err, mean_err)
    print("KERNEL_OK")
</pallas_src>

<mosaic_0001>
module attributes {stable_mosaic.version = 11 : i64} {
  func.func @_resnet_block_kernel(%arg0: i32, %arg1: memref<1x16x16x4xf32, #tpu.memory_space<vmem>>, %arg2: memref<9x4x4xbf16, #tpu.memory_space<vmem>>, %arg3: memref<9x4x4xbf16, #tpu.memory_space<vmem>>, %arg4: memref<1x16x16x4xf32, #tpu.memory_space<vmem>>, %arg5: memref<19x24x4xf32, #tpu.memory_space<vmem>>) attributes {dimension_semantics = [#tpu.dimension_semantics<parallel>], iteration_bounds = array<i64: 2>, scalar_prefetch = 0 : i64, scratch_operands = 1 : i64, tpu.core_type = #tpu.core_type<tc>, window_params = [{transform_indices = @transform_0, window_bounds = array<i64: 1, 16, 16, 4>}, {pipeline_mode = #tpu.pipeline_mode<synchronous>, transform_indices = @transform_1, window_bounds = array<i64: 9, 4, 4>}, {pipeline_mode = #tpu.pipeline_mode<synchronous>, transform_indices = @transform_2, window_bounds = array<i64: 9, 4, 4>}, {transform_indices = @transform_3, window_bounds = array<i64: 1, 16, 16, 4>}]} {
    %c0 = arith.constant 0 : index
    %c0_0 = arith.constant 0 : index
    %c0_1 = arith.constant 0 : index
    %c0_2 = arith.constant 0 : index
    %0 = vector.load %arg1[%c0, %c0_0, %c0_1, %c0_2] : memref<1x16x16x4xf32, #tpu.memory_space<vmem>>, vector<1x16x16x4xf32>
    %1 = vector.shape_cast %0 : vector<1x16x16x4xf32> to vector<16x16x4xf32>
    %cst = arith.constant 0.000000e+00 : f32
    %2 = vector.broadcast %cst : f32 to vector<19x6x4xf32>
    %c0_3 = arith.constant 0 : index
    %c18 = arith.constant 18 : index
    %c0_4 = arith.constant 0 : index
    %3 = vector.load %arg5[%c0_3, %c18, %c0_4] : memref<19x24x4xf32, #tpu.memory_space<vmem>>, vector<19x6x4xf32>
    tpu.vector_store %arg5[%c0_3, %c18, %c0_4], %2 {strides = array<i32>} : memref<19x24x4xf32, #tpu.memory_space<vmem>>, vector<19x6x4xf32>,
    %cst_5 = arith.constant 0.000000e+00 : f32
    %4 = vector.broadcast %cst_5 : f32 to vector<1x24x4xf32>
    %c18_6 = arith.constant 18 : index
    %c0_7 = arith.constant 0 : index
    %c0_8 = arith.constant 0 : index
    %5 = vector.load %arg5[%c18_6, %c0_7, %c0_8] : memref<19x24x4xf32, #tpu.memory_space<vmem>>, vector<1x24x4xf32>
    tpu.vector_store %arg5[%c18_6, %c0_7, %c0_8], %4 {strides = array<i32>} : memref<19x24x4xf32, #tpu.memory_space<vmem>>, vector<1x24x4xf32>,
    %c1 = arith.constant 1 : index
    %c1_9 = arith.constant 1 : index
    %c0_10 = arith.constant 0 : index
    %6 = vector.load %arg5[%c1, %c1_9, %c0_10] : memref<19x24x4xf32, #tpu.memory_space<vmem>>, vector<16x16x4xf32>
    tpu.vector_store %arg5[%c1, %c1_9, %c0_10], %1 {strides = array<i32>} : memref<19x24x4xf32, #tpu.memory_space<vmem>>, vector<16x16x4xf32>,
    %7 = vector.extract_strided_slice %1 {offsets = [1, 0, 0], sizes = [1, 16, 4], strides = [1, 1, 1]} : vector<16x16x4xf32> to vector<1x16x4xf32>
    %c0_11 = arith.constant 0 : index
    %c1_12 = arith.constant 1 : index
    %c0_13 = arith.constant 0 : index
    %8 = vector.load %arg5[%c0_11, %c1_12, %c0_13] : memref<19x24x4xf32, #tpu.memory_space<vmem>>, vector<1x16x4xf32>
    tpu.vector_store %arg5[%c0_11, %c1_12, %c0_13], %7 {strides = array<i32>} : memref<19x24x4xf32, #tpu.memory_space<vmem>>, vector<1x16x4xf32>,
    %9 = vector.extract_strided_slice %1 {offsets = [14, 0, 0], sizes = [1, 16, 4], strides = [1, 1, 1]} : vector<16x16x4xf32> to vector<1x16x4xf32>
    %c17 = arith.constant 17 : index
    %c1_14 = arith.constant 1 : index
    %c0_15 = arith.constant 0 : index
    %10 = vector.load %arg5[%c17, %c1_14, %c0_15] : memref<19x24x4xf32, #tpu.memory_space<vmem>>, vector<1x16x4xf32>
    tpu.vector_store %arg5[%c17, %c1_14, %c0_15], %9 {strides = array<i32>} : memref<19x24x4xf32, #tpu.memory_space<vmem>>, vector<1x16x4xf32>,
    %c0_16 = arith.constant 0 : index
    %c2 = arith.constant 2 : index
    %c0_17 = arith.constant 0 : index
    %11 = vector.load %arg5[%c0_16, %c2, %c0_17] : memref<19x24x4xf32, #tpu.memory_space<vmem>>, vector<19x1x4xf32>
    %c0_18 = arith.constant 0 : index
    %c0_19 = arith.constant 0 : index
    %c0_20 = arith.constant 0 : index
    %12 = vector.load %arg5[%c0_18, %c0_19, %c0_20] : memref<19x24x4xf32, #tpu.memory_space<vmem>>, vector<19x1x4xf32>
    tpu.vector_store %arg5[%c0_18, %c0_19, %c0_20], %11 {strides = array<i32>} : memref<19x24x4xf32, #tpu.memory_space<vmem>>, vector<19x1x4xf32>,
    %c0_21 = arith.constant 0 : index
    %c15 = arith.constant 15 : index
    %c0_22 = arith.constant 0 : index
    %13 = vector.load %arg5[%c0_21, %c15, %c0_22] : memref<19x24x4xf32, #tpu.memory_space<vmem>>, vector<19x1x4xf32>
    %c0_23 = arith.constant 0 : index
    %c17_24 = arith.constant 17 : index
    %c0_25 = arith.constant 0 : index
    %14 = vector.load %arg5[%c0_23, %c17_24, %c0_25] : memref<19x24x4xf32, #tpu.memory_space<vmem>>, vector<19x1x4xf32>
    tpu.vector_store %arg5[%c0_23, %c17_24, %c0_25], %13 {strides = array<i32>} : memref<19x24x4xf32, #tpu.memory_space<vmem>>, vector<19x1x4xf32>,
    %c0_26 = arith.constant 0 : index
    %c0_27 = arith.constant 0 : index
    %c0_28 = arith.constant 0 : index
    %15 = vector.load %arg5[%c0_26, %c0_27, %c0_28] : memref<19x24x4xf32, #tpu.memory_space<vmem>>, vector<19x24x4xf32>
    %16 = vector.shape_cast %15 : vector<19x24x4xf32> to vector<456x4xf32>
    %cst_29 = arith.constant 0.000000e+00 : f32
    %17 = vector.broadcast %cst_29 : f32 to vector<384x4xf32>
    %18 = vector.extract_strided_slice %16 {offsets = [0, 0], sizes = [432, 4], strides = [1, 1]} : vector<456x4xf32> to vector<432x4xf32>
    %19 = vector.extract_strided_slice %18 {offsets = [0, 0], sizes = [384, 4], strides = [1, 1]} : vector<432x4xf32> to vector<384x4xf32>
    %20 = arith.truncf %19 : vector<384x4xf32> to vector<384x4xbf16>
    %c0_30 = arith.constant 0 : index
    %c0_31 = arith.constant 0 : index
    %c0_32 = arith.constant 0 : index
    %21 = vector.load %arg2[%c0_30, %c0_31, %c0_32] : memref<9x4x4xbf16, #tpu.memory_space<vmem>>, vector<1x4x4xbf16>
    %22 = vector.shape_cast %21 : vector<1x4x4xbf16> to vector<4x4xbf16>
    %cst_33 = arith.constant dense<0.000000e+00> : vector<384x4xf32>
    %23 = tpu.matmul %20, %22, %cst_33 {dimension_numbers = #tpu.dot_dimension_numbers<[1], [0], [0], [1], [0, 0, 1, 1], [], []>} : vector<384x4xbf16>, vector<4x4xbf16>, vector<384x4xf32> -> vector<384x4xf32>
    %24 = arith.addf %17, %23 : vector<384x4xf32>
    %25 = vector.extract_strided_slice %18 {offsets = [24, 0], sizes = [384, 4], strides = [1, 1]} : vector<432x4xf32> to vector<384x4xf32>
    %26 = arith.truncf %25 : vector<384x4xf32> to vector<384x4xbf16>
    %c3 = arith.constant 3 : index
    %c0_34 = arith.constant 0 : index
    %c0_35 = arith.constant 0 : index
    %27 = vector.load %arg2[%c3, %c0_34, %c0_35] : memref<9x4x4xbf16, #tpu.memory_space<vmem>>, vector<1x4x4xbf16>
    %28 = vector.shape_cast %27 : vector<1x4x4xbf16> to vector<4x4xbf16>
    %cst_36 = arith.constant dense<0.000000e+00> : vector<384x4xf32>
    %29 = tpu.matmul %26, %28, %cst_36 {dimension_numbers = #tpu.dot_dimension_numbers<[1], [0], [0], [1], [0, 0, 1, 1], [], []>} : vector<384x4xbf16>, vector<4x4xbf16>, vector<384x4xf32> -> vector<384x4xf32>
    %30 = arith.addf %24, %29 : vector<384x4xf32>
    %31 = vector.extract_strided_slice %18 {offsets = [48, 0], sizes = [384, 4], strides = [1, 1]} : vector<432x4xf32> to vector<384x4xf32>
    %32 = arith.truncf %31 : vector<384x4xf32> to vector<384x4xbf16>
    %c6 = arith.constant 6 : index
    %c0_37 = arith.constant 0 : index
    %c0_38 = arith.constant 0 : index
    %33 = vector.load %arg2[%c6, %c0_37, %c0_38] : memref<9x4x4xbf16, #tpu.memory_space<vmem>>, vector<1x4x4xbf16>
    %34 = vector.shape_cast %33 : vector<1x4x4xbf16> to vector<4x4xbf16>
    %cst_39 = arith.constant dense<0.000000e+00> : vector<384x4xf32>
    %35 = tpu.matmul %32, %34, %cst_39 {dimension_numbers = #tpu.dot_dimension_numbers<[1], [0], [0], [1], [0, 0, 1, 1], [], []>} : vector<384x4xbf16>, vector<4x4xbf16>, vector<384x4xf32> -> vector<384x4xf32>
    %36 = arith.addf %30, %35 : vector<384x4xf32>
    %37 = vector.extract_strided_slice %16 {offsets = [1, 0], sizes = [432, 4], strides = [1, 1]} : vector<456x4xf32> to vector<432x4xf32>
    %38 = vector.extract_strided_slice %37 {offsets = [0, 0], sizes = [384, 4], strides = [1, 1]} : vector<432x4xf32> to vector<384x4xf32>
    %39 = arith.truncf %38 : vector<384x4xf32> to vector<384x4xbf16>
    %c1_40 = arith.constant 1 : index
    %c0_41 = arith.constant 0 : index
    %c0_42 = arith.constant 0 : index
    %40 = vector.load %arg2[%c1_40, %c0_41, %c0_42] : memref<9x4x4xbf16, #tpu.memory_space<vmem>>, vector<1x4x4xbf16>
    %41 = vector.shape_cast %40 : vector<1x4x4xbf16> to vector<4x4xbf16>
    %cst_43 = arith.constant dense<0.000000e+00> : vector<384x4xf32>
    %42 = tpu.matmul %39, %41, %cst_43 {dimension_numbers = #tpu.dot_dimension_numbers<[1], [0], [0], [1], [0, 0, 1, 1], [], []>} : vector<384x4xbf16>, vector<4x4xbf16>, vector<384x4xf32> -> vector<384x4xf32>
    %43 = arith.addf %36, %42 : vector<384x4xf32>
    %44 = vector.extract_strided_slice %37 {offsets = [24, 0], sizes = [384, 4], strides = [1, 1]} : vector<432x4xf32> to vector<384x4xf32>
    %45 = arith.truncf %44 : vector<384x4xf32> to vector<384x4xbf16>
    %c4 = arith.constant 4 : index
    %c0_44 = arith.constant 0 : index
    %c0_45 = arith.constant 0 : index
    %46 = vector.load %arg2[%c4, %c0_44, %c0_45] : memref<9x4x4xbf16, #tpu.memory_space<vmem>>, vector<1x4x4xbf16>
    %47 = vector.shape_cast %46 : vector<1x4x4xbf16> to vector<4x4xbf16>
    %cst_46 = arith.constant dense<0.000000e+00> : vector<384x4xf32>
    %48 = tpu.matmul %45, %47, %cst_46 {dimension_numbers = #tpu.dot_dimension_numbers<[1], [0], [0], [1], [0, 0, 1, 1], [], []>} : vector<384x4xbf16>, vector<4x4xbf16>, vector<384x4xf32> -> vector<384x4xf32>
    %49 = arith.addf %43, %48 : vector<384x4xf32>
    %50 = vector.extract_strided_slice %37 {offsets = [48, 0], sizes = [384, 4], strides = [1, 1]} : vector<432x4xf32> to vector<384x4xf32>
    %51 = arith.truncf %50 : vector<384x4xf32> to vector<384x4xbf16>
    %c7 = arith.constant 7 : index
    %c0_47 = arith.constant 0 : index
    %c0_48 = arith.constant 0 : index
    %52 = vector.load %arg2[%c7, %c0_47, %c0_48] : memref<9x4x4xbf16, #tpu.memory_space<vmem>>, vector<1x4x4xbf16>
    %53 = vector.shape_cast %52 : vector<1x4x4xbf16> to vector<4x4xbf16>
    %cst_49 = arith.constant dense<0.000000e+00> : vector<384x4xf32>
    %54 = tpu.matmul %51, %53, %cst_49 {dimension_numbers = #tpu.dot_dimension_numbers<[1], [0], [0], [1], [0, 0, 1, 1], [], []>} : vector<384x4xbf16>, vector<4x4xbf16>, vector<384x4xf32> -> vector<384x4xf32>
    %55 = arith.addf %49, %54 : vector<384x4xf32>
    %56 = vector.extract_strided_slice %16 {offsets = [2, 0], sizes = [432, 4], strides = [1, 1]} : vector<456x4xf32> to vector<432x4xf32>
    %57 = vector.extract_strided_slice %56 {offsets = [0, 0], sizes = [384, 4], strides = [1, 1]} : vector<432x4xf32> to vector<384x4xf32>
    %58 = arith.truncf %57 : vector<384x4xf32> to vector<384x4xbf16>
    %c2_50 = arith.constant 2 : index
    %c0_51 = arith.constant 0 : index
    %c0_52 = arith.constant 0 : index
    %59 = vector.load %arg2[%c2_50, %c0_51, %c0_52] : memref<9x4x4xbf16, #tpu.memory_space<vmem>>, vector<1x4x4xbf16>
    %60 = vector.shape_cast %59 : vector<1x4x4xbf16> to vector<4x4xbf16>
    %cst_53 = arith.constant dense<0.000000e+00> : vector<384x4xf32>
    %61 = tpu.matmul %58, %60, %cst_53 {dimension_numbers = #tpu.dot_dimension_numbers<[1], [0], [0], [1], [0, 0, 1, 1], [], []>} : vector<384x4xbf16>, vector<4x4xbf16>, vector<384x4xf32> -> vector<384x4xf32>
    %62 = arith.addf %55, %61 : vector<384x4xf32>
    %63 = vector.extract_strided_slice %56 {offsets = [24, 0], sizes = [384, 4], strides = [1, 1]} : vector<432x4xf32> to vector<384x4xf32>
    %64 = arith.truncf %63 : vector<384x4xf32> to vector<384x4xbf16>
    %c5 = arith.constant 5 : index
    %c0_54 = arith.constant 0 : index
    %c0_55 = arith.constant 0 : index
    %65 = vector.load %arg2[%c5, %c0_54, %c0_55] : memref<9x4x4xbf16, #tpu.memory_space<vmem>>, vector<1x4x4xbf16>
    %66 = vector.shape_cast %65 : vector<1x4x4xbf16> to vector<4x4xbf16>
    %cst_56 = arith.constant dense<0.000000e+00> : vector<384x4xf32>
    %67 = tpu.matmul %64, %66, %cst_56 {dimension_numbers = #tpu.dot_dimension_numbers<[1], [0], [0], [1], [0, 0, 1, 1], [], []>} : vector<384x4xbf16>, vector<4x4xbf16>, vector<384x4xf32> -> vector<384x4xf32>
    %68 = arith.addf %62, %67 : vector<384x4xf32>
    %69 = vector.extract_strided_slice %56 {offsets = [48, 0], sizes = [384, 4], strides = [1, 1]} : vector<432x4xf32> to vector<384x4xf32>
    %70 = arith.truncf %69 : vector<384x4xf32> to vector<384x4xbf16>
    %c8 = arith.constant 8 : index
    %c0_57 = arith.constant 0 : index
    %c0_58 = arith.constant 0 : index
    %71 = vector.load %arg2[%c8, %c0_57, %c0_58] : memref<9x4x4xbf16, #tpu.memory_space<vmem>>, vector<1x4x4xbf16>
    %72 = vector.shape_cast %71 : vector<1x4x4xbf16> to vector<4x4xbf16>
    %cst_59 = arith.constant dense<0.000000e+00> : vector<384x4xf32>
    %73 = tpu.matmul %70, %72, %cst_59 {dimension_numbers = #tpu.dot_dimension_numbers<[1], [0], [0], [1], [0, 0, 1, 1], [], []>} : vector<384x4xbf16>, vector<4x4xbf16>, vector<384x4xf32> -> vector<384x4xf32>
    %74 = arith.addf %68, %73 : vector<384x4xf32>
    %75 = vector.shape_cast %74 : vector<384x4xf32> to vector<16x24x4xf32>
    %76 = vector.extract_strided_slice %75 {offsets = [0, 0, 0], sizes = [16, 16, 4], strides = [1, 1, 1]} : vector<16x24x4xf32> to vector<16x16x4xf32>
    %cst_60 = arith.constant dense<0.000000e+00> : vector<4xf32>
    %77 = vector.multi_reduction <add>, %76, %cst_60 [0, 1] : vector<16x16x4xf32> to vector<4xf32>
    %78 = vector.shape_cast %77 : vector<4xf32> to vector<1x1x4xf32>
    %cst_61 = arith.constant 2.560000e+02 : f32
    %79 = vector.broadcast %cst_61 : f32 to vector<1x1x4xf32>
    %80 = arith.divf %78, %79 : vector<1x1x4xf32>
    %81 = vector.broadcast %80 : vector<1x1x4xf32> to vector<16x16x4xf32>
    %82 = arith.subf %76, %81 : vector<16x16x4xf32>
    %83 = arith.mulf %82, %82 : vector<16x16x4xf32>
    %cst_62 = arith.constant dense<0.000000e+00> : vector<4xf32>
    %84 = vector.multi_reduction <add>, %83, %cst_62 [0, 1] : vector<16x16x4xf32> to vector<4xf32>
    %85 = vector.shape_cast %84 : vector<4xf32> to vector<1x1x4xf32>
    %cst_63 = arith.constant 2.560000e+02 : f32
    %86 = vector.broadcast %cst_63 : f32 to vector<1x1x4xf32>
    %87 = arith.divf %85, %86 : vector<1x1x4xf32>
    %cst_64 = arith.constant 9.99999974E-6 : f32
    %88 = vector.broadcast %cst_64 : f32 to vector<1x1x4xf32>
    %89 = arith.addf %87, %88 : vector<1x1x4xf32>
    %90 = math.rsqrt %89 : vector<1x1x4xf32>
    %91 = vector.broadcast %90 : vector<1x1x4xf32> to vector<16x16x4xf32>
    %92 = arith.mulf %82, %91 : vector<16x16x4xf32>
    %cst_65 = arith.constant 0.000000e+00 : f32
    %93 = vector.broadcast %cst_65 : f32 to vector<16x16x4xf32>
    %94 = arith.maximumf %92, %93 : vector<16x16x4xf32>
    %c1_66 = arith.constant 1 : index
    %c1_67 = arith.constant 1 : index
    %c0_68 = arith.constant 0 : index
    %95 = vector.load %arg5[%c1_66, %c1_67, %c0_68] : memref<19x24x4xf32, #tpu.memory_space<vmem>>, vector<16x16x4xf32>
    tpu.vector_store %arg5[%c1_66, %c1_67, %c0_68], %94 {strides = array<i32>} : memref<19x24x4xf32, #tpu.memory_space<vmem>>, vector<16x16x4xf32>,
    %96 = vector.extract_strided_slice %94 {offsets = [1, 0, 0], sizes = [1, 16, 4], strides = [1, 1, 1]} : vector<16x16x4xf32> to vector<1x16x4xf32>
    %c0_69 = arith.constant 0 : index
    %c1_70 = arith.constant 1 : index
    %c0_71 = arith.constant 0 : index
    %97 = vector.load %arg5[%c0_69, %c1_70, %c0_71] : memref<19x24x4xf32, #tpu.memory_space<vmem>>, vector<1x16x4xf32>
    tpu.vector_store %arg5[%c0_69, %c1_70, %c0_71], %96 {strides = array<i32>} : memref<19x24x4xf32, #tpu.memory_space<vmem>>, vector<1x16x4xf32>,
    %98 = vector.extract_strided_slice %94 {offsets = [14, 0, 0], sizes = [1, 16, 4], strides = [1, 1, 1]} : vector<16x16x4xf32> to vector<1x16x4xf32>
    %c17_72 = arith.constant 17 : index
    %c1_73 = arith.constant 1 : index
    %c0_74 = arith.constant 0 : index
    %99 = vector.load %arg5[%c17_72, %c1_73, %c0_74] : memref<19x24x4xf32, #tpu.memory_space<vmem>>, vector<1x16x4xf32>
    tpu.vector_store %arg5[%c17_72, %c1_73, %c0_74], %98 {strides = array<i32>} : memref<19x24x4xf32, #tpu.memory_space<vmem>>, vector<1x16x4xf32>,
    %c0_75 = arith.constant 0 : index
    %c2_76 = arith.constant 2 : index
    %c0_77 = arith.constant 0 : index
    %100 = vector.load %arg5[%c0_75, %c2_76, %c0_77] : memref<19x24x4xf32, #tpu.memory_space<vmem>>, vector<19x1x4xf32>
    %c0_78 = arith.constant 0 : index
    %c0_79 = arith.constant 0 : index
    %c0_80 = arith.constant 0 : index
    %101 = vector.load %arg5[%c0_78, %c0_79, %c0_80] : memref<19x24x4xf32, #tpu.memory_space<vmem>>, vector<19x1x4xf32>
    tpu.vector_store %arg5[%c0_78, %c0_79, %c0_80], %100 {strides = array<i32>} : memref<19x24x4xf32, #tpu.memory_space<vmem>>, vector<19x1x4xf32>,
    %c0_81 = arith.constant 0 : index
    %c15_82 = arith.constant 15 : index
    %c0_83 = arith.constant 0 : index
    %102 = vector.load %arg5[%c0_81, %c15_82, %c0_83] : memref<19x24x4xf32, #tpu.memory_space<vmem>>, vector<19x1x4xf32>
    %c0_84 = arith.constant 0 : index
    %c17_85 = arith.constant 17 : index
    %c0_86 = arith.constant 0 : index
    %103 = vector.load %arg5[%c0_84, %c17_85, %c0_86] : memref<19x24x4xf32, #tpu.memory_space<vmem>>, vector<19x1x4xf32>
    tpu.vector_store %arg5[%c0_84, %c17_85, %c0_86], %102 {strides = array<i32>} : memref<19x24x4xf32, #tpu.memory_space<vmem>>, vector<19x1x4xf32>,
    %c0_87 = arith.constant 0 : index
    %c0_88 = arith.constant 0 : index
    %c0_89 = arith.constant 0 : index
    %104 = vector.load %arg5[%c0_87, %c0_88, %c0_89] : memref<19x24x4xf32, #tpu.memory_space<vmem>>, vector<19x24x4xf32>
    %105 = vector.shape_cast %104 : vector<19x24x4xf32> to vector<456x4xf32>
    %cst_90 = arith.constant 0.000000e+00 : f32
    %106 = vector.broadcast %cst_90 : f32 to vector<384x4xf32>
    %107 = vector.extract_strided_slice %105 {offsets = [0, 0], sizes = [432, 4], strides = [1, 1]} : vector<456x4xf32> to vector<432x4xf32>
    %108 = vector.extract_strided_slice %107 {offsets = [0, 0], sizes = [384, 4], strides = [1, 1]} : vector<432x4xf32> to vector<384x4xf32>
    %109 = arith.truncf %108 : vector<384x4xf32> to vector<384x4xbf16>
    %c0_91 = arith.constant 0 : index
    %c0_92 = arith.constant 0 : index
    %c0_93 = arith.constant 0 : index
    %110 = vector.load %arg3[%c0_91, %c0_92, %c0_93] : memref<9x4x4xbf16, #tpu.memory_space<vmem>>, vector<1x4x4xbf16>
    %111 = vector.shape_cast %110 : vector<1x4x4xbf16> to vector<4x4xbf16>
    %cst_94 = arith.constant dense<0.000000e+00> : vector<384x4xf32>
    %112 = tpu.matmul %109, %111, %cst_94 {dimension_numbers = #tpu.dot_dimension_numbers<[1], [0], [0], [1], [0, 0, 1, 1], [], []>} : vector<384x4xbf16>, vector<4x4xbf16>, vector<384x4xf32> -> vector<384x4xf32>
    %113 = arith.addf %106, %112 : vector<384x4xf32>
    %114 = vector.extract_strided_slice %107 {offsets = [24, 0], sizes = [384, 4], strides = [1, 1]} : vector<432x4xf32> to vector<384x4xf32>
    %115 = arith.truncf %114 : vector<384x4xf32> to vector<384x4xbf16>
    %c3_95 = arith.constant 3 : index
    %c0_96 = arith.constant 0 : index
    %c0_97 = arith.constant 0 : index
    %116 = vector.load %arg3[%c3_95, %c0_96, %c0_97] : memref<9x4x4xbf16, #tpu.memory_space<vmem>>, vector<1x4x4xbf16>
    %117 = vector.shape_cast %116 : vector<1x4x4xbf16> to vector<4x4xbf16>
    %cst_98 = arith.constant dense<0.000000e+00> : vector<384x4xf32>
    %118 = tpu.matmul %115, %117, %cst_98 {dimension_numbers = #tpu.dot_dimension_numbers<[1], [0], [0], [1], [0, 0, 1, 1], [], []>} : vector<384x4xbf16>, vector<4x4xbf16>, vector<384x4xf32> -> vector<384x4xf32>
    %119 = arith.addf %113, %118 : vector<384x4xf32>
    %120 = vector.extract_strided_slice %107 {offsets = [48, 0], sizes = [384, 4], strides = [1, 1]} : vector<432x4xf32> to vector<384x4xf32>
    %121 = arith.truncf %120 : vector<384x4xf32> to vector<384x4xbf16>
    %c6_99 = arith.constant 6 : index
    %c0_100 = arith.constant 0 : index
    %c0_101 = arith.constant 0 : index
    %122 = vector.load %arg3[%c6_99, %c0_100, %c0_101] : memref<9x4x4xbf16, #tpu.memory_space<vmem>>, vector<1x4x4xbf16>
    %123 = vector.shape_cast %122 : vector<1x4x4xbf16> to vector<4x4xbf16>
    %cst_102 = arith.constant dense<0.000000e+00> : vector<384x4xf32>
    %124 = tpu.matmul %121, %123, %cst_102 {dimension_numbers = #tpu.dot_dimension_numbers<[1], [0], [0], [1], [0, 0, 1, 1], [], []>} : vector<384x4xbf16>, vector<4x4xbf16>, vector<384x4xf32> -> vector<384x4xf32>
    %125 = arith.addf %119, %124 : vector<384x4xf32>
    %126 = vector.extract_strided_slice %105 {offsets = [1, 0], sizes = [432, 4], strides = [1, 1]} : vector<456x4xf32> to vector<432x4xf32>
    %127 = vector.extract_strided_slice %126 {offsets = [0, 0], sizes = [384, 4], strides = [1, 1]} : vector<432x4xf32> to vector<384x4xf32>
    %128 = arith.truncf %127 : vector<384x4xf32> to vector<384x4xbf16>
    %c1_103 = arith.constant 1 : index
    %c0_104 = arith.constant 0 : index
    %c0_105 = arith.constant 0 : index
    %129 = vector.load %arg3[%c1_103, %c0_104, %c0_105] : memref<9x4x4xbf16, #tpu.memory_space<vmem>>, vector<1x4x4xbf16>
    %130 = vector.shape_cast %129 : vector<1x4x4xbf16> to vector<4x4xbf16>
    %cst_106 = arith.constant dense<0.000000e+00> : vector<384x4xf32>
    %131 = tpu.matmul %128, %130, %cst_106 {dimension_numbers = #tpu.dot_dimension_numbers<[1], [0], [0], [1], [0, 0, 1, 1], [], []>} : vector<384x4xbf16>, vector<4x4xbf16>, vector<384x4xf32> -> vector<384x4xf32>
    %132 = arith.addf %125, %131 : vector<384x4xf32>
    %133 = vector.extract_strided_slice %126 {offsets = [24, 0], sizes = [384, 4], strides = [1, 1]} : vector<432x4xf32> to vector<384x4xf32>
    %134 = arith.truncf %133 : vector<384x4xf32> to vector<384x4xbf16>
    %c4_107 = arith.constant 4 : index
    %c0_108 = arith.constant 0 : index
    %c0_109 = arith.constant 0 : index
    %135 = vector.load %arg3[%c4_107, %c0_108, %c0_109] : memref<9x4x4xbf16, #tpu.memory_space<vmem>>, vector<1x4x4xbf16>
    %136 = vector.shape_cast %135 : vector<1x4x4xbf16> to vector<4x4xbf16>
    %cst_110 = arith.constant dense<0.000000e+00> : vector<384x4xf32>
    %137 = tpu.matmul %134, %136, %cst_110 {dimension_numbers = #tpu.dot_dimension_numbers<[1], [0], [0], [1], [0, 0, 1, 1], [], []>} : vector<384x4xbf16>, vector<4x4xbf16>, vector<384x4xf32> -> vector<384x4xf32>
    %138 = arith.addf %132, %137 : vector<384x4xf32>
    %139 = vector.extract_strided_slice %126 {offsets = [48, 0], sizes = [384, 4], strides = [1, 1]} : vector<432x4xf32> to vector<384x4xf32>
    %140 = arith.truncf %139 : vector<384x4xf32> to vector<384x4xbf16>
    %c7_111 = arith.constant 7 : index
    %c0_112 = arith.constant 0 : index
    %c0_113 = arith.constant 0 : index
    %141 = vector.load %arg3[%c7_111, %c0_112, %c0_113] : memref<9x4x4xbf16, #tpu.memory_space<vmem>>, vector<1x4x4xbf16>
    %142 = vector.shape_cast %141 : vector<1x4x4xbf16> to vector<4x4xbf16>
    %cst_114 = arith.constant dense<0.000000e+00> : vector<384x4xf32>
    %143 = tpu.matmul %140, %142, %cst_114 {dimension_numbers = #tpu.dot_dimension_numbers<[1], [0], [0], [1], [0, 0, 1, 1], [], []>} : vector<384x4xbf16>, vector<4x4xbf16>, vector<384x4xf32> -> vector<384x4xf32>
    %144 = arith.addf %138, %143 : vector<384x4xf32>
    %145 = vector.extract_strided_slice %105 {offsets = [2, 0], sizes = [432, 4], strides = [1, 1]} : vector<456x4xf32> to vector<432x4xf32>
    %146 = vector.extract_strided_slice %145 {offsets = [0, 0], sizes = [384, 4], strides = [1, 1]} : vector<432x4xf32> to vector<384x4xf32>
    %147 = arith.truncf %146 : vector<384x4xf32> to vector<384x4xbf16>
    %c2_115 = arith.constant 2 : index
    %c0_116 = arith.constant 0 : index
    %c0_117 = arith.constant 0 : index
    %148 = vector.load %arg3[%c2_115, %c0_116, %c0_117] : memref<9x4x4xbf16, #tpu.memory_space<vmem>>, vector<1x4x4xbf16>
    %149 = vector.shape_cast %148 : vector<1x4x4xbf16> to vector<4x4xbf16>
    %cst_118 = arith.constant dense<0.000000e+00> : vector<384x4xf32>
    %150 = tpu.matmul %147, %149, %cst_118 {dimension_numbers = #tpu.dot_dimension_numbers<[1], [0], [0], [1], [0, 0, 1, 1], [], []>} : vector<384x4xbf16>, vector<4x4xbf16>, vector<384x4xf32> -> vector<384x4xf32>
    %151 = arith.addf %144, %150 : vector<384x4xf32>
    %152 = vector.extract_strided_slice %145 {offsets = [24, 0], sizes = [384, 4], strides = [1, 1]} : vector<432x4xf32> to vector<384x4xf32>
    %153 = arith.truncf %152 : vector<384x4xf32> to vector<384x4xbf16>
    %c5_119 = arith.constant 5 : index
    %c0_120 = arith.constant 0 : index
    %c0_121 = arith.constant 0 : index
    %154 = vector.load %arg3[%c5_119, %c0_120, %c0_121] : memref<9x4x4xbf16, #tpu.memory_space<vmem>>, vector<1x4x4xbf16>
    %155 = vector.shape_cast %154 : vector<1x4x4xbf16> to vector<4x4xbf16>
    %cst_122 = arith.constant dense<0.000000e+00> : vector<384x4xf32>
    %156 = tpu.matmul %153, %155, %cst_122 {dimension_numbers = #tpu.dot_dimension_numbers<[1], [0], [0], [1], [0, 0, 1, 1], [], []>} : vector<384x4xbf16>, vector<4x4xbf16>, vector<384x4xf32> -> vector<384x4xf32>
    %157 = arith.addf %151, %156 : vector<384x4xf32>
    %158 = vector.extract_strided_slice %145 {offsets = [48, 0], sizes = [384, 4], strides = [1, 1]} : vector<432x4xf32> to vector<384x4xf32>
    %159 = arith.truncf %158 : vector<384x4xf32> to vector<384x4xbf16>
    %c8_123 = arith.constant 8 : index
    %c0_124 = arith.constant 0 : index
    %c0_125 = arith.constant 0 : index
    %160 = vector.load %arg3[%c8_123, %c0_124, %c0_125] : memref<9x4x4xbf16, #tpu.memory_space<vmem>>, vector<1x4x4xbf16>
    %161 = vector.shape_cast %160 : vector<1x4x4xbf16> to vector<4x4xbf16>
    %cst_126 = arith.constant dense<0.000000e+00> : vector<384x4xf32>
    %162 = tpu.matmul %159, %161, %cst_126 {dimension_numbers = #tpu.dot_dimension_numbers<[1], [0], [0], [1], [0, 0, 1, 1], [], []>} : vector<384x4xbf16>, vector<4x4xbf16>, vector<384x4xf32> -> vector<384x4xf32>
    %163 = arith.addf %157, %162 : vector<384x4xf32>
    %164 = vector.shape_cast %163 : vector<384x4xf32> to vector<16x24x4xf32>
    %165 = vector.extract_strided_slice %164 {offsets = [0, 0, 0], sizes = [16, 16, 4], strides = [1, 1, 1]} : vector<16x24x4xf32> to vector<16x16x4xf32>
    %cst_127 = arith.constant dense<0.000000e+00> : vector<4xf32>
    %166 = vector.multi_reduction <add>, %165, %cst_127 [0, 1] : vector<16x16x4xf32> to vector<4xf32>
    %167 = vector.shape_cast %166 : vector<4xf32> to vector<1x1x4xf32>
    %cst_128 = arith.constant 2.560000e+02 : f32
    %168 = vector.broadcast %cst_128 : f32 to vector<1x1x4xf32>
    %169 = arith.divf %167, %168 : vector<1x1x4xf32>
    %170 = vector.broadcast %169 : vector<1x1x4xf32> to vector<16x16x4xf32>
    %171 = arith.subf %165, %170 : vector<16x16x4xf32>
    %172 = arith.mulf %171, %171 : vector<16x16x4xf32>
    %cst_129 = arith.constant dense<0.000000e+00> : vector<4xf32>
    %173 = vector.multi_reduction <add>, %172, %cst_129 [0, 1] : vector<16x16x4xf32> to vector<4xf32>
    %174 = vector.shape_cast %173 : vector<4xf32> to vector<1x1x4xf32>
    %cst_130 = arith.constant 2.560000e+02 : f32
    %175 = vector.broadcast %cst_130 : f32 to vector<1x1x4xf32>
    %176 = arith.divf %174, %175 : vector<1x1x4xf32>
    %cst_131 = arith.constant 9.99999974E-6 : f32
    %177 = vector.broadcast %cst_131 : f32 to vector<1x1x4xf32>
    %178 = arith.addf %176, %177 : vector<1x1x4xf32>
    %179 = math.rsqrt %178 : vector<1x1x4xf32>
    %180 = vector.broadcast %179 : vector<1x1x4xf32> to vector<16x16x4xf32>
    %181 = arith.mulf %171, %180 : vector<16x16x4xf32>
    %182 = arith.addf %1, %181 : vector<16x16x4xf32>
    %c0_132 = arith.constant 0 : index
    %c0_133 = arith.constant 0 : index
    %c0_134 = arith.constant 0 : index
    %c0_135 = arith.constant 0 : index
    %183 = vector.load %arg4[%c0_132, %c0_133, %c0_134, %c0_135] : memref<1x16x16x4xf32, #tpu.memory_space<vmem>>, vector<1x16x16x4xf32>
    %184 = vector.shape_cast %183 : vector<1x16x16x4xf32> to vector<16x16x4xf32>
    %185 = vector.shape_cast %182 : vector<16x16x4xf32> to vector<1x16x16x4xf32>
    tpu.vector_store %arg4[%c0_132, %c0_133, %c0_134, %c0_135], %185 {strides = array<i32>} : memref<1x16x16x4xf32, #tpu.memory_space<vmem>>, vector<1x16x16x4xf32>,
    return
  }
  func.func @transform_0(%arg0: i32) -> (i32, i32, i32, i32) {
    %c0_i32 = arith.constant 0 : i32
    %c0_i32_0 = arith.constant 0 : i32
    %c0_i32_1 = arith.constant 0 : i32
    %c0_i32_2 = arith.constant 0 : i32
    return %arg0, %c0_i32, %c0_i32_0, %c0_i32_1 : i32, i32, i32, i32
  }
  func.func @transform_1(%arg0: i32) -> (i32, i32, i32) {
    %c0_i32 = arith.constant 0 : i32
    %c0_i32_0 = arith.constant 0 : i32
    %c0_i32_1 = arith.constant 0 : i32
    %c0_i32_2 = arith.constant 0 : i32
    return %c0_i32, %c0_i32_0, %c0_i32_1 : i32, i32, i32
  }
  func.func @transform_2(%arg0: i32) -> (i32, i32, i32) {
    %c0_i32 = arith.constant 0 : i32
    %c0_i32_0 = arith.constant 0 : i32
    %c0_i32_1 = arith.constant 0 : i32
    %c0_i32_2 = arith.constant 0 : i32
    return %c0_i32, %c0_i32_0, %c0_i32_1 : i32, i32, i32
  }
  func.func @transform_3(%arg0: i32) -> (i32, i32, i32, i32) {
    %c0_i32 = arith.constant 0 : i32
    %c0_i32_0 = arith.constant 0 : i32
    %c0_i32_1 = arith.constant 0 : i32
    %c0_i32_2 = arith.constant 0 : i32
    return %arg0, %c0_i32, %c0_i32_0, %c0_i32_1 : i32, i32, i32, i32
  }
}

</mosaic_0001>

<llo_original>
// kernel: resnet_block_forward.1
$region0: #{resnet_block_forward.1}
  #allocation0 [shape = 'u32[]', space=smem, size = 0x4, offset = 0x4, fixed_abs, tag = 'smem constant byte address 0x4 - core index']
  #allocation1 [shape = 'u32[144,128]{1,0:T(1,128)}', space=vmem, size = 0x12000, scoped, tag = 'internal scratch']
  #allocation2 [shape = 'f32[19,24,4]{2,1,0:T(8,128)}', space=vmem, size = 0x39000, scoped, tag = 'scratch operand']
  %s0 = inlined_call_operand.vmem [shape: f32[2,16,16,4], index: 0, kind: input, shape index: {}]
  %s1 = inlined_call_operand.vmem [shape: bf16[9,4,4], index: 1, kind: input, shape index: {}]
  %s2 = inlined_call_operand.vmem [shape: bf16[9,4,4], index: 2, kind: input, shape index: {}]
  %s3 = inlined_call_operand.vmem [shape: f32[2,16,16,4], index: 3, kind: output, shape index: {}]
  %s4 = sld [smem:[#allocation0]]
  $region45: #{resnet_block_forward.1} parent=0
    _
  %s6 = ssub.s32 1, %s4
  %s7 = scalar_select 0, %s6, %s4
  loop: start=0, step=1, limit=4
  $region2: #{resnet_block_forward.1} parent=0 // loop_pre_header
    _
  $region3: #{resnet_block_forward.1} parent=0 // loop_header
    %s9 = sphi 0, %s13
    %p10 = scmp.ge.s32.totalorder %s9, 4
    %s19 = sphi 0, %s21
    %s22 = sphi 0, %s19
    %s23 = sphi 0, %s22
    %s39 = sphi 0, %s23
    %s43 = sphi 0, %s43
    %s45 = sphi 0, %s43
    %s46 = sphi 0, %s45
    %s60 = sphi 0, %s46
    %s64 = sphi 0, %s64
    %s66 = sphi 0, %s64
    %s67 = sphi 0, %s66
    %s81 = sphi 0, %s67
    %s87 = sphi 0, %s89
    %s90 = sphi 0, %s87
    %s91 = sphi 0, %s90
    %s107 = sphi 0, %s91
  $region4: #{resnet_block_forward.1} parent=0 // loop_header_branch
    %12 = sbr.rel (%p10) target = $region8
  $region5: #{resnet_block_forward.1} parent=0 // loop_body
    %s14 = ssub.s32 %s9, 1
    %s15 = ssub.s32 %s9, 2
    %s16 = sadd.s32 %s9, 1
    %s17 = ssub.s32 %s9, %s16
    %p18 = scmp.eq.s32.totalorder %s17, 0
    %s20 = sadd.s32 %s19, 1
    %s21 = scalar_select %p18, %s19, %s20
    %p24 = pneg %p18
    %p25 = scmp.eq.s32.totalorder %s9, 1
    %p26 = por %p24, %p25
    %p27 = scmp.ne.s32.totalorder %s19, %s22
    %p28 = scmp.eq.s32.totalorder %s9, 0
    %p29 = por %p27, %p28
    %p30 = scmp.ne.s32.totalorder %s19, %s22
    %p31 = scmp.eq.s32.totalorder %s14, 1
    %p32 = por %p30, %p31
    %p33 = scmp.ne.s32.totalorder %s22, %s23
    %p34 = scmp.eq.s32.totalorder %s14, 0
    %p35 = por %p33, %p34
    %p36 = scmp.ne.s32.totalorder %s22, %s23
    %p37 = scmp.eq.s32.totalorder %s15, 1
    %p38 = por %p36, %p37
    %p40 = scmp.ne.s32.totalorder %s23, %s39
    %p41 = scmp.eq.s32.totalorder %s15, 0
    %p42 = por %p40, %p41
    %s44 = sadd.s32 %s43, 1
    %p47 = scmp.eq.s32.totalorder %s9, 1
    %p48 = scmp.ne.s32.totalorder %s43, %s45
    %p49 = scmp.eq.s32.totalorder %s9, 0
    %p50 = por %p48, %p49
    %p51 = scmp.ne.s32.totalorder %s43, %s45
    %p52 = scmp.eq.s32.totalorder %s14, 1
    %p53 = por %p51, %p52
    %p54 = scmp.ne.s32.totalorder %s45, %s46
    %p55 = scmp.eq.s32.totalorder %s14, 0
    %p56 = por %p54, %p55
    %p57 = scmp.ne.s32.totalorder %s45, %s46
    %p58 = scmp.eq.s32.totalorder %s15, 1
    %p59 = por %p57, %p58
    %p61 = scmp.ne.s32.totalorder %s46, %s60
    %p62 = scmp.eq.s32.totalorder %s15, 0
    %p63 = por %p61, %p62
    %s65 = sadd.s32 %s64, 1
    %p68 = scmp.eq.s32.totalorder %s9, 1
    %p69 = scmp.ne.s32.totalorder %s64, %s66
    %p70 = scmp.eq.s32.totalorder %s9, 0
    %p71 = por %p69, %p70
    %p72 = scmp.ne.s32.totalorder %s64, %s66
    %p73 = scmp.eq.s32.totalorder %s14, 1
    %p74 = por %p72, %p73
    %p75 = scmp.ne.s32.totalorder %s66, %s67
    %p76 = scmp.eq.s32.totalorder %s14, 0
    %p77 = por %p75, %p76
    %p78 = scmp.ne.s32.totalorder %s66, %s67
    %p79 = scmp.eq.s32.totalorder %s15, 1
    %p80 = por %p78, %p79
    %p82 = scmp.ne.s32.totalorder %s67, %s81
    %p83 = scmp.eq.s32.totalorder %s15, 0
    %p84 = por %p82, %p83
    %s85 = ssub.s32 %s9, %s16
    %p86 = scmp.eq.s32.totalorder %s85, 0
    %s88 = sadd.s32 %s87, 1
    %s89 = scalar_select %p86, %s87, %s88
    %p92 = pneg %p86
    %p93 = scmp.eq.s32.totalorder %s9, 1
    %p94 = por %p92, %p93
    %p95 = scmp.ne.s32.totalorder %s87, %s90
    %p96 = scmp.eq.s32.totalorder %s9, 0
    %p97 = por %p95, %p96
    %p98 = scmp.ne.s32.totalorder %s87, %s90
    %p99 = scmp.eq.s32.totalorder %s14, 1
    %p100 = por %p98, %p99
    %p101 = scmp.ne.s32.totalorder %s90, %s91
    %p102 = scmp.eq.s32.totalorder %s14, 0
    %p103 = por %p101, %p102
    %p104 = scmp.ne.s32.totalorder %s90, %s91
    %p105 = scmp.eq.s32.totalorder %s15, 1
    %p106 = por %p104, %p105
    %p108 = scmp.ne.s32.totalorder %s91, %s107
    %p109 = scmp.eq.s32.totalorder %s15, 0
    %p110 = por %p108, %p109
    %p111 = scmp.le.s32.totalorder 1, %s9
    %p112 = scmp.lt.s32.totalorder %s9, 3
    %p113 = pnand %p111, %p112
    %p114 = pneg %p113
    // Predicated region
    $region9: #{resnet_block_forward.1} parent=5 // pred_check
      _
    $region10: #{resnet_block_forward.1} parent=5 // pred_check_branch
      %116 = sbr.rel (%p113) target = $region12
    $region11: #{resnet_block_forward.1} parent=5 // pred_region
      %s117 = ssub.s32 %s9, 1
      // Predicated region
      $region13: #{resnet_block_forward.1} parent=11 // pred_check
        %p118 = pneg %p56
      $region14: #{resnet_block_forward.1} parent=11 // pred_check_branch
        %120 = sbr.rel (%p118) target = $region16
      $region15: #{resnet_block_forward.1} parent=11 // pred_region
        _
      $region16: #{resnet_block_forward.1} parent=11 // pred_fallthru
        _
      // Predicated region
      $region17: #{resnet_block_forward.1} parent=11 // pred_check
        %p121 = pneg %p77
      $region18: #{resnet_block_forward.1} parent=11 // pred_check_branch
        %123 = sbr.rel (%p121) target = $region20
      $region19: #{resnet_block_forward.1} parent=11 // pred_region
        _
      $region20: #{resnet_block_forward.1} parent=11 // pred_fallthru
        _
    $region12: #{resnet_block_forward.1} parent=5 // pred_fallthru
      _
    %p124 = scmp.lt.s32.totalorder %s9, 2
    // Predicated region
    $region21: #{resnet_block_forward.1} parent=5 // pred_check
      %p125 = pneg %p124
    $region22: #{resnet_block_forward.1} parent=5 // pred_check_branch
      %127 = sbr.rel (%p125) target = $region24
    $region23: #{resnet_block_forward.1} parent=5 // pred_region
      // Predicated region
      $region25: #{resnet_block_forward.1} parent=23 // pred_check
        %p128 = pneg %p29
      $region26: #{resnet_block_forward.1} parent=23 // pred_check_branch
        %130 = sbr.rel (%p128) target = $region28
      $region27: #{resnet_block_forward.1} parent=23 // pred_region
        %p131 = scmp.lt.s32.totalorder %s9, 1
        %s132 = scalar_select %p131, %s9, 1
        %s133 = smul.addr %s132, 32
        %s134 = smul.addr %s133, 8
        %s135 = scalar_lea.vmem %s0, %s134
      $region28: #{resnet_block_forward.1} parent=23 // pred_fallthru
        _
    $region24: #{resnet_block_forward.1} parent=5 // pred_fallthru
      _
    %p136 = scmp.le.s32.totalorder 1, %s9
    %p137 = scmp.lt.s32.totalorder %s9, 3
    %p138 = pnand %p136, %p137
    %p139 = pneg %p138
    // Predicated region
    $region29: #{resnet_block_forward.1} parent=5 // pred_check
      _
    $region30: #{resnet_block_forward.1} parent=5 // pred_check_branch
      %141 = sbr.rel (%p138) target = $region32
    $region31: #{resnet_block_forward.1} parent=5 // pred_region
      %s142 = ssub.s32 %s9, 1
      %p143 = scmp.lt.s32.totalorder %s14, 1
      %s144 = scalar_select %p143, %s14, 1
      %s145 = smul.addr %s144, 32
      %s146 = smul.addr %s145, 8
      %s147 = scalar_lea.vmem %s0, %s146
      %p148 = pneg %p35
      %p149 = pneg %p32
      %p150 = pneg %p56
      %p151 = pneg %p53
      %p152 = pneg %p77
      %p153 = pneg %p74
      %p154 = pneg %p103
      %p155 = pneg %p100
      %p156 = scmp.lt.s32.totalorder %s14, 1
      %s157 = scalar_select %p156, %s14, 1
      %s158 = smul.addr %s157, 32
      %s159 = smul.addr %s158, 8
      %s160 = scalar_lea.vmem %s3, %s159
      %p161 = scmp.lt.s32.totalorder %s14, 1
      %s162 = scalar_select %p161, %s14, 1
      %s163 = smul.addr %s162, 32
      %s164 = smul.addr %s163, 8
      %s165 = scalar_lea.vmem %s0, %s164
      %p166 = scmp.lt.s32.totalorder %s14, 1
      %s167 = scalar_select %p166, %s14, 1
      %s168 = smul.addr %s167, 32
      %s169 = smul.addr %s168, 8
      %s170 = scalar_lea.vmem %s3, %s169
      %v172 = vld [vmem:[%s165] sm:$0xff]
      %v173 = vld [vmem:[%s165 + $0x8] sm:$0xff]
      %v174 = vld [vmem:[%s165 + $0x10] sm:$0xff]
      %v175 = vld [vmem:[%s165 + $0x18] sm:$0xff]
      %v176 = vld [vmem:[%s165 + $0x20] sm:$0xff]
      %v177 = vld [vmem:[%s165 + $0x28] sm:$0xff]
      %v178 = vld [vmem:[%s165 + $0x30] sm:$0xff]
      %v179 = vld [vmem:[%s165 + $0x38] sm:$0xff]
      %v180 = vld [vmem:[%s165 + $0x40] sm:$0xff]
      %v181 = vld [vmem:[%s165 + $0x48] sm:$0xff]
      %v182 = vld [vmem:[%s165 + $0x50] sm:$0xff]
      %v183 = vld [vmem:[%s165 + $0x58] sm:$0xff]
      %v184 = vld [vmem:[%s165 + $0x60] sm:$0xff]
      %v185 = vld [vmem:[%s165 + $0x68] sm:$0xff]
      %v186 = vld [vmem:[%s165 + $0x70] sm:$0xff]
      %v187 = vld [vmem:[%s165 + $0x78] sm:$0xff]
      %v188 = vld [vmem:[%s165 + $0x80] sm:$0xff]
      %v189 = vld [vmem:[%s165 + $0x88] sm:$0xff]
      %v190 = vld [vmem:[%s165 + $0x90] sm:$0xff]
      %v191 = vld [vmem:[%s165 + $0x98] sm:$0xff]
      %v192 = vld [vmem:[%s165 + $0xa0] sm:$0xff]
      %v193 = vld [vmem:[%s165 + $0xa8] sm:$0xff]
      %v194 = vld [vmem:[%s165 + $0xb0] sm:$0xff]
      %v195 = vld [vmem:[%s165 + $0xb8] sm:$0xff]
      %v196 = vld [vmem:[%s165 + $0xc0] sm:$0xff]
      %v197 = vld [vmem:[%s165 + $0xc8] sm:$0xff]
      %v198 = vld [vmem:[%s165 + $0xd0] sm:$0xff]
      %v199 = vld [vmem:[%s165 + $0xd8] sm:$0xff]
      %v200 = vld [vmem:[%s165 + $0xe0] sm:$0xff]
      %v201 = vld [vmem:[%s165 + $0xe8] sm:$0xff]
      %v202 = vld [vmem:[%s165 + $0xf0] sm:$0xff]
      %v203 = vld [vmem:[%s165 + $0xf8] sm:$0xff]
      %vm204 = vcmask 29696
      %205 = vst.msk [vmem:[#allocation2 + $0x12] sm:$0x3f] %vm204, 0.0
      %206 = vst.msk [vmem:[#allocation2 + $0x2a] sm:$0x3f] %vm204, 0.0
      %207 = vst.msk [vmem:[#allocation2 + $0x42] sm:$0x3f] %vm204, 0.0
      %208 = vst.msk [vmem:[#allocation2 + $0x5a] sm:$0x3f] %vm204, 0.0
      %209 = vst.msk [vmem:[#allocation2 + $0x72] sm:$0x3f] %vm204, 0.0
      %210 = vst.msk [vmem:[#allocation2 + $0x8a] sm:$0x3f] %vm204, 0.0
      %211 = vst.msk [vmem:[#allocation2 + $0xa2] sm:$0x3f] %vm204, 0.0
      %212 = vst.msk [vmem:[#allocation2 + $0xba] sm:$0x3f] %vm204, 0.0
      %213 = vst.msk [vmem:[#allocation2 + $0xd2] sm:$0x3f] %vm204, 0.0
      %214 = vst.msk [vmem:[#allocation2 + $0xea] sm:$0x3f] %vm204, 0.0
      %215 = vst.msk [vmem:[#allocation2 + $0x102] sm:$0x3f] %vm204, 0.0
      %216 = vst.msk [vmem:[#allocation2 + $0x11a] sm:$0x3f] %vm204, 0.0
      %217 = vst.msk [vmem:[#allocation2 + $0x132] sm:$0x3f] %vm204, 0.0
      %218 = vst.msk [vmem:[#allocation2 + $0x14a] sm:$0x3f] %vm204, 0.0
      %219 = vst.msk [vmem:[#allocation2 + $0x162] sm:$0x3f] %vm204, 0.0
      %220 = vst.msk [vmem:[#allocation2 + $0x17a] sm:$0x3f] %vm204, 0.0
      %221 = vst.msk [vmem:[#allocation2 + $0x192] sm:$0x3f] %vm204, 0.0
      %222 = vst.msk [vmem:[#allocation2 + $0x1aa] sm:$0x3f] %vm204, 0.0
      %223 = vst.msk [vmem:[#allocation2 + $0x1c2] sm:$0x3f] %vm204, 0.0
      %s224 = scalar_lea.vmem [#allocation2], 432
      %vm225 = vcmask 31744
      %226 = vst.msk [vmem:[%s224] sm:$0xff] %vm225, 0.0
      %227 = vst.msk [vmem:[%s224 + $0x8] sm:$0xff] %vm225, 0.0
      %228 = vst.msk [vmem:[%s224 + $0x10] sm:$0xff] %vm225, 0.0
      %s229 = scalar_lea.vmem [#allocation2], 24
      %230 = vst.msk [vmem:[%s229 + $0x1] sm:$0xff] %vm225, %v172
      %231 = vst.msk [vmem:[%s229 + $0x9] sm:$0xff] %vm225, %v173
      %232 = vst.msk [vmem:[%s229 + $0x19] sm:$0xff] %vm225, %v174
      %233 = vst.msk [vmem:[%s229 + $0x21] sm:$0xff] %vm225, %v175
      %234 = vst.msk [vmem:[%s229 + $0x31] sm:$0xff] %vm225, %v176
      %235 = vst.msk [vmem:[%s229 + $0x39] sm:$0xff] %vm225, %v177
      %236 = vst.msk [vmem:[%s229 + $0x49] sm:$0xff] %vm225, %v178
      %237 = vst.msk [vmem:[%s229 + $0x51] sm:$0xff] %vm225, %v179
      %238 = vst.msk [vmem:[%s229 + $0x61] sm:$0xff] %vm225, %v180
      %239 = vst.msk [vmem:[%s229 + $0x69] sm:$0xff] %vm225, %v181
      %240 = vst.msk [vmem:[%s229 + $0x79] sm:$0xff] %vm225, %v182
      %241 = vst.msk [vmem:[%s229 + $0x81] sm:$0xff] %vm225, %v183
      %242 = vst.msk [vmem:[%s229 + $0x91] sm:$0xff] %vm225, %v184
      %243 = vst.msk [vmem:[%s229 + $0x99] sm:$0xff] %vm225, %v185
      %244 = vst.msk [vmem:[%s229 + $0xa9] sm:$0xff] %vm225, %v186
      %245 = vst.msk [vmem:[%s229 + $0xb1] sm:$0xff] %vm225, %v187
      %246 = vst.msk [vmem:[%s229 + $0xc1] sm:$0xff] %vm225, %v188
      %247 = vst.msk [vmem:[%s229 + $0xc9] sm:$0xff] %vm225, %v189
      %248 = vst.msk [vmem:[%s229 + $0xd9] sm:$0xff] %vm225, %v190
      %249 = vst.msk [vmem:[%s229 + $0xe1] sm:$0xff] %vm225, %v191
      %250 = vst.msk [vmem:[%s229 + $0xf1] sm:$0xff] %vm225, %v192
      %251 = vst.msk [vmem:[%s229 + $0xf9] sm:$0xff] %vm225, %v193
      %252 = vst.msk [vmem:[%s229 + $0x109] sm:$0xff] %vm225, %v194
      %253 = vst.msk [vmem:[%s229 + $0x111] sm:$0xff] %vm225, %v195
      %254 = vst.msk [vmem:[%s229 + $0x121] sm:$0xff] %vm225, %v196
      %255 = vst.msk [vmem:[%s229 + $0x129] sm:$0xff] %vm225, %v197
      %256 = vst.msk [vmem:[%s229 + $0x139] sm:$0xff] %vm225, %v198
      %257 = vst.msk [vmem:[%s229 + $0x141] sm:$0xff] %vm225, %v199
      %258 = vst.msk [vmem:[%s229 + $0x151] sm:$0xff] %vm225, %v200
      %259 = vst.msk [vmem:[%s229 + $0x159] sm:$0xff] %vm225, %v201
      %260 = vst.msk [vmem:[%s229 + $0x169] sm:$0xff] %vm225, %v202
      %261 = vst.msk [vmem:[%s229 + $0x171] sm:$0xff] %vm225, %v203
      %262 = vst.msk [vmem:[#allocation2 + $0x1] sm:$0xff] %vm225, %v174
      %263 = vst.msk [vmem:[#allocation2 + $0x9] sm:$0xff] %vm225, %v175
      %s264 = scalar_lea.vmem [#allocation2], 408
      %265 = vst.msk [vmem:[%s264 + $0x1] sm:$0xff] %vm225, %v200
      %266 = vst.msk [vmem:[%s264 + $0x9] sm:$0xff] %vm225, %v201
      %v267 = vld [vmem:[#allocation2 + $0x2] sm:$0x1]
      %v268 = vld [vmem:[#allocation2 + $0x1a] sm:$0x1]
      %v269 = vld [vmem:[#allocation2 + $0x32] sm:$0x1]
      %v270 = vld [vmem:[#allocation2 + $0x4a] sm:$0x1]
      %v271 = vld [vmem:[#allocation2 + $0x62] sm:$0x1]
      %v272 = vld [vmem:[#allocation2 + $0x7a] sm:$0x1]
      %v273 = vld [vmem:[#allocation2 + $0x92] sm:$0x1]
      %v274 = vld [vmem:[#allocation2 + $0xaa] sm:$0x1]
      %v275 = vld [vmem:[#allocation2 + $0xc2] sm:$0x1]
      %v276 = vld [vmem:[#allocation2 + $0xda] sm:$0x1]
      %v277 = vld [vmem:[#allocation2 + $0xf2] sm:$0x1]
      %v278 = vld [vmem:[#allocation2 + $0x10a] sm:$0x1]
      %v279 = vld [vmem:[#allocation2 + $0x122] sm:$0x1]
      %v280 = vld [vmem:[#allocation2 + $0x13a] sm:$0x1]
      %v281 = vld [vmem:[#allocation2 + $0x152] sm:$0x1]
      %v282 = vld [vmem:[#allocation2 + $0x16a] sm:$0x1]
      %v283 = vld [vmem:[#allocation2 + $0x182] sm:$0x1]
      %v284 = vld [vmem:[#allocation2 + $0x19a] sm:$0x1]
      %v285 = vld [vmem:[#allocation2 + $0x1b2] sm:$0x1]
      %vm286 = vcmask 24576
      %287 = vst.msk [vmem:[#allocation2] sm:$0x1] %vm286, %v267
      %288 = vst.msk [vmem:[#allocation2 + $0x18] sm:$0x1] %vm286, %v268
      %289 = vst.msk [vmem:[#allocation2 + $0x30] sm:$0x1] %vm286, %v269
      %290 = vst.msk [vmem:[#allocation2 + $0x48] sm:$0x1] %vm286, %v270
      %291 = vst.msk [vmem:[#allocation2 + $0x60] sm:$0x1] %vm286, %v271
      %292 = vst.msk [vmem:[#allocation2 + $0x78] sm:$0x1] %vm286, %v272
      %293 = vst.msk [vmem:[#allocation2 + $0x90] sm:$0x1] %vm286, %v273
      %294 = vst.msk [vmem:[#allocation2 + $0xa8] sm:$0x1] %vm286, %v274
      %295 = vst.msk [vmem:[#allocation2 + $0xc0] sm:$0x1] %vm286, %v275
      %296 = vst.msk [vmem:[#allocation2 + $0xd8] sm:$0x1] %vm286, %v276
      %297 = vst.msk [vmem:[#allocation2 + $0xf0] sm:$0x1] %vm286, %v277
      %298 = vst.msk [vmem:[#allocation2 + $0x108] sm:$0x1] %vm286, %v278
      %299 = vst.msk [vmem:[#allocation2 + $0x120] sm:$0x1] %vm286, %v279
      %300 = vst.msk [vmem:[#allocation2 + $0x138] sm:$0x1] %vm286, %v280
      %301 = vst.msk [vmem:[#allocation2 + $0x150] sm:$0x1] %vm286, %v281
      %302 = vst.msk [vmem:[#allocation2 + $0x168] sm:$0x1] %vm286, %v282
      %303 = vst.msk [vmem:[#allocation2 + $0x180] sm:$0x1] %vm286, %v283
      %304 = vst.msk [vmem:[#allocation2 + $0x198] sm:$0x1] %vm286, %v284
      %305 = vst.msk [vmem:[#allocation2 + $0x1b0] sm:$0x1] %vm286, %v285
      %v306 = vld [vmem:[#allocation2 + $0xf] sm:$0x1]
      %v307 = vld [vmem:[#allocation2 + $0x27] sm:$0x1]
      %v308 = vld [vmem:[#allocation2 + $0x3f] sm:$0x1]
      %v309 = vld [vmem:[#allocation2 + $0x57] sm:$0x1]
      %v310 = vld [vmem:[#allocation2 + $0x6f] sm:$0x1]
      %v311 = vld [vmem:[#allocation2 + $0x87] sm:$0x1]
      %v312 = vld [vmem:[#allocation2 + $0x9f] sm:$0x1]
      %v313 = vld [vmem:[#allocation2 + $0xb7] sm:$0x1]
      %v314 = vld [vmem:[#allocation2 + $0xcf] sm:$0x1]
      %v315 = vld [vmem:[#allocation2 + $0xe7] sm:$0x1]
      %v316 = vld [vmem:[#allocation2 + $0xff] sm:$0x1]
      %v317 = vld [vmem:[#allocation2 + $0x117] sm:$0x1]
      %v318 = vld [vmem:[#allocation2 + $0x12f] sm:$0x1]
      %v319 = vld [vmem:[#allocation2 + $0x147] sm:$0x1]
      %v320 = vld [vmem:[#allocation2 + $0x15f] sm:$0x1]
      %v321 = vld [vmem:[#allocation2 + $0x177] sm:$0x1]
      %v322 = vld [vmem:[#allocation2 + $0x18f] sm:$0x1]
      %v323 = vld [vmem:[#allocation2 + $0x1a7] sm:$0x1]
      %v324 = vld [vmem:[#allocation2 + $0x1bf] sm:$0x1]
      %325 = vst.msk [vmem:[#allocation2 + $0x11] sm:$0x1] %vm286, %v306
      %326 = vst.msk [vmem:[#allocation2 + $0x29] sm:$0x1] %vm286, %v307
      %327 = vst.msk [vmem:[#allocation2 + $0x41] sm:$0x1] %vm286, %v308
      %328 = vst.msk [vmem:[#allocation2 + $0x59] sm:$0x1] %vm286, %v309
      %329 = vst.msk [vmem:[#allocation2 + $0x71] sm:$0x1] %vm286, %v310
      %330 = vst.msk [vmem:[#allocation2 + $0x89] sm:$0x1] %vm286, %v311
      %331 = vst.msk [vmem:[#allocation2 + $0xa1] sm:$0x1] %vm286, %v312
      %332 = vst.msk [vmem:[#allocation2 + $0xb9] sm:$0x1] %vm286, %v313
      %333 = vst.msk [vmem:[#allocation2 + $0xd1] sm:$0x1] %vm286, %v314
      %334 = vst.msk [vmem:[#allocation2 + $0xe9] sm:$0x1] %vm286, %v315
      %335 = vst.msk [vmem:[#allocation2 + $0x101] sm:$0x1] %vm286, %v316
      %336 = vst.msk [vmem:[#allocation2 + $0x119] sm:$0x1] %vm286, %v317
      %337 = vst.msk [vmem:[#allocation2 + $0x131] sm:$0x1] %vm286, %v318
      %338 = vst.msk [vmem:[#allocation2 + $0x149] sm:$0x1] %vm286, %v319
      %339 = vst.msk [vmem:[#allocation2 + $0x161] sm:$0x1] %vm286, %v320
      %340 = vst.msk [vmem:[#allocation2 + $0x179] sm:$0x1] %vm286, %v321
      %341 = vst.msk [vmem:[#allocation2 + $0x191] sm:$0x1] %vm286, %v322
      %342 = vst.msk [vmem:[#allocation2 + $0x1a9] sm:$0x1] %vm286, %v323
      %343 = vst.msk [vmem:[#allocation2 + $0x1c1] sm:$0x1] %vm286, %v324
      %v344 = vld [vmem:[#allocation2] sm:$0xff]
      %v345 = vld [vmem:[#allocation2 + $0x8] sm:$0xff]
      %v346 = vld [vmem:[#allocation2 + $0x10] sm:$0xff]
      %v347 = vld [vmem:[#allocation2 + $0x18] sm:$0xff]
      %v348 = vld [vmem:[#allocation2 + $0x20] sm:$0xff]
      %v349 = vld [vmem:[#allocation2 + $0x28] sm:$0xff]
      %v350 = vld [vmem:[#allocation2 + $0x30] sm:$0xff]
      %v351 = vld [vmem:[#allocation2 + $0x38] sm:$0xff]
      %v352 = vld [vmem:[#allocation2 + $0x40] sm:$0xff]
      %v353 = vld [vmem:[#allocation2 + $0x48] sm:$0xff]
      %v354 = vld [vmem:[#allocation2 + $0x50] sm:$0xff]
      %v355 = vld [vmem:[#allocation2 + $0x58] sm:$0xff]
      %v356 = vld [vmem:[#allocation2 + $0x60] sm:$0xff]
      %v357 = vld [vmem:[#allocation2 + $0x68] sm:$0xff]
      %v358 = vld [vmem:[#allocation2 + $0x70] sm:$0xff]
      %v359 = vld [vmem:[#allocation2 + $0x78] sm:$0xff]
      %v360 = vld [vmem:[#allocation2 + $0x80] sm:$0xff]
      %v361 = vld [vmem:[#allocation2 + $0x88] sm:$0xff]
      %v362 = vld [vmem:[#allocation2 + $0x90] sm:$0xff]
      %v363 = vld [vmem:[#allocation2 + $0x98] sm:$0xff]
      %v364 = vld [vmem:[#allocation2 + $0xa0] sm:$0xff]
      %v365 = vld [vmem:[#allocation2 + $0xa8] sm:$0xff]
      %v366 = vld [vmem:[#allocation2 + $0xb0] sm:$0xff]
      %v367 = vld [vmem:[#allocation2 + $0xb8] sm:$0xff]
      %v368 = vld [vmem:[#allocation2 + $0xc0] sm:$0xff]
      %v369 = vld [vmem:[#allocation2 + $0xc8] sm:$0xff]
      %v370 = vld [vmem:[#allocation2 + $0xd0] sm:$0xff]
      %v371 = vld [vmem:[#allocation2 + $0xd8] sm:$0xff]
      %v372 = vld [vmem:[#allocation2 + $0xe0] sm:$0xff]
      %v373 = vld [vmem:[#allocation2 + $0xe8] sm:$0xff]
      %v374 = vld [vmem:[#allocation2 + $0xf0] sm:$0xff]
      %v375 = vld [vmem:[#allocation2 + $0xf8] sm:$0xff]
      %v376 = vld [vmem:[#allocation2 + $0x100] sm:$0xff]
      %v377 = vld [vmem:[#allocation2 + $0x108] sm:$0xff]
      %v378 = vld [vmem:[#allocation2 + $0x110] sm:$0xff]
      %v379 = vld [vmem:[#allocation2 + $0x118] sm:$0xff]
      %v380 = vld [vmem:[#allocation2 + $0x120] sm:$0xff]
      %v381 = vld [vmem:[#allocation2 + $0x128] sm:$0xff]
      %v382 = vld [vmem:[#allocation2 + $0x130] sm:$0xff]
      %v383 = vld [vmem:[#allocation2 + $0x138] sm:$0xff]
      %v384 = vld [vmem:[#allocation2 + $0x140] sm:$0xff]
      %v385 = vld [vmem:[#allocation2 + $0x148] sm:$0xff]
      %v386 = vld [vmem:[#allocation2 + $0x150] sm:$0xff]
      %v387 = vld [vmem:[#allocation2 + $0x158] sm:$0xff]
      %v388 = vld [vmem:[#allocation2 + $0x160] sm:$0xff]
      %v389 = vld [vmem:[#allocation2 + $0x168] sm:$0xff]
      %v390 = vld [vmem:[#allocation2 + $0x170] sm:$0xff]
      %v391 = vld [vmem:[#allocation2 + $0x178] sm:$0xff]
      %v392 = vld [vmem:[#allocation2 + $0x180] sm:$0xff]
      %v393 = vld [vmem:[#allocation2 + $0x188] sm:$0xff]
      %v394 = vld [vmem:[#allocation2 + $0x190] sm:$0xff]
      %v395 = vld [vmem:[#allocation2 + $0x198] sm:$0xff]
      %v396 = vld [vmem:[#allocation2 + $0x1a0] sm:$0xff]
      %v397 = vld [vmem:[#allocation2 + $0x1a8] sm:$0xff]
      %v398 = vld [vmem:[#allocation2 + $0x1b0] sm:$0xff]
      %v399 = vpack.c.bf16 %v345, %v344
      %v400 = vpack.c.bf16 %v347, %v346
      %v401 = vpack.c.bf16 %v349, %v348
      %v402 = vpack.c.bf16 %v351, %v350
      %v403 = vpack.c.bf16 %v353, %v352
      %v404 = vpack.c.bf16 %v355, %v354
      %v405 = vpack.c.bf16 %v357, %v356
      %v406 = vpack.c.bf16 %v359, %v358
      %v407 = vpack.c.bf16 %v361, %v360
      %v408 = vpack.c.bf16 %v363, %v362
      %v409 = vpack.c.bf16 %v365, %v364
      %v410 = vpack.c.bf16 %v367, %v366
      %v411 = vpack.c.bf16 %v369, %v368
      %v412 = vpack.c.bf16 %v371, %v370
      %v413 = vpack.c.bf16 %v373, %v372
      %v414 = vpack.c.bf16 %v375, %v374
      %v415 = vpack.c.bf16 %v377, %v376
      %v416 = vpack.c.bf16 %v379, %v378
      %v417 = vpack.c.bf16 %v381, %v380
      %v418 = vpack.c.bf16 %v383, %v382
      %v419 = vpack.c.bf16 %v385, %v384
      %v420 = vpack.c.bf16 %v387, %v386
      %v421 = vpack.c.bf16 %v389, %v388
      %v422 = vpack.c.bf16 %v391, %v390
      %v423 = vld [vmem:[%s1] sm:$0x3]
      %v424 = vpack.c.bf16 %v348, %v347
      %v425 = vpack.c.bf16 %v350, %v349
      %v426 = vpack.c.bf16 %v352, %v351
      %v427 = vpack.c.bf16 %v354, %v353
      %v428 = vpack.c.bf16 %v356, %v355
      %v429 = vpack.c.bf16 %v358, %v357
      %v430 = vpack.c.bf16 %v360, %v359
      %v431 = vpack.c.bf16 %v362, %v361
      %v432 = vpack.c.bf16 %v364, %v363
      %v433 = vpack.c.bf16 %v366, %v365
      %v434 = vpack.c.bf16 %v368, %v367
      %v435 = vpack.c.bf16 %v370, %v369
      %v436 = vpack.c.bf16 %v372, %v371
      %v437 = vpack.c.bf16 %v374, %v373
      %v438 = vpack.c.bf16 %v376, %v375
      %v439 = vpack.c.bf16 %v378, %v377
      %v440 = vpack.c.bf16 %v380, %v379
      %v441 = vpack.c.bf16 %v382, %v381
      %v442 = vpack.c.bf16 %v384, %v383
      %v443 = vpack.c.bf16 %v386, %v385
      %v444 = vpack.c.bf16 %v388, %v387
      %v445 = vpack.c.bf16 %v390, %v389
      %v446 = vpack.c.bf16 %v392, %v391
      %v447 = vpack.c.bf16 %v394, %v393
      %s448 = scalar_lea.vmem %s1, 6
      %v449 = vld [vmem:[%s448] sm:$0x3]
      %v451 = vsel %vm225, %v424, 0
      %v454 = vsel %vm225, %v425, 0
      %v457 = vsel %vm225, %v426, 0
      %v460 = vsel %vm225, %v427, 0
      %v463 = vsel %vm225, %v428, 0
      %v466 = vsel %vm225, %v429, 0
      %v469 = vsel %vm225, %v430, 0
      %v472 = vsel %vm225, %v431, 0
      %v475 = vsel %vm225, %v432, 0
      %v478 = vsel %vm225, %v433, 0
      %v481 = vsel %vm225, %v434, 0
      %v484 = vsel %vm225, %v435, 0
      %v487 = vsel %vm225, %v436, 0
      %v490 = vsel %vm225, %v437, 0
      %v493 = vsel %vm225, %v438, 0
      %v496 = vsel %vm225, %v439, 0
      %v499 = vsel %vm225, %v440, 0
      %v502 = vsel %vm225, %v441, 0
      %v505 = vsel %vm225, %v442, 0
      %v508 = vsel %vm225, %v443, 0
      %v511 = vsel %vm225, %v444, 0
      %v514 = vsel %vm225, %v445, 0
      %v517 = vsel %vm225, %v446, 0
      %v520 = vsel %vm225, %v447, 0
      %vm522 = vcmask 1041408
      %v524 = vsel %vm522, %v449, 0
      %526 = vmatprep.subr.bf16.mxu0 0
      %527 = vmatpush1.bf16.msra.mxu0 %v524
      %528 = vmatprep.subr.bf16.mxu0 0
      %529 = vmatpush1.bf16.msra.mxu0 0
      %530 = vmatprep.subr.bf16.mxu0 0
      %531 = vmatpush1.bf16.msra.mxu0 0
      %532 = vmatprep.subr.bf16.mxu0 0
      %533 = vmatpush1.bf16.msra.mxu0 0
      %534 = vmatprep.subr.bf16.mxu0 0
      %535 = vmatpush1.bf16.msra.mxu0 0
      %536 = vmatprep.subr.bf16.mxu0 0
      %537 = vmatpush1.bf16.msra.mxu0 0
      %538 = vmatprep.subr.bf16.mxu0 0
      %539 = vmatpush1.bf16.msra.mxu0 0
      %540 = vmatprep.subr.bf16.mxu0 0
      %541 = vmatpush1.bf16.msra.mxu0 0
      %542 = vmatprep.subr.bf16.mxu0 0
      %543 = vmatpush1.bf16.msra.mxu0 0
      %544 = vmatprep.subr.bf16.mxu0 0
      %545 = vmatpush1.bf16.msra.mxu0 0
      %546 = vmatprep.subr.bf16.mxu0 0
      %547 = vmatpush1.bf16.msra.mxu0 0
      %548 = vmatprep.subr.bf16.mxu0 0
      %549 = vmatpush1.bf16.msra.mxu0 0
      %550 = vmatprep.subr.bf16.mxu0 0
      %551 = vmatpush1.bf16.msra.mxu0 0
      %552 = vmatprep.subr.bf16.mxu0 0
      %553 = vmatpush1.bf16.msra.mxu0 0
      %554 = vmatprep.subr.bf16.mxu0 0
      %555 = vmatpush1.bf16.msra.mxu0 0
      %556 = vmatprep.subr.bf16.mxu0 0
      %557 = vmatpush1.bf16.msra.mxu0 0
      %558 = vmatprep.mubr.bf16.mxu0 0
      %559 = vmatmul.mubr.bf16.gmra.mrb[0].mxu0 %v451
      %v560 = vpop.f32.mrb[0].mxu0
      %v561 = vadd.f32 0.0, %v560
      %v562 = vpop.f32.mrb[0].mxu0
      %v563 = vpop.f32.mrb[0].mxu0
      %v564 = vadd.f32 0.0, %v563
      %v565 = vpop.f32.mrb[0].mxu0
      %566 = vmatprep.mubr.bf16.mxu0 0
      %567 = vmatmul.mubr.bf16.gmra.mrb[0].mxu0 %v454
      %v568 = vpop.f32.mrb[0].mxu0
      %v569 = vpop.f32.mrb[0].mxu0
      %v570 = vpop.f32.mrb[0].mxu0
      %v571 = vadd.f32 0.0, %v570
      %v572 = vpop.f32.mrb[0].mxu0
      %573 = vmatprep.mubr.bf16.mxu0 0
      %574 = vmatmul.mubr.bf16.gmra.mrb[0].mxu0 %v457
      %v575 = vpop.f32.mrb[0].mxu0
      %v576 = vadd.f32 0.0, %v575
      %v577 = vpop.f32.mrb[0].mxu0
      %v578 = vpop.f32.mrb[0].mxu0
      %v579 = vpop.f32.mrb[0].mxu0
      %580 = vmatprep.mubr.bf16.mxu0 0
      %581 = vmatmul.mubr.bf16.gmra.mrb[0].mxu0 %v460
      %v582 = vpop.f32.mrb[0].mxu0
      %v583 = vadd.f32 0.0, %v582
      %v584 = vpop.f32.mrb[0].mxu0
      %v585 = vpop.f32.mrb[0].mxu0
      %v586 = vadd.f32 0.0, %v585
      %v587 = vpop.f32.mrb[0].mxu0
      %588 = vmatprep.mubr.bf16.mxu0 0
      %589 = vmatmul.mubr.bf16.gmra.mrb[0].mxu0 %v463
      %v590 = vpop.f32.mrb[0].mxu0
      %v591 = vpop.f32.mrb[0].mxu0
      %v592 = vpop.f32.mrb[0].mxu0
      %v593 = vadd.f32 0.0, %v592
      %v594 = vpop.f32.mrb[0].mxu0
      %595 = vmatprep.mubr.bf16.mxu0 0
      %596 = vmatmul.mubr.bf16.gmra.mrb[0].mxu0 %v466
      %v597 = vpop.f32.mrb[0].mxu0
      %v598 = vadd.f32 0.0, %v597
      %v599 = vpop.f32.mrb[0].mxu0
      %v600 = vpop.f32.mrb[0].mxu0
      %v601 = vpop.f32.mrb[0].mxu0
      %602 = vmatprep.mubr.bf16.mxu0 0
      %603 = vmatmul.mubr.bf16.gmra.mrb[0].mxu0 %v469
      %v604 = vpop.f32.mrb[0].mxu0
      %v605 = vadd.f32 0.0, %v604
      %v606 = vpop.f32.mrb[0].mxu0
      %v607 = vpop.f32.mrb[0].mxu0
      %v608 = vadd.f32 0.0, %v607
      %v609 = vpop.f32.mrb[0].mxu0
      %610 = vmatprep.mubr.bf16.mxu0 0
      %611 = vmatmul.mubr.bf16.gmra.mrb[0].mxu0 %v472
      %v612 = vpop.f32.mrb[0].mxu0
      %v613 = vpop.f32.mrb[0].mxu0
      %v614 = vpop.f32.mrb[0].mxu0
      %v615 = vadd.f32 0.0, %v614
      %v616 = vpop.f32.mrb[0].mxu0
      %617 = vmatprep.mubr.bf16.mxu0 0
      %618 = vmatmul.mubr.bf16.gmra.mrb[0].mxu0 %v475
      %v619 = vpop.f32.mrb[0].mxu0
      %v620 = vadd.f32 0.0, %v619
      %v621 = vpop.f32.mrb[0].mxu0
      %v622 = vpop.f32.mrb[0].mxu0
      %v623 = vpop.f32.mrb[0].mxu0
      %624 = vmatprep.mubr.bf16.mxu0 0
      %625 = vmatmul.mubr.bf16.gmra.mrb[0].mxu0 %v478
      %v626 = vpop.f32.mrb[0].mxu0
      %v627 = vadd.f32 0.0, %v626
      %v628 = vpop.f32.mrb[0].mxu0
      %v629 = vpop.f32.mrb[0].mxu0
      %v630 = vadd.f32 0.0, %v629
      %v631 = vpop.f32.mrb[0].mxu0
      %632 = vmatprep.mubr.bf16.mxu0 0
      %633 = vmatmul.mubr.bf16.gmra.mrb[0].mxu0 %v481
      %v634 = vpop.f32.mrb[0].mxu0
      %v635 = vpop.f32.mrb[0].mxu0
      %v636 = vpop.f32.mrb[0].mxu0
      %v637 = vadd.f32 0.0, %v636
      %v638 = vpop.f32.mrb[0].mxu0
      %639 = vmatprep.mubr.bf16.mxu0 0
      %640 = vmatmul.mubr.bf16.gmra.mrb[0].mxu0 %v484
      %v641 = vpop.f32.mrb[0].mxu0
      %v642 = vadd.f32 0.0, %v641
      %v643 = vpop.f32.mrb[0].mxu0
      %v644 = vpop.f32.mrb[0].mxu0
      %v645 = vpop.f32.mrb[0].mxu0
      %646 = vmatprep.mubr.bf16.mxu0 0
      %647 = vmatmul.mubr.bf16.gmra.mrb[0].mxu0 %v487
      %v648 = vpop.f32.mrb[0].mxu0
      %v649 = vadd.f32 0.0, %v648
      %v650 = vpop.f32.mrb[0].mxu0
      %v651 = vpop.f32.mrb[0].mxu0
      %v652 = vadd.f32 0.0, %v651
      %v653 = vpop.f32.mrb[0].mxu0
      %654 = vmatprep.mubr.bf16.mxu0 0
      %655 = vmatmul.mubr.bf16.gmra.mrb[0].mxu0 %v490
      %v656 = vpop.f32.mrb[0].mxu0
      %v657 = vpop.f32.mrb[0].mxu0
      %v658 = vpop.f32.mrb[0].mxu0
      %v659 = vadd.f32 0.0, %v658
      %v660 = vpop.f32.mrb[0].mxu0
      %661 = vmatprep.mubr.bf16.mxu0 0
      %662 = vmatmul.mubr.bf16.gmra.mrb[0].mxu0 %v493
      %v663 = vpop.f32.mrb[0].mxu0
      %v664 = vadd.f32 0.0, %v663
      %v665 = vpop.f32.mrb[0].mxu0
      %v666 = vpop.f32.mrb[0].mxu0
      %v667 = vpop.f32.mrb[0].mxu0
      %668 = vmatprep.mubr.bf16.mxu0 0
      %669 = vmatmul.mubr.bf16.gmra.mrb[0].mxu0 %v496
      %v670 = vpop.f32.mrb[0].mxu0
      %v671 = vadd.f32 0.0, %v670
      %v672 = vpop.f32.mrb[0].mxu0
      %v673 = vpop.f32.mrb[0].mxu0
      %v674 = vadd.f32 0.0, %v673
      %v675 = vpop.f32.mrb[0].mxu0
      %676 = vmatprep.mubr.bf16.mxu0 0
      %677 = vmatmul.mubr.bf16.gmra.mrb[0].mxu0 %v499
      %v678 = vpop.f32.mrb[0].mxu0
      %v679 = vpop.f32.mrb[0].mxu0
      %v680 = vpop.f32.mrb[0].mxu0
      %v681 = vadd.f32 0.0, %v680
      %v682 = vpop.f32.mrb[0].mxu0
      %683 = vmatprep.mubr.bf16.mxu0 0
      %684 = vmatmul.mubr.bf16.gmra.mrb[0].mxu0 %v502
      %v685 = vpop.f32.mrb[0].mxu0
      %v686 = vadd.f32 0.0, %v685
      %v687 = vpop.f32.mrb[0].mxu0
      %v688 = vpop.f32.mrb[0].mxu0
      %v689 = vpop.f32.mrb[0].mxu0
      %690 = vmatprep.mubr.bf16.mxu0 0
      %691 = vmatmul.mubr.bf16.gmra.mrb[0].mxu0 %v505
      %v692 = vpop.f32.mrb[0].mxu0
      %v693 = vadd.f32 0.0, %v692
      %v694 = vpop.f32.mrb[0].mxu0
      %v695 = vpop.f32.mrb[0].mxu0
      %v696 = vadd.f32 0.0, %v695
      %v697 = vpop.f32.mrb[0].mxu0
      %698 = vmatprep.mubr.bf16.mxu0 0
      %699 = vmatmul.mubr.bf16.gmra.mrb[0].mxu0 %v508
      %v700 = vpop.f32.mrb[0].mxu0
      %v701 = vpop.f32.mrb[0].mxu0
      %v702 = vpop.f32.mrb[0].mxu0
      %v703 = vadd.f32 0.0, %v702
      %v704 = vpop.f32.mrb[0].mxu0
      %705 = vmatprep.mubr.bf16.mxu0 0
      %706 = vmatmul.mubr.bf16.gmra.mrb[0].mxu0 %v511
      %v707 = vpop.f32.mrb[0].mxu0
      %v708 = vadd.f32 0.0, %v707
      %v709 = vpop.f32.mrb[0].mxu0
      %v710 = vpop.f32.mrb[0].mxu0
      %v711 = vpop.f32.mrb[0].mxu0
      %712 = vmatprep.mubr.bf16.mxu0 0
      %713 = vmatmul.mubr.bf16.gmra.mrb[0].mxu0 %v514
      %v714 = vpop.f32.mrb[0].mxu0
      %v715 = vadd.f32 0.0, %v714
      %v716 = vpop.f32.mrb[0].mxu0
      %v717 = vpop.f32.mrb[0].mxu0
      %v718 = vadd.f32 0.0, %v717
      %v719 = vpop.f32.mrb[0].mxu0
      %720 = vmatprep.mubr.bf16.mxu0 0
      %721 = vmatmul.mubr.bf16.gmra.mrb[0].mxu0 %v517
      %v722 = vpop.f32.mrb[0].mxu0
      %v723 = vpop.f32.mrb[0].mxu0
      %v724 = vpop.f32.mrb[0].mxu0
      %v725 = vadd.f32 0.0, %v724
      %v726 = vpop.f32.mrb[0].mxu0
      %727 = vmatprep.mubr.bf16.mxu0 0
      %728 = vmatmul.mubr.bf16.gmra.mrb[0].mxu0 %v520
      %v729 = vpop.f32.mrb[0].mxu0
      %v730 = vadd.f32 0.0, %v729
      %v731 = vpop.f32.mrb[0].mxu0
      %v732 = vpop.f32.mrb[0].mxu0
      %v733 = vpop.f32.mrb[0].mxu0
      %734 = vdwg.mxu0
      %v736 = vsel %vm225, %v399, 0
      %v739 = vsel %vm225, %v400, 0
      %v742 = vsel %vm225, %v401, 0
      %v745 = vsel %vm225, %v402, 0
      %v748 = vsel %vm225, %v403, 0
      %v751 = vsel %vm225, %v404, 0
      %v754 = vsel %vm225, %v405, 0
      %v757 = vsel %vm225, %v406, 0
      %v760 = vsel %vm225, %v407, 0
      %v763 = vsel %vm225, %v408, 0
      %v766 = vsel %vm225, %v409, 0
      %v769 = vsel %vm225, %v410, 0
      %v772 = vsel %vm225, %v411, 0
      %v775 = vsel %vm225, %v412, 0
      %v778 = vsel %vm225, %v413, 0
      %v781 = vsel %vm225, %v414, 0
      %v784 = vsel %vm225, %v415, 0
      %v787 = vsel %vm225, %v416, 0
      %v790 = vsel %vm225, %v417, 0
      %v793 = vsel %vm225, %v418, 0
      %v796 = vsel %vm225, %v419, 0
      %v799 = vsel %vm225, %v420, 0
      %v802 = vsel %vm225, %v421, 0
      %v805 = vsel %vm225, %v422, 0
      %v808 = vsel %vm522, %v423, 0
      %810 = vmatprep.subr.bf16.mxu0 0
      %811 = vmatpush1.bf16.msra.mxu0 %v808
      %812 = vmatprep.subr.bf16.mxu0 0
      %813 = vmatpush1.bf16.msra.mxu0 0
      %814 = vmatprep.subr.bf16.mxu0 0
      %815 = vmatpush1.bf16.msra.mxu0 0
      %816 = vmatprep.subr.bf16.mxu0 0
      %817 = vmatpush1.bf16.msra.mxu0 0
      %818 = vmatprep.subr.bf16.mxu0 0
      %819 = vmatpush1.bf16.msra.mxu0 0
      %820 = vmatprep.subr.bf16.mxu0 0
      %821 = vmatpush1.bf16.msra.mxu0 0
      %822 = vmatprep.subr.bf16.mxu0 0
      %823 = vmatpush1.bf16.msra.mxu0 0
      %824 = vmatprep.subr.bf16.mxu0 0
      %825 = vmatpush1.bf16.msra.mxu0 0
      %826 = vmatprep.subr.bf16.mxu0 0
      %827 = vmatpush1.bf16.msra.mxu0 0
      %828 = vmatprep.subr.bf16.mxu0 0
      %829 = vmatpush1.bf16.msra.mxu0 0
      %830 = vmatprep.subr.bf16.mxu0 0
      %831 = vmatpush1.bf16.msra.mxu0 0
      %832 = vmatprep.subr.bf16.mxu0 0
      %833 = vmatpush1.bf16.msra.mxu0 0
      %834 = vmatprep.subr.bf16.mxu0 0
      %835 = vmatpush1.bf16.msra.mxu0 0
      %836 = vmatprep.subr.bf16.mxu0 0
      %837 = vmatpush1.bf16.msra.mxu0 0
      %838 = vmatprep.subr.bf16.mxu0 0
      %839 = vmatpush1.bf16.msra.mxu0 0
      %840 = vmatprep.subr.bf16.mxu0 0
      %841 = vmatpush1.bf16.msra.mxu0 0
      %842 = vmatprep.mubr.bf16.mxu0 0
      %843 = vmatmul.mubr.bf16.gmra.mrb[0].mxu0 %v736
      %v844 = vpop.f32.mrb[0].mxu0
      %v845 = vadd.f32 %v561, %v844
      %v846 = vpop.f32.mrb[0].mxu0
      %v847 = vpop.f32.mrb[0].mxu0
      %v848 = vadd.f32 %v564, %v847
      %v849 = vpop.f32.mrb[0].mxu0
      %850 = vmatprep.mubr.bf16.mxu0 0
      %851 = vmatmul.mubr.bf16.gmra.mrb[0].mxu0 %v739
      %v852 = vpop.f32.mrb[0].mxu0
      %v853 = vpop.f32.mrb[0].mxu0
      %v854 = vpop.f32.mrb[0].mxu0
      %v855 = vadd.f32 %v571, %v854
      %v856 = vpop.f32.mrb[0].mxu0
      %857 = vmatprep.mubr.bf16.mxu0 0
      %858 = vmatmul.mubr.bf16.gmra.mrb[0].mxu0 %v742
      %v859 = vpop.f32.mrb[0].mxu0
      %v860 = vadd.f32 %v576, %v859
      %v861 = vpop.f32.mrb[0].mxu0
      %v862 = vpop.f32.mrb[0].mxu0
      %v863 = vpop.f32.mrb[0].mxu0
      %864 = vmatprep.mubr.bf16.mxu0 0
      %865 = vmatmul.mubr.bf16.gmra.mrb[0].mxu0 %v745
      %v866 = vpop.f32.mrb[0].mxu0
      %v867 = vadd.f32 %v583, %v866
      %v868 = vpop.f32.mrb[0].mxu0
      %v869 = vpop.f32.mrb[0].mxu0
      %v870 = vadd.f32 %v586, %v869
      %v871 = vpop.f32.mrb[0].mxu0
      %872 = vmatprep.mubr.bf16.mxu0 0
      %873 = vmatmul.mubr.bf16.gmra.mrb[0].mxu0 %v748
      %v874 = vpop.f32.mrb[0].mxu0
      %v875 = vpop.f32.mrb[0].mxu0
      %v876 = vpop.f32.mrb[0].mxu0
      %v877 = vadd.f32 %v593, %v876
      %v878 = vpop.f32.mrb[0].mxu0
      %879 = vmatprep.mubr.bf16.mxu0 0
      %880 = vmatmul.mubr.bf16.gmra.mrb[0].mxu0 %v751
      %v881 = vpop.f32.mrb[0].mxu0
      %v882 = vadd.f32 %v598, %v881
      %v883 = vpop.f32.mrb[0].mxu0
      %v884 = vpop.f32.mrb[0].mxu0
      %v885 = vpop.f32.mrb[0].mxu0
      %886 = vmatprep.mubr.bf16.mxu0 0
      %887 = vmatmul.mubr.bf16.gmra.mrb[0].mxu0 %v754
      %v888 = vpop.f32.mrb[0].mxu0
      %v889 = vadd.f32 %v605, %v888
      %v890 = vpop.f32.mrb[0].mxu0
      %v891 = vpop.f32.mrb[0].mxu0
      %v892 = vadd.f32 %v608, %v891
      %v893 = vpop.f32.mrb[0].mxu0
      %894 = vmatprep.mubr.bf16.mxu0 0
      %895 = vmatmul.mubr.bf16.gmra.mrb[0].mxu0 %v757
      %v896 = vpop.f32.mrb[0].mxu0
      %v897 = vpop.f32.mrb[0].mxu0
      %v898 = vpop.f32.mrb[0].mxu0
      %v899 = vadd.f32 %v615, %v898
      %v900 = vpop.f32.mrb[0].mxu0
      %901 = vmatprep.mubr.bf16.mxu0 0
      %902 = vmatmul.mubr.bf16.gmra.mrb[0].mxu0 %v760
      %v903 = vpop.f32.mrb[0].mxu0
      %v904 = vadd.f32 %v620, %v903
      %v905 = vpop.f32.mrb[0].mxu0
      %v906 = vpop.f32.mrb[0].mxu0
      %v907 = vpop.f32.mrb[0].mxu0
      %908 = vmatprep.mubr.bf16.mxu0 0
      %909 = vmatmul.mubr.bf16.gmra.mrb[0].mxu0 %v763
      %v910 = vpop.f32.mrb[0].mxu0
      %v911 = vadd.f32 %v627, %v910
      %v912 = vpop.f32.mrb[0].mxu0
      %v913 = vpop.f32.mrb[0].mxu0
      %v914 = vadd.f32 %v630, %v913
      %v915 = vpop.f32.mrb[0].mxu0
      %916 = vmatprep.mubr.bf16.mxu0 0
      %917 = vmatmul.mubr.bf16.gmra.mrb[0].mxu0 %v766
      %v918 = vpop.f32.mrb[0].mxu0
      %v919 = vpop.f32.mrb[0].mxu0
      %v920 = vpop.f32.mrb[0].mxu0
      %v921 = vadd.f32 %v637, %v920
      %v922 = vpop.f32.mrb[0].mxu0
      %923 = vmatprep.mubr.bf16.mxu0 0
      %924 = vmatmul.mubr.bf16.gmra.mrb[0].mxu0 %v769
      %v925 = vpop.f32.mrb[0].mxu0
      %v926 = vadd.f32 %v642, %v925
      %v927 = vpop.f32.mrb[0].mxu0
      %v928 = vpop.f32.mrb[0].mxu0
      %v929 = vpop.f32.mrb[0].mxu0
      %930 = vmatprep.mubr.bf16.mxu0 0
      %931 = vmatmul.mubr.bf16.gmra.mrb[0].mxu0 %v772
      %v932 = vpop.f32.mrb[0].mxu0
      %v933 = vadd.f32 %v649, %v932
      %v934 = vpop.f32.mrb[0].mxu0
      %v935 = vpop.f32.mrb[0].mxu0
      %v936 = vadd.f32 %v652, %v935
      %v937 = vpop.f32.mrb[0].mxu0
      %938 = vmatprep.mubr.bf16.mxu0 0
      %939 = vmatmul.mubr.bf16.gmra.mrb[0].mxu0 %v775
      %v940 = vpop.f32.mrb[0].mxu0
      %v941 = vpop.f32.mrb[0].mxu0
      %v942 = vpop.f32.mrb[0].mxu0
      %v943 = vadd.f32 %v659, %v942
      %v944 = vpop.f32.mrb[0].mxu0
      %945 = vmatprep.mubr.bf16.mxu0 0
      %946 = vmatmul.mubr.bf16.gmra.mrb[0].mxu0 %v778
      %v947 = vpop.f32.mrb[0].mxu0
      %v948 = vadd.f32 %v664, %v947
      %v949 = vpop.f32.mrb[0].mxu0
      %v950 = vpop.f32.mrb[0].mxu0
      %v951 = vpop.f32.mrb[0].mxu0
      %952 = vmatprep.mubr.bf16.mxu0 0
      %953 = vmatmul.mubr.bf16.gmra.mrb[0].mxu0 %v781
      %v954 = vpop.f32.mrb[0].mxu0
      %v955 = vadd.f32 %v671, %v954
      %v956 = vpop.f32.mrb[0].mxu0
      %v957 = vpop.f32.mrb[0].mxu0
      %v958 = vadd.f32 %v674, %v957
      %v959 = vpop.f32.mrb[0].mxu0
      %960 = vmatprep.mubr.bf16.mxu0 0
      %961 = vmatmul.mubr.bf16.gmra.mrb[0].mxu0 %v784
      %v962 = vpop.f32.mrb[0].mxu0
      %v963 = vpop.f32.mrb[0].mxu0
      %v964 = vpop.f32.mrb[0].mxu0
      %v965 = vadd.f32 %v681, %v964
      %v966 = vpop.f32.mrb[0].mxu0
      %967 = vmatprep.mubr.bf16.mxu0 0
      %968 = vmatmul.mubr.bf16.gmra.mrb[0].mxu0 %v787
      %v969 = vpop.f32.mrb[0].mxu0
      %v970 = vadd.f32 %v686, %v969
      %v971 = vpop.f32.mrb[0].mxu0
      %v972 = vpop.f32.mrb[0].mxu0
      %v973 = vpop.f32.mrb[0].mxu0
      %974 = vmatprep.mubr.bf16.mxu0 0
      %975 = vmatmul.mubr.bf16.gmra.mrb[0].mxu0 %v790
      %v976 = vpop.f32.mrb[0].mxu0
      %v977 = vadd.f32 %v693, %v976
      %v978 = vpop.f32.mrb[0].mxu0
      %v979 = vpop.f32.mrb[0].mxu0
      %v980 = vadd.f32 %v696, %v979
      %v981 = vpop.f32.mrb[0].mxu0
      %982 = vmatprep.mubr.bf16.mxu0 0
      %983 = vmatmul.mubr.bf16.gmra.mrb[0].mxu0 %v793
      %v984 = vpop.f32.mrb[0].mxu0
      %v985 = vpop.f32.mrb[0].mxu0
      %v986 = vpop.f32.mrb[0].mxu0
      %v987 = vadd.f32 %v703, %v986
      %v988 = vpop.f32.mrb[0].mxu0
      %989 = vmatprep.mubr.bf16.mxu0 0
      %990 = vmatmul.mubr.bf16.gmra.mrb[0].mxu0 %v796
      %v991 = vpop.f32.mrb[0].mxu0
      %v992 = vadd.f32 %v708, %v991
      %v993 = vpop.f32.mrb[0].mxu0
      %v994 = vpop.f32.mrb[0].mxu0
      %v995 = vpop.f32.mrb[0].mxu0
      %996 = vmatprep.mubr.bf16.mxu0 0
      %997 = vmatmul.mubr.bf16.gmra.mrb[0].mxu0 %v799
      %v998 = vpop.f32.mrb[0].mxu0
      %v999 = vadd.f32 %v715, %v998
      %v1000 = vpop.f32.mrb[0].mxu0
      %v1001 = vpop.f32.mrb[0].mxu0
      %v1002 = vadd.f32 %v718, %v1001
      %v1003 = vpop.f32.mrb[0].mxu0
      %1004 = vmatprep.mubr.bf16.mxu0 0
      %1005 = vmatmul.mubr.bf16.gmra.mrb[0].mxu0 %v802
      %v1006 = vpop.f32.mrb[0].mxu0
      %v1007 = vpop.f32.mrb[0].mxu0
      %v1008 = vpop.f32.mrb[0].mxu0
      %v1009 = vadd.f32 %v725, %v1008
      %v1010 = vpop.f32.mrb[0].mxu0
      %1011 = vmatprep.mubr.bf16.mxu0 0
      %1012 = vmatmul.mubr.bf16.gmra.mrb[0].mxu0 %v805
      %v1013 = vpop.f32.mrb[0].mxu0
      %v1014 = vadd.f32 %v730, %v1013
      %v1015 = vpop.f32.mrb[0].mxu0
      %v1016 = vpop.f32.mrb[0].mxu0
      %v1017 = vpop.f32.mrb[0].mxu0
      %1018 = vdwg.mxu0
      %v1019 = vpack.c.bf16 %v393, %v392
      %v1020 = vpack.c.bf16 %v395, %v394
      %v1021 = vpack.c.bf16 %v397, %v396
      %s1022 = scalar_lea.vmem %s1, 12
      %v1023 = vld [vmem:[%s1022] sm:$0x3]
      %v1025 = vsel %vm225, %v1019, 0
      %v1028 = vsel %vm225, %v1020, 0
      %v1031 = vsel %vm225, %v1021, 0
      %v1034 = vsel %vm522, %v1023, 0
      %1036 = vmatprep.subr.bf16.mxu0 0
      %1037 = vmatpush1.bf16.msra.mxu0 %v1034
      %1038 = vmatprep.subr.bf16.mxu0 0
      %1039 = vmatpush1.bf16.msra.mxu0 0
      %1040 = vmatprep.subr.bf16.mxu0 0
      %1041 = vmatpush1.bf16.msra.mxu0 0
      %1042 = vmatprep.subr.bf16.mxu0 0
      %1043 = vmatpush1.bf16.msra.mxu0 0
      %1044 = vmatprep.subr.bf16.mxu0 0
      %1045 = vmatpush1.bf16.msra.mxu0 0
      %1046 = vmatprep.subr.bf16.mxu0 0
      %1047 = vmatpush1.bf16.msra.mxu0 0
      %1048 = vmatprep.subr.bf16.mxu0 0
      %1049 = vmatpush1.bf16.msra.mxu0 0
      %1050 = vmatprep.subr.bf16.mxu0 0
      %1051 = vmatpush1.bf16.msra.mxu0 0
      %1052 = vmatprep.subr.bf16.mxu0 0
      %1053 = vmatpush1.bf16.msra.mxu0 0
      %1054 = vmatprep.subr.bf16.mxu0 0
      %1055 = vmatpush1.bf16.msra.mxu0 0
      %1056 = vmatprep.subr.bf16.mxu0 0
      %1057 = vmatpush1.bf16.msra.mxu0 0
      %1058 = vmatprep.subr.bf16.mxu0 0
      %1059 = vmatpush1.bf16.msra.mxu0 0
      %1060 = vmatprep.subr.bf16.mxu0 0
      %1061 = vmatpush1.bf16.msra.mxu0 0
      %1062 = vmatprep.subr.bf16.mxu0 0
      %1063 = vmatpush1.bf16.msra.mxu0 0
      %1064 = vmatprep.subr.bf16.mxu0 0
      %1065 = vmatpush1.bf16.msra.mxu0 0
      %1066 = vmatprep.subr.bf16.mxu0 0
      %1067 = vmatpush1.bf16.msra.mxu0 0
      %1068 = vmatprep.mubr.bf16.mxu0 0
      %1069 = vmatmul.mubr.bf16.gmra.mrb[0].mxu0 %v745
      %v1070 = vpop.f32.mrb[0].mxu0
      %v1071 = vadd.f32 0.0, %v1070
      %v1072 = vpop.f32.mrb[0].mxu0
      %v1073 = vpop.f32.mrb[0].mxu0
      %v1074 = vadd.f32 0.0, %v1073
      %v1075 = vpop.f32.mrb[0].mxu0
      %1076 = vmatprep.mubr.bf16.mxu0 0
      %1077 = vmatmul.mubr.bf16.gmra.mrb[0].mxu0 %v748
      %v1078 = vpop.f32.mrb[0].mxu0
      %v1079 = vpop.f32.mrb[0].mxu0
      %v1080 = vpop.f32.mrb[0].mxu0
      %v1081 = vadd.f32 0.0, %v1080
      %v1082 = vpop.f32.mrb[0].mxu0
      %1083 = vmatprep.mubr.bf16.mxu0 0
      %1084 = vmatmul.mubr.bf16.gmra.mrb[0].mxu0 %v751
      %v1085 = vpop.f32.mrb[0].mxu0
      %v1086 = vadd.f32 0.0, %v1085
      %v1087 = vpop.f32.mrb[0].mxu0
      %v1088 = vpop.f32.mrb[0].mxu0
      %v1089 = vpop.f32.mrb[0].mxu0
      %1090 = vmatprep.mubr.bf16.mxu0 0
      %1091 = vmatmul.mubr.bf16.gmra.mrb[0].mxu0 %v754
      %v1092 = vpop.f32.mrb[0].mxu0
      %v1093 = vadd.f32 0.0, %v1092
      %v1094 = vpop.f32.mrb[0].mxu0
      %v1095 = vpop.f32.mrb[0].mxu0
      %v1096 = vadd.f32 0.0, %v1095
      %v1097 = vpop.f32.mrb[0].mxu0
      %1098 = vmatprep.mubr.bf16.mxu0 0
      %1099 = vmatmul.mubr.bf16.gmra.mrb[0].mxu0 %v757
      %v1100 = vpop.f32.mrb[0].mxu0
      %v1101 = vpop.f32.mrb[0].mxu0
      %v1102 = vpop.f32.mrb[0].mxu0
      %v1103 = vadd.f32 0.0, %v1102
      %v1104 = vpop.f32.mrb[0].mxu0
      %1105 = vmatprep.mubr.bf16.mxu0 0
      %1106 = vmatmul.mubr.bf16.gmra.mrb[0].mxu0 %v760
      %v1107 = vpop.f32.mrb[0].mxu0
      %v1108 = vadd.f32 0.0, %v1107
      %v1109 = vpop.f32.mrb[0].mxu0
      %v1110 = vpop.f32.mrb[0].mxu0
      %v1111 = vpop.f32.mrb[0].mxu0
      %1112 = vmatprep.mubr.bf16.mxu0 0
      %1113 = vmatmul.mubr.bf16.gmra.mrb[0].mxu0 %v763
      %v1114 = vpop.f32.mrb[0].mxu0
      %v1115 = vadd.f32 0.0, %v1114
      %v1116 = vpop.f32.mrb[0].mxu0
      %v1117 = vpop.f32.mrb[0].mxu0
      %v1118 = vadd.f32 0.0, %v1117
      %v1119 = vpop.f32.mrb[0].mxu0
      %1120 = vmatprep.mubr.bf16.mxu0 0
      %1121 = vmatmul.mubr.bf16.gmra.mrb[0].mxu0 %v766
      %v1122 = vpop.f32.mrb[0].mxu0
      %v1123 = vpop.f32.mrb[0].mxu0
      %v1124 = vpop.f32.mrb[0].mxu0
      %v1125 = vadd.f32 0.0, %v1124
      %v1126 = vpop.f32.mrb[0].mxu0
      %1127 = vmatprep.mubr.bf16.mxu0 0
      %1128 = vmatmul.mubr.bf16.gmra.mrb[0].mxu0 %v769
      %v1129 = vpop.f32.mrb[0].mxu0
      %v1130 = vadd.f32 0.0, %v1129
      %v1131 = vpop.f32.mrb[0].mxu0
      %v1132 = vpop.f32.mrb[0].mxu0
      %v1133 = vpop.f32.mrb[0].mxu0
      %1134 = vmatprep.mubr.bf16.mxu0 0
      %1135 = vmatmul.mubr.bf16.gmra.mrb[0].mxu0 %v772
      %v1136 = vpop.f32.mrb[0].mxu0
      %v1137 = vadd.f32 0.0, %v1136
      %v1138 = vpop.f32.mrb[0].mxu0
      %v1139 = vpop.f32.mrb[0].mxu0
      %v1140 = vadd.f32 0.0, %v1139
      %v1141 = vpop.f32.mrb[0].mxu0
      %1142 = vmatprep.mubr.bf16.mxu0 0
      %1143 = vmatmul.mubr.bf16.gmra.mrb[0].mxu0 %v775
      %v1144 = vpop.f32.mrb[0].mxu0
      %v1145 = vpop.f32.mrb[0].mxu0
      %v1146 = vpop.f32.mrb[0].mxu0
      %v1147 = vadd.f32 0.0, %v1146
      %v1148 = vpop.f32.mrb[0].mxu0
      %1149 = vmatprep.mubr.bf16.mxu0 0
      %1150 = vmatmul.mubr.bf16.gmra.mrb[0].mxu0 %v778
      %v1151 = vpop.f32.mrb[0].mxu0
      %v1152 = vadd.f32 0.0, %v1151
      %v1153 = vpop.f32.mrb[0].mxu0
      %v1154 = vpop.f32.mrb[0].mxu0
      %v1155 = vpop.f32.mrb[0].mxu0
      %1156 = vmatprep.mubr.bf16.mxu0 0
      %1157 = vmatmul.mubr.bf16.gmra.mrb[0].mxu0 %v781
      %v1158 = vpop.f32.mrb[0].mxu0
      %v1159 = vadd.f32 0.0, %v1158
      %v1160 = vpop.f32.mrb[0].mxu0
      %v1161 = vpop.f32.mrb[0].mxu0
      %v1162 = vadd.f32 0.0, %v1161
      %v1163 = vpop.f32.mrb[0].mxu0
      %1164 = vmatprep.mubr.bf16.mxu0 0
      %1165 = vmatmul.mubr.bf16.gmra.mrb[0].mxu0 %v784
      %v1166 = vpop.f32.mrb[0].mxu0
      %v1167 = vpop.f32.mrb[0].mxu0
      %v1168 = vpop.f32.mrb[0].mxu0
      %v1169 = vadd.f32 0.0, %v1168
      %v1170 = vpop.f32.mrb[0].mxu0
      %1171 = vmatprep.mubr.bf16.mxu0 0
      %1172 = vmatmul.mubr.bf16.gmra.mrb[0].mxu0 %v787
      %v1173 = vpop.f32.mrb[0].mxu0
      %v1174 = vadd.f32 0.0, %v1173
      %v1175 = vpop.f32.mrb[0].mxu0
      %v1176 = vpop.f32.mrb[0].mxu0
      %v1177 = vpop.f32.mrb[0].mxu0
      %1178 = vmatprep.mubr.bf16.mxu0 0
      %1179 = vmatmul.mubr.bf16.gmra.mrb[0].mxu0 %v790
      %v1180 = vpop.f32.mrb[0].mxu0
      %v1181 = vadd.f32 0.0, %v1180
      %v1182 = vpop.f32.mrb[0].mxu0
      %v1183 = vpop.f32.mrb[0].mxu0
      %v1184 = vadd.f32 0.0, %v1183
      %v1185 = vpop.f32.mrb[0].mxu0
      %1186 = vmatprep.mubr.bf16.mxu0 0
      %1187 = vmatmul.mubr.bf16.gmra.mrb[0].mxu0 %v793
      %v1188 = vpop.f32.mrb[0].mxu0
      %v1189 = vpop.f32.mrb[0].mxu0
      %v1190 = vpop.f32.mrb[0].mxu0
      %v1191 = vadd.f32 0.0, %v1190
      %v1192 = vpop.f32.mrb[0].mxu0
      %1193 = vmatprep.mubr.bf16.mxu0 0
      %1194 = vmatmul.mubr.bf16.gmra.mrb[0].mxu0 %v796
      %v1195 = vpop.f32.mrb[0].mxu0
      %v1196 = vadd.f32 0.0, %v1195
      %v1197 = vpop.f32.mrb[0].mxu0
      %v1198 = vpop.f32.mrb[0].mxu0
      %v1199 = vpop.f32.mrb[0].mxu0
      %1200 = vmatprep.mubr.bf16.mxu0 0
      %1201 = vmatmul.mubr.bf16.gmra.mrb[0].mxu0 %v799
      %v1202 = vpop.f32.mrb[0].mxu0
      %v1203 = vadd.f32 0.0, %v1202
      %v1204 = vpop.f32.mrb[0].mxu0
      %v1205 = vpop.f32.mrb[0].mxu0
      %v1206 = vadd.f32 0.0, %v1205
      %v1207 = vpop.f32.mrb[0].mxu0
      %1208 = vmatprep.mubr.bf16.mxu0 0
      %1209 = vmatmul.mubr.bf16.gmra.mrb[0].mxu0 %v802
      %v1210 = vpop.f32.mrb[0].mxu0
      %v1211 = vpop.f32.mrb[0].mxu0
      %v1212 = vpop.f32.mrb[0].mxu0
      %v1213 = vadd.f32 0.0, %v1212
      %v1214 = vpop.f32.mrb[0].mxu0
      %1215 = vmatprep.mubr.bf16.mxu0 0
      %1216 = vmatmul.mubr.bf16.gmra.mrb[0].mxu0 %v805
      %v1217 = vpop.f32.mrb[0].mxu0
      %v1218 = vadd.f32 0.0, %v1217
      %v1219 = vpop.f32.mrb[0].mxu0
      %v1220 = vpop.f32.mrb[0].mxu0
      %v1221 = vpop.f32.mrb[0].mxu0
      %1222 = vmatprep.mubr.bf16.mxu0 0
      %1223 = vmatmul.mubr.bf16.gmra.mrb[0].mxu0 %v1025
      %v1224 = vpop.f32.mrb[0].mxu0
      %v1225 = vadd.f32 0.0, %v1224
      %v1226 = vpop.f32.mrb[0].mxu0
      %v1227 = vpop.f32.mrb[0].mxu0
      %v1228 = vadd.f32 0.0, %v1227
      %v1229 = vpop.f32.mrb[0].mxu0
      %1230 = vmatprep.mubr.bf16.mxu0 0
      %1231 = vmatmul.mubr.bf16.gmra.mrb[0].mxu0 %v1028
      %v1232 = vpop.f32.mrb[0].mxu0
      %v1233 = vpop.f32.mrb[0].mxu0
      %v1234 = vpop.f32.mrb[0].mxu0
      %v1235 = vadd.f32 0.0, %v1234
      %v1236 = vpop.f32.mrb[0].mxu0
      %1237 = vmatprep.mubr.bf16.mxu0 0
      %1238 = vmatmul.mubr.bf16.gmra.mrb[0].mxu0 %v1031
      %v1239 = vpop.f32.mrb[0].mxu0
      %v1240 = vadd.f32 0.0, %v1239
      %v1241 = vpop.f32.mrb[0].mxu0
      %v1242 = vpop.f32.mrb[0].mxu0
      %v1243 = vpop.f32.mrb[0].mxu0
      %1244 = vdwg.mxu0
      %v1245 = vadd.f32 %v845, %v1071
      %v1246 = vadd.f32 %v848, %v1074
      %v1247 = vadd.f32 %v855, %v1081
      %v1248 = vadd.f32 %v860, %v1086
      %v1249 = vadd.f32 %v867, %v1093
      %v1250 = vadd.f32 %v870, %v1096
      %v1251 = vadd.f32 %v877, %v1103
      %v1252 = vadd.f32 %v882, %v1108
      %v1253 = vadd.f32 %v889, %v1115
      %v1254 = vadd.f32 %v892, %v1118
      %v1255 = vadd.f32 %v899, %v1125
      %v1256 = vadd.f32 %v904, %v1130
      %v1257 = vadd.f32 %v911, %v1137
      %v1258 = vadd.f32 %v914, %v1140
      %v1259 = vadd.f32 %v921, %v1147
      %v1260 = vadd.f32 %v926, %v1152
      %v1261 = vadd.f32 %v933, %v1159
      %v1262 = vadd.f32 %v936, %v1162
      %v1263 = vadd.f32 %v943, %v1169
      %v1264 = vadd.f32 %v948, %v1174
      %v1265 = vadd.f32 %v955, %v1181
      %v1266 = vadd.f32 %v958, %v1184
      %v1267 = vadd.f32 %v965, %v1191
      %v1268 = vadd.f32 %v970, %v1196
      %v1269 = vadd.f32 %v977, %v1203
      %v1270 = vadd.f32 %v980, %v1206
      %v1271 = vadd.f32 %v987, %v1213
      %v1272 = vadd.f32 %v992, %v1218
      %v1273 = vadd.f32 %v999, %v1225
      %v1274 = vadd.f32 %v1002, %v1228
      %v1275 = vadd.f32 %v1009, %v1235
      %v1276 = vadd.f32 %v1014, %v1240
      %v1277 = vpack.c.bf16 %v392, %v392
      %s1278 = scalar_lea.vmem %s1, 2
      %v1279 = vld [vmem:[%s1278] sm:$0x3]
      %vm1280 = vsmask.f32 7424
      %v1281 = vshrl.u32 %v399, 16
      %v1283 = vshll.u32 %v399, 16
      %v1285 = vrot.slane %v1283, 1
      %v1286 = vor.u32 %v1281, %v1285
      %v1287 = vshll.u32 %v400, 16
      %v1289 = vrot.slane %v1287, 1
      %v1290 = vsel %vm1280, %v1286, %v1289
      %v1291 = vshrl.u32 %v400, 16
      %v1293 = vor.u32 %v1291, %v1289
      %v1294 = vshll.u32 %v401, 16
      %v1296 = vrot.slane %v1294, 1
      %v1297 = vsel %vm1280, %v1293, %v1296
      %v1298 = vshrl.u32 %v401, 16
      %v1300 = vor.u32 %v1298, %v1296
      %v1301 = vshll.u32 %v402, 16
      %v1303 = vrot.slane %v1301, 1
      %v1304 = vsel %vm1280, %v1300, %v1303
      %v1305 = vshrl.u32 %v402, 16
      %v1307 = vor.u32 %v1305, %v1303
      %v1308 = vshll.u32 %v403, 16
      %v1310 = vrot.slane %v1308, 1
      %v1311 = vsel %vm1280, %v1307, %v1310
      %v1312 = vshrl.u32 %v403, 16
      %v1314 = vor.u32 %v1312, %v1310
      %v1315 = vshll.u32 %v404, 16
      %v1317 = vrot.slane %v1315, 1
      %v1318 = vsel %vm1280, %v1314, %v1317
      %v1319 = vshrl.u32 %v404, 16
      %v1321 = vor.u32 %v1319, %v1317
      %v1322 = vshll.u32 %v405, 16
      %v1324 = vrot.slane %v1322, 1
      %v1325 = vsel %vm1280, %v1321, %v1324
      %v1326 = vshrl.u32 %v405, 16
      %v1328 = vor.u32 %v1326, %v1324
      %v1329 = vshll.u32 %v406, 16
      %v1331 = vrot.slane %v1329, 1
      %v1332 = vsel %vm1280, %v1328, %v1331
      %v1333 = vshrl.u32 %v406, 16
      %v1335 = vor.u32 %v1333, %v1331
      %v1336 = vshll.u32 %v407, 16
      %v1338 = vrot.slane %v1336, 1
      %v1339 = vsel %vm1280, %v1335, %v1338
      %v1340 = vshrl.u32 %v407, 16
      %v1342 = vor.u32 %v1340, %v1338
      %v1343 = vshll.u32 %v408, 16
      %v1345 = vrot.slane %v1343, 1
      %v1346 = vsel %vm1280, %v1342, %v1345
      %v1347 = vshrl.u32 %v408, 16
      %v1349 = vor.u32 %v1347, %v1345
      %v1350 = vshll.u32 %v409, 16
      %v1352 = vrot.slane %v1350, 1
      %v1353 = vsel %vm1280, %v1349, %v1352
      %v1354 = vshrl.u32 %v409, 16
      %v1356 = vor.u32 %v1354, %v1352
      %v1357 = vshll.u32 %v410, 16
      %v1359 = vrot.slane %v1357, 1
      %v1360 = vsel %vm1280, %v1356, %v1359
      %v1361 = vshrl.u32 %v410, 16
      %v1363 = vor.u32 %v1361, %v1359
      %v1364 = vshll.u32 %v411, 16
      %v1366 = vrot.slane %v1364, 1
      %v1367 = vsel %vm1280, %v1363, %v1366
      %v1368 = vshrl.u32 %v411, 16
      %v1370 = vor.u32 %v1368, %v1366
      %v1371 = vshll.u32 %v412, 16
      %v1373 = vrot.slane %v1371, 1
      %v1374 = vsel %vm1280, %v1370, %v1373
      %v1375 = vshrl.u32 %v412, 16
      %v1377 = vor.u32 %v1375, %v1373
      %v1378 = vshll.u32 %v413, 16
      %v1380 = vrot.slane %v1378, 1
      %v1381 = vsel %vm1280, %v1377, %v1380
      %v1382 = vshrl.u32 %v413, 16
      %v1384 = vor.u32 %v1382, %v1380
      %v1385 = vshll.u32 %v414, 16
      %v1387 = vrot.slane %v1385, 1
      %v1388 = vsel %vm1280, %v1384, %v1387
      %v1389 = vshrl.u32 %v414, 16
      %v1391 = vor.u32 %v1389, %v1387
      %v1392 = vshll.u32 %v415, 16
      %v1394 = vrot.slane %v1392, 1
      %v1395 = vsel %vm1280, %v1391, %v1394
      %v1396 = vshrl.u32 %v415, 16
      %v1398 = vor.u32 %v1396, %v1394
      %v1399 = vshll.u32 %v416, 16
      %v1401 = vrot.slane %v1399, 1
      %v1402 = vsel %vm1280, %v1398, %v1401
      %v1403 = vshrl.u32 %v416, 16
      %v1405 = vor.u32 %v1403, %v1401
      %v1406 = vshll.u32 %v417, 16
      %v1408 = vrot.slane %v1406, 1
      %v1409 = vsel %vm1280, %v1405, %v1408
      %v1410 = vshrl.u32 %v417, 16
      %v1412 = vor.u32 %v1410, %v1408
      %v1413 = vshll.u32 %v418, 16
      %v1415 = vrot.slane %v1413, 1
      %v1416 = vsel %vm1280, %v1412, %v1415
      %v1417 = vshrl.u32 %v418, 16
      %v1419 = vor.u32 %v1417, %v1415
      %v1420 = vshll.u32 %v419, 16
      %v1422 = vrot.slane %v1420, 1
      %v1423 = vsel %vm1280, %v1419, %v1422
      %v1424 = vshrl.u32 %v419, 16
      %v1426 = vor.u32 %v1424, %v1422
      %v1427 = vshll.u32 %v420, 16
      %v1429 = vrot.slane %v1427, 1
      %v1430 = vsel %vm1280, %v1426, %v1429
      %v1431 = vshrl.u32 %v420, 16
      %v1433 = vor.u32 %v1431, %v1429
      %v1434 = vshll.u32 %v421, 16
      %v1436 = vrot.slane %v1434, 1
      %v1437 = vsel %vm1280, %v1433, %v1436
      %v1438 = vshrl.u32 %v421, 16
      %v1440 = vor.u32 %v1438, %v1436
      %v1441 = vshll.u32 %v422, 16
      %v1443 = vrot.slane %v1441, 1
      %v1444 = vsel %vm1280, %v1440, %v1443
      %v1445 = vshrl.u32 %v422, 16
      %v1447 = vor.u32 %v1445, %v1443
      %v1449 = vshll.u32 %v1277, 16
      %v1451 = vrot.slane %v1449, 1
      %v1452 = vsel %vm1280, %v1447, %v1451
      %v1454 = vsel %vm225, %v1290, 0
      %v1457 = vsel %vm225, %v1297, 0
      %v1460 = vsel %vm225, %v1304, 0
      %v1463 = vsel %vm225, %v1311, 0
      %v1466 = vsel %vm225, %v1318, 0
      %v1469 = vsel %vm225, %v1325, 0
      %v1472 = vsel %vm225, %v1332, 0
      %v1475 = vsel %vm225, %v1339, 0
      %v1478 = vsel %vm225, %v1346, 0
      %v1481 = vsel %vm225, %v1353, 0
      %v1484 = vsel %vm225, %v1360, 0
      %v1487 = vsel %vm225, %v1367, 0
      %v1490 = vsel %vm225, %v1374, 0
      %v1493 = vsel %vm225, %v1381, 0
      %v1496 = vsel %vm225, %v1388, 0
      %v1499 = vsel %vm225, %v1395, 0
      %v1502 = vsel %vm225, %v1402, 0
      %v1505 = vsel %vm225, %v1409, 0
      %v1508 = vsel %vm225, %v1416, 0
      %v1511 = vsel %vm225, %v1423, 0
      %v1514 = vsel %vm225, %v1430, 0
      %v1517 = vsel %vm225, %v1437, 0
      %v1520 = vsel %vm225, %v1444, 0
      %v1523 = vsel %vm225, %v1452, 0
      %v1526 = vsel %vm522, %v1279, 0
      %1528 = vmatprep.subr.bf16.mxu0 0
      %1529 = vmatpush1.bf16.msra.mxu0 %v1526
      %1530 = vmatprep.subr.bf16.mxu0 0
      %1531 = vmatpush1.bf16.msra.mxu0 0
      %1532 = vmatprep.subr.bf16.mxu0 0
      %1533 = vmatpush1.bf16.msra.mxu0 0
      %1534 = vmatprep.subr.bf16.mxu0 0
      %1535 = vmatpush1.bf16.msra.mxu0 0
      %1536 = vmatprep.subr.bf16.mxu0 0
      %1537 = vmatpush1.bf16.msra.mxu0 0
      %1538 = vmatprep.subr.bf16.mxu0 0
      %1539 = vmatpush1.bf16.msra.mxu0 0
      %1540 = vmatprep.subr.bf16.mxu0 0
      %1541 = vmatpush1.bf16.msra.mxu0 0
      %1542 = vmatprep.subr.bf16.mxu0 0
      %1543 = vmatpush1.bf16.msra.mxu0 0
      %1544 = vmatprep.subr.bf16.mxu0 0
      %1545 = vmatpush1.bf16.msra.mxu0 0
      %1546 = vmatprep.subr.bf16.mxu0 0
      %1547 = vmatpush1.bf16.msra.mxu0 0
      %1548 = vmatprep.subr.bf16.mxu0 0
      %1549 = vmatpush1.bf16.msra.mxu0 0
      %1550 = vmatprep.subr.bf16.mxu0 0
      %1551 = vmatpush1.bf16.msra.mxu0 0
      %1552 = vmatprep.subr.bf16.mxu0 0
      %1553 = vmatpush1.bf16.msra.mxu0 0
      %1554 = vmatprep.subr.bf16.mxu0 0
      %1555 = vmatpush1.bf16.msra.mxu0 0
      %1556 = vmatprep.subr.bf16.mxu0 0
      %1557 = vmatpush1.bf16.msra.mxu0 0
      %1558 = vmatprep.subr.bf16.mxu0 0
      %1559 = vmatpush1.bf16.msra.mxu0 0
      %1560 = vmatprep.mubr.bf16.mxu0 0
      %1561 = vmatmul.mubr.bf16.gmra.mrb[0].mxu0 %v1454
      %v1562 = vpop.f32.mrb[0].mxu0
      %v1563 = vadd.f32 0.0, %v1562
      %v1564 = vpop.f32.mrb[0].mxu0
      %v1565 = vpop.f32.mrb[0].mxu0
      %v1566 = vadd.f32 0.0, %v1565
      %v1567 = vpop.f32.mrb[0].mxu0
      %1568 = vmatprep.mubr.bf16.mxu0 0
      %1569 = vmatmul.mubr.bf16.gmra.mrb[0].mxu0 %v1457
      %v1570 = vpop.f32.mrb[0].mxu0
      %v1571 = vpop.f32.mrb[0].mxu0
      %v1572 = vpop.f32.mrb[0].mxu0
      %v1573 = vadd.f32 0.0, %v1572
      %v1574 = vpop.f32.mrb[0].mxu0
      %1575 = vmatprep.mubr.bf16.mxu0 0
      %1576 = vmatmul.mubr.bf16.gmra.mrb[0].mxu0 %v1460
      %v1577 = vpop.f32.mrb[0].mxu0
      %v1578 = vadd.f32 0.0, %v1577
      %v1579 = vpop.f32.mrb[0].mxu0
      %v1580 = vpop.f32.mrb[0].mxu0
      %v1581 = vpop.f32.mrb[0].mxu0
      %1582 = vmatprep.mubr.bf16.mxu0 0
      %1583 = vmatmul.mubr.bf16.gmra.mrb[0].mxu0 %v1463
      %v1584 = vpop.f32.mrb[0].mxu0
      %v1585 = vadd.f32 0.0, %v1584
      %v1586 = vpop.f32.mrb[0].mxu0
      %v1587 = vpop.f32.mrb[0].mxu0
      %v1588 = vadd.f32 0.0, %v1587
      %v1589 = vpop.f32.mrb[0].mxu0
      %1590 = vmatprep.mubr.bf16.mxu0 0
      %1591 = vmatmul.mubr.bf16.gmra.mrb[0].mxu0 %v1466
      %v1592 = vpop.f32.mrb[0].mxu0
      %v1593 = vpop.f32.mrb[0].mxu0
      %v1594 = vpop.f32.mrb[0].mxu0
      %v1595 = vadd.f32 0.0, %v1594
      %v1596 = vpop.f32.mrb[0].mxu0
      %1597 = vmatprep.mubr.bf16.mxu0 0
      %1598 = vmatmul.mubr.bf16.gmra.mrb[0].mxu0 %v1469
      %v1599 = vpop.f32.mrb[0].mxu0
      %v1600 = vadd.f32 0.0, %v1599
      %v1601 = vpop.f32.mrb[0].mxu0
      %v1602 = vpop.f32.mrb[0].mxu0
      %v1603 = vpop.f32.mrb[0].mxu0
      %1604 = vmatprep.mubr.bf16.mxu0 0
      %1605 = vmatmul.mubr.bf16.gmra.mrb[0].mxu0 %v1472
      %v1606 = vpop.f32.mrb[0].mxu0
      %v1607 = vadd.f32 0.0, %v1606
      %v1608 = vpop.f32.mrb[0].mxu0
      %v1609 = vpop.f32.mrb[0].mxu0
      %v1610 = vadd.f32 0.0, %v1609
      %v1611 = vpop.f32.mrb[0].mxu0
      %1612 = vmatprep.mubr.bf16.mxu0 0
      %1613 = vmatmul.mubr.bf16.gmra.mrb[0].mxu0 %v1475
      %v1614 = vpop.f32.mrb[0].mxu0
      %v1615 = vpop.f32.mrb[0].mxu0
      %v1616 = vpop.f32.mrb[0].mxu0
      %v1617 = vadd.f32 0.0, %v1616
      %v1618 = vpop.f32.mrb[0].mxu0
      %1619 = vmatprep.mubr.bf16.mxu0 0
      %1620 = vmatmul.mubr.bf16.gmra.mrb[0].mxu0 %v1478
      %v1621 = vpop.f32.mrb[0].mxu0
      %v1622 = vadd.f32 0.0, %v1621
      %v1623 = vpop.f32.mrb[0].mxu0
      %v1624 = vpop.f32.mrb[0].mxu0
      %v1625 = vpop.f32.mrb[0].mxu0
      %1626 = vmatprep.mubr.bf16.mxu0 0
      %1627 = vmatmul.mubr.bf16.gmra.mrb[0].mxu0 %v1481
      %v1628 = vpop.f32.mrb[0].mxu0
      %v1629 = vadd.f32 0.0, %v1628
      %v1630 = vpop.f32.mrb[0].mxu0
      %v1631 = vpop.f32.mrb[0].mxu0
      %v1632 = vadd.f32 0.0, %v1631
      %v1633 = vpop.f32.mrb[0].mxu0
      %1634 = vmatprep.mubr.bf16.mxu0 0
      %1635 = vmatmul.mubr.bf16.gmra.mrb[0].mxu0 %v1484
      %v1636 = vpop.f32.mrb[0].mxu0
      %v1637 = vpop.f32.mrb[0].mxu0
      %v1638 = vpop.f32.mrb[0].mxu0
      %v1639 = vadd.f32 0.0, %v1638
      %v1640 = vpop.f32.mrb[0].mxu0
      %1641 = vmatprep.mubr.bf16.mxu0 0
      %1642 = vmatmul.mubr.bf16.gmra.mrb[0].mxu0 %v1487
      %v1643 = vpop.f32.mrb[0].mxu0
      %v1644 = vadd.f32 0.0, %v1643
      %v1645 = vpop.f32.mrb[0].mxu0
      %v1646 = vpop.f32.mrb[0].mxu0
      %v1647 = vpop.f32.mrb[0].mxu0
      %1648 = vmatprep.mubr.bf16.mxu0 0
      %1649 = vmatmul.mubr.bf16.gmra.mrb[0].mxu0 %v1490
      %v1650 = vpop.f32.mrb[0].mxu0
      %v1651 = vadd.f32 0.0, %v1650
      %v1652 = vpop.f32.mrb[0].mxu0
      %v1653 = vpop.f32.mrb[0].mxu0
      %v1654 = vadd.f32 0.0, %v1653
      %v1655 = vpop.f32.mrb[0].mxu0
      %1656 = vmatprep.mubr.bf16.mxu0 0
      %1657 = vmatmul.mubr.bf16.gmra.mrb[0].mxu0 %v1493
      %v1658 = vpop.f32.mrb[0].mxu0
      %v1659 = vpop.f32.mrb[0].mxu0
      %v1660 = vpop.f32.mrb[0].mxu0
      %v1661 = vadd.f32 0.0, %v1660
      %v1662 = vpop.f32.mrb[0].mxu0
      %1663 = vmatprep.mubr.bf16.mxu0 0
      %1664 = vmatmul.mubr.bf16.gmra.mrb[0].mxu0 %v1496
      %v1665 = vpop.f32.mrb[0].mxu0
      %v1666 = vadd.f32 0.0, %v1665
      %v1667 = vpop.f32.mrb[0].mxu0
      %v1668 = vpop.f32.mrb[0].mxu0
      %v1669 = vpop.f32.mrb[0].mxu0
      %1670 = vmatprep.mubr.bf16.mxu0 0
      %1671 = vmatmul.mubr.bf16.gmra.mrb[0].mxu0 %v1499
      %v1672 = vpop.f32.mrb[0].mxu0
      %v1673 = vadd.f32 0.0, %v1672
      %v1674 = vpop.f32.mrb[0].mxu0
      %v1675 = vpop.f32.mrb[0].mxu0
      %v1676 = vadd.f32 0.0, %v1675
      %v1677 = vpop.f32.mrb[0].mxu0
      %1678 = vmatprep.mubr.bf16.mxu0 0
      %1679 = vmatmul.mubr.bf16.gmra.mrb[0].mxu0 %v1502
      %v1680 = vpop.f32.mrb[0].mxu0
      %v1681 = vpop.f32.mrb[0].mxu0
      %v1682 = vpop.f32.mrb[0].mxu0
      %v1683 = vadd.f32 0.0, %v1682
      %v1684 = vpop.f32.mrb[0].mxu0
      %1685 = vmatprep.mubr.bf16.mxu0 0
      %1686 = vmatmul.mubr.bf16.gmra.mrb[0].mxu0 %v1505
      %v1687 = vpop.f32.mrb[0].mxu0
      %v1688 = vadd.f32 0.0, %v1687
      %v1689 = vpop.f32.mrb[0].mxu0
      %v1690 = vpop.f32.mrb[0].mxu0
      %v1691 = vpop.f32.mrb[0].mxu0
      %1692 = vmatprep.mubr.bf16.mxu0 0
      %1693 = vmatmul.mubr.bf16.gmra.mrb[0].mxu0 %v1508
      %v1694 = vpop.f32.mrb[0].mxu0
      %v1695 = vadd.f32 0.0, %v1694
      %v1696 = vpop.f32.mrb[0].mxu0
      %v1697 = vpop.f32.mrb[0].mxu0
      %v1698 = vadd.f32 0.0, %v1697
      %v1699 = vpop.f32.mrb[0].mxu0
      %1700 = vmatprep.mubr.bf16.mxu0 0
      %1701 = vmatmul.mubr.bf16.gmra.mrb[0].mxu0 %v1511
      %v1702 = vpop.f32.mrb[0].mxu0
      %v1703 = vpop.f32.mrb[0].mxu0
      %v1704 = vpop.f32.mrb[0].mxu0
      %v1705 = vadd.f32 0.0, %v1704
      %v1706 = vpop.f32.mrb[0].mxu0
      %1707 = vmatprep.mubr.bf16.mxu0 0
      %1708 = vmatmul.mubr.bf16.gmra.mrb[0].mxu0 %v1514
      %v1709 = vpop.f32.mrb[0].mxu0
      %v1710 = vadd.f32 0.0, %v1709
      %v1711 = vpop.f32.mrb[0].mxu0
      %v1712 = vpop.f32.mrb[0].mxu0
      %v1713 = vpop.f32.mrb[0].mxu0
      %1714 = vmatprep.mubr.bf16.mxu0 0
      %1715 = vmatmul.mubr.bf16.gmra.mrb[0].mxu0 %v1517
      %v1716 = vpop.f32.mrb[0].mxu0
      %v1717 = vadd.f32 0.0, %v1716
      %v1718 = vpop.f32.mrb[0].mxu0
      %v1719 = vpop.f32.mrb[0].mxu0
      %v1720 = vadd.f32 0.0, %v1719
      %v1721 = vpop.f32.mrb[0].mxu0
      %1722 = vmatprep.mubr.bf16.mxu0 0
      %1723 = vmatmul.mubr.bf16.gmra.mrb[0].mxu0 %v1520
      %v1724 = vpop.f32.mrb[0].mxu0
      %v1725 = vpop.f32.mrb[0].mxu0
      %v1726 = vpop.f32.mrb[0].mxu0
      %v1727 = vadd.f32 0.0, %v1726
      %v1728 = vpop.f32.mrb[0].mxu0
      %1729 = vmatprep.mubr.bf16.mxu0 0
      %1730 = vmatmul.mubr.bf16.gmra.mrb[0].mxu0 %v1523
      %v1731 = vpop.f32.mrb[0].mxu0
      %v1732 = vadd.f32 0.0, %v1731
      %v1733 = vpop.f32.mrb[0].mxu0
      %v1734 = vpop.f32.mrb[0].mxu0
      %v1735 = vpop.f32.mrb[0].mxu0
      %1736 = vdwg.mxu0
      %v1737 = vadd.f32 %v1245, %v1563
      %v1738 = vadd.f32 %v1246, %v1566
      %v1739 = vadd.f32 %v1247, %v1573
      %v1740 = vadd.f32 %v1248, %v1578
      %v1741 = vadd.f32 %v1249, %v1585
      %v1742 = vadd.f32 %v1250, %v1588
      %v1743 = vadd.f32 %v1251, %v1595
      %v1744 = vadd.f32 %v1252, %v1600
      %v1745 = vadd.f32 %v1253, %v1607
      %v1746 = vadd.f32 %v1254, %v1610
      %v1747 = vadd.f32 %v1255, %v1617
      %v1748 = vadd.f32 %v1256, %v1622
      %v1749 = vadd.f32 %v1257, %v1629
      %v1750 = vadd.f32 %v1258, %v1632
      %v1751 = vadd.f32 %v1259, %v1639
      %v1752 = vadd.f32 %v1260, %v1644
      %v1753 = vadd.f32 %v1261, %v1651
      %v1754 = vadd.f32 %v1262, %v1654
      %v1755 = vadd.f32 %v1263, %v1661
      %v1756 = vadd.f32 %v1264, %v1666
      %v1757 = vadd.f32 %v1265, %v1673
      %v1758 = vadd.f32 %v1266, %v1676
      %v1759 = vadd.f32 %v1267, %v1683
      %v1760 = vadd.f32 %v1268, %v1688
      %v1761 = vadd.f32 %v1269, %v1695
      %v1762 = vadd.f32 %v1270, %v1698
      %v1763 = vadd.f32 %v1271, %v1705
      %v1764 = vadd.f32 %v1272, %v1710
      %v1765 = vadd.f32 %v1273, %v1717
      %v1766 = vadd.f32 %v1274, %v1720
      %v1767 = vadd.f32 %v1275, %v1727
      %v1768 = vadd.f32 %v1276, %v1732
      %v1769 = vpack.c.bf16 %v395, %v395
      %s1770 = scalar_lea.vmem %s1, 8
      %v1771 = vld [vmem:[%s1770] sm:$0x3]
      %v1772 = vshrl.u32 %v424, 16
      %v1774 = vshll.u32 %v424, 16
      %v1776 = vrot.slane %v1774, 1
      %v1777 = vor.u32 %v1772, %v1776
      %v1778 = vshll.u32 %v425, 16
      %v1780 = vrot.slane %v1778, 1
      %v1781 = vsel %vm1280, %v1777, %v1780
      %v1782 = vshrl.u32 %v425, 16
      %v1784 = vor.u32 %v1782, %v1780
      %v1785 = vshll.u32 %v426, 16
      %v1787 = vrot.slane %v1785, 1
      %v1788 = vsel %vm1280, %v1784, %v1787
      %v1789 = vshrl.u32 %v426, 16
      %v1791 = vor.u32 %v1789, %v1787
      %v1792 = vshll.u32 %v427, 16
      %v1794 = vrot.slane %v1792, 1
      %v1795 = vsel %vm1280, %v1791, %v1794
      %v1796 = vshrl.u32 %v427, 16
      %v1798 = vor.u32 %v1796, %v1794
      %v1799 = vshll.u32 %v428, 16
      %v1801 = vrot.slane %v1799, 1
      %v1802 = vsel %vm1280, %v1798, %v1801
      %v1803 = vshrl.u32 %v428, 16
      %v1805 = vor.u32 %v1803, %v1801
      %v1806 = vshll.u32 %v429, 16
      %v1808 = vrot.slane %v1806, 1
      %v1809 = vsel %vm1280, %v1805, %v1808
      %v1810 = vshrl.u32 %v429, 16
      %v1812 = vor.u32 %v1810, %v1808
      %v1813 = vshll.u32 %v430, 16
      %v1815 = vrot.slane %v1813, 1
      %v1816 = vsel %vm1280, %v1812, %v1815
      %v1817 = vshrl.u32 %v430, 16
      %v1819 = vor.u32 %v1817, %v1815
      %v1820 = vshll.u32 %v431, 16
      %v1822 = vrot.slane %v1820, 1
      %v1823 = vsel %vm1280, %v1819, %v1822
      %v1824 = vshrl.u32 %v431, 16
      %v1826 = vor.u32 %v1824, %v1822
      %v1827 = vshll.u32 %v432, 16
      %v1829 = vrot.slane %v1827, 1
      %v1830 = vsel %vm1280, %v1826, %v1829
      %v1831 = vshrl.u32 %v432, 16
      %v1833 = vor.u32 %v1831, %v1829
      %v1834 = vshll.u32 %v433, 16
      %v1836 = vrot.slane %v1834, 1
      %v1837 = vsel %vm1280, %v1833, %v1836
      %v1838 = vshrl.u32 %v433, 16
      %v1840 = vor.u32 %v1838, %v1836
      %v1841 = vshll.u32 %v434, 16
      %v1843 = vrot.slane %v1841, 1
      %v1844 = vsel %vm1280, %v1840, %v1843
      %v1845 = vshrl.u32 %v434, 16
      %v1847 = vor.u32 %v1845, %v1843
      %v1848 = vshll.u32 %v435, 16
      %v1850 = vrot.slane %v1848, 1
      %v1851 = vsel %vm1280, %v1847, %v1850
      %v1852 = vshrl.u32 %v435, 16
      %v1854 = vor.u32 %v1852, %v1850
      %v1855 = vshll.u32 %v436, 16
      %v1857 = vrot.slane %v1855, 1
      %v1858 = vsel %vm1280, %v1854, %v1857
      %v1859 = vshrl.u32 %v436, 16
      %v1861 = vor.u32 %v1859, %v1857
      %v1862 = vshll.u32 %v437, 16
      %v1864 = vrot.slane %v1862, 1
      %v1865 = vsel %vm1280, %v1861, %v1864
      %v1866 = vshrl.u32 %v437, 16
      %v1868 = vor.u32 %v1866, %v1864
      %v1869 = vshll.u32 %v438, 16
      %v1871 = vrot.slane %v1869, 1
      %v1872 = vsel %vm1280, %v1868, %v1871
      %v1873 = vshrl.u32 %v438, 16
      %v1875 = vor.u32 %v1873, %v1871
      %v1876 = vshll.u32 %v439, 16
      %v1878 = vrot.slane %v1876, 1
      %v1879 = vsel %vm1280, %v1875, %v1878
      %v1880 = vshrl.u32 %v439, 16
      %v1882 = vor.u32 %v1880, %v1878
      %v1883 = vshll.u32 %v440, 16
      %v1885 = vrot.slane %v1883, 1
      %v1886 = vsel %vm1280, %v1882, %v1885
      %v1887 = vshrl.u32 %v440, 16
      %v1889 = vor.u32 %v1887, %v1885
      %v1890 = vshll.u32 %v441, 16
      %v1892 = vrot.slane %v1890, 1
      %v1893 = vsel %vm1280, %v1889, %v1892
      %v1894 = vshrl.u32 %v441, 16
      %v1896 = vor.u32 %v1894, %v1892
      %v1897 = vshll.u32 %v442, 16
      %v1899 = vrot.slane %v1897, 1
      %v1900 = vsel %vm1280, %v1896, %v1899
      %v1901 = vshrl.u32 %v442, 16
      %v1903 = vor.u32 %v1901, %v1899
      %v1904 = vshll.u32 %v443, 16
      %v1906 = vrot.slane %v1904, 1
      %v1907 = vsel %vm1280, %v1903, %v1906
      %v1908 = vshrl.u32 %v443, 16
      %v1910 = vor.u32 %v1908, %v1906
      %v1911 = vshll.u32 %v444, 16
      %v1913 = vrot.slane %v1911, 1
      %v1914 = vsel %vm1280, %v1910, %v1913
      %v1915 = vshrl.u32 %v444, 16
      %v1917 = vor.u32 %v1915, %v1913
      %v1918 = vshll.u32 %v445, 16
      %v1920 = vrot.slane %v1918, 1
      %v1921 = vsel %vm1280, %v1917, %v1920
      %v1922 = vshrl.u32 %v445, 16
      %v1924 = vor.u32 %v1922, %v1920
      %v1925 = vshll.u32 %v446, 16
      %v1927 = vrot.slane %v1925, 1
      %v1928 = vsel %vm1280, %v1924, %v1927
      %v1929 = vshrl.u32 %v446, 16
      %v1931 = vor.u32 %v1929, %v1927
      %v1932 = vshll.u32 %v447, 16
      %v1934 = vrot.slane %v1932, 1
      %v1935 = vsel %vm1280, %v1931, %v1934
      %v1936 = vshrl.u32 %v447, 16
      %v1938 = vor.u32 %v1936, %v1934
      %v1940 = vshll.u32 %v1769, 16
      %v1942 = vrot.slane %v1940, 1
      %v1943 = vsel %vm1280, %v1938, %v1942
      %v1945 = vsel %vm225, %v1781, 0
      %v1948 = vsel %vm225, %v1788, 0
      %v1951 = vsel %vm225, %v1795, 0
      %v1954 = vsel %vm225, %v1802, 0
      %v1957 = vsel %vm225, %v1809, 0
      %v1960 = vsel %vm225, %v1816, 0
      %v1963 = vsel %vm225, %v1823, 0
      %v1966 = vsel %vm225, %v1830, 0
      %v1969 = vsel %vm225, %v1837, 0
      %v1972 = vsel %vm225, %v1844, 0
      %v1975 = vsel %vm225, %v1851, 0
      %v1978 = vsel %vm225, %v1858, 0
      %v1981 = vsel %vm225, %v1865, 0
      %v1984 = vsel %vm225, %v1872, 0
      %v1987 = vsel %vm225, %v1879, 0
      %v1990 = vsel %vm225, %v1886, 0
      %v1993 = vsel %vm225, %v1893, 0
      %v1996 = vsel %vm225, %v1900, 0
      %v1999 = vsel %vm225, %v1907, 0
      %v2002 = vsel %vm225, %v1914, 0
      %v2005 = vsel %vm225, %v1921, 0
      %v2008 = vsel %vm225, %v1928, 0
      %v2011 = vsel %vm225, %v1935, 0
      %v2014 = vsel %vm225, %v1943, 0
      %v2017 = vsel %vm522, %v1771, 0
      %2019 = vmatprep.subr.bf16.mxu0 0
      %2020 = vmatpush1.bf16.msra.mxu0 %v2017
      %2021 = vmatprep.subr.bf16.mxu0 0
      %2022 = vmatpush1.bf16.msra.mxu0 0
      %2023 = vmatprep.subr.bf16.mxu0 0
      %2024 = vmatpush1.bf16.msra.mxu0 0
      %2025 = vmatprep.subr.bf16.mxu0 0
      %2026 = vmatpush1.bf16.msra.mxu0 0
      %2027 = vmatprep.subr.bf16.mxu0 0
      %2028 = vmatpush1.bf16.msra.mxu0 0
      %2029 = vmatprep.subr.bf16.mxu0 0
      %2030 = vmatpush1.bf16.msra.mxu0 0
      %2031 = vmatprep.subr.bf16.mxu0 0
      %2032 = vmatpush1.bf16.msra.mxu0 0
      %2033 = vmatprep.subr.bf16.mxu0 0
      %2034 = vmatpush1.bf16.msra.mxu0 0
      %2035 = vmatprep.subr.bf16.mxu0 0
      %2036 = vmatpush1.bf16.msra.mxu0 0
      %2037 = vmatprep.subr.bf16.mxu0 0
      %2038 = vmatpush1.bf16.msra.mxu0 0
      %2039 = vmatprep.subr.bf16.mxu0 0
      %2040 = vmatpush1.bf16.msra.mxu0 0
      %2041 = vmatprep.subr.bf16.mxu0 0
      %2042 = vmatpush1.bf16.msra.mxu0 0
      %2043 = vmatprep.subr.bf16.mxu0 0
      %2044 = vmatpush1.bf16.msra.mxu0 0
      %2045 = vmatprep.subr.bf16.mxu0 0
      %2046 = vmatpush1.bf16.msra.mxu0 0
      %2047 = vmatprep.subr.bf16.mxu0 0
      %2048 = vmatpush1.bf16.msra.mxu0 0
      %2049 = vmatprep.subr.bf16.mxu0 0
      %2050 = vmatpush1.bf16.msra.mxu0 0
      %2051 = vmatprep.mubr.bf16.mxu0 0
      %2052 = vmatmul.mubr.bf16.gmra.mrb[0].mxu0 %v1945
      %v2053 = vpop.f32.mrb[0].mxu0
      %v2054 = vadd.f32 0.0, %v2053
      %v2055 = vpop.f32.mrb[0].mxu0
      %v2056 = vpop.f32.mrb[0].mxu0
      %v2057 = vadd.f32 0.0, %v2056
      %v2058 = vpop.f32.mrb[0].mxu0
      %2059 = vmatprep.mubr.bf16.mxu0 0
      %2060 = vmatmul.mubr.bf16.gmra.mrb[0].mxu0 %v1948
      %v2061 = vpop.f32.mrb[0].mxu0
      %v2062 = vpop.f32.mrb[0].mxu0
      %v2063 = vpop.f32.mrb[0].mxu0
      %v2064 = vadd.f32 0.0, %v2063
      %v2065 = vpop.f32.mrb[0].mxu0
      %2066 = vmatprep.mubr.bf16.mxu0 0
      %2067 = vmatmul.mubr.bf16.gmra.mrb[0].mxu0 %v1951
      %v2068 = vpop.f32.mrb[0].mxu0
      %v2069 = vadd.f32 0.0, %v2068
      %v2070 = vpop.f32.mrb[0].mxu0
      %v2071 = vpop.f32.mrb[0].mxu0
      %v2072 = vpop.f32.mrb[0].mxu0
      %2073 = vmatprep.mubr.bf16.mxu0 0
      %2074 = vmatmul.mubr.bf16.gmra.mrb[0].mxu0 %v1954
      %v2075 = vpop.f32.mrb[0].mxu0
      %v2076 = vadd.f32 0.0, %v2075
      %v2077 = vpop.f32.mrb[0].mxu0
      %v2078 = vpop.f32.mrb[0].mxu0
      %v2079 = vadd.f32 0.0, %v2078
      %v2080 = vpop.f32.mrb[0].mxu0
      %2081 = vmatprep.mubr.bf16.mxu0 0
      %2082 = vmatmul.mubr.bf16.gmra.mrb[0].mxu0 %v1957
      %v2083 = vpop.f32.mrb[0].mxu0
      %v2084 = vpop.f32.mrb[0].mxu0
      %v2085 = vpop.f32.mrb[0].mxu0
      %v2086 = vadd.f32 0.0, %v2085
      %v2087 = vpop.f32.mrb[0].mxu0
      %2088 = vmatprep.mubr.bf16.mxu0 0
      %2089 = vmatmul.mubr.bf16.gmra.mrb[0].mxu0 %v1960
      %v2090 = vpop.f32.mrb[0].mxu0
      %v2091 = vadd.f32 0.0, %v2090
      %v2092 = vpop.f32.mrb[0].mxu0
      %v2093 = vpop.f32.mrb[0].mxu0
      %v2094 = vpop.f32.mrb[0].mxu0
      %2095 = vmatprep.mubr.bf16.mxu0 0
      %2096 = vmatmul.mubr.bf16.gmra.mrb[0].mxu0 %v1963
      %v2097 = vpop.f32.mrb[0].mxu0
      %v2098 = vadd.f32 0.0, %v2097
      %v2099 = vpop.f32.mrb[0].mxu0
      %v2100 = vpop.f32.mrb[0].mxu0
      %v2101 = vadd.f32 0.0, %v2100
      %v2102 = vpop.f32.mrb[0].mxu0
      %2103 = vmatprep.mubr.bf16.mxu0 0
      %2104 = vmatmul.mubr.bf16.gmra.mrb[0].mxu0 %v1966
      %v2105 = vpop.f32.mrb[0].mxu0
      %v2106 = vpop.f32.mrb[0].mxu0
      %v2107 = vpop.f32.mrb[0].mxu0
      %v2108 = vadd.f32 0.0, %v2107
      %v2109 = vpop.f32.mrb[0].mxu0
      %2110 = vmatprep.mubr.bf16.mxu0 0
      %2111 = vmatmul.mubr.bf16.gmra.mrb[0].mxu0 %v1969
      %v2112 = vpop.f32.mrb[0].mxu0
      %v2113 = vadd.f32 0.0, %v2112
      %v2114 = vpop.f32.mrb[0].mxu0
      %v2115 = vpop.f32.mrb[0].mxu0
      %v2116 = vpop.f32.mrb[0].mxu0
      %2117 = vmatprep.mubr.bf16.mxu0 0
      %2118 = vmatmul.mubr.bf16.gmra.mrb[0].mxu0 %v1972
      %v2119 = vpop.f32.mrb[0].mxu0
      %v2120 = vadd.f32 0.0, %v2119
      %v2121 = vpop.f32.mrb[0].mxu0
      %v2122 = vpop.f32.mrb[0].mxu0
      %v2123 = vadd.f32 0.0, %v2122
      %v2124 = vpop.f32.mrb[0].mxu0
      %2125 = vmatprep.mubr.bf16.mxu0 0
      %2126 = vmatmul.mubr.bf16.gmra.mrb[0].mxu0 %v1975
      %v2127 = vpop.f32.mrb[0].mxu0
      %v2128 = vpop.f32.mrb[0].mxu0
      %v2129 = vpop.f32.mrb[0].mxu0
      %v2130 = vadd.f32 0.0, %v2129
      %v2131 = vpop.f32.mrb[0].mxu0
      %2132 = vmatprep.mubr.bf16.mxu0 0
      %2133 = vmatmul.mubr.bf16.gmra.mrb[0].mxu0 %v1978
      %v2134 = vpop.f32.mrb[0].mxu0
      %v2135 = vadd.f32 0.0, %v2134
      %v2136 = vpop.f32.mrb[0].mxu0
      %v2137 = vpop.f32.mrb[0].mxu0
      %v2138 = vpop.f32.mrb[0].mxu0
      %2139 = vmatprep.mubr.bf16.mxu0 0
      %2140 = vmatmul.mubr.bf16.gmra.mrb[0].mxu0 %v1981
      %v2141 = vpop.f32.mrb[0].mxu0
      %v2142 = vadd.f32 0.0, %v2141
      %v2143 = vpop.f32.mrb[0].mxu0
      %v2144 = vpop.f32.mrb[0].mxu0
      %v2145 = vadd.f32 0.0, %v2144
      %v2146 = vpop.f32.mrb[0].mxu0
      %2147 = vmatprep.mubr.bf16.mxu0 0
      %2148 = vmatmul.mubr.bf16.gmra.mrb[0].mxu0 %v1984
      %v2149 = vpop.f32.mrb[0].mxu0
      %v2150 = vpop.f32.mrb[0].mxu0
      %v2151 = vpop.f32.mrb[0].mxu0
      %v2152 = vadd.f32 0.0, %v2151
      %v2153 = vpop.f32.mrb[0].mxu0
      %2154 = vmatprep.mubr.bf16.mxu0 0
      %2155 = vmatmul.mubr.bf16.gmra.mrb[0].mxu0 %v1987
      %v2156 = vpop.f32.mrb[0].mxu0
      %v2157 = vadd.f32 0.0, %v2156
      %v2158 = vpop.f32.mrb[0].mxu0
      %v2159 = vpop.f32.mrb[0].mxu0
      %v2160 = vpop.f32.mrb[0].mxu0
      %2161 = vmatprep.mubr.bf16.mxu0 0
      %2162 = vmatmul.mubr.bf16.gmra.mrb[0].mxu0 %v1990
      %v2163 = vpop.f32.mrb[0].mxu0
      %v2164 = vadd.f32 0.0, %v2163
      %v2165 = vpop.f32.mrb[0].mxu0
      %v2166 = vpop.f32.mrb[0].mxu0
      %v2167 = vadd.f32 0.0, %v2166
      %v2168 = vpop.f32.mrb[0].mxu0
      %2169 = vmatprep.mubr.bf16.mxu0 0
      %2170 = vmatmul.mubr.bf16.gmra.mrb[0].mxu0 %v1993
      %v2171 = vpop.f32.mrb[0].mxu0
      %v2172 = vpop.f32.mrb[0].mxu0
      %v2173 = vpop.f32.mrb[0].mxu0
      %v2174 = vadd.f32 0.0, %v2173
      %v2175 = vpop.f32.mrb[0].mxu0
      %2176 = vmatprep.mubr.bf16.mxu0 0
      %2177 = vmatmul.mubr.bf16.gmra.mrb[0].mxu0 %v1996
      %v2178 = vpop.f32.mrb[0].mxu0
      %v2179 = vadd.f32 0.0, %v2178
      %v2180 = vpop.f32.mrb[0].mxu0
      %v2181 = vpop.f32.mrb[0].mxu0
      %v2182 = vpop.f32.mrb[0].mxu0
      %2183 = vmatprep.mubr.bf16.mxu0 0
      %2184 = vmatmul.mubr.bf16.gmra.mrb[0].mxu0 %v1999
      %v2185 = vpop.f32.mrb[0].mxu0
      %v2186 = vadd.f32 0.0, %v2185
      %v2187 = vpop.f32.mrb[0].mxu0
      %v2188 = vpop.f32.mrb[0].mxu0
      %v2189 = vadd.f32 0.0, %v2188
      %v2190 = vpop.f32.mrb[0].mxu0
      %2191 = vmatprep.mubr.bf16.mxu0 0
      %2192 = vmatmul.mubr.bf16.gmra.mrb[0].mxu0 %v2002
      %v2193 = vpop.f32.mrb[0].mxu0
      %v2194 = vpop.f32.mrb[0].mxu0
      %v2195 = vpop.f32.mrb[0].mxu0
      %v2196 = vadd.f32 0.0, %v2195
      %v2197 = vpop.f32.mrb[0].mxu0
      %2198 = vmatprep.mubr.bf16.mxu0 0
      %2199 = vmatmul.mubr.bf16.gmra.mrb[0].mxu0 %v2005
      %v2200 = vpop.f32.mrb[0].mxu0
      %v2201 = vadd.f32 0.0, %v2200
      %v2202 = vpop.f32.mrb[0].mxu0
      %v2203 = vpop.f32.mrb[0].mxu0
      %v2204 = vpop.f32.mrb[0].mxu0
      %2205 = vmatprep.mubr.bf16.mxu0 0
      %2206 = vmatmul.mubr.bf16.gmra.mrb[0].mxu0 %v2008
      %v2207 = vpop.f32.mrb[0].mxu0
      %v2208 = vadd.f32 0.0, %v2207
      %v2209 = vpop.f32.mrb[0].mxu0
      %v2210 = vpop.f32.mrb[0].mxu0
      %v2211 = vadd.f32 0.0, %v2210
      %v2212 = vpop.f32.mrb[0].mxu0
      %2213 = vmatprep.mubr.bf16.mxu0 0
      %2214 = vmatmul.mubr.bf16.gmra.mrb[0].mxu0 %v2011
      %v2215 = vpop.f32.mrb[0].mxu0
      %v2216 = vpop.f32.mrb[0].mxu0
      %v2217 = vpop.f32.mrb[0].mxu0
      %v2218 = vadd.f32 0.0, %v2217
      %v2219 = vpop.f32.mrb[0].mxu0
      %2220 = vmatprep.mubr.bf16.mxu0 0
      %2221 = vmatmul.mubr.bf16.gmra.mrb[0].mxu0 %v2014
      %v2222 = vpop.f32.mrb[0].mxu0
      %v2223 = vadd.f32 0.0, %v2222
      %v2224 = vpop.f32.mrb[0].mxu0
      %v2225 = vpop.f32.mrb[0].mxu0
      %v2226 = vpop.f32.mrb[0].mxu0
      %2227 = vdwg.mxu0
      %v2228 = vadd.f32 %v1737, %v2054
      %v2229 = vadd.f32 %v1738, %v2057
      %v2230 = vadd.f32 %v1739, %v2064
      %v2231 = vadd.f32 %v1740, %v2069
      %v2232 = vadd.f32 %v1741, %v2076
      %v2233 = vadd.f32 %v1742, %v2079
      %v2234 = vadd.f32 %v1743, %v2086
      %v2235 = vadd.f32 %v1744, %v2091
      %v2236 = vadd.f32 %v1745, %v2098
      %v2237 = vadd.f32 %v1746, %v2101
      %v2238 = vadd.f32 %v1747, %v2108
      %v2239 = vadd.f32 %v1748, %v2113
      %v2240 = vadd.f32 %v1749, %v2120
      %v2241 = vadd.f32 %v1750, %v2123
      %v2242 = vadd.f32 %v1751, %v2130
      %v2243 = vadd.f32 %v1752, %v2135
      %v2244 = vadd.f32 %v1753, %v2142
      %v2245 = vadd.f32 %v1754, %v2145
      %v2246 = vadd.f32 %v1755, %v2152
      %v2247 = vadd.f32 %v1756, %v2157
      %v2248 = vadd.f32 %v1757, %v2164
      %v2249 = vadd.f32 %v1758, %v2167
      %v2250 = vadd.f32 %v1759, %v2174
      %v2251 = vadd.f32 %v1760, %v2179
      %v2252 = vadd.f32 %v1761, %v2186
      %v2253 = vadd.f32 %v1762, %v2189
      %v2254 = vadd.f32 %v1763, %v2196
      %v2255 = vadd.f32 %v1764, %v2201
      %v2256 = vadd.f32 %v1765, %v2208
      %v2257 = vadd.f32 %v1766, %v2211
      %v2258 = vadd.f32 %v1767, %v2218
      %v2259 = vadd.f32 %v1768, %v2223
      %v2260 = vpack.c.bf16 %v398, %v398
      %s2261 = scalar_lea.vmem %s1, 14
      %v2262 = vld [vmem:[%s2261] sm:$0x3]
      %v2263 = vshll.u32 %v1019, 16
      %v2265 = vrot.slane %v2263, 1
      %v2266 = vsel %vm1280, %v1447, %v2265
      %v2267 = vshrl.u32 %v1019, 16
      %v2269 = vor.u32 %v2267, %v2265
      %v2270 = vshll.u32 %v1020, 16
      %v2272 = vrot.slane %v2270, 1
      %v2273 = vsel %vm1280, %v2269, %v2272
      %v2274 = vshrl.u32 %v1020, 16
      %v2276 = vor.u32 %v2274, %v2272
      %v2277 = vshll.u32 %v1021, 16
      %v2279 = vrot.slane %v2277, 1
      %v2280 = vsel %vm1280, %v2276, %v2279
      %v2281 = vshrl.u32 %v1021, 16
      %v2283 = vor.u32 %v2281, %v2279
      %v2285 = vshll.u32 %v2260, 16
      %v2287 = vrot.slane %v2285, 1
      %v2288 = vsel %vm1280, %v2283, %v2287
      %v2290 = vsel %vm225, %v2266, 0
      %v2293 = vsel %vm225, %v2273, 0
      %v2296 = vsel %vm225, %v2280, 0
      %v2299 = vsel %vm225, %v2288, 0
      %v2302 = vsel %vm522, %v2262, 0
      %2304 = vmatprep.subr.bf16.mxu0 0
      %2305 = vmatpush1.bf16.msra.mxu0 %v2302
      %2306 = vmatprep.subr.bf16.mxu0 0
      %2307 = vmatpush1.bf16.msra.mxu0 0
      %2308 = vmatprep.subr.bf16.mxu0 0
      %2309 = vmatpush1.bf16.msra.mxu0 0
      %2310 = vmatprep.subr.bf16.mxu0 0
      %2311 = vmatpush1.bf16.msra.mxu0 0
      %2312 = vmatprep.subr.bf16.mxu0 0
      %2313 = vmatpush1.bf16.msra.mxu0 0
      %2314 = vmatprep.subr.bf16.mxu0 0
      %2315 = vmatpush1.bf16.msra.mxu0 0
      %2316 = vmatprep.subr.bf16.mxu0 0
      %2317 = vmatpush1.bf16.msra.mxu0 0
      %2318 = vmatprep.subr.bf16.mxu0 0
      %2319 = vmatpush1.bf16.msra.mxu0 0
      %2320 = vmatprep.subr.bf16.mxu0 0
      %2321 = vmatpush1.bf16.msra.mxu0 0
      %2322 = vmatprep.subr.bf16.mxu0 0
      %2323 = vmatpush1.bf16.msra.mxu0 0
      %2324 = vmatprep.subr.bf16.mxu0 0
      %2325 = vmatpush1.bf16.msra.mxu0 0
      %2326 = vmatprep.subr.bf16.mxu0 0
      %2327 = vmatpush1.bf16.msra.mxu0 0
      %2328 = vmatprep.subr.bf16.mxu0 0
      %2329 = vmatpush1.bf16.msra.mxu0 0
      %2330 = vmatprep.subr.bf16.mxu0 0
      %2331 = vmatpush1.bf16.msra.mxu0 0
      %2332 = vmatprep.subr.bf16.mxu0 0
      %2333 = vmatpush1.bf16.msra.mxu0 0
      %2334 = vmatprep.subr.bf16.mxu0 0
      %2335 = vmatpush1.bf16.msra.mxu0 0
      %2336 = vmatprep.mubr.bf16.mxu0 0
      %2337 = vmatmul.mubr.bf16.gmra.mrb[0].mxu0 %v1463
      %v2338 = vpop.f32.mrb[0].mxu0
      %v2339 = vadd.f32 0.0, %v2338
      %v2340 = vpop.f32.mrb[0].mxu0
      %v2341 = vpop.f32.mrb[0].mxu0
      %v2342 = vadd.f32 0.0, %v2341
      %v2343 = vpop.f32.mrb[0].mxu0
      %2344 = vmatprep.mubr.bf16.mxu0 0
      %2345 = vmatmul.mubr.bf16.gmra.mrb[0].mxu0 %v1466
      %v2346 = vpop.f32.mrb[0].mxu0
      %v2347 = vpop.f32.mrb[0].mxu0
      %v2348 = vpop.f32.mrb[0].mxu0
      %v2349 = vadd.f32 0.0, %v2348
      %v2350 = vpop.f32.mrb[0].mxu0
      %2351 = vmatprep.mubr.bf16.mxu0 0
      %2352 = vmatmul.mubr.bf16.gmra.mrb[0].mxu0 %v1469
      %v2353 = vpop.f32.mrb[0].mxu0
      %v2354 = vadd.f32 0.0, %v2353
      %v2355 = vpop.f32.mrb[0].mxu0
      %v2356 = vpop.f32.mrb[0].mxu0
      %v2357 = vpop.f32.mrb[0].mxu0
      %2358 = vmatprep.mubr.bf16.mxu0 0
      %2359 = vmatmul.mubr.bf16.gmra.mrb[0].mxu0 %v1472
      %v2360 = vpop.f32.mrb[0].mxu0
      %v2361 = vadd.f32 0.0, %v2360
      %v2362 = vpop.f32.mrb[0].mxu0
      %v2363 = vpop.f32.mrb[0].mxu0
      %v2364 = vadd.f32 0.0, %v2363
      %v2365 = vpop.f32.mrb[0].mxu0
      %2366 = vmatprep.mubr.bf16.mxu0 0
      %2367 = vmatmul.mubr.bf16.gmra.mrb[0].mxu0 %v1475
      %v2368 = vpop.f32.mrb[0].mxu0
      %v2369 = vpop.f32.mrb[0].mxu0
      %v2370 = vpop.f32.mrb[0].mxu0
      %v2371 = vadd.f32 0.0, %v2370
      %v2372 = vpop.f32.mrb[0].mxu0
      %2373 = vmatprep.mubr.bf16.mxu0 0
      %2374 = vmatmul.mubr.bf16.gmra.mrb[0].mxu0 %v1478
      %v2375 = vpop.f32.mrb[0].mxu0
      %v2376 = vadd.f32 0.0, %v2375
      %v2377 = vpop.f32.mrb[0].mxu0
      %v2378 = vpop.f32.mrb[0].mxu0
      %v2379 = vpop.f32.mrb[0].mxu0
      %2380 = vmatprep.mubr.bf16.mxu0 0
      %2381 = vmatmul.mubr.bf16.gmra.mrb[0].mxu0 %v1481
      %v2382 = vpop.f32.mrb[0].mxu0
      %v2383 = vadd.f32 0.0, %v2382
      %v2384 = vpop.f32.mrb[0].mxu0
      %v2385 = vpop.f32.mrb[0].mxu0
      %v2386 = vadd.f32 0.0, %v2385
      %v2387 = vpop.f32.mrb[0].mxu0
      %2388 = vmatprep.mubr.bf16.mxu0 0
      %2389 = vmatmul.mubr.bf16.gmra.mrb[0].mxu0 %v1484
      %v2390 = vpop.f32.mrb[0].mxu0
      %v2391 = vpop.f32.mrb[0].mxu0
      %v2392 = vpop.f32.mrb[0].mxu0
      %v2393 = vadd.f32 0.0, %v2392
      %v2394 = vpop.f32.mrb[0].mxu0
      %2395 = vmatprep.mubr.bf16.mxu0 0
      %2396 = vmatmul.mubr.bf16.gmra.mrb[0].mxu0 %v1487
      %v2397 = vpop.f32.mrb[0].mxu0
      %v2398 = vadd.f32 0.0, %v2397
      %v2399 = vpop.f32.mrb[0].mxu0
      %v2400 = vpop.f32.mrb[0].mxu0
      %v2401 = vpop.f32.mrb[0].mxu0
      %2402 = vmatprep.mubr.bf16.mxu0 0
      %2403 = vmatmul.mubr.bf16.gmra.mrb[0].mxu0 %v1490
      %v2404 = vpop.f32.mrb[0].mxu0
      %v2405 = vadd.f32 0.0, %v2404
      %v2406 = vpop.f32.mrb[0].mxu0
      %v2407 = vpop.f32.mrb[0].mxu0
      %v2408 = vadd.f32 0.0, %v2407
      %v2409 = vpop.f32.mrb[0].mxu0
      %2410 = vmatprep.mubr.bf16.mxu0 0
      %2411 = vmatmul.mubr.bf16.gmra.mrb[0].mxu0 %v1493
      %v2412 = vpop.f32.mrb[0].mxu0
      %v2413 = vpop.f32.mrb[0].mxu0
      %v2414 = vpop.f32.mrb[0].mxu0
      %v2415 = vadd.f32 0.0, %v2414
      %v2416 = vpop.f32.mrb[0].mxu0
      %2417 = vmatprep.mubr.bf16.mxu0 0
      %2418 = vmatmul.mubr.bf16.gmra.mrb[0].mxu0 %v1496
      %v2419 = vpop.f32.mrb[0].mxu0
      %v2420 = vadd.f32 0.0, %v2419
      %v2421 = vpop.f32.mrb[0].mxu0
      %v2422 = vpop.f32.mrb[0].mxu0
      %v2423 = vpop.f32.mrb[0].mxu0
      %2424 = vmatprep.mubr.bf16.mxu0 0
      %2425 = vmatmul.mubr.bf16.gmra.mrb[0].mxu0 %v1499
      %v2426 = vpop.f32.mrb[0].mxu0
      %v2427 = vadd.f32 0.0, %v2426
      %v2428 = vpop.f32.mrb[0].mxu0
      %v2429 = vpop.f32.mrb[0].mxu0
      %v2430 = vadd.f32 0.0, %v2429
      %v2431 = vpop.f32.mrb[0].mxu0
      %2432 = vmatprep.mubr.bf16.mxu0 0
      %2433 = vmatmul.mubr.bf16.gmra.mrb[0].mxu0 %v1502
      %v2434 = vpop.f32.mrb[0].mxu0
      %v2435 = vpop.f32.mrb[0].mxu0
      %v2436 = vpop.f32.mrb[0].mxu0
      %v2437 = vadd.f32 0.0, %v2436
      %v2438 = vpop.f32.mrb[0].mxu0
      %2439 = vmatprep.mubr.bf16.mxu0 0
      %2440 = vmatmul.mubr.bf16.gmra.mrb[0].mxu0 %v1505
      %v2441 = vpop.f32.mrb[0].mxu0
      %v2442 = vadd.f32 0.0, %v2441
      %v2443 = vpop.f32.mrb[0].mxu0
      %v2444 = vpop.f32.mrb[0].mxu0
      %v2445 = vpop.f32.mrb[0].mxu0
      %2446 = vmatprep.mubr.bf16.mxu0 0
      %2447 = vmatmul.mubr.bf16.gmra.mrb[0].mxu0 %v1508
      %v2448 = vpop.f32.mrb[0].mxu0
      %v2449 = vadd.f32 0.0, %v2448
      %v2450 = vpop.f32.mrb[0].mxu0
      %v2451 = vpop.f32.mrb[0].mxu0
      %v2452 = vadd.f32 0.0, %v2451
      %v2453 = vpop.f32.mrb[0].mxu0
      %2454 = vmatprep.mubr.bf16.mxu0 0
      %2455 = vmatmul.mubr.bf16.gmra.mrb[0].mxu0 %v1511
      %v2456 = vpop.f32.mrb[0].mxu0
      %v2457 = vpop.f32.mrb[0].mxu0
      %v2458 = vpop.f32.mrb[0].mxu0
      %v2459 = vadd.f32 0.0, %v2458
      %v2460 = vpop.f32.mrb[0].mxu0
      %2461 = vmatprep.mubr.bf16.mxu0 0
      %2462 = vmatmul.mubr.bf16.gmra.mrb[0].mxu0 %v1514
      %v2463 = vpop.f32.mrb[0].mxu0
      %v2464 = vadd.f32 0.0, %v2463
      %v2465 = vpop.f32.mrb[0].mxu0
      %v2466 = vpop.f32.mrb[0].mxu0
      %v2467 = vpop.f32.mrb[0].mxu0
      %2468 = vmatprep.mubr.bf16.mxu0 0
      %2469 = vmatmul.mubr.bf16.gmra.mrb[0].mxu0 %v1517
      %v2470 = vpop.f32.mrb[0].mxu0
      %v2471 = vadd.f32 0.0, %v2470
      %v2472 = vpop.f32.mrb[0].mxu0
      %v2473 = vpop.f32.mrb[0].mxu0
      %v2474 = vadd.f32 0.0, %v2473
      %v2475 = vpop.f32.mrb[0].mxu0
      %2476 = vmatprep.mubr.bf16.mxu0 0
      %2477 = vmatmul.mubr.bf16.gmra.mrb[0].mxu0 %v1520
      %v2478 = vpop.f32.mrb[0].mxu0
      %v2479 = vpop.f32.mrb[0].mxu0
      %v2480 = vpop.f32.mrb[0].mxu0
      %v2481 = vadd.f32 0.0, %v2480
      %v2482 = vpop.f32.mrb[0].mxu0
      %2483 = vmatprep.mubr.bf16.mxu0 0
      %2484 = vmatmul.mubr.bf16.gmra.mrb[0].mxu0 %v2290
      %v2485 = vpop.f32.mrb[0].mxu0
      %v2486 = vadd.f32 0.0, %v2485
      %v2487 = vpop.f32.mrb[0].mxu0
      %v2488 = vpop.f32.mrb[0].mxu0
      %v2489 = vpop.f32.mrb[0].mxu0
      %2490 = vmatprep.mubr.bf16.mxu0 0
      %2491 = vmatmul.mubr.bf16.gmra.mrb[0].mxu0 %v2293
      %v2492 = vpop.f32.mrb[0].mxu0
      %v2493 = vadd.f32 0.0, %v2492
      %v2494 = vpop.f32.mrb[0].mxu0
      %v2495 = vpop.f32.mrb[0].mxu0
      %v2496 = vadd.f32 0.0, %v2495
      %v2497 = vpop.f32.mrb[0].mxu0
      %2498 = vmatprep.mubr.bf16.mxu0 0
      %2499 = vmatmul.mubr.bf16.gmra.mrb[0].mxu0 %v2296
      %v2500 = vpop.f32.mrb[0].mxu0
      %v2501 = vpop.f32.mrb[0].mxu0
      %v2502 = vpop.f32.mrb[0].mxu0
      %v2503 = vadd.f32 0.0, %v2502
      %v2504 = vpop.f32.mrb[0].mxu0
      %2505 = vmatprep.mubr.bf16.mxu0 0
      %2506 = vmatmul.mubr.bf16.gmra.mrb[0].mxu0 %v2299
      %v2507 = vpop.f32.mrb[0].mxu0
      %v2508 = vadd.f32 0.0, %v2507
      %v2509 = vpop.f32.mrb[0].mxu0
      %v2510 = vpop.f32.mrb[0].mxu0
      %v2511 = vpop.f32.mrb[0].mxu0
      %2512 = vdwg.mxu0
      %v2513 = vadd.f32 %v2228, %v2339
      %v2514 = vadd.f32 %v2229, %v2342
      %v2515 = vadd.f32 %v2230, %v2349
      %v2516 = vadd.f32 %v2231, %v2354
      %v2517 = vadd.f32 %v2232, %v2361
      %v2518 = vadd.f32 %v2233, %v2364
      %v2519 = vadd.f32 %v2234, %v2371
      %v2520 = vadd.f32 %v2235, %v2376
      %v2521 = vadd.f32 %v2236, %v2383
      %v2522 = vadd.f32 %v2237, %v2386
      %v2523 = vadd.f32 %v2238, %v2393
      %v2524 = vadd.f32 %v2239, %v2398
      %v2525 = vadd.f32 %v2240, %v2405
      %v2526 = vadd.f32 %v2241, %v2408
      %v2527 = vadd.f32 %v2242, %v2415
      %v2528 = vadd.f32 %v2243, %v2420
      %v2529 = vadd.f32 %v2244, %v2427
      %v2530 = vadd.f32 %v2245, %v2430
      %v2531 = vadd.f32 %v2246, %v2437
      %v2532 = vadd.f32 %v2247, %v2442
      %v2533 = vadd.f32 %v2248, %v2449
      %v2534 = vadd.f32 %v2249, %v2452
      %v2535 = vadd.f32 %v2250, %v2459
      %v2536 = vadd.f32 %v2251, %v2464
      %v2537 = vadd.f32 %v2252, %v2471
      %v2538 = vadd.f32 %v2253, %v2474
      %v2539 = vadd.f32 %v2254, %v2481
      %v2540 = vadd.f32 %v2255, %v2486
      %v2541 = vadd.f32 %v2256, %v2493
      %v2542 = vadd.f32 %v2257, %v2496
      %v2543 = vadd.f32 %v2258, %v2503
      %v2544 = vadd.f32 %v2259, %v2508
      %s2545 = scalar_lea.vmem %s1, 4
      %v2546 = vld [vmem:[%s2545] sm:$0x3]
      %vm2572 = vcmask 1046528
      %v2573 = vrot.slane %v399, 1
      %v2574 = vrot.slane %v400, 1
      %v2575 = vsel %vm2572, %v2573, %v2574
      %v2576 = vrot.slane %v401, 1
      %v2577 = vsel %vm2572, %v2574, %v2576
      %v2578 = vrot.slane %v402, 1
      %v2579 = vsel %vm2572, %v2576, %v2578
      %v2580 = vrot.slane %v403, 1
      %v2581 = vsel %vm2572, %v2578, %v2580
      %v2582 = vrot.slane %v404, 1
      %v2583 = vsel %vm2572, %v2580, %v2582
      %v2584 = vrot.slane %v405, 1
      %v2585 = vsel %vm2572, %v2582, %v2584
      %v2586 = vrot.slane %v406, 1
      %v2587 = vsel %vm2572, %v2584, %v2586
      %v2588 = vrot.slane %v407, 1
      %v2589 = vsel %vm2572, %v2586, %v2588
      %v2590 = vrot.slane %v408, 1
      %v2591 = vsel %vm2572, %v2588, %v2590
      %v2592 = vrot.slane %v409, 1
      %v2593 = vsel %vm2572, %v2590, %v2592
      %v2594 = vrot.slane %v410, 1
      %v2595 = vsel %vm2572, %v2592, %v2594
      %v2596 = vrot.slane %v411, 1
      %v2597 = vsel %vm2572, %v2594, %v2596
      %v2598 = vrot.slane %v412, 1
      %v2599 = vsel %vm2572, %v2596, %v2598
      %v2600 = vrot.slane %v413, 1
      %v2601 = vsel %vm2572, %v2598, %v2600
      %v2602 = vrot.slane %v414, 1
      %v2603 = vsel %vm2572, %v2600, %v2602
      %v2604 = vrot.slane %v415, 1
      %v2605 = vsel %vm2572, %v2602, %v2604
      %v2606 = vrot.slane %v416, 1
      %v2607 = vsel %vm2572, %v2604, %v2606
      %v2608 = vrot.slane %v417, 1
      %v2609 = vsel %vm2572, %v2606, %v2608
      %v2610 = vrot.slane %v418, 1
      %v2611 = vsel %vm2572, %v2608, %v2610
      %v2612 = vrot.slane %v419, 1
      %v2613 = vsel %vm2572, %v2610, %v2612
      %v2614 = vrot.slane %v420, 1
      %v2615 = vsel %vm2572, %v2612, %v2614
      %v2616 = vrot.slane %v421, 1
      %v2617 = vsel %vm2572, %v2614, %v2616
      %v2618 = vrot.slane %v422, 1
      %v2619 = vsel %vm2572, %v2616, %v2618
      %v2620 = vrot.slane %v1277, 1
      %v2621 = vsel %vm2572, %v2618, %v2620
      %v2623 = vsel %vm225, %v2575, 0
      %v2626 = vsel %vm225, %v2577, 0
      %v2629 = vsel %vm225, %v2579, 0
      %v2632 = vsel %vm225, %v2581, 0
      %v2635 = vsel %vm225, %v2583, 0
      %v2638 = vsel %vm225, %v2585, 0
      %v2641 = vsel %vm225, %v2587, 0
      %v2644 = vsel %vm225, %v2589, 0
      %v2647 = vsel %vm225, %v2591, 0
      %v2650 = vsel %vm225, %v2593, 0
      %v2653 = vsel %vm225, %v2595, 0
      %v2656 = vsel %vm225, %v2597, 0
      %v2659 = vsel %vm225, %v2599, 0
      %v2662 = vsel %vm225, %v2601, 0
      %v2665 = vsel %vm225, %v2603, 0
      %v2668 = vsel %vm225, %v2605, 0
      %v2671 = vsel %vm225, %v2607, 0
      %v2674 = vsel %vm225, %v2609, 0
      %v2677 = vsel %vm225, %v2611, 0
      %v2680 = vsel %vm225, %v2613, 0
      %v2683 = vsel %vm225, %v2615, 0
      %v2686 = vsel %vm225, %v2617, 0
      %v2689 = vsel %vm225, %v2619, 0
      %v2692 = vsel %vm225, %v2621, 0
      %v2695 = vsel %vm522, %v2546, 0
      %2697 = vmatprep.subr.bf16.mxu0 0
      %2698 = vmatpush1.bf16.msra.mxu0 %v2695
      %2699 = vmatprep.subr.bf16.mxu0 0
      %2700 = vmatpush1.bf16.msra.mxu0 0
      %2701 = vmatprep.subr.bf16.mxu0 0
      %2702 = vmatpush1.bf16.msra.mxu0 0
      %2703 = vmatprep.subr.bf16.mxu0 0
      %2704 = vmatpush1.bf16.msra.mxu0 0
      %2705 = vmatprep.subr.bf16.mxu0 0
      %2706 = vmatpush1.bf16.msra.mxu0 0
      %2707 = vmatprep.subr.bf16.mxu0 0
      %2708 = vmatpush1.bf16.msra.mxu0 0
      %2709 = vmatprep.subr.bf16.mxu0 0
      %2710 = vmatpush1.bf16.msra.mxu0 0
      %2711 = vmatprep.subr.bf16.mxu0 0
      %2712 = vmatpush1.bf16.msra.mxu0 0
      %2713 = vmatprep.subr.bf16.mxu0 0
      %2714 = vmatpush1.bf16.msra.mxu0 0
      %2715 = vmatprep.subr.bf16.mxu0 0
      %2716 = vmatpush1.bf16.msra.mxu0 0
      %2717 = vmatprep.subr.bf16.mxu0 0
      %2718 = vmatpush1.bf16.msra.mxu0 0
      %2719 = vmatprep.subr.bf16.mxu0 0
      %2720 = vmatpush1.bf16.msra.mxu0 0
      %2721 = vmatprep.subr.bf16.mxu0 0
      %2722 = vmatpush1.bf16.msra.mxu0 0
      %2723 = vmatprep.subr.bf16.mxu0 0
      %2724 = vmatpush1.bf16.msra.mxu0 0
      %2725 = vmatprep.subr.bf16.mxu0 0
      %2726 = vmatpush1.bf16.msra.mxu0 0
      %2727 = vmatprep.subr.bf16.mxu0 0
      %2728 = vmatpush1.bf16.msra.mxu0 0
      %2729 = vmatprep.mubr.bf16.mxu0 0
      %2730 = vmatmul.mubr.bf16.gmra.mrb[0].mxu0 %v2623
      %v2731 = vpop.f32.mrb[0].mxu0
      %v2732 = vadd.f32 0.0, %v2731
      %v2733 = vpop.f32.mrb[0].mxu0
      %v2734 = vpop.f32.mrb[0].mxu0
      %v2735 = vadd.f32 0.0, %v2734
      %v2736 = vpop.f32.mrb[0].mxu0
      %2737 = vmatprep.mubr.bf16.mxu0 0
      %2738 = vmatmul.mubr.bf16.gmra.mrb[0].mxu0 %v2626
      %v2739 = vpop.f32.mrb[0].mxu0
      %v2740 = vpop.f32.mrb[0].mxu0
      %v2741 = vpop.f32.mrb[0].mxu0
      %v2742 = vadd.f32 0.0, %v2741
      %v2743 = vpop.f32.mrb[0].mxu0
      %2744 = vmatprep.mubr.bf16.mxu0 0
      %2745 = vmatmul.mubr.bf16.gmra.mrb[0].mxu0 %v2629
      %v2746 = vpop.f32.mrb[0].mxu0
      %v2747 = vadd.f32 0.0, %v2746
      %v2748 = vpop.f32.mrb[0].mxu0
      %v2749 = vpop.f32.mrb[0].mxu0
      %v2750 = vpop.f32.mrb[0].mxu0
      %2751 = vmatprep.mubr.bf16.mxu0 0
      %2752 = vmatmul.mubr.bf16.gmra.mrb[0].mxu0 %v2632
      %v2753 = vpop.f32.mrb[0].mxu0
      %v2754 = vadd.f32 0.0, %v2753
      %v2755 = vpop.f32.mrb[0].mxu0
      %v2756 = vpop.f32.mrb[0].mxu0
      %v2757 = vadd.f32 0.0, %v2756
      %v2758 = vpop.f32.mrb[0].mxu0
      %2759 = vmatprep.mubr.bf16.mxu0 0
      %2760 = vmatmul.mubr.bf16.gmra.mrb[0].mxu0 %v2635
      %v2761 = vpop.f32.mrb[0].mxu0
      %v2762 = vpop.f32.mrb[0].mxu0
      %v2763 = vpop.f32.mrb[0].mxu0
      %v2764 = vadd.f32 0.0, %v2763
      %v2765 = vpop.f32.mrb[0].mxu0
      %2766 = vmatprep.mubr.bf16.mxu0 0
      %2767 = vmatmul.mubr.bf16.gmra.mrb[0].mxu0 %v2638
      %v2768 = vpop.f32.mrb[0].mxu0
      %v2769 = vadd.f32 0.0, %v2768
      %v2770 = vpop.f32.mrb[0].mxu0
      %v2771 = vpop.f32.mrb[0].mxu0
      %v2772 = vpop.f32.mrb[0].mxu0
      %2773 = vmatprep.mubr.bf16.mxu0 0
      %2774 = vmatmul.mubr.bf16.gmra.mrb[0].mxu0 %v2641
      %v2775 = vpop.f32.mrb[0].mxu0
      %v2776 = vadd.f32 0.0, %v2775
      %v2777 = vpop.f32.mrb[0].mxu0
      %v2778 = vpop.f32.mrb[0].mxu0
      %v2779 = vadd.f32 0.0, %v2778
      %v2780 = vpop.f32.mrb[0].mxu0
      %2781 = vmatprep.mubr.bf16.mxu0 0
      %2782 = vmatmul.mubr.bf16.gmra.mrb[0].mxu0 %v2644
      %v2783 = vpop.f32.mrb[0].mxu0
      %v2784 = vpop.f32.mrb[0].mxu0
      %v2785 = vpop.f32.mrb[0].mxu0
      %v2786 = vadd.f32 0.0, %v2785
      %v2787 = vpop.f32.mrb[0].mxu0
      %2788 = vmatprep.mubr.bf16.mxu0 0
      %2789 = vmatmul.mubr.bf16.gmra.mrb[0].mxu0 %v2647
      %v2790 = vpop.f32.mrb[0].mxu0
      %v2791 = vadd.f32 0.0, %v2790
      %v2792 = vpop.f32.mrb[0].mxu0
      %v2793 = vpop.f32.mrb[0].mxu0
      %v2794 = vpop.f32.mrb[0].mxu0
      %2795 = vmatprep.mubr.bf16.mxu0 0
      %2796 = vmatmul.mubr.bf16.gmra.mrb[0].mxu0 %v2650
      %v2797 = vpop.f32.mrb[0].mxu0
      %v2798 = vadd.f32 0.0, %v2797
      %v2799 = vpop.f32.mrb[0].mxu0
      %v2800 = vpop.f32.mrb[0].mxu0
      %v2801 = vadd.f32 0.0, %v2800
      %v2802 = vpop.f32.mrb[0].mxu0
      %2803 = vmatprep.mubr.bf16.mxu0 0
      %2804 = vmatmul.mubr.bf16.gmra.mrb[0].mxu0 %v2653
      %v2805 = vpop.f32.mrb[0].mxu0
      %v2806 = vpop.f32.mrb[0].mxu0
      %v2807 = vpop.f32.mrb[0].mxu0
      %v2808 = vadd.f32 0.0, %v2807
      %v2809 = vpop.f32.mrb[0].mxu0
      %2810 = vmatprep.mubr.bf16.mxu0 0
      %2811 = vmatmul.mubr.bf16.gmra.mrb[0].mxu0 %v2656
      %v2812 = vpop.f32.mrb[0].mxu0
      %v2813 = vadd.f32 0.0, %v2812
      %v2814 = vpop.f32.mrb[0].mxu0
      %v2815 = vpop.f32.mrb[0].mxu0
      %v2816 = vpop.f32.mrb[0].mxu0
      %2817 = vmatprep.mubr.bf16.mxu0 0
      %2818 = vmatmul.mubr.bf16.gmra.mrb[0].mxu0 %v2659
      %v2819 = vpop.f32.mrb[0].mxu0
      %v2820 = vadd.f32 0.0, %v2819
      %v2821 = vpop.f32.mrb[0].mxu0
      %v2822 = vpop.f32.mrb[0].mxu0
      %v2823 = vadd.f32 0.0, %v2822
      %v2824 = vpop.f32.mrb[0].mxu0
      %2825 = vmatprep.mubr.bf16.mxu0 0
      %2826 = vmatmul.mubr.bf16.gmra.mrb[0].mxu0 %v2662
      %v2827 = vpop.f32.mrb[0].mxu0
      %v2828 = vpop.f32.mrb[0].mxu0
      %v2829 = vpop.f32.mrb[0].mxu0
      %v2830 = vadd.f32 0.0, %v2829
      %v2831 = vpop.f32.mrb[0].mxu0
      %2832 = vmatprep.mubr.bf16.mxu0 0
      %2833 = vmatmul.mubr.bf16.gmra.mrb[0].mxu0 %v2665
      %v2834 = vpop.f32.mrb[0].mxu0
      %v2835 = vadd.f32 0.0, %v2834
      %v2836 = vpop.f32.mrb[0].mxu0
      %v2837 = vpop.f32.mrb[0].mxu0
      %v2838 = vpop.f32.mrb[0].mxu0
      %2839 = vmatprep.mubr.bf16.mxu0 0
      %2840 = vmatmul.mubr.bf16.gmra.mrb[0].mxu0 %v2668
      %v2841 = vpop.f32.mrb[0].mxu0
      %v2842 = vadd.f32 0.0, %v2841
      %v2843 = vpop.f32.mrb[0].mxu0
      %v2844 = vpop.f32.mrb[0].mxu0
      %v2845 = vadd.f32 0.0, %v2844
      %v2846 = vpop.f32.mrb[0].mxu0
      %2847 = vmatprep.mubr.bf16.mxu0 0
      %2848 = vmatmul.mubr.bf16.gmra.mrb[0].mxu0 %v2671
      %v2849 = vpop.f32.mrb[0].mxu0
      %v2850 = vpop.f32.mrb[0].mxu0
      %v2851 = vpop.f32.mrb[0].mxu0
      %v2852 = vadd.f32 0.0, %v2851
      %v2853 = vpop.f32.mrb[0].mxu0
      %2854 = vmatprep.mubr.bf16.mxu0 0
      %2855 = vmatmul.mubr.bf16.gmra.mrb[0].mxu0 %v2674
      %v2856 = vpop.f32.mrb[0].mxu0
      %v2857 = vadd.f32 0.0, %v2856
      %v2858 = vpop.f32.mrb[0].mxu0
      %v2859 = vpop.f32.mrb[0].mxu0
      %v2860 = vpop.f32.mrb[0].mxu0
      %2861 = vmatprep.mubr.bf16.mxu0 0
      %2862 = vmatmul.mubr.bf16.gmra.mrb[0].mxu0 %v2677
      %v2863 = vpop.f32.mrb[0].mxu0
      %v2864 = vadd.f32 0.0, %v2863
      %v2865 = vpop.f32.mrb[0].mxu0
      %v2866 = vpop.f32.mrb[0].mxu0
      %v2867 = vadd.f32 0.0, %v2866
      %v2868 = vpop.f32.mrb[0].mxu0
      %2869 = vmatprep.mubr.bf16.mxu0 0
      %2870 = vmatmul.mubr.bf16.gmra.mrb[0].mxu0 %v2680
      %v2871 = vpop.f32.mrb[0].mxu0
      %v2872 = vpop.f32.mrb[0].mxu0
      %v2873 = vpop.f32.mrb[0].mxu0
      %v2874 = vadd.f32 0.0, %v2873
      %v2875 = vpop.f32.mrb[0].mxu0
      %2876 = vmatprep.mubr.bf16.mxu0 0
      %2877 = vmatmul.mubr.bf16.gmra.mrb[0].mxu0 %v2683
      %v2878 = vpop.f32.mrb[0].mxu0
      %v2879 = vadd.f32 0.0, %v2878
      %v2880 = vpop.f32.mrb[0].mxu0
      %v2881 = vpop.f32.mrb[0].mxu0
      %v2882 = vpop.f32.mrb[0].mxu0
      %2883 = vmatprep.mubr.bf16.mxu0 0
      %2884 = vmatmul.mubr.bf16.gmra.mrb[0].mxu0 %v2686
      %v2885 = vpop.f32.mrb[0].mxu0
      %v2886 = vadd.f32 0.0, %v2885
      %v2887 = vpop.f32.mrb[0].mxu0
      %v2888 = vpop.f32.mrb[0].mxu0
      %v2889 = vadd.f32 0.0, %v2888
      %v2890 = vpop.f32.mrb[0].mxu0
      %2891 = vmatprep.mubr.bf16.mxu0 0
      %2892 = vmatmul.mubr.bf16.gmra.mrb[0].mxu0 %v2689
      %v2893 = vpop.f32.mrb[0].mxu0
      %v2894 = vpop.f32.mrb[0].mxu0
      %v2895 = vpop.f32.mrb[0].mxu0
      %v2896 = vadd.f32 0.0, %v2895
      %v2897 = vpop.f32.mrb[0].mxu0
      %2898 = vmatprep.mubr.bf16.mxu0 0
      %2899 = vmatmul.mubr.bf16.gmra.mrb[0].mxu0 %v2692
      %v2900 = vpop.f32.mrb[0].mxu0
      %v2901 = vadd.f32 0.0, %v2900
      %v2902 = vpop.f32.mrb[0].mxu0
      %v2903 = vpop.f32.mrb[0].mxu0
      %v2904 = vpop.f32.mrb[0].mxu0
      %2905 = vdwg.mxu0
      %v2906 = vadd.f32 %v2513, %v2732
      %v2907 = vadd.f32 %v2514, %v2735
      %v2908 = vadd.f32 %v2515, %v2742
      %v2909 = vadd.f32 %v2516, %v2747
      %v2910 = vadd.f32 %v2517, %v2754
      %v2911 = vadd.f32 %v2518, %v2757
      %v2912 = vadd.f32 %v2519, %v2764
      %v2913 = vadd.f32 %v2520, %v2769
      %v2914 = vadd.f32 %v2521, %v2776
      %v2915 = vadd.f32 %v2522, %v2779
      %v2916 = vadd.f32 %v2523, %v2786
      %v2917 = vadd.f32 %v2524, %v2791
      %v2918 = vadd.f32 %v2525, %v2798
      %v2919 = vadd.f32 %v2526, %v2801
      %v2920 = vadd.f32 %v2527, %v2808
      %v2921 = vadd.f32 %v2528, %v2813
      %v2922 = vadd.f32 %v2529, %v2820
      %v2923 = vadd.f32 %v2530, %v2823
      %v2924 = vadd.f32 %v2531, %v2830
      %v2925 = vadd.f32 %v2532, %v2835
      %v2926 = vadd.f32 %v2533, %v2842
      %v2927 = vadd.f32 %v2534, %v2845
      %v2928 = vadd.f32 %v2535, %v2852
      %v2929 = vadd.f32 %v2536, %v2857
      %v2930 = vadd.f32 %v2537, %v2864
      %v2931 = vadd.f32 %v2538, %v2867
      %v2932 = vadd.f32 %v2539, %v2874
      %v2933 = vadd.f32 %v2540, %v2879
      %v2934 = vadd.f32 %v2541, %v2886
      %v2935 = vadd.f32 %v2542, %v2889
      %v2936 = vadd.f32 %v2543, %v2896
      %v2937 = vadd.f32 %v2544, %v2901
      %s2938 = scalar_lea.vmem %s1, 10
      %v2939 = vld [vmem:[%s2938] sm:$0x3]
      %v2965 = vrot.slane %v424, 1
      %v2966 = vrot.slane %v425, 1
      %v2967 = vsel %vm2572, %v2965, %v2966
      %v2968 = vrot.slane %v426, 1
      %v2969 = vsel %vm2572, %v2966, %v2968
      %v2970 = vrot.slane %v427, 1
      %v2971 = vsel %vm2572, %v2968, %v2970
      %v2972 = vrot.slane %v428, 1
      %v2973 = vsel %vm2572, %v2970, %v2972
      %v2974 = vrot.slane %v429, 1
      %v2975 = vsel %vm2572, %v2972, %v2974
      %v2976 = vrot.slane %v430, 1
      %v2977 = vsel %vm2572, %v2974, %v2976
      %v2978 = vrot.slane %v431, 1
      %v2979 = vsel %vm2572, %v2976, %v2978
      %v2980 = vrot.slane %v432, 1
      %v2981 = vsel %vm2572, %v2978, %v2980
      %v2982 = vrot.slane %v433, 1
      %v2983 = vsel %vm2572, %v2980, %v2982
      %v2984 = vrot.slane %v434, 1
      %v2985 = vsel %vm2572, %v2982, %v2984
      %v2986 = vrot.slane %v435, 1
      %v2987 = vsel %vm2572, %v2984, %v2986
      %v2988 = vrot.slane %v436, 1
      %v2989 = vsel %vm2572, %v2986, %v2988
      %v2990 = vrot.slane %v437, 1
      %v2991 = vsel %vm2572, %v2988, %v2990
      %v2992 = vrot.slane %v438, 1
      %v2993 = vsel %vm2572, %v2990, %v2992
      %v2994 = vrot.slane %v439, 1
      %v2995 = vsel %vm2572, %v2992, %v2994
      %v2996 = vrot.slane %v440, 1
      %v2997 = vsel %vm2572, %v2994, %v2996
      %v2998 = vrot.slane %v441, 1
      %v2999 = vsel %vm2572, %v2996, %v2998
      %v3000 = vrot.slane %v442, 1
      %v3001 = vsel %vm2572, %v2998, %v3000
      %v3002 = vrot.slane %v443, 1
      %v3003 = vsel %vm2572, %v3000, %v3002
      %v3004 = vrot.slane %v444, 1
      %v3005 = vsel %vm2572, %v3002, %v3004
      %v3006 = vrot.slane %v445, 1
      %v3007 = vsel %vm2572, %v3004, %v3006
      %v3008 = vrot.slane %v446, 1
      %v3009 = vsel %vm2572, %v3006, %v3008
      %v3010 = vrot.slane %v447, 1
      %v3011 = vsel %vm2572, %v3008, %v3010
      %v3012 = vrot.slane %v1769, 1
      %v3013 = vsel %vm2572, %v3010, %v3012
      %v3015 = vsel %vm225, %v2967, 0
      %v3018 = vsel %vm225, %v2969, 0
      %v3021 = vsel %vm225, %v2971, 0
      %v3024 = vsel %vm225, %v2973, 0
      %v3027 = vsel %vm225, %v2975, 0
      %v3030 = vsel %vm225, %v2977, 0
      %v3033 = vsel %vm225, %v2979, 0
      %v3036 = vsel %vm225, %v2981, 0
      %v3039 = vsel %vm225, %v2983, 0
      %v3042 = vsel %vm225, %v2985, 0
      %v3045 = vsel %vm225, %v2987, 0
      %v3048 = vsel %vm225, %v2989, 0
      %v3051 = vsel %vm225, %v2991, 0
      %v3054 = vsel %vm225, %v2993, 0
      %v3057 = vsel %vm225, %v2995, 0
      %v3060 = vsel %vm225, %v2997, 0
      %v3063 = vsel %vm225, %v2999, 0
      %v3066 = vsel %vm225, %v3001, 0
      %v3069 = vsel %vm225, %v3003, 0
      %v3072 = vsel %vm225, %v3005, 0
      %v3075 = vsel %vm225, %v3007, 0
      %v3078 = vsel %vm225, %v3009, 0
      %v3081 = vsel %vm225, %v3011, 0
      %v3084 = vsel %vm225, %v3013, 0
      %v3087 = vsel %vm522, %v2939, 0
      %3089 = vmatprep.subr.bf16.mxu0 0
      %3090 = vmatpush1.bf16.msra.mxu0 %v3087
      %3091 = vmatprep.subr.bf16.mxu0 0
      %3092 = vmatpush1.bf16.msra.mxu0 0
      %3093 = vmatprep.subr.bf16.mxu0 0
      %3094 = vmatpush1.bf16.msra.mxu0 0
      %3095 = vmatprep.subr.bf16.mxu0 0
      %3096 = vmatpush1.bf16.msra.mxu0 0
      %3097 = vmatprep.subr.bf16.mxu0 0
      %3098 = vmatpush1.bf16.msra.mxu0 0
      %3099 = vmatprep.subr.bf16.mxu0 0
      %3100 = vmatpush1.bf16.msra.mxu0 0
      %3101 = vmatprep.subr.bf16.mxu0 0
      %3102 = vmatpush1.bf16.msra.mxu0 0
      %3103 = vmatprep.subr.bf16.mxu0 0
      %3104 = vmatpush1.bf16.msra.mxu0 0
      %3105 = vmatprep.subr.bf16.mxu0 0
      %3106 = vmatpush1.bf16.msra.mxu0 0
      %3107 = vmatprep.subr.bf16.mxu0 0
      %3108 = vmatpush1.bf16.msra.mxu0 0
      %3109 = vmatprep.subr.bf16.mxu0 0
      %3110 = vmatpush1.bf16.msra.mxu0 0
      %3111 = vmatprep.subr.bf16.mxu0 0
      %3112 = vmatpush1.bf16.msra.mxu0 0
      %3113 = vmatprep.subr.bf16.mxu0 0
      %3114 = vmatpush1.bf16.msra.mxu0 0
      %3115 = vmatprep.subr.bf16.mxu0 0
      %3116 = vmatpush1.bf16.msra.mxu0 0
      %3117 = vmatprep.subr.bf16.mxu0 0
      %3118 = vmatpush1.bf16.msra.mxu0 0
      %3119 = vmatprep.subr.bf16.mxu0 0
      %3120 = vmatpush1.bf16.msra.mxu0 0
      %3121 = vmatprep.mubr.bf16.mxu0 0
      %3122 = vmatmul.mubr.bf16.gmra.mrb[0].mxu0 %v3015
      %v3123 = vpop.f32.mrb[0].mxu0
      %v3124 = vadd.f32 0.0, %v3123
      %v3125 = vpop.f32.mrb[0].mxu0
      %v3126 = vpop.f32.mrb[0].mxu0
      %v3127 = vadd.f32 0.0, %v3126
      %v3128 = vpop.f32.mrb[0].mxu0
      %3129 = vmatprep.mubr.bf16.mxu0 0
      %3130 = vmatmul.mubr.bf16.gmra.mrb[0].mxu0 %v3018
      %v3131 = vpop.f32.mrb[0].mxu0
      %v3132 = vpop.f32.mrb[0].mxu0
      %v3133 = vpop.f32.mrb[0].mxu0
      %v3134 = vadd.f32 0.0, %v3133
      %v3135 = vpop.f32.mrb[0].mxu0
      %3136 = vmatprep.mubr.bf16.mxu0 0
      %3137 = vmatmul.mubr.bf16.gmra.mrb[0].mxu0 %v3021
      %v3138 = vpop.f32.mrb[0].mxu0
      %v3139 = vadd.f32 0.0, %v3138
      %v3140 = vpop.f32.mrb[0].mxu0
      %v3141 = vpop.f32.mrb[0].mxu0
      %v3142 = vpop.f32.mrb[0].mxu0
      %3143 = vmatprep.mubr.bf16.mxu0 0
      %3144 = vmatmul.mubr.bf16.gmra.mrb[0].mxu0 %v3024
      %v3145 = vpop.f32.mrb[0].mxu0
      %v3146 = vadd.f32 0.0, %v3145
      %v3147 = vpop.f32.mrb[0].mxu0
      %v3148 = vpop.f32.mrb[0].mxu0
      %v3149 = vadd.f32 0.0, %v3148
      %v3150 = vpop.f32.mrb[0].mxu0
      %3151 = vmatprep.mubr.bf16.mxu0 0
      %3152 = vmatmul.mubr.bf16.gmra.mrb[0].mxu0 %v3027
      %v3153 = vpop.f32.mrb[0].mxu0
      %v3154 = vpop.f32.mrb[0].mxu0
      %v3155 = vpop.f32.mrb[0].mxu0
      %v3156 = vadd.f32 0.0, %v3155
      %v3157 = vpop.f32.mrb[0].mxu0
      %3158 = vmatprep.mubr.bf16.mxu0 0
      %3159 = vmatmul.mubr.bf16.gmra.mrb[0].mxu0 %v3030
      %v3160 = vpop.f32.mrb[0].mxu0
      %v3161 = vadd.f32 0.0, %v3160
      %v3162 = vpop.f32.mrb[0].mxu0
      %v3163 = vpop.f32.mrb[0].mxu0
      %v3164 = vpop.f32.mrb[0].mxu0
      %3165 = vmatprep.mubr.bf16.mxu0 0
      %3166 = vmatmul.mubr.bf16.gmra.mrb[0].mxu0 %v3033
      %v3167 = vpop.f32.mrb[0].mxu0
      %v3168 = vadd.f32 0.0, %v3167
      %v3169 = vpop.f32.mrb[0].mxu0
      %v3170 = vpop.f32.mrb[0].mxu0
      %v3171 = vadd.f32 0.0, %v3170
      %v3172 = vpop.f32.mrb[0].mxu0
      %3173 = vmatprep.mubr.bf16.mxu0 0
      %3174 = vmatmul.mubr.bf16.gmra.mrb[0].mxu0 %v3036
      %v3175 = vpop.f32.mrb[0].mxu0
      %v3176 = vpop.f32.mrb[0].mxu0
      %v3177 = vpop.f32.mrb[0].mxu0
      %v3178 = vadd.f32 0.0, %v3177
      %v3179 = vpop.f32.mrb[0].mxu0
      %3180 = vmatprep.mubr.bf16.mxu0 0
      %3181 = vmatmul.mubr.bf16.gmra.mrb[0].mxu0 %v3039
      %v3182 = vpop.f32.mrb[0].mxu0
      %v3183 = vadd.f32 0.0, %v3182
      %v3184 = vpop.f32.mrb[0].mxu0
      %v3185 = vpop.f32.mrb[0].mxu0
      %v3186 = vpop.f32.mrb[0].mxu0
      %3187 = vmatprep.mubr.bf16.mxu0 0
      %3188 = vmatmul.mubr.bf16.gmra.mrb[0].mxu0 %v3042
      %v3189 = vpop.f32.mrb[0].mxu0
      %v3190 = vadd.f32 0.0, %v3189
      %v3191 = vpop.f32.mrb[0].mxu0
      %v3192 = vpop.f32.mrb[0].mxu0
      %v3193 = vadd.f32 0.0, %v3192
      %v3194 = vpop.f32.mrb[0].mxu0
      %3195 = vmatprep.mubr.bf16.mxu0 0
      %3196 = vmatmul.mubr.bf16.gmra.mrb[0].mxu0 %v3045
      %v3197 = vpop.f32.mrb[0].mxu0
      %v3198 = vpop.f32.mrb[0].mxu0
      %v3199 = vpop.f32.mrb[0].mxu0
      %v3200 = vadd.f32 0.0, %v3199
      %v3201 = vpop.f32.mrb[0].mxu0
      %3202 = vmatprep.mubr.bf16.mxu0 0
      %3203 = vmatmul.mubr.bf16.gmra.mrb[0].mxu0 %v3048
      %v3204 = vpop.f32.mrb[0].mxu0
      %v3205 = vadd.f32 0.0, %v3204
      %v3206 = vpop.f32.mrb[0].mxu0
      %v3207 = vpop.f32.mrb[0].mxu0
      %v3208 = vpop.f32.mrb[0].mxu0
      %3209 = vmatprep.mubr.bf16.mxu0 0
      %3210 = vmatmul.mubr.bf16.gmra.mrb[0].mxu0 %v3051
      %v3211 = vpop.f32.mrb[0].mxu0
      %v3212 = vadd.f32 0.0, %v3211
      %v3213 = vpop.f32.mrb[0].mxu0
      %v3214 = vpop.f32.mrb[0].mxu0
      %v3215 = vadd.f32 0.0, %v3214
      %v3216 = vpop.f32.mrb[0].mxu0
      %3217 = vmatprep.mubr.bf16.mxu0 0
      %3218 = vmatmul.mubr.bf16.gmra.mrb[0].mxu0 %v3054
      %v3219 = vpop.f32.mrb[0].mxu0
      %v3220 = vpop.f32.mrb[0].mxu0
      %v3221 = vpop.f32.mrb[0].mxu0
      %v3222 = vadd.f32 0.0, %v3221
      %v3223 = vpop.f32.mrb[0].mxu0
      %3224 = vmatprep.mubr.bf16.mxu0 0
      %3225 = vmatmul.mubr.bf16.gmra.mrb[0].mxu0 %v3057
      %v3226 = vpop.f32.mrb[0].mxu0
      %v3227 = vadd.f32 0.0, %v3226
      %v3228 = vpop.f32.mrb[0].mxu0
      %v3229 = vpop.f32.mrb[0].mxu0
      %v3230 = vpop.f32.mrb[0].mxu0
      %3231 = vmatprep.mubr.bf16.mxu0 0
      %3232 = vmatmul.mubr.bf16.gmra.mrb[0].mxu0 %v3060
      %v3233 = vpop.f32.mrb[0].mxu0
      %v3234 = vadd.f32 0.0, %v3233
      %v3235 = vpop.f32.mrb[0].mxu0
      %v3236 = vpop.f32.mrb[0].mxu0
      %v3237 = vadd.f32 0.0, %v3236
      %v3238 = vpop.f32.mrb[0].mxu0
      %3239 = vmatprep.mubr.bf16.mxu0 0
      %3240 = vmatmul.mubr.bf16.gmra.mrb[0].mxu0 %v3063
      %v3241 = vpop.f32.mrb[0].mxu0
      %v3242 = vpop.f32.mrb[0].mxu0
      %v3243 = vpop.f32.mrb[0].mxu0
      %v3244 = vadd.f32 0.0, %v3243
      %v3245 = vpop.f32.mrb[0].mxu0
      %3246 = vmatprep.mubr.bf16.mxu0 0
      %3247 = vmatmul.mubr.bf16.gmra.mrb[0].mxu0 %v3066
      %v3248 = vpop.f32.mrb[0].mxu0
      %v3249 = vadd.f32 0.0, %v3248
      %v3250 = vpop.f32.mrb[0].mxu0
      %v3251 = vpop.f32.mrb[0].mxu0
      %v3252 = vpop.f32.mrb[0].mxu0
      %3253 = vmatprep.mubr.bf16.mxu0 0
      %3254 = vmatmul.mubr.bf16.gmra.mrb[0].mxu0 %v3069
      %v3255 = vpop.f32.mrb[0].mxu0
      %v3256 = vadd.f32 0.0, %v3255
      %v3257 = vpop.f32.mrb[0].mxu0
      %v3258 = vpop.f32.mrb[0].mxu0
      %v3259 = vadd.f32 0.0, %v3258
      %v3260 = vpop.f32.mrb[0].mxu0
      %3261 = vmatprep.mubr.bf16.mxu0 0
      %3262 = vmatmul.mubr.bf16.gmra.mrb[0].mxu0 %v3072
      %v3263 = vpop.f32.mrb[0].mxu0
      %v3264 = vpop.f32.mrb[0].mxu0
      %v3265 = vpop.f32.mrb[0].mxu0
      %v3266 = vadd.f32 0.0, %v3265
      %v3267 = vpop.f32.mrb[0].mxu0
      %3268 = vmatprep.mubr.bf16.mxu0 0
      %3269 = vmatmul.mubr.bf16.gmra.mrb[0].mxu0 %v3075
      %v3270 = vpop.f32.mrb[0].mxu0
      %v3271 = vadd.f32 0.0, %v3270
      %v3272 = vpop.f32.mrb[0].mxu0
      %v3273 = vpop.f32.mrb[0].mxu0
      %v3274 = vpop.f32.mrb[0].mxu0
      %3275 = vmatprep.mubr.bf16.mxu0 0
      %3276 = vmatmul.mubr.bf16.gmra.mrb[0].mxu0 %v3078
      %v3277 = vpop.f32.mrb[0].mxu0
      %v3278 = vadd.f32 0.0, %v3277
      %v3279 = vpop.f32.mrb[0].mxu0
      %v3280 = vpop.f32.mrb[0].mxu0
      %v3281 = vadd.f32 0.0, %v3280
      %v3282 = vpop.f32.mrb[0].mxu0
      %3283 = vmatprep.mubr.bf16.mxu0 0
      %3284 = vmatmul.mubr.bf16.gmra.mrb[0].mxu0 %v3081
      %v3285 = vpop.f32.mrb[0].mxu0
      %v3286 = vpop.f32.mrb[0].mxu0
      %v3287 = vpop.f32.mrb[0].mxu0
      %v3288 = vadd.f32 0.0, %v3287
      %v3289 = vpop.f32.mrb[0].mxu0
      %3290 = vmatprep.mubr.bf16.mxu0 0
      %3291 = vmatmul.mubr.bf16.gmra.mrb[0].mxu0 %v3084
      %v3292 = vpop.f32.mrb[0].mxu0
      %v3293 = vadd.f32 0.0, %v3292
      %v3294 = vpop.f32.mrb[0].mxu0
      %v3295 = vpop.f32.mrb[0].mxu0
      %v3296 = vpop.f32.mrb[0].mxu0
      %3297 = vdwg.mxu0
      %v3298 = vadd.f32 %v2906, %v3124
      %v3299 = vadd.f32 %v2907, %v3127
      %v3300 = vadd.f32 %v2908, %v3134
      %v3301 = vadd.f32 %v2909, %v3139
      %v3302 = vadd.f32 %v2910, %v3146
      %v3303 = vadd.f32 %v2911, %v3149
      %v3304 = vadd.f32 %v2912, %v3156
      %v3305 = vadd.f32 %v2913, %v3161
      %v3306 = vadd.f32 %v2914, %v3168
      %v3307 = vadd.f32 %v2915, %v3171
      %v3308 = vadd.f32 %v2916, %v3178
      %v3309 = vadd.f32 %v2917, %v3183
      %v3310 = vadd.f32 %v2918, %v3190
      %v3311 = vadd.f32 %v2919, %v3193
      %v3312 = vadd.f32 %v2920, %v3200
      %v3313 = vadd.f32 %v2921, %v3205
      %v3314 = vadd.f32 %v2922, %v3212
      %v3315 = vadd.f32 %v2923, %v3215
      %v3316 = vadd.f32 %v2924, %v3222
      %v3317 = vadd.f32 %v2925, %v3227
      %v3318 = vadd.f32 %v2926, %v3234
      %v3319 = vadd.f32 %v2927, %v3237
      %v3320 = vadd.f32 %v2928, %v3244
      %v3321 = vadd.f32 %v2929, %v3249
      %v3322 = vadd.f32 %v2930, %v3256
      %v3323 = vadd.f32 %v2931, %v3259
      %v3324 = vadd.f32 %v2932, %v3266
      %v3325 = vadd.f32 %v2933, %v3271
      %v3326 = vadd.f32 %v2934, %v3278
      %v3327 = vadd.f32 %v2935, %v3281
      %v3328 = vadd.f32 %v2936, %v3288
      %v3329 = vadd.f32 %v2937, %v3293
      %s3330 = scalar_lea.vmem %s1, 16
      %v3331 = vld [vmem:[%s3330] sm:$0x3]
      %v3336 = vrot.slane %v1019, 1
      %v3337 = vsel %vm2572, %v2618, %v3336
      %v3338 = vrot.slane %v1020, 1
      %v3339 = vsel %vm2572, %v3336, %v3338
      %v3340 = vrot.slane %v1021, 1
      %v3341 = vsel %vm2572, %v3338, %v3340
      %v3342 = vrot.slane %v2260, 1
      %v3343 = vsel %vm2572, %v3340, %v3342
      %v3345 = vsel %vm225, %v3337, 0
      %v3348 = vsel %vm225, %v3339, 0
      %v3351 = vsel %vm225, %v3341, 0
      %v3354 = vsel %vm225, %v3343, 0
      %v3357 = vsel %vm522, %v3331, 0
      %3359 = vmatprep.subr.bf16.mxu0 0
      %3360 = vmatpush1.bf16.msra.mxu0 %v3357
      %3361 = vmatprep.subr.bf16.mxu0 0
      %3362 = vmatpush1.bf16.msra.mxu0 0
      %3363 = vmatprep.subr.bf16.mxu0 0
      %3364 = vmatpush1.bf16.msra.mxu0 0
      %3365 = vmatprep.subr.bf16.mxu0 0
      %3366 = vmatpush1.bf16.msra.mxu0 0
      %3367 = vmatprep.subr.bf16.mxu0 0
      %3368 = vmatpush1.bf16.msra.mxu0 0
      %3369 = vmatprep.subr.bf16.mxu0 0
      %3370 = vmatpush1.bf16.msra.mxu0 0
      %3371 = vmatprep.subr.bf16.mxu0 0
      %3372 = vmatpush1.bf16.msra.mxu0 0
      %3373 = vmatprep.subr.bf16.mxu0 0
      %3374 = vmatpush1.bf16.msra.mxu0 0
      %3375 = vmatprep.subr.bf16.mxu0 0
      %3376 = vmatpush1.bf16.msra.mxu0 0
      %3377 = vmatprep.subr.bf16.mxu0 0
      %3378 = vmatpush1.bf16.msra.mxu0 0
      %3379 = vmatprep.subr.bf16.mxu0 0
      %3380 = vmatpush1.bf16.msra.mxu0 0
      %3381 = vmatprep.subr.bf16.mxu0 0
      %3382 = vmatpush1.bf16.msra.mxu0 0
      %3383 = vmatprep.subr.bf16.mxu0 0
      %3384 = vmatpush1.bf16.msra.mxu0 0
      %3385 = vmatprep.subr.bf16.mxu0 0
      %3386 = vmatpush1.bf16.msra.mxu0 0
      %3387 = vmatprep.subr.bf16.mxu0 0
      %3388 = vmatpush1.bf16.msra.mxu0 0
      %3389 = vmatprep.subr.bf16.mxu0 0
      %3390 = vmatpush1.bf16.msra.mxu0 0
      %3391 = vmatprep.mubr.bf16.mxu0 0
      %3392 = vmatmul.mubr.bf16.gmra.mrb[0].mxu0 %v2632
      %v3393 = vpop.f32.mrb[0].mxu0
      %v3394 = vadd.f32 0.0, %v3393
      %v3395 = vpop.f32.mrb[0].mxu0
      %v3396 = vpop.f32.mrb[0].mxu0
      %v3397 = vadd.f32 0.0, %v3396
      %v3398 = vpop.f32.mrb[0].mxu0
      %3399 = vmatprep.mubr.bf16.mxu0 0
      %3400 = vmatmul.mubr.bf16.gmra.mrb[0].mxu0 %v2635
      %v3401 = vpop.f32.mrb[0].mxu0
      %v3402 = vpop.f32.mrb[0].mxu0
      %v3403 = vpop.f32.mrb[0].mxu0
      %v3404 = vadd.f32 0.0, %v3403
      %v3405 = vpop.f32.mrb[0].mxu0
      %3406 = vmatprep.mubr.bf16.mxu0 0
      %3407 = vmatmul.mubr.bf16.gmra.mrb[0].mxu0 %v2638
      %v3408 = vpop.f32.mrb[0].mxu0
      %v3409 = vadd.f32 0.0, %v3408
      %v3410 = vpop.f32.mrb[0].mxu0
      %v3411 = vpop.f32.mrb[0].mxu0
      %v3412 = vpop.f32.mrb[0].mxu0
      %3413 = vmatprep.mubr.bf16.mxu0 0
      %3414 = vmatmul.mubr.bf16.gmra.mrb[0].mxu0 %v2641
      %v3415 = vpop.f32.mrb[0].mxu0
      %v3416 = vadd.f32 0.0, %v3415
      %v3417 = vpop.f32.mrb[0].mxu0
      %v3418 = vpop.f32.mrb[0].mxu0
      %v3419 = vadd.f32 0.0, %v3418
      %v3420 = vpop.f32.mrb[0].mxu0
      %3421 = vmatprep.mubr.bf16.mxu0 0
      %3422 = vmatmul.mubr.bf16.gmra.mrb[0].mxu0 %v2644
      %v3423 = vpop.f32.mrb[0].mxu0
      %v3424 = vpop.f32.mrb[0].mxu0
      %v3425 = vpop.f32.mrb[0].mxu0
      %v3426 = vadd.f32 0.0, %v3425
      %v3427 = vpop.f32.mrb[0].mxu0
      %3428 = vmatprep.mubr.bf16.mxu0 0
      %3429 = vmatmul.mubr.bf16.gmra.mrb[0].mxu0 %v2647
      %v3430 = vpop.f32.mrb[0].mxu0
      %v3431 = vadd.f32 0.0, %v3430
      %v3432 = vpop.f32.mrb[0].mxu0
      %v3433 = vpop.f32.mrb[0].mxu0
      %v3434 = vpop.f32.mrb[0].mxu0
      %3435 = vmatprep.mubr.bf16.mxu0 0
      %3436 = vmatmul.mubr.bf16.gmra.mrb[0].mxu0 %v2650
      %v3437 = vpop.f32.mrb[0].mxu0
      %v3438 = vadd.f32 0.0, %v3437
      %v3439 = vpop.f32.mrb[0].mxu0
      %v3440 = vpop.f32.mrb[0].mxu0
      %v3441 = vadd.f32 0.0, %v3440
      %v3442 = vpop.f32.mrb[0].mxu0
      %3443 = vmatprep.mubr.bf16.mxu0 0
      %3444 = vmatmul.mubr.bf16.gmra.mrb[0].mxu0 %v2653
      %v3445 = vpop.f32.mrb[0].mxu0
      %v3446 = vpop.f32.mrb[0].mxu0
      %v3447 = vpop.f32.mrb[0].mxu0
      %v3448 = vadd.f32 0.0, %v3447
      %v3449 = vpop.f32.mrb[0].mxu0
      %3450 = vmatprep.mubr.bf16.mxu0 0
      %3451 = vmatmul.mubr.bf16.gmra.mrb[0].mxu0 %v2656
      %v3452 = vpop.f32.mrb[0].mxu0
      %v3453 = vadd.f32 0.0, %v3452
      %v3454 = vpop.f32.mrb[0].mxu0
      %v3455 = vpop.f32.mrb[0].mxu0
      %v3456 = vpop.f32.mrb[0].mxu0
      %3457 = vmatprep.mubr.bf16.mxu0 0
      %3458 = vmatmul.mubr.bf16.gmra.mrb[0].mxu0 %v2659
      %v3459 = vpop.f32.mrb[0].mxu0
      %v3460 = vadd.f32 0.0, %v3459
      %v3461 = vpop.f32.mrb[0].mxu0
      %v3462 = vpop.f32.mrb[0].mxu0
      %v3463 = vadd.f32 0.0, %v3462
      %v3464 = vpop.f32.mrb[0].mxu0
      %3465 = vmatprep.mubr.bf16.mxu0 0
      %3466 = vmatmul.mubr.bf16.gmra.mrb[0].mxu0 %v2662
      %v3467 = vpop.f32.mrb[0].mxu0
      %v3468 = vpop.f32.mrb[0].mxu0
      %v3469 = vpop.f32.mrb[0].mxu0
      %v3470 = vadd.f32 0.0, %v3469
      %v3471 = vpop.f32.mrb[0].mxu0
      %3472 = vmatprep.mubr.bf16.mxu0 0
      %3473 = vmatmul.mubr.bf16.gmra.mrb[0].mxu0 %v2665
      %v3474 = vpop.f32.mrb[0].mxu0
      %v3475 = vadd.f32 0.0, %v3474
      %v3476 = vpop.f32.mrb[0].mxu0
      %v3477 = vpop.f32.mrb[0].mxu0
      %v3478 = vpop.f32.mrb[0].mxu0
      %3479 = vmatprep.mubr.bf16.mxu0 0
      %3480 = vmatmul.mubr.bf16.gmra.mrb[0].mxu0 %v2668
      %v3481 = vpop.f32.mrb[0].mxu0
      %v3482 = vadd.f32 0.0, %v3481
      %v3483 = vpop.f32.mrb[0].mxu0
      %v3484 = vpop.f32.mrb[0].mxu0
      %v3485 = vadd.f32 0.0, %v3484
      %v3486 = vpop.f32.mrb[0].mxu0
      %3487 = vmatprep.mubr.bf16.mxu0 0
      %3488 = vmatmul.mubr.bf16.gmra.mrb[0].mxu0 %v2671
      %v3489 = vpop.f32.mrb[0].mxu0
      %v3490 = vpop.f32.mrb[0].mxu0
      %v3491 = vpop.f32.mrb[0].mxu0
      %v3492 = vadd.f32 0.0, %v3491
      %v3493 = vpop.f32.mrb[0].mxu0
      %3494 = vmatprep.mubr.bf16.mxu0 0
      %3495 = vmatmul.mubr.bf16.gmra.mrb[0].mxu0 %v2674
      %v3496 = vpop.f32.mrb[0].mxu0
      %v3497 = vadd.f32 0.0, %v3496
      %v3498 = vpop.f32.mrb[0].mxu0
      %v3499 = vpop.f32.mrb[0].mxu0
      %v3500 = vpop.f32.mrb[0].mxu0
      %3501 = vmatprep.mubr.bf16.mxu0 0
      %3502 = vmatmul.mubr.bf16.gmra.mrb[0].mxu0 %v2677
      %v3503 = vpop.f32.mrb[0].mxu0
      %v3504 = vadd.f32 0.0, %v3503
      %v3505 = vpop.f32.mrb[0].mxu0
      %v3506 = vpop.f32.mrb[0].mxu0
      %v3507 = vadd.f32 0.0, %v3506
      %v3508 = vpop.f32.mrb[0].mxu0
      %3509 = vmatprep.mubr.bf16.mxu0 0
      %3510 = vmatmul.mubr.bf16.gmra.mrb[0].mxu0 %v2680
      %v3511 = vpop.f32.mrb[0].mxu0
      %v3512 = vpop.f32.mrb[0].mxu0
      %v3513 = vpop.f32.mrb[0].mxu0
      %v3514 = vadd.f32 0.0, %v3513
      %v3515 = vpop.f32.mrb[0].mxu0
      %3516 = vmatprep.mubr.bf16.mxu0 0
      %3517 = vmatmul.mubr.bf16.gmra.mrb[0].mxu0 %v2683
      %v3518 = vpop.f32.mrb[0].mxu0
      %v3519 = vadd.f32 0.0, %v3518
      %v3520 = vpop.f32.mrb[0].mxu0
      %v3521 = vpop.f32.mrb[0].mxu0
      %v3522 = vpop.f32.mrb[0].mxu0
      %3523 = vmatprep.mubr.bf16.mxu0 0
      %3524 = vmatmul.mubr.bf16.gmra.mrb[0].mxu0 %v2686
      %v3525 = vpop.f32.mrb[0].mxu0
      %v3526 = vadd.f32 0.0, %v3525
      %v3527 = vpop.f32.mrb[0].mxu0
      %v3528 = vpop.f32.mrb[0].mxu0
      %v3529 = vadd.f32 0.0, %v3528
      %v3530 = vpop.f32.mrb[0].mxu0
      %3531 = vmatprep.mubr.bf16.mxu0 0
      %3532 = vmatmul.mubr.bf16.gmra.mrb[0].mxu0 %v2689
      %v3533 = vpop.f32.mrb[0].mxu0
      %v3534 = vpop.f32.mrb[0].mxu0
      %v3535 = vpop.f32.mrb[0].mxu0
      %v3536 = vadd.f32 0.0, %v3535
      %v3537 = vpop.f32.mrb[0].mxu0
      %3538 = vmatprep.mubr.bf16.mxu0 0
      %3539 = vmatmul.mubr.bf16.gmra.mrb[0].mxu0 %v3345
      %v3540 = vpop.f32.mrb[0].mxu0
      %v3541 = vadd.f32 0.0, %v3540
      %v3542 = vpop.f32.mrb[0].mxu0
      %v3543 = vpop.f32.mrb[0].mxu0
      %v3544 = vpop.f32.mrb[0].mxu0
      %3545 = vmatprep.mubr.bf16.mxu0 0
      %3546 = vmatmul.mubr.bf16.gmra.mrb[0].mxu0 %v3348
      %v3547 = vpop.f32.mrb[0].mxu0
      %v3548 = vadd.f32 0.0, %v3547
      %v3549 = vpop.f32.mrb[0].mxu0
      %v3550 = vpop.f32.mrb[0].mxu0
      %v3551 = vadd.f32 0.0, %v3550
      %v3552 = vpop.f32.mrb[0].mxu0
      %3553 = vmatprep.mubr.bf16.mxu0 0
      %3554 = vmatmul.mubr.bf16.gmra.mrb[0].mxu0 %v3351
      %v3555 = vpop.f32.mrb[0].mxu0
      %v3556 = vpop.f32.mrb[0].mxu0
      %v3557 = vpop.f32.mrb[0].mxu0
      %v3558 = vadd.f32 0.0, %v3557
      %v3559 = vpop.f32.mrb[0].mxu0
      %3560 = vmatprep.mubr.bf16.mxu0 0
      %3561 = vmatmul.mubr.bf16.gmra.mrb[0].mxu0 %v3354
      %v3562 = vpop.f32.mrb[0].mxu0
      %v3563 = vadd.f32 0.0, %v3562
      %v3564 = vpop.f32.mrb[0].mxu0
      %v3565 = vpop.f32.mrb[0].mxu0
      %v3566 = vpop.f32.mrb[0].mxu0
      %3567 = vdwg.mxu0
      %v3568 = vadd.f32 %v3298, %v3394
      %v3569 = vadd.f32 %v3299, %v3397
      %v3570 = vadd.f32 %v3300, %v3404
      %v3571 = vadd.f32 %v3301, %v3409
      %v3572 = vadd.f32 %v3302, %v3416
      %v3573 = vadd.f32 %v3303, %v3419
      %v3574 = vadd.f32 %v3304, %v3426
      %v3575 = vadd.f32 %v3305, %v3431
      %v3576 = vadd.f32 %v3306, %v3438
      %v3577 = vadd.f32 %v3307, %v3441
      %v3578 = vadd.f32 %v3308, %v3448
      %v3579 = vadd.f32 %v3309, %v3453
      %v3580 = vadd.f32 %v3310, %v3460
      %v3581 = vadd.f32 %v3311, %v3463
      %v3582 = vadd.f32 %v3312, %v3470
      %v3583 = vadd.f32 %v3313, %v3475
      %v3584 = vadd.f32 %v3314, %v3482
      %v3585 = vadd.f32 %v3315, %v3485
      %v3586 = vadd.f32 %v3316, %v3492
      %v3587 = vadd.f32 %v3317, %v3497
      %v3588 = vadd.f32 %v3318, %v3504
      %v3589 = vadd.f32 %v3319, %v3507
      %v3590 = vadd.f32 %v3320, %v3514
      %v3591 = vadd.f32 %v3321, %v3519
      %v3592 = vadd.f32 %v3322, %v3526
      %v3593 = vadd.f32 %v3323, %v3529
      %v3594 = vadd.f32 %v3324, %v3536
      %v3595 = vadd.f32 %v3325, %v3541
      %v3596 = vadd.f32 %v3326, %v3548
      %v3597 = vadd.f32 %v3327, %v3551
      %v3598 = vadd.f32 %v3328, %v3558
      %v3599 = vadd.f32 %v3329, %v3563
      %v3600 = vsel %vm225, %v3568, 0.0
      %v3601 = vsel %vm225, %v3569, 0.0
      %v3602 = vadd.f32 %v3600, %v3601
      %v3603 = vsel %vm225, %v3570, 0.0
      %v3604 = vadd.f32 %v3602, %v3603
      %v3605 = vsel %vm225, %v3571, 0.0
      %v3606 = vadd.f32 %v3604, %v3605
      %v3607 = vsel %vm225, %v3572, 0.0
      %v3608 = vadd.f32 %v3606, %v3607
      %v3609 = vsel %vm225, %v3573, 0.0
      %v3610 = vadd.f32 %v3608, %v3609
      %v3611 = vsel %vm225, %v3574, 0.0
      %v3612 = vadd.f32 %v3610, %v3611
      %v3613 = vsel %vm225, %v3575, 0.0
      %v3614 = vadd.f32 %v3612, %v3613
      %v3615 = vsel %vm225, %v3576, 0.0
      %v3616 = vadd.f32 %v3614, %v3615
      %v3617 = vsel %vm225, %v3577, 0.0
      %v3618 = vadd.f32 %v3616, %v3617
      %v3619 = vsel %vm225, %v3578, 0.0
      %v3620 = vadd.f32 %v3618, %v3619
      %v3621 = vsel %vm225, %v3579, 0.0
      %v3622 = vadd.f32 %v3620, %v3621
      %v3623 = vsel %vm225, %v3580, 0.0
      %v3624 = vadd.f32 %v3622, %v3623
      %v3625 = vsel %vm225, %v3581, 0.0
      %v3626 = vadd.f32 %v3624, %v3625
      %v3627 = vsel %vm225, %v3582, 0.0
      %v3628 = vadd.f32 %v3626, %v3627
      %v3629 = vsel %vm225, %v3583, 0.0
      %v3630 = vadd.f32 %v3628, %v3629
      %v3631 = vsel %vm225, %v3584, 0.0
      %v3632 = vadd.f32 %v3630, %v3631
      %v3633 = vsel %vm225, %v3585, 0.0
      %v3634 = vadd.f32 %v3632, %v3633
      %v3635 = vsel %vm225, %v3586, 0.0
      %v3636 = vadd.f32 %v3634, %v3635
      %v3637 = vsel %vm225, %v3587, 0.0
      %v3638 = vadd.f32 %v3636, %v3637
      %v3639 = vsel %vm225, %v3588, 0.0
      %v3640 = vadd.f32 %v3638, %v3639
      %v3641 = vsel %vm225, %v3589, 0.0
      %v3642 = vadd.f32 %v3640, %v3641
      %v3643 = vsel %vm225, %v3590, 0.0
      %v3644 = vadd.f32 %v3642, %v3643
      %v3645 = vsel %vm225, %v3591, 0.0
      %v3646 = vadd.f32 %v3644, %v3645
      %v3647 = vsel %vm225, %v3592, 0.0
      %v3648 = vadd.f32 %v3646, %v3647
      %v3649 = vsel %vm225, %v3593, 0.0
      %v3650 = vadd.f32 %v3648, %v3649
      %v3651 = vsel %vm225, %v3594, 0.0
      %v3652 = vadd.f32 %v3650, %v3651
      %v3653 = vsel %vm225, %v3595, 0.0
      %v3654 = vadd.f32 %v3652, %v3653
      %v3655 = vsel %vm225, %v3596, 0.0
      %v3656 = vadd.f32 %v3654, %v3655
      %v3657 = vsel %vm225, %v3597, 0.0
      %v3658 = vadd.f32 %v3656, %v3657
      %v3659 = vsel %vm225, %v3598, 0.0
      %v3660 = vadd.f32 %v3658, %v3659
      %v3661 = vsel %vm225, %v3599, 0.0
      %v3662 = vadd.f32 %v3660, %v3661
      %v3663 = vrot.slane %v3662, 4
      %v3664 = vadd.f32 %v3662, %v3663
      %v3665 = vrot.slane %v3664, 2
      %v3666 = vadd.f32 %v3664, %v3665
      %v3667 = vrot.slane %v3666, 1
      %v3668 = vadd.f32 %v3666, %v3667
      %v3669 = vrcp.pop 256.0
      %v3670 = vmul.f32 %v3668, %v3669
      %v3671 = vsub.f32 %v3568, %v3670
      %v3672 = vsub.f32 %v3569, %v3670
      %v3673 = vsub.f32 %v3570, %v3670
      %v3674 = vsub.f32 %v3571, %v3670
      %v3675 = vsub.f32 %v3572, %v3670
      %v3676 = vsub.f32 %v3573, %v3670
      %v3677 = vsub.f32 %v3574, %v3670
      %v3678 = vsub.f32 %v3575, %v3670
      %v3679 = vsub.f32 %v3576, %v3670
      %v3680 = vsub.f32 %v3577, %v3670
      %v3681 = vsub.f32 %v3578, %v3670
      %v3682 = vsub.f32 %v3579, %v3670
      %v3683 = vsub.f32 %v3580, %v3670
      %v3684 = vsub.f32 %v3581, %v3670
      %v3685 = vsub.f32 %v3582, %v3670
      %v3686 = vsub.f32 %v3583, %v3670
      %v3687 = vsub.f32 %v3584, %v3670
      %v3688 = vsub.f32 %v3585, %v3670
      %v3689 = vsub.f32 %v3586, %v3670
      %v3690 = vsub.f32 %v3587, %v3670
      %v3691 = vsub.f32 %v3588, %v3670
      %v3692 = vsub.f32 %v3589, %v3670
      %v3693 = vsub.f32 %v3590, %v3670
      %v3694 = vsub.f32 %v3591, %v3670
      %v3695 = vsub.f32 %v3592, %v3670
      %v3696 = vsub.f32 %v3593, %v3670
      %v3697 = vsub.f32 %v3594, %v3670
      %v3698 = vsub.f32 %v3595, %v3670
      %v3699 = vsub.f32 %v3596, %v3670
      %v3700 = vsub.f32 %v3597, %v3670
      %v3701 = vsub.f32 %v3598, %v3670
      %v3702 = vsub.f32 %v3599, %v3670
      %v3703 = vmul.f32 %v3671, %v3671
      %v3704 = vmul.f32 %v3672, %v3672
      %v3705 = vmul.f32 %v3673, %v3673
      %v3706 = vmul.f32 %v3674, %v3674
      %v3707 = vmul.f32 %v3675, %v3675
      %v3708 = vmul.f32 %v3676, %v3676
      %v3709 = vmul.f32 %v3677, %v3677
      %v3710 = vmul.f32 %v3678, %v3678
      %v3711 = vmul.f32 %v3679, %v3679
      %v3712 = vmul.f32 %v3680, %v3680
      %v3713 = vmul.f32 %v3681, %v3681
      %v3714 = vmul.f32 %v3682, %v3682
      %v3715 = vmul.f32 %v3683, %v3683
      %v3716 = vmul.f32 %v3684, %v3684
      %v3717 = vmul.f32 %v3685, %v3685
      %v3718 = vmul.f32 %v3686, %v3686
      %v3719 = vmul.f32 %v3687, %v3687
      %v3720 = vmul.f32 %v3688, %v3688
      %v3721 = vmul.f32 %v3689, %v3689
      %v3722 = vmul.f32 %v3690, %v3690
      %v3723 = vmul.f32 %v3691, %v3691
      %v3724 = vmul.f32 %v3692, %v3692
      %v3725 = vmul.f32 %v3693, %v3693
      %v3726 = vmul.f32 %v3694, %v3694
      %v3727 = vmul.f32 %v3695, %v3695
      %v3728 = vmul.f32 %v3696, %v3696
      %v3729 = vmul.f32 %v3697, %v3697
      %v3730 = vmul.f32 %v3698, %v3698
      %v3731 = vmul.f32 %v3699, %v3699
      %v3732 = vmul.f32 %v3700, %v3700
      %v3733 = vmul.f32 %v3701, %v3701
      %v3734 = vmul.f32 %v3702, %v3702
      %v3735 = vsel %vm225, %v3703, 0.0
      %v3736 = vsel %vm225, %v3704, 0.0
      %v3737 = vadd.f32 %v3735, %v3736
      %v3738 = vsel %vm225, %v3705, 0.0
      %v3739 = vadd.f32 %v3737, %v3738
      %v3740 = vsel %vm225, %v3706, 0.0
      %v3741 = vadd.f32 %v3739, %v3740
      %v3742 = vsel %vm225, %v3707, 0.0
      %v3743 = vadd.f32 %v3741, %v3742
      %v3744 = vsel %vm225, %v3708, 0.0
      %v3745 = vadd.f32 %v3743, %v3744
      %v3746 = vsel %vm225, %v3709, 0.0
      %v3747 = vadd.f32 %v3745, %v3746
      %v3748 = vsel %vm225, %v3710, 0.0
      %v3749 = vadd.f32 %v3747, %v3748
      %v3750 = vsel %vm225, %v3711, 0.0
      %v3751 = vadd.f32 %v3749, %v3750
      %v3752 = vsel %vm225, %v3712, 0.0
      %v3753 = vadd.f32 %v3751, %v3752
      %v3754 = vsel %vm225, %v3713, 0.0
      %v3755 = vadd.f32 %v3753, %v3754
      %v3756 = vsel %vm225, %v3714, 0.0
      %v3757 = vadd.f32 %v3755, %v3756
      %v3758 = vsel %vm225, %v3715, 0.0
      %v3759 = vadd.f32 %v3757, %v3758
      %v3760 = vsel %vm225, %v3716, 0.0
      %v3761 = vadd.f32 %v3759, %v3760
      %v3762 = vsel %vm225, %v3717, 0.0
      %v3763 = vadd.f32 %v3761, %v3762
      %v3764 = vsel %vm225, %v3718, 0.0
      %v3765 = vadd.f32 %v3763, %v3764
      %v3766 = vsel %vm225, %v3719, 0.0
      %v3767 = vadd.f32 %v3765, %v3766
      %v3768 = vsel %vm225, %v3720, 0.0
      %v3769 = vadd.f32 %v3767, %v3768
      %v3770 = vsel %vm225, %v3721, 0.0
      %v3771 = vadd.f32 %v3769, %v3770
      %v3772 = vsel %vm225, %v3722, 0.0
      %v3773 = vadd.f32 %v3771, %v3772
      %v3774 = vsel %vm225, %v3723, 0.0
      %v3775 = vadd.f32 %v3773, %v3774
      %v3776 = vsel %vm225, %v3724, 0.0
      %v3777 = vadd.f32 %v3775, %v3776
      %v3778 = vsel %vm225, %v3725, 0.0
      %v3779 = vadd.f32 %v3777, %v3778
      %v3780 = vsel %vm225, %v3726, 0.0
      %v3781 = vadd.f32 %v3779, %v3780
      %v3782 = vsel %vm225, %v3727, 0.0
      %v3783 = vadd.f32 %v3781, %v3782
      %v3784 = vsel %vm225, %v3728, 0.0
      %v3785 = vadd.f32 %v3783, %v3784
      %v3786 = vsel %vm225, %v3729, 0.0
      %v3787 = vadd.f32 %v3785, %v3786
      %v3788 = vsel %vm225, %v3730, 0.0
      %v3789 = vadd.f32 %v3787, %v3788
      %v3790 = vsel %vm225, %v3731, 0.0
      %v3791 = vadd.f32 %v3789, %v3790
      %v3792 = vsel %vm225, %v3732, 0.0
      %v3793 = vadd.f32 %v3791, %v3792
      %v3794 = vsel %vm225, %v3733, 0.0
      %v3795 = vadd.f32 %v3793, %v3794
      %v3796 = vsel %vm225, %v3734, 0.0
      %v3797 = vadd.f32 %v3795, %v3796
      %v3798 = vrot.slane %v3797, 4
      %v3799 = vadd.f32 %v3797, %v3798
      %v3800 = vrot.slane %v3799, 2
      %v3801 = vadd.f32 %v3799, %v3800
      %v3802 = vrot.slane %v3801, 1
      %v3803 = vadd.f32 %v3801, %v3802
      %v3804 = vmul.f32 %v3803, %v3669
      %v3805 = vadd.f32 %v3804, 1e-05
      %v3806 = vrsqrt.pop %v3805
      %v3807 = vmul.f32 %v3671, %v3806
      %v3808 = vmul.f32 %v3672, %v3806
      %v3809 = vmul.f32 %v3673, %v3806
      %v3810 = vmul.f32 %v3674, %v3806
      %v3811 = vmul.f32 %v3675, %v3806
      %v3812 = vmul.f32 %v3676, %v3806
      %v3813 = vmul.f32 %v3677, %v3806
      %v3814 = vmul.f32 %v3678, %v3806
      %v3815 = vmul.f32 %v3679, %v3806
      %v3816 = vmul.f32 %v3680, %v3806
      %v3817 = vmul.f32 %v3681, %v3806
      %v3818 = vmul.f32 %v3682, %v3806
      %v3819 = vmul.f32 %v3683, %v3806
      %v3820 = vmul.f32 %v3684, %v3806
      %v3821 = vmul.f32 %v3685, %v3806
      %v3822 = vmul.f32 %v3686, %v3806
      %v3823 = vmul.f32 %v3687, %v3806
      %v3824 = vmul.f32 %v3688, %v3806
      %v3825 = vmul.f32 %v3689, %v3806
      %v3826 = vmul.f32 %v3690, %v3806
      %v3827 = vmul.f32 %v3691, %v3806
      %v3828 = vmul.f32 %v3692, %v3806
      %v3829 = vmul.f32 %v3693, %v3806
      %v3830 = vmul.f32 %v3694, %v3806
      %v3831 = vmul.f32 %v3695, %v3806
      %v3832 = vmul.f32 %v3696, %v3806
      %v3833 = vmul.f32 %v3697, %v3806
      %v3834 = vmul.f32 %v3698, %v3806
      %v3835 = vmul.f32 %v3699, %v3806
      %v3836 = vmul.f32 %v3700, %v3806
      %v3837 = vmul.f32 %v3701, %v3806
      %v3838 = vmul.f32 %v3702, %v3806
      %v3839 = vmax.f32 %v3807, 0.0
      %v3840 = vmax.f32 %v3808, 0.0
      %v3841 = vmax.f32 %v3809, 0.0
      %v3842 = vmax.f32 %v3810, 0.0
      %v3843 = vmax.f32 %v3811, 0.0
      %v3844 = vmax.f32 %v3812, 0.0
      %v3845 = vmax.f32 %v3813, 0.0
      %v3846 = vmax.f32 %v3814, 0.0
      %v3847 = vmax.f32 %v3815, 0.0
      %v3848 = vmax.f32 %v3816, 0.0
      %v3849 = vmax.f32 %v3817, 0.0
      %v3850 = vmax.f32 %v3818, 0.0
      %v3851 = vmax.f32 %v3819, 0.0
      %v3852 = vmax.f32 %v3820, 0.0
      %v3853 = vmax.f32 %v3821, 0.0
      %v3854 = vmax.f32 %v3822, 0.0
      %v3855 = vmax.f32 %v3823, 0.0
      %v3856 = vmax.f32 %v3824, 0.0
      %v3857 = vmax.f32 %v3825, 0.0
      %v3858 = vmax.f32 %v3826, 0.0
      %v3859 = vmax.f32 %v3827, 0.0
      %v3860 = vmax.f32 %v3828, 0.0
      %v3861 = vmax.f32 %v3829, 0.0
      %v3862 = vmax.f32 %v3830, 0.0
      %v3863 = vmax.f32 %v3831, 0.0
      %v3864 = vmax.f32 %v3832, 0.0
      %v3865 = vmax.f32 %v3833, 0.0
      %v3866 = vmax.f32 %v3834, 0.0
      %v3867 = vmax.f32 %v3835, 0.0
      %v3868 = vmax.f32 %v3836, 0.0
      %v3869 = vmax.f32 %v3837, 0.0
      %v3870 = vmax.f32 %v3838, 0.0
      %3871 = vst.msk [vmem:[%s229 + $0x1] sm:$0xff] %vm225, %v3839
      %3872 = vst.msk [vmem:[%s229 + $0x9] sm:$0xff] %vm225, %v3840
      %3873 = vst.msk [vmem:[%s229 + $0x19] sm:$0xff] %vm225, %v3841
      %3874 = vst.msk [vmem:[%s229 + $0x21] sm:$0xff] %vm225, %v3842
      %3875 = vst.msk [vmem:[%s229 + $0x31] sm:$0xff] %vm225, %v3843
      %3876 = vst.msk [vmem:[%s229 + $0x39] sm:$0xff] %vm225, %v3844
      %3877 = vst.msk [vmem:[%s229 + $0x49] sm:$0xff] %vm225, %v3845
      %3878 = vst.msk [vmem:[%s229 + $0x51] sm:$0xff] %vm225, %v3846
      %3879 = vst.msk [vmem:[%s229 + $0x61] sm:$0xff] %vm225, %v3847
      %3880 = vst.msk [vmem:[%s229 + $0x69] sm:$0xff] %vm225, %v3848
      %3881 = vst.msk [vmem:[%s229 + $0x79] sm:$0xff] %vm225, %v3849
      %3882 = vst.msk [vmem:[%s229 + $0x81] sm:$0xff] %vm225, %v3850
      %3883 = vst.msk [vmem:[%s229 + $0x91] sm:$0xff] %vm225, %v3851
      %3884 = vst.msk [vmem:[%s229 + $0x99] sm:$0xff] %vm225, %v3852
      %3885 = vst.msk [vmem:[%s229 + $0xa9] sm:$0xff] %vm225, %v3853
      %3886 = vst.msk [vmem:[%s229 + $0xb1] sm:$0xff] %vm225, %v3854
      %3887 = vst.msk [vmem:[%s229 + $0xc1] sm:$0xff] %vm225, %v3855
      %3888 = vst.msk [vmem:[%s229 + $0xc9] sm:$0xff] %vm225, %v3856
      %3889 = vst.msk [vmem:[%s229 + $0xd9] sm:$0xff] %vm225, %v3857
      %3890 = vst.msk [vmem:[%s229 + $0xe1] sm:$0xff] %vm225, %v3858
      %3891 = vst.msk [vmem:[%s229 + $0xf1] sm:$0xff] %vm225, %v3859
      %3892 = vst.msk [vmem:[%s229 + $0xf9] sm:$0xff] %vm225, %v3860
      %3893 = vst.msk [vmem:[%s229 + $0x109] sm:$0xff] %vm225, %v3861
      %3894 = vst.msk [vmem:[%s229 + $0x111] sm:$0xff] %vm225, %v3862
      %3895 = vst.msk [vmem:[%s229 + $0x121] sm:$0xff] %vm225, %v3863
      %3896 = vst.msk [vmem:[%s229 + $0x129] sm:$0xff] %vm225, %v3864
      %3897 = vst.msk [vmem:[%s229 + $0x139] sm:$0xff] %vm225, %v3865
      %3898 = vst.msk [vmem:[%s229 + $0x141] sm:$0xff] %vm225, %v3866
      %3899 = vst.msk [vmem:[%s229 + $0x151] sm:$0xff] %vm225, %v3867
      %3900 = vst.msk [vmem:[%s229 + $0x159] sm:$0xff] %vm225, %v3868
      %3901 = vst.msk [vmem:[%s229 + $0x169] sm:$0xff] %vm225, %v3869
      %3902 = vst.msk [vmem:[%s229 + $0x171] sm:$0xff] %vm225, %v3870
      %3903 = vst.msk [vmem:[#allocation2 + $0x1] sm:$0xff] %vm225, %v3841
      %3904 = vst.msk [vmem:[#allocation2 + $0x9] sm:$0xff] %vm225, %v3842
      %3905 = vst.msk [vmem:[%s264 + $0x1] sm:$0xff] %vm225, %v3867
      %3906 = vst.msk [vmem:[%s264 + $0x9] sm:$0xff] %vm225, %v3868
      %v3907 = vld [vmem:[#allocation2 + $0x2] sm:$0x1]
      %v3908 = vld [vmem:[#allocation2 + $0x1a] sm:$0x1]
      %v3909 = vld [vmem:[#allocation2 + $0x32] sm:$0x1]
      %v3910 = vld [vmem:[#allocation2 + $0x4a] sm:$0x1]
      %v3911 = vld [vmem:[#allocation2 + $0x62] sm:$0x1]
      %v3912 = vld [vmem:[#allocation2 + $0x7a] sm:$0x1]
      %v3913 = vld [vmem:[#allocation2 + $0x92] sm:$0x1]
      %v3914 = vld [vmem:[#allocation2 + $0xaa] sm:$0x1]
      %v3915 = vld [vmem:[#allocation2 + $0xc2] sm:$0x1]
      %v3916 = vld [vmem:[#allocation2 + $0xda] sm:$0x1]
      %v3917 = vld [vmem:[#allocation2 + $0xf2] sm:$0x1]
      %v3918 = vld [vmem:[#allocation2 + $0x10a] sm:$0x1]
      %v3919 = vld [vmem:[#allocation2 + $0x122] sm:$0x1]
      %v3920 = vld [vmem:[#allocation2 + $0x13a] sm:$0x1]
      %v3921 = vld [vmem:[#allocation2 + $0x152] sm:$0x1]
      %v3922 = vld [vmem:[#allocation2 + $0x16a] sm:$0x1]
      %v3923 = vld [vmem:[#allocation2 + $0x182] sm:$0x1]
      %v3924 = vld [vmem:[#allocation2 + $0x19a] sm:$0x1]
      %v3925 = vld [vmem:[#allocation2 + $0x1b2] sm:$0x1]
      %3926 = vst.msk [vmem:[#allocation2] sm:$0x1] %vm286, %v3907
      %3927 = vst.msk [vmem:[#allocation2 + $0x18] sm:$0x1] %vm286, %v3908
      %3928 = vst.msk [vmem:[#allocation2 + $0x30] sm:$0x1] %vm286, %v3909
      %3929 = vst.msk [vmem:[#allocation2 + $0x48] sm:$0x1] %vm286, %v3910
      %3930 = vst.msk [vmem:[#allocation2 + $0x60] sm:$0x1] %vm286, %v3911
      %3931 = vst.msk [vmem:[#allocation2 + $0x78] sm:$0x1] %vm286, %v3912
      %3932 = vst.msk [vmem:[#allocation2 + $0x90] sm:$0x1] %vm286, %v3913
      %3933 = vst.msk [vmem:[#allocation2 + $0xa8] sm:$0x1] %vm286, %v3914
      %3934 = vst.msk [vmem:[#allocation2 + $0xc0] sm:$0x1] %vm286, %v3915
      %3935 = vst.msk [vmem:[#allocation2 + $0xd8] sm:$0x1] %vm286, %v3916
      %3936 = vst.msk [vmem:[#allocation2 + $0xf0] sm:$0x1] %vm286, %v3917
      %3937 = vst.msk [vmem:[#allocation2 + $0x108] sm:$0x1] %vm286, %v3918
      %3938 = vst.msk [vmem:[#allocation2 + $0x120] sm:$0x1] %vm286, %v3919
      %3939 = vst.msk [vmem:[#allocation2 + $0x138] sm:$0x1] %vm286, %v3920
      %3940 = vst.msk [vmem:[#allocation2 + $0x150] sm:$0x1] %vm286, %v3921
      %3941 = vst.msk [vmem:[#allocation2 + $0x168] sm:$0x1] %vm286, %v3922
      %3942 = vst.msk [vmem:[#allocation2 + $0x180] sm:$0x1] %vm286, %v3923
      %3943 = vst.msk [vmem:[#allocation2 + $0x198] sm:$0x1] %vm286, %v3924
      %3944 = vst.msk [vmem:[#allocation2 + $0x1b0] sm:$0x1] %vm286, %v3925
      %v3945 = vld [vmem:[#allocation2 + $0xf] sm:$0x1]
      %v3946 = vld [vmem:[#allocation2 + $0x27] sm:$0x1]
      %v3947 = vld [vmem:[#allocation2 + $0x3f] sm:$0x1]
      %v3948 = vld [vmem:[#allocation2 + $0x57] sm:$0x1]
      %v3949 = vld [vmem:[#allocation2 + $0x6f] sm:$0x1]
      %v3950 = vld [vmem:[#allocation2 + $0x87] sm:$0x1]
      %v3951 = vld [vmem:[#allocation2 + $0x9f] sm:$0x1]
      %v3952 = vld [vmem:[#allocation2 + $0xb7] sm:$0x1]
      %v3953 = vld [vmem:[#allocation2 + $0xcf] sm:$0x1]
      %v3954 = vld [vmem:[#allocation2 + $0xe7] sm:$0x1]
      %v3955 = vld [vmem:[#allocation2 + $0xff] sm:$0x1]
      %v3956 = vld [vmem:[#allocation2 + $0x117] sm:$0x1]
      %v3957 = vld [vmem:[#allocation2 + $0x12f] sm:$0x1]
      %v3958 = vld [vmem:[#allocation2 + $0x147] sm:$0x1]
      %v3959 = vld [vmem:[#allocation2 + $0x15f] sm:$0x1]
      %v3960 = vld [vmem:[#allocation2 + $0x177] sm:$0x1]
      %v3961 = vld [vmem:[#allocation2 + $0x18f] sm:$0x1]
      %v3962 = vld [vmem:[#allocation2 + $0x1a7] sm:$0x1]
      %v3963 = vld [vmem:[#allocation2 + $0x1bf] sm:$0x1]
      %3964 = vst.msk [vmem:[#allocation2 + $0x11] sm:$0x1] %vm286, %v3945
      %3965 = vst.msk [vmem:[#allocation2 + $0x29] sm:$0x1] %vm286, %v3946
      %3966 = vst.msk [vmem:[#allocation2 + $0x41] sm:$0x1] %vm286, %v3947
      %3967 = vst.msk [vmem:[#allocation2 + $0x59] sm:$0x1] %vm286, %v3948
      %3968 = vst.msk [vmem:[#allocation2 + $0x71] sm:$0x1] %vm286, %v3949
      %3969 = vst.msk [vmem:[#allocation2 + $0x89] sm:$0x1] %vm286, %v3950
      %3970 = vst.msk [vmem:[#allocation2 + $0xa1] sm:$0x1] %vm286, %v3951
      %3971 = vst.msk [vmem:[#allocation2 + $0xb9] sm:$0x1] %vm286, %v3952
      %3972 = vst.msk [vmem:[#allocation2 + $0xd1] sm:$0x1] %vm286, %v3953
      %3973 = vst.msk [vmem:[#allocation2 + $0xe9] sm:$0x1] %vm286, %v3954
      %3974 = vst.msk [vmem:[#allocation2 + $0x101] sm:$0x1] %vm286, %v3955
      %3975 = vst.msk [vmem:[#allocation2 + $0x119] sm:$0x1] %vm286, %v3956
      %3976 = vst.msk [vmem:[#allocation2 + $0x131] sm:$0x1] %vm286, %v3957
      %3977 = vst.msk [vmem:[#allocation2 + $0x149] sm:$0x1] %vm286, %v3958
      %3978 = vst.msk [vmem:[#allocation2 + $0x161] sm:$0x1] %vm286, %v3959
      %3979 = vst.msk [vmem:[#allocation2 + $0x179] sm:$0x1] %vm286, %v3960
      %3980 = vst.msk [vmem:[#allocation2 + $0x191] sm:$0x1] %vm286, %v3961
      %3981 = vst.msk [vmem:[#allocation2 + $0x1a9] sm:$0x1] %vm286, %v3962
      %3982 = vst.msk [vmem:[#allocation2 + $0x1c1] sm:$0x1] %vm286, %v3963
      %v3983 = vld [vmem:[#allocation2] sm:$0xff]
      %v3984 = vld [vmem:[#allocation2 + $0x8] sm:$0xff]
      %v3985 = vld [vmem:[#allocation2 + $0x10] sm:$0xff]
      %v3986 = vld [vmem:[#allocation2 + $0x18] sm:$0xff]
      %v3987 = vld [vmem:[#allocation2 + $0x20] sm:$0xff]
      %v3988 = vld [vmem:[#allocation2 + $0x28] sm:$0xff]
      %v3989 = vld [vmem:[#allocation2 + $0x30] sm:$0xff]
      %v3990 = vld [vmem:[#allocation2 + $0x38] sm:$0xff]
      %v3991 = vld [vmem:[#allocation2 + $0x40] sm:$0xff]
      %v3992 = vld [vmem:[#allocation2 + $0x48] sm:$0xff]
      %v3993 = vld [vmem:[#allocation2 + $0x50] sm:$0xff]
      %v3994 = vld [vmem:[#allocation2 + $0x58] sm:$0xff]
      %v3995 = vld [vmem:[#allocation2 + $0x60] sm:$0xff]
      %v3996 = vld [vmem:[#allocation2 + $0x68] sm:$0xff]
      %v3997 = vld [vmem:[#allocation2 + $0x70] sm:$0xff]
      %v3998 = vld [vmem:[#allocation2 + $0x78] sm:$0xff]
      %v3999 = vld [vmem:[#allocation2 + $0x80] sm:$0xff]
      %v4000 = vld [vmem:[#allocation2 + $0x88] sm:$0xff]
      %v4001 = vld [vmem:[#allocation2 + $0x90] sm:$0xff]
      %v4002 = vld [vmem:[#allocation2 + $0x98] sm:$0xff]
      %v4003 = vld [vmem:[#allocation2 + $0xa0] sm:$0xff]
      %v4004 = vld [vmem:[#allocation2 + $0xa8] sm:$0xff]
      %v4005 = vld [vmem:[#allocation2 + $0xb0] sm:$0xff]
      %v4006 = vld [vmem:[#allocation2 + $0xb8] sm:$0xff]
      %v4007 = vld [vmem:[#allocation2 + $0xc0] sm:$0xff]
      %v4008 = vld [vmem:[#allocation2 + $0xc8] sm:$0xff]
      %v4009 = vld [vmem:[#allocation2 + $0xd0] sm:$0xff]
      %v4010 = vld [vmem:[#allocation2 + $0xd8] sm:$0xff]
      %v4011 = vld [vmem:[#allocation2 + $0xe0] sm:$0xff]
      %v4012 = vld [vmem:[#allocation2 + $0xe8] sm:$0xff]
      %v4013 = vld [vmem:[#allocation2 + $0xf0] sm:$0xff]
      %v4014 = vld [vmem:[#allocation2 + $0xf8] sm:$0xff]
      %v4015 = vld [vmem:[#allocation2 + $0x100] sm:$0xff]
      %v4016 = vld [vmem:[#allocation2 + $0x108] sm:$0xff]
      %v4017 = vld [vmem:[#allocation2 + $0x110] sm:$0xff]
      %v4018 = vld [vmem:[#allocation2 + $0x118] sm:$0xff]
      %v4019 = vld [vmem:[#allocation2 + $0x120] sm:$0xff]
      %v4020 = vld [vmem:[#allocation2 + $0x128] sm:$0xff]
      %v4021 = vld [vmem:[#allocation2 + $0x130] sm:$0xff]
      %v4022 = vld [vmem:[#allocation2 + $0x138] sm:$0xff]
      %v4023 = vld [vmem:[#allocation2 + $0x140] sm:$0xff]
      %v4024 = vld [vmem:[#allocation2 + $0x148] sm:$0xff]
      %v4025 = vld [vmem:[#allocation2 + $0x150] sm:$0xff]
      %v4026 = vld [vmem:[#allocation2 + $0x158] sm:$0xff]
      %v4027 = vld [vmem:[#allocation2 + $0x160] sm:$0xff]
      %v4028 = vld [vmem:[#allocation2 + $0x168] sm:$0xff]
      %v4029 = vld [vmem:[#allocation2 + $0x170] sm:$0xff]
      %v4030 = vld [vmem:[#allocation2 + $0x178] sm:$0xff]
      %v4031 = vld [vmem:[#allocation2 + $0x180] sm:$0xff]
      %v4032 = vld [vmem:[#allocation2 + $0x188] sm:$0xff]
      %v4033 = vld [vmem:[#allocation2 + $0x190] sm:$0xff]
      %v4034 = vld [vmem:[#allocation2 + $0x198] sm:$0xff]
      %v4035 = vld [vmem:[#allocation2 + $0x1a0] sm:$0xff]
      %v4036 = vld [vmem:[#allocation2 + $0x1a8] sm:$0xff]
      %v4037 = vld [vmem:[#allocation2 + $0x1b0] sm:$0xff]
      %v4038 = vpack.c.bf16 %v3984, %v3983
      %v4039 = vpack.c.bf16 %v3986, %v3985
      %v4040 = vpack.c.bf16 %v3988, %v3987
      %v4041 = vpack.c.bf16 %v3990, %v3989
      %v4042 = vpack.c.bf16 %v3992, %v3991
      %v4043 = vpack.c.bf16 %v3994, %v3993
      %v4044 = vpack.c.bf16 %v3996, %v3995
      %v4045 = vpack.c.bf16 %v3998, %v3997
      %v4046 = vpack.c.bf16 %v4000, %v3999
      %v4047 = vpack.c.bf16 %v4002, %v4001
      %v4048 = vpack.c.bf16 %v4004, %v4003
      %v4049 = vpack.c.bf16 %v4006, %v4005
      %v4050 = vpack.c.bf16 %v4008, %v4007
      %v4051 = vpack.c.bf16 %v4010, %v4009
      %v4052 = vpack.c.bf16 %v4012, %v4011
      %v4053 = vpack.c.bf16 %v4014, %v4013
      %v4054 = vpack.c.bf16 %v4016, %v4015
      %v4055 = vpack.c.bf16 %v4018, %v4017
      %v4056 = vpack.c.bf16 %v4020, %v4019
      %v4057 = vpack.c.bf16 %v4022, %v4021
      %v4058 = vpack.c.bf16 %v4024, %v4023
      %v4059 = vpack.c.bf16 %v4026, %v4025
      %v4060 = vpack.c.bf16 %v4028, %v4027
      %v4061 = vpack.c.bf16 %v4030, %v4029
      %v4062 = vld [vmem:[%s2] sm:$0x3]
      %v4063 = vpack.c.bf16 %v3987, %v3986
      %v4064 = vpack.c.bf16 %v3989, %v3988
      %v4065 = vpack.c.bf16 %v3991, %v3990
      %v4066 = vpack.c.bf16 %v3993, %v3992
      %v4067 = vpack.c.bf16 %v3995, %v3994
      %v4068 = vpack.c.bf16 %v3997, %v3996
      %v4069 = vpack.c.bf16 %v3999, %v3998
      %v4070 = vpack.c.bf16 %v4001, %v4000
      %v4071 = vpack.c.bf16 %v4003, %v4002
      %v4072 = vpack.c.bf16 %v4005, %v4004
      %v4073 = vpack.c.bf16 %v4007, %v4006
      %v4074 = vpack.c.bf16 %v4009, %v4008
      %v4075 = vpack.c.bf16 %v4011, %v4010
      %v4076 = vpack.c.bf16 %v4013, %v4012
      %v4077 = vpack.c.bf16 %v4015, %v4014
      %v4078 = vpack.c.bf16 %v4017, %v4016
      %v4079 = vpack.c.bf16 %v4019, %v4018
      %v4080 = vpack.c.bf16 %v4021, %v4020
      %v4081 = vpack.c.bf16 %v4023, %v4022
      %v4082 = vpack.c.bf16 %v4025, %v4024
      %v4083 = vpack.c.bf16 %v4027, %v4026
      %v4084 = vpack.c.bf16 %v4029, %v4028
      %v4085 = vpack.c.bf16 %v4031, %v4030
      %v4086 = vpack.c.bf16 %v4033, %v4032
      %s4087 = scalar_lea.vmem %s2, 6
      %v4088 = vld [vmem:[%s4087] sm:$0x3]
      %v4090 = vsel %vm225, %v4063, 0
      %v4093 = vsel %vm225, %v4064, 0
      %v4096 = vsel %vm225, %v4065, 0
      %v4099 = vsel %vm225, %v4066, 0
      %v4102 = vsel %vm225, %v4067, 0
      %v4105 = vsel %vm225, %v4068, 0
      %v4108 = vsel %vm225, %v4069, 0
      %v4111 = vsel %vm225, %v4070, 0
      %v4114 = vsel %vm225, %v4071, 0
      %v4117 = vsel %vm225, %v4072, 0
      %v4120 = vsel %vm225, %v4073, 0
      %v4123 = vsel %vm225, %v4074, 0
      %v4126 = vsel %vm225, %v4075, 0
      %v4129 = vsel %vm225, %v4076, 0
      %v4132 = vsel %vm225, %v4077, 0
      %v4135 = vsel %vm225, %v4078, 0
      %v4138 = vsel %vm225, %v4079, 0
      %v4141 = vsel %vm225, %v4080, 0
      %v4144 = vsel %vm225, %v4081, 0
      %v4147 = vsel %vm225, %v4082, 0
      %v4150 = vsel %vm225, %v4083, 0
      %v4153 = vsel %vm225, %v4084, 0
      %v4156 = vsel %vm225, %v4085, 0
      %v4159 = vsel %vm225, %v4086, 0
      %v4162 = vsel %vm522, %v4088, 0
      %4164 = vmatprep.subr.bf16.mxu0 0
      %4165 = vmatpush1.bf16.msra.mxu0 %v4162
      %4166 = vmatprep.subr.bf16.mxu0 0
      %4167 = vmatpush1.bf16.msra.mxu0 0
      %4168 = vmatprep.subr.bf16.mxu0 0
      %4169 = vmatpush1.bf16.msra.mxu0 0
      %4170 = vmatprep.subr.bf16.mxu0 0
      %4171 = vmatpush1.bf16.msra.mxu0 0
      %4172 = vmatprep.subr.bf16.mxu0 0
      %4173 = vmatpush1.bf16.msra.mxu0 0
      %4174 = vmatprep.subr.bf16.mxu0 0
      %4175 = vmatpush1.bf16.msra.mxu0 0
      %4176 = vmatprep.subr.bf16.mxu0 0
      %4177 = vmatpush1.bf16.msra.mxu0 0
      %4178 = vmatprep.subr.bf16.mxu0 0
      %4179 = vmatpush1.bf16.msra.mxu0 0
      %4180 = vmatprep.subr.bf16.mxu0 0
      %4181 = vmatpush1.bf16.msra.mxu0 0
      %4182 = vmatprep.subr.bf16.mxu0 0
      %4183 = vmatpush1.bf16.msra.mxu0 0
      %4184 = vmatprep.subr.bf16.mxu0 0
      %4185 = vmatpush1.bf16.msra.mxu0 0
      %4186 = vmatprep.subr.bf16.mxu0 0
      %4187 = vmatpush1.bf16.msra.mxu0 0
      %4188 = vmatprep.subr.bf16.mxu0 0
      %4189 = vmatpush1.bf16.msra.mxu0 0
      %4190 = vmatprep.subr.bf16.mxu0 0
      %4191 = vmatpush1.bf16.msra.mxu0 0
      %4192 = vmatprep.subr.bf16.mxu0 0
      %4193 = vmatpush1.bf16.msra.mxu0 0
      %4194 = vmatprep.subr.bf16.mxu0 0
      %4195 = vmatpush1.bf16.msra.mxu0 0
      %4196 = vmatprep.mubr.bf16.mxu0 0
      %4197 = vmatmul.mubr.bf16.gmra.mrb[0].mxu0 %v4090
      %v4198 = vpop.f32.mrb[0].mxu0
      %v4199 = vadd.f32 0.0, %v4198
      %v4200 = vpop.f32.mrb[0].mxu0
      %v4201 = vpop.f32.mrb[0].mxu0
      %v4202 = vadd.f32 0.0, %v4201
      %v4203 = vpop.f32.mrb[0].mxu0
      %4204 = vmatprep.mubr.bf16.mxu0 0
      %4205 = vmatmul.mubr.bf16.gmra.mrb[0].mxu0 %v4093
      %v4206 = vpop.f32.mrb[0].mxu0
      %v4207 = vpop.f32.mrb[0].mxu0
      %v4208 = vpop.f32.mrb[0].mxu0
      %v4209 = vadd.f32 0.0, %v4208
      %v4210 = vpop.f32.mrb[0].mxu0
      %4211 = vmatprep.mubr.bf16.mxu0 0
      %4212 = vmatmul.mubr.bf16.gmra.mrb[0].mxu0 %v4096
      %v4213 = vpop.f32.mrb[0].mxu0
      %v4214 = vadd.f32 0.0, %v4213
      %v4215 = vpop.f32.mrb[0].mxu0
      %v4216 = vpop.f32.mrb[0].mxu0
      %v4217 = vpop.f32.mrb[0].mxu0
      %4218 = vmatprep.mubr.bf16.mxu0 0
      %4219 = vmatmul.mubr.bf16.gmra.mrb[0].mxu0 %v4099
      %v4220 = vpop.f32.mrb[0].mxu0
      %v4221 = vadd.f32 0.0, %v4220
      %v4222 = vpop.f32.mrb[0].mxu0
      %v4223 = vpop.f32.mrb[0].mxu0
      %v4224 = vadd.f32 0.0, %v4223
      %v4225 = vpop.f32.mrb[0].mxu0
      %4226 = vmatprep.mubr.bf16.mxu0 0
      %4227 = vmatmul.mubr.bf16.gmra.mrb[0].mxu0 %v4102
      %v4228 = vpop.f32.mrb[0].mxu0
      %v4229 = vpop.f32.mrb[0].mxu0
      %v4230 = vpop.f32.mrb[0].mxu0
      %v4231 = vadd.f32 0.0, %v4230
      %v4232 = vpop.f32.mrb[0].mxu0
      %4233 = vmatprep.mubr.bf16.mxu0 0
      %4234 = vmatmul.mubr.bf16.gmra.mrb[0].mxu0 %v4105
      %v4235 = vpop.f32.mrb[0].mxu0
      %v4236 = vadd.f32 0.0, %v4235
      %v4237 = vpop.f32.mrb[0].mxu0
      %v4238 = vpop.f32.mrb[0].mxu0
      %v4239 = vpop.f32.mrb[0].mxu0
      %4240 = vmatprep.mubr.bf16.mxu0 0
      %4241 = vmatmul.mubr.bf16.gmra.mrb[0].mxu0 %v4108
      %v4242 = vpop.f32.mrb[0].mxu0
      %v4243 = vadd.f32 0.0, %v4242
      %v4244 = vpop.f32.mrb[0].mxu0
      %v4245 = vpop.f32.mrb[0].mxu0
      %v4246 = vadd.f32 0.0, %v4245
      %v4247 = vpop.f32.mrb[0].mxu0
      %4248 = vmatprep.mubr.bf16.mxu0 0
      %4249 = vmatmul.mubr.bf16.gmra.mrb[0].mxu0 %v4111
      %v4250 = vpop.f32.mrb[0].mxu0
      %v4251 = vpop.f32.mrb[0].mxu0
      %v4252 = vpop.f32.mrb[0].mxu0
      %v4253 = vadd.f32 0.0, %v4252
      %v4254 = vpop.f32.mrb[0].mxu0
      %4255 = vmatprep.mubr.bf16.mxu0 0
      %4256 = vmatmul.mubr.bf16.gmra.mrb[0].mxu0 %v4114
      %v4257 = vpop.f32.mrb[0].mxu0
      %v4258 = vadd.f32 0.0, %v4257
      %v4259 = vpop.f32.mrb[0].mxu0
      %v4260 = vpop.f32.mrb[0].mxu0
      %v4261 = vpop.f32.mrb[0].mxu0
      %4262 = vmatprep.mubr.bf16.mxu0 0
      %4263 = vmatmul.mubr.bf16.gmra.mrb[0].mxu0 %v4117
      %v4264 = vpop.f32.mrb[0].mxu0
      %v4265 = vadd.f32 0.0, %v4264
      %v4266 = vpop.f32.mrb[0].mxu0
      %v4267 = vpop.f32.mrb[0].mxu0
      %v4268 = vadd.f32 0.0, %v4267
      %v4269 = vpop.f32.mrb[0].mxu0
      %4270 = vmatprep.mubr.bf16.mxu0 0
      %4271 = vmatmul.mubr.bf16.gmra.mrb[0].mxu0 %v4120
      %v4272 = vpop.f32.mrb[0].mxu0
      %v4273 = vpop.f32.mrb[0].mxu0
      %v4274 = vpop.f32.mrb[0].mxu0
      %v4275 = vadd.f32 0.0, %v4274
      %v4276 = vpop.f32.mrb[0].mxu0
      %4277 = vmatprep.mubr.bf16.mxu0 0
      %4278 = vmatmul.mubr.bf16.gmra.mrb[0].mxu0 %v4123
      %v4279 = vpop.f32.mrb[0].mxu0
      %v4280 = vadd.f32 0.0, %v4279
      %v4281 = vpop.f32.mrb[0].mxu0
      %v4282 = vpop.f32.mrb[0].mxu0
      %v4283 = vpop.f32.mrb[0].mxu0
      %4284 = vmatprep.mubr.bf16.mxu0 0
      %4285 = vmatmul.mubr.bf16.gmra.mrb[0].mxu0 %v4126
      %v4286 = vpop.f32.mrb[0].mxu0
      %v4287 = vadd.f32 0.0, %v4286
      %v4288 = vpop.f32.mrb[0].mxu0
      %v4289 = vpop.f32.mrb[0].mxu0
      %v4290 = vadd.f32 0.0, %v4289
      %v4291 = vpop.f32.mrb[0].mxu0
      %4292 = vmatprep.mubr.bf16.mxu0 0
      %4293 = vmatmul.mubr.bf16.gmra.mrb[0].mxu0 %v4129
      %v4294 = vpop.f32.mrb[0].mxu0
      %v4295 = vpop.f32.mrb[0].mxu0
      %v4296 = vpop.f32.mrb[0].mxu0
      %v4297 = vadd.f32 0.0, %v4296
      %v4298 = vpop.f32.mrb[0].mxu0
      %4299 = vmatprep.mubr.bf16.mxu0 0
      %4300 = vmatmul.mubr.bf16.gmra.mrb[0].mxu0 %v4132
      %v4301 = vpop.f32.mrb[0].mxu0
      %v4302 = vadd.f32 0.0, %v4301
      %v4303 = vpop.f32.mrb[0].mxu0
      %v4304 = vpop.f32.mrb[0].mxu0
      %v4305 = vpop.f32.mrb[0].mxu0
      %4306 = vmatprep.mubr.bf16.mxu0 0
      %4307 = vmatmul.mubr.bf16.gmra.mrb[0].mxu0 %v4135
      %v4308 = vpop.f32.mrb[0].mxu0
      %v4309 = vadd.f32 0.0, %v4308
      %v4310 = vpop.f32.mrb[0].mxu0
      %v4311 = vpop.f32.mrb[0].mxu0
      %v4312 = vadd.f32 0.0, %v4311
      %v4313 = vpop.f32.mrb[0].mxu0
      %4314 = vmatprep.mubr.bf16.mxu0 0
      %4315 = vmatmul.mubr.bf16.gmra.mrb[0].mxu0 %v4138
      %v4316 = vpop.f32.mrb[0].mxu0
      %v4317 = vpop.f32.mrb[0].mxu0
      %v4318 = vpop.f32.mrb[0].mxu0
      %v4319 = vadd.f32 0.0, %v4318
      %v4320 = vpop.f32.mrb[0].mxu0
      %4321 = vmatprep.mubr.bf16.mxu0 0
      %4322 = vmatmul.mubr.bf16.gmra.mrb[0].mxu0 %v4141
      %v4323 = vpop.f32.mrb[0].mxu0
      %v4324 = vadd.f32 0.0, %v4323
      %v4325 = vpop.f32.mrb[0].mxu0
      %v4326 = vpop.f32.mrb[0].mxu0
      %v4327 = vpop.f32.mrb[0].mxu0
      %4328 = vmatprep.mubr.bf16.mxu0 0
      %4329 = vmatmul.mubr.bf16.gmra.mrb[0].mxu0 %v4144
      %v4330 = vpop.f32.mrb[0].mxu0
      %v4331 = vadd.f32 0.0, %v4330
      %v4332 = vpop.f32.mrb[0].mxu0
      %v4333 = vpop.f32.mrb[0].mxu0
      %v4334 = vadd.f32 0.0, %v4333
      %v4335 = vpop.f32.mrb[0].mxu0
      %4336 = vmatprep.mubr.bf16.mxu0 0
      %4337 = vmatmul.mubr.bf16.gmra.mrb[0].mxu0 %v4147
      %v4338 = vpop.f32.mrb[0].mxu0
      %v4339 = vpop.f32.mrb[0].mxu0
      %v4340 = vpop.f32.mrb[0].mxu0
      %v4341 = vadd.f32 0.0, %v4340
      %v4342 = vpop.f32.mrb[0].mxu0
      %4343 = vmatprep.mubr.bf16.mxu0 0
      %4344 = vmatmul.mubr.bf16.gmra.mrb[0].mxu0 %v4150
      %v4345 = vpop.f32.mrb[0].mxu0
      %v4346 = vadd.f32 0.0, %v4345
      %v4347 = vpop.f32.mrb[0].mxu0
      %v4348 = vpop.f32.mrb[0].mxu0
      %v4349 = vpop.f32.mrb[0].mxu0
      %4350 = vmatprep.mubr.bf16.mxu0 0
      %4351 = vmatmul.mubr.bf16.gmra.mrb[0].mxu0 %v4153
      %v4352 = vpop.f32.mrb[0].mxu0
      %v4353 = vadd.f32 0.0, %v4352
      %v4354 = vpop.f32.mrb[0].mxu0
      %v4355 = vpop.f32.mrb[0].mxu0
      %v4356 = vadd.f32 0.0, %v4355
      %v4357 = vpop.f32.mrb[0].mxu0
      %4358 = vmatprep.mubr.bf16.mxu0 0
      %4359 = vmatmul.mubr.bf16.gmra.mrb[0].mxu0 %v4156
      %v4360 = vpop.f32.mrb[0].mxu0
      %v4361 = vpop.f32.mrb[0].mxu0
      %v4362 = vpop.f32.mrb[0].mxu0
      %v4363 = vadd.f32 0.0, %v4362
      %v4364 = vpop.f32.mrb[0].mxu0
      %4365 = vmatprep.mubr.bf16.mxu0 0
      %4366 = vmatmul.mubr.bf16.gmra.mrb[0].mxu0 %v4159
      %v4367 = vpop.f32.mrb[0].mxu0
      %v4368 = vadd.f32 0.0, %v4367
      %v4369 = vpop.f32.mrb[0].mxu0
      %v4370 = vpop.f32.mrb[0].mxu0
      %v4371 = vpop.f32.mrb[0].mxu0
      %4372 = vdwg.mxu0
      %v4374 = vsel %vm225, %v4038, 0
      %v4377 = vsel %vm225, %v4039, 0
      %v4380 = vsel %vm225, %v4040, 0
      %v4383 = vsel %vm225, %v4041, 0
      %v4386 = vsel %vm225, %v4042, 0
      %v4389 = vsel %vm225, %v4043, 0
      %v4392 = vsel %vm225, %v4044, 0
      %v4395 = vsel %vm225, %v4045, 0
      %v4398 = vsel %vm225, %v4046, 0
      %v4401 = vsel %vm225, %v4047, 0
      %v4404 = vsel %vm225, %v4048, 0
      %v4407 = vsel %vm225, %v4049, 0
      %v4410 = vsel %vm225, %v4050, 0
      %v4413 = vsel %vm225, %v4051, 0
      %v4416 = vsel %vm225, %v4052, 0
      %v4419 = vsel %vm225, %v4053, 0
      %v4422 = vsel %vm225, %v4054, 0
      %v4425 = vsel %vm225, %v4055, 0
      %v4428 = vsel %vm225, %v4056, 0
      %v4431 = vsel %vm225, %v4057, 0
      %v4434 = vsel %vm225, %v4058, 0
      %v4437 = vsel %vm225, %v4059, 0
      %v4440 = vsel %vm225, %v4060, 0
      %v4443 = vsel %vm225, %v4061, 0
      %v4446 = vsel %vm522, %v4062, 0
      %4448 = vmatprep.subr.bf16.mxu0 0
      %4449 = vmatpush1.bf16.msra.mxu0 %v4446
      %4450 = vmatprep.subr.bf16.mxu0 0
      %4451 = vmatpush1.bf16.msra.mxu0 0
      %4452 = vmatprep.subr.bf16.mxu0 0
      %4453 = vmatpush1.bf16.msra.mxu0 0
      %4454 = vmatprep.subr.bf16.mxu0 0
      %4455 = vmatpush1.bf16.msra.mxu0 0
      %4456 = vmatprep.subr.bf16.mxu0 0
      %4457 = vmatpush1.bf16.msra.mxu0 0
      %4458 = vmatprep.subr.bf16.mxu0 0
      %4459 = vmatpush1.bf16.msra.mxu0 0
      %4460 = vmatprep.subr.bf16.mxu0 0
      %4461 = vmatpush1.bf16.msra.mxu0 0
      %4462 = vmatprep.subr.bf16.mxu0 0
      %4463 = vmatpush1.bf16.msra.mxu0 0
      %4464 = vmatprep.subr.bf16.mxu0 0
      %4465 = vmatpush1.bf16.msra.mxu0 0
      %4466 = vmatprep.subr.bf16.mxu0 0
      %4467 = vmatpush1.bf16.msra.mxu0 0
      %4468 = vmatprep.subr.bf16.mxu0 0
      %4469 = vmatpush1.bf16.msra.mxu0 0
      %4470 = vmatprep.subr.bf16.mxu0 0
      %4471 = vmatpush1.bf16.msra.mxu0 0
      %4472 = vmatprep.subr.bf16.mxu0 0
      %4473 = vmatpush1.bf16.msra.mxu0 0
      %4474 = vmatprep.subr.bf16.mxu0 0
      %4475 = vmatpush1.bf16.msra.mxu0 0
      %4476 = vmatprep.subr.bf16.mxu0 0
      %4477 = vmatpush1.bf16.msra.mxu0 0
      %4478 = vmatprep.subr.bf16.mxu0 0
      %4479 = vmatpush1.bf16.msra.mxu0 0
      %4480 = vmatprep.mubr.bf16.mxu0 0
      %4481 = vmatmul.mubr.bf16.gmra.mrb[0].mxu0 %v4374
      %v4482 = vpop.f32.mrb[0].mxu0
      %v4483 = vadd.f32 %v4199, %v4482
      %v4484 = vpop.f32.mrb[0].mxu0
      %v4485 = vpop.f32.mrb[0].mxu0
      %v4486 = vadd.f32 %v4202, %v4485
      %v4487 = vpop.f32.mrb[0].mxu0
      %4488 = vmatprep.mubr.bf16.mxu0 0
      %4489 = vmatmul.mubr.bf16.gmra.mrb[0].mxu0 %v4377
      %v4490 = vpop.f32.mrb[0].mxu0
      %v4491 = vpop.f32.mrb[0].mxu0
      %v4492 = vpop.f32.mrb[0].mxu0
      %v4493 = vadd.f32 %v4209, %v4492
      %v4494 = vpop.f32.mrb[0].mxu0
      %4495 = vmatprep.mubr.bf16.mxu0 0
      %4496 = vmatmul.mubr.bf16.gmra.mrb[0].mxu0 %v4380
      %v4497 = vpop.f32.mrb[0].mxu0
      %v4498 = vadd.f32 %v4214, %v4497
      %v4499 = vpop.f32.mrb[0].mxu0
      %v4500 = vpop.f32.mrb[0].mxu0
      %v4501 = vpop.f32.mrb[0].mxu0
      %4502 = vmatprep.mubr.bf16.mxu0 0
      %4503 = vmatmul.mubr.bf16.gmra.mrb[0].mxu0 %v4383
      %v4504 = vpop.f32.mrb[0].mxu0
      %v4505 = vadd.f32 %v4221, %v4504
      %v4506 = vpop.f32.mrb[0].mxu0
      %v4507 = vpop.f32.mrb[0].mxu0
      %v4508 = vadd.f32 %v4224, %v4507
      %v4509 = vpop.f32.mrb[0].mxu0
      %4510 = vmatprep.mubr.bf16.mxu0 0
      %4511 = vmatmul.mubr.bf16.gmra.mrb[0].mxu0 %v4386
      %v4512 = vpop.f32.mrb[0].mxu0
      %v4513 = vpop.f32.mrb[0].mxu0
      %v4514 = vpop.f32.mrb[0].mxu0
      %v4515 = vadd.f32 %v4231, %v4514
      %v4516 = vpop.f32.mrb[0].mxu0
      %4517 = vmatprep.mubr.bf16.mxu0 0
      %4518 = vmatmul.mubr.bf16.gmra.mrb[0].mxu0 %v4389
      %v4519 = vpop.f32.mrb[0].mxu0
      %v4520 = vadd.f32 %v4236, %v4519
      %v4521 = vpop.f32.mrb[0].mxu0
      %v4522 = vpop.f32.mrb[0].mxu0
      %v4523 = vpop.f32.mrb[0].mxu0
      %4524 = vmatprep.mubr.bf16.mxu0 0
      %4525 = vmatmul.mubr.bf16.gmra.mrb[0].mxu0 %v4392
      %v4526 = vpop.f32.mrb[0].mxu0
      %v4527 = vadd.f32 %v4243, %v4526
      %v4528 = vpop.f32.mrb[0].mxu0
      %v4529 = vpop.f32.mrb[0].mxu0
      %v4530 = vadd.f32 %v4246, %v4529
      %v4531 = vpop.f32.mrb[0].mxu0
      %4532 = vmatprep.mubr.bf16.mxu0 0
      %4533 = vmatmul.mubr.bf16.gmra.mrb[0].mxu0 %v4395
      %v4534 = vpop.f32.mrb[0].mxu0
      %v4535 = vpop.f32.mrb[0].mxu0
      %v4536 = vpop.f32.mrb[0].mxu0
      %v4537 = vadd.f32 %v4253, %v4536
      %v4538 = vpop.f32.mrb[0].mxu0
      %4539 = vmatprep.mubr.bf16.mxu0 0
      %4540 = vmatmul.mubr.bf16.gmra.mrb[0].mxu0 %v4398
      %v4541 = vpop.f32.mrb[0].mxu0
      %v4542 = vadd.f32 %v4258, %v4541
      %v4543 = vpop.f32.mrb[0].mxu0
      %v4544 = vpop.f32.mrb[0].mxu0
      %v4545 = vpop.f32.mrb[0].mxu0
      %4546 = vmatprep.mubr.bf16.mxu0 0
      %4547 = vmatmul.mubr.bf16.gmra.mrb[0].mxu0 %v4401
      %v4548 = vpop.f32.mrb[0].mxu0
      %v4549 = vadd.f32 %v4265, %v4548
      %v4550 = vpop.f32.mrb[0].mxu0
      %v4551 = vpop.f32.mrb[0].mxu0
      %v4552 = vadd.f32 %v4268, %v4551
      %v4553 = vpop.f32.mrb[0].mxu0
      %4554 = vmatprep.mubr.bf16.mxu0 0
      %4555 = vmatmul.mubr.bf16.gmra.mrb[0].mxu0 %v4404
      %v4556 = vpop.f32.mrb[0].mxu0
      %v4557 = vpop.f32.mrb[0].mxu0
      %v4558 = vpop.f32.mrb[0].mxu0
      %v4559 = vadd.f32 %v4275, %v4558
      %v4560 = vpop.f32.mrb[0].mxu0
      %4561 = vmatprep.mubr.bf16.mxu0 0
      %4562 = vmatmul.mubr.bf16.gmra.mrb[0].mxu0 %v4407
      %v4563 = vpop.f32.mrb[0].mxu0
      %v4564 = vadd.f32 %v4280, %v4563
      %v4565 = vpop.f32.mrb[0].mxu0
      %v4566 = vpop.f32.mrb[0].mxu0
      %v4567 = vpop.f32.mrb[0].mxu0
      %4568 = vmatprep.mubr.bf16.mxu0 0
      %4569 = vmatmul.mubr.bf16.gmra.mrb[0].mxu0 %v4410
      %v4570 = vpop.f32.mrb[0].mxu0
      %v4571 = vadd.f32 %v4287, %v4570
      %v4572 = vpop.f32.mrb[0].mxu0
      %v4573 = vpop.f32.mrb[0].mxu0
      %v4574 = vadd.f32 %v4290, %v4573
      %v4575 = vpop.f32.mrb[0].mxu0
      %4576 = vmatprep.mubr.bf16.mxu0 0
      %4577 = vmatmul.mubr.bf16.gmra.mrb[0].mxu0 %v4413
      %v4578 = vpop.f32.mrb[0].mxu0
      %v4579 = vpop.f32.mrb[0].mxu0
      %v4580 = vpop.f32.mrb[0].mxu0
      %v4581 = vadd.f32 %v4297, %v4580
      %v4582 = vpop.f32.mrb[0].mxu0
      %4583 = vmatprep.mubr.bf16.mxu0 0
      %4584 = vmatmul.mubr.bf16.gmra.mrb[0].mxu0 %v4416
      %v4585 = vpop.f32.mrb[0].mxu0
      %v4586 = vadd.f32 %v4302, %v4585
      %v4587 = vpop.f32.mrb[0].mxu0
      %v4588 = vpop.f32.mrb[0].mxu0
      %v4589 = vpop.f32.mrb[0].mxu0
      %4590 = vmatprep.mubr.bf16.mxu0 0
      %4591 = vmatmul.mubr.bf16.gmra.mrb[0].mxu0 %v4419
      %v4592 = vpop.f32.mrb[0].mxu0
      %v4593 = vadd.f32 %v4309, %v4592
      %v4594 = vpop.f32.mrb[0].mxu0
      %v4595 = vpop.f32.mrb[0].mxu0
      %v4596 = vadd.f32 %v4312, %v4595
      %v4597 = vpop.f32.mrb[0].mxu0
      %4598 = vmatprep.mubr.bf16.mxu0 0
      %4599 = vmatmul.mubr.bf16.gmra.mrb[0].mxu0 %v4422
      %v4600 = vpop.f32.mrb[0].mxu0
      %v4601 = vpop.f32.mrb[0].mxu0
      %v4602 = vpop.f32.mrb[0].mxu0
      %v4603 = vadd.f32 %v4319, %v4602
      %v4604 = vpop.f32.mrb[0].mxu0
      %4605 = vmatprep.mubr.bf16.mxu0 0
      %4606 = vmatmul.mubr.bf16.gmra.mrb[0].mxu0 %v4425
      %v4607 = vpop.f32.mrb[0].mxu0
      %v4608 = vadd.f32 %v4324, %v4607
      %v4609 = vpop.f32.mrb[0].mxu0
      %v4610 = vpop.f32.mrb[0].mxu0
      %v4611 = vpop.f32.mrb[0].mxu0
      %4612 = vmatprep.mubr.bf16.mxu0 0
      %4613 = vmatmul.mubr.bf16.gmra.mrb[0].mxu0 %v4428
      %v4614 = vpop.f32.mrb[0].mxu0
      %v4615 = vadd.f32 %v4331, %v4614
      %v4616 = vpop.f32.mrb[0].mxu0
      %v4617 = vpop.f32.mrb[0].mxu0
      %v4618 = vadd.f32 %v4334, %v4617
      %v4619 = vpop.f32.mrb[0].mxu0
      %4620 = vmatprep.mubr.bf16.mxu0 0
      %4621 = vmatmul.mubr.bf16.gmra.mrb[0].mxu0 %v4431
      %v4622 = vpop.f32.mrb[0].mxu0
      %v4623 = vpop.f32.mrb[0].mxu0
      %v4624 = vpop.f32.mrb[0].mxu0
      %v4625 = vadd.f32 %v4341, %v4624
      %v4626 = vpop.f32.mrb[0].mxu0
      %4627 = vmatprep.mubr.bf16.mxu0 0
      %4628 = vmatmul.mubr.bf16.gmra.mrb[0].mxu0 %v4434
      %v4629 = vpop.f32.mrb[0].mxu0
      %v4630 = vadd.f32 %v4346, %v4629
      %v4631 = vpop.f32.mrb[0].mxu0
      %v4632 = vpop.f32.mrb[0].mxu0
      %v4633 = vpop.f32.mrb[0].mxu0
      %4634 = vmatprep.mubr.bf16.mxu0 0
      %4635 = vmatmul.mubr.bf16.gmra.mrb[0].mxu0 %v4437
      %v4636 = vpop.f32.mrb[0].mxu0
      %v4637 = vadd.f32 %v4353, %v4636
      %v4638 = vpop.f32.mrb[0].mxu0
      %v4639 = vpop.f32.mrb[0].mxu0
      %v4640 = vadd.f32 %v4356, %v4639
      %v4641 = vpop.f32.mrb[0].mxu0
      %4642 = vmatprep.mubr.bf16.mxu0 0
      %4643 = vmatmul.mubr.bf16.gmra.mrb[0].mxu0 %v4440
      %v4644 = vpop.f32.mrb[0].mxu0
      %v4645 = vpop.f32.mrb[0].mxu0
      %v4646 = vpop.f32.mrb[0].mxu0
      %v4647 = vadd.f32 %v4363, %v4646
      %v4648 = vpop.f32.mrb[0].mxu0
      %4649 = vmatprep.mubr.bf16.mxu0 0
      %4650 = vmatmul.mubr.bf16.gmra.mrb[0].mxu0 %v4443
      %v4651 = vpop.f32.mrb[0].mxu0
      %v4652 = vadd.f32 %v4368, %v4651
      %v4653 = vpop.f32.mrb[0].mxu0
      %v4654 = vpop.f32.mrb[0].mxu0
      %v4655 = vpop.f32.mrb[0].mxu0
      %4656 = vdwg.mxu0
      %v4657 = vpack.c.bf16 %v4032, %v4031
      %v4658 = vpack.c.bf16 %v4034, %v4033
      %v4659 = vpack.c.bf16 %v4036, %v4035
      %s4660 = scalar_lea.vmem %s2, 12
      %v4661 = vld [vmem:[%s4660] sm:$0x3]
      %v4663 = vsel %vm225, %v4657, 0
      %v4666 = vsel %vm225, %v4658, 0
      %v4669 = vsel %vm225, %v4659, 0
      %v4672 = vsel %vm522, %v4661, 0
      %4674 = vmatprep.subr.bf16.mxu0 0
      %4675 = vmatpush1.bf16.msra.mxu0 %v4672
      %4676 = vmatprep.subr.bf16.mxu0 0
      %4677 = vmatpush1.bf16.msra.mxu0 0
      %4678 = vmatprep.subr.bf16.mxu0 0
      %4679 = vmatpush1.bf16.msra.mxu0 0
      %4680 = vmatprep.subr.bf16.mxu0 0
      %4681 = vmatpush1.bf16.msra.mxu0 0
      %4682 = vmatprep.subr.bf16.mxu0 0
      %4683 = vmatpush1.bf16.msra.mxu0 0
      %4684 = vmatprep.subr.bf16.mxu0 0
      %4685 = vmatpush1.bf16.msra.mxu0 0
      %4686 = vmatprep.subr.bf16.mxu0 0
      %4687 = vmatpush1.bf16.msra.mxu0 0
      %4688 = vmatprep.subr.bf16.mxu0 0
      %4689 = vmatpush1.bf16.msra.mxu0 0
      %4690 = vmatprep.subr.bf16.mxu0 0
      %4691 = vmatpush1.bf16.msra.mxu0 0
      %4692 = vmatprep.subr.bf16.mxu0 0
      %4693 = vmatpush1.bf16.msra.mxu0 0
      %4694 = vmatprep.subr.bf16.mxu0 0
      %4695 = vmatpush1.bf16.msra.mxu0 0
      %4696 = vmatprep.subr.bf16.mxu0 0
      %4697 = vmatpush1.bf16.msra.mxu0 0
      %4698 = vmatprep.subr.bf16.mxu0 0
      %4699 = vmatpush1.bf16.msra.mxu0 0
      %4700 = vmatprep.subr.bf16.mxu0 0
      %4701 = vmatpush1.bf16.msra.mxu0 0
      %4702 = vmatprep.subr.bf16.mxu0 0
      %4703 = vmatpush1.bf16.msra.mxu0 0
      %4704 = vmatprep.subr.bf16.mxu0 0
      %4705 = vmatpush1.bf16.msra.mxu0 0
      %4706 = vmatprep.mubr.bf16.mxu0 0
      %4707 = vmatmul.mubr.bf16.gmra.mrb[0].mxu0 %v4383
      %v4708 = vpop.f32.mrb[0].mxu0
      %v4709 = vadd.f32 0.0, %v4708
      %v4710 = vpop.f32.mrb[0].mxu0
      %v4711 = vpop.f32.mrb[0].mxu0
      %v4712 = vadd.f32 0.0, %v4711
      %v4713 = vpop.f32.mrb[0].mxu0
      %4714 = vmatprep.mubr.bf16.mxu0 0
      %4715 = vmatmul.mubr.bf16.gmra.mrb[0].mxu0 %v4386
      %v4716 = vpop.f32.mrb[0].mxu0
      %v4717 = vpop.f32.mrb[0].mxu0
      %v4718 = vpop.f32.mrb[0].mxu0
      %v4719 = vadd.f32 0.0, %v4718
      %v4720 = vpop.f32.mrb[0].mxu0
      %4721 = vmatprep.mubr.bf16.mxu0 0
      %4722 = vmatmul.mubr.bf16.gmra.mrb[0].mxu0 %v4389
      %v4723 = vpop.f32.mrb[0].mxu0
      %v4724 = vadd.f32 0.0, %v4723
      %v4725 = vpop.f32.mrb[0].mxu0
      %v4726 = vpop.f32.mrb[0].mxu0
      %v4727 = vpop.f32.mrb[0].mxu0
      %4728 = vmatprep.mubr.bf16.mxu0 0
      %4729 = vmatmul.mubr.bf16.gmra.mrb[0].mxu0 %v4392
      %v4730 = vpop.f32.mrb[0].mxu0
      %v4731 = vadd.f32 0.0, %v4730
      %v4732 = vpop.f32.mrb[0].mxu0
      %v4733 = vpop.f32.mrb[0].mxu0
      %v4734 = vadd.f32 0.0, %v4733
      %v4735 = vpop.f32.mrb[0].mxu0
      %4736 = vmatprep.mubr.bf16.mxu0 0
      %4737 = vmatmul.mubr.bf16.gmra.mrb[0].mxu0 %v4395
      %v4738 = vpop.f32.mrb[0].mxu0
      %v4739 = vpop.f32.mrb[0].mxu0
      %v4740 = vpop.f32.mrb[0].mxu0
      %v4741 = vadd.f32 0.0, %v4740
      %v4742 = vpop.f32.mrb[0].mxu0
      %4743 = vmatprep.mubr.bf16.mxu0 0
      %4744 = vmatmul.mubr.bf16.gmra.mrb[0].mxu0 %v4398
      %v4745 = vpop.f32.mrb[0].mxu0
      %v4746 = vadd.f32 0.0, %v4745
      %v4747 = vpop.f32.mrb[0].mxu0
      %v4748 = vpop.f32.mrb[0].mxu0
      %v4749 = vpop.f32.mrb[0].mxu0
      %4750 = vmatprep.mubr.bf16.mxu0 0
      %4751 = vmatmul.mubr.bf16.gmra.mrb[0].mxu0 %v4401
      %v4752 = vpop.f32.mrb[0].mxu0
      %v4753 = vadd.f32 0.0, %v4752
      %v4754 = vpop.f32.mrb[0].mxu0
      %v4755 = vpop.f32.mrb[0].mxu0
      %v4756 = vadd.f32 0.0, %v4755
      %v4757 = vpop.f32.mrb[0].mxu0
      %4758 = vmatprep.mubr.bf16.mxu0 0
      %4759 = vmatmul.mubr.bf16.gmra.mrb[0].mxu0 %v4404
      %v4760 = vpop.f32.mrb[0].mxu0
      %v4761 = vpop.f32.mrb[0].mxu0
      %v4762 = vpop.f32.mrb[0].mxu0
      %v4763 = vadd.f32 0.0, %v4762
      %v4764 = vpop.f32.mrb[0].mxu0
      %4765 = vmatprep.mubr.bf16.mxu0 0
      %4766 = vmatmul.mubr.bf16.gmra.mrb[0].mxu0 %v4407
      %v4767 = vpop.f32.mrb[0].mxu0
      %v4768 = vadd.f32 0.0, %v4767
      %v4769 = vpop.f32.mrb[0].mxu0
      %v4770 = vpop.f32.mrb[0].mxu0
      %v4771 = vpop.f32.mrb[0].mxu0
      %4772 = vmatprep.mubr.bf16.mxu0 0
      %4773 = vmatmul.mubr.bf16.gmra.mrb[0].mxu0 %v4410
      %v4774 = vpop.f32.mrb[0].mxu0
      %v4775 = vadd.f32 0.0, %v4774
      %v4776 = vpop.f32.mrb[0].mxu0
      %v4777 = vpop.f32.mrb[0].mxu0
      %v4778 = vadd.f32 0.0, %v4777
      %v4779 = vpop.f32.mrb[0].mxu0
      %4780 = vmatprep.mubr.bf16.mxu0 0
      %4781 = vmatmul.mubr.bf16.gmra.mrb[0].mxu0 %v4413
      %v4782 = vpop.f32.mrb[0].mxu0
      %v4783 = vpop.f32.mrb[0].mxu0
      %v4784 = vpop.f32.mrb[0].mxu0
      %v4785 = vadd.f32 0.0, %v4784
      %v4786 = vpop.f32.mrb[0].mxu0
      %4787 = vmatprep.mubr.bf16.mxu0 0
      %4788 = vmatmul.mubr.bf16.gmra.mrb[0].mxu0 %v4416
      %v4789 = vpop.f32.mrb[0].mxu0
      %v4790 = vadd.f32 0.0, %v4789
      %v4791 = vpop.f32.mrb[0].mxu0
      %v4792 = vpop.f32.mrb[0].mxu0
      %v4793 = vpop.f32.mrb[0].mxu0
      %4794 = vmatprep.mubr.bf16.mxu0 0
      %4795 = vmatmul.mubr.bf16.gmra.mrb[0].mxu0 %v4419
      %v4796 = vpop.f32.mrb[0].mxu0
      %v4797 = vadd.f32 0.0, %v4796
      %v4798 = vpop.f32.mrb[0].mxu0
      %v4799 = vpop.f32.mrb[0].mxu0
      %v4800 = vadd.f32 0.0, %v4799
      %v4801 = vpop.f32.mrb[0].mxu0
      %4802 = vmatprep.mubr.bf16.mxu0 0
      %4803 = vmatmul.mubr.bf16.gmra.mrb[0].mxu0 %v4422
      %v4804 = vpop.f32.mrb[0].mxu0
      %v4805 = vpop.f32.mrb[0].mxu0
      %v4806 = vpop.f32.mrb[0].mxu0
      %v4807 = vadd.f32 0.0, %v4806
      %v4808 = vpop.f32.mrb[0].mxu0
      %4809 = vmatprep.mubr.bf16.mxu0 0
      %4810 = vmatmul.mubr.bf16.gmra.mrb[0].mxu0 %v4425
      %v4811 = vpop.f32.mrb[0].mxu0
      %v4812 = vadd.f32 0.0, %v4811
      %v4813 = vpop.f32.mrb[0].mxu0
      %v4814 = vpop.f32.mrb[0].mxu0
      %v4815 = vpop.f32.mrb[0].mxu0
      %4816 = vmatprep.mubr.bf16.mxu0 0
      %4817 = vmatmul.mubr.bf16.gmra.mrb[0].mxu0 %v4428
      %v4818 = vpop.f32.mrb[0].mxu0
      %v4819 = vadd.f32 0.0, %v4818
      %v4820 = vpop.f32.mrb[0].mxu0
      %v4821 = vpop.f32.mrb[0].mxu0
      %v4822 = vadd.f32 0.0, %v4821
      %v4823 = vpop.f32.mrb[0].mxu0
      %4824 = vmatprep.mubr.bf16.mxu0 0
      %4825 = vmatmul.mubr.bf16.gmra.mrb[0].mxu0 %v4431
      %v4826 = vpop.f32.mrb[0].mxu0
      %v4827 = vpop.f32.mrb[0].mxu0
      %v4828 = vpop.f32.mrb[0].mxu0
      %v4829 = vadd.f32 0.0, %v4828
      %v4830 = vpop.f32.mrb[0].mxu0
      %4831 = vmatprep.mubr.bf16.mxu0 0
      %4832 = vmatmul.mubr.bf16.gmra.mrb[0].mxu0 %v4434
      %v4833 = vpop.f32.mrb[0].mxu0
      %v4834 = vadd.f32 0.0, %v4833
      %v4835 = vpop.f32.mrb[0].mxu0
      %v4836 = vpop.f32.mrb[0].mxu0
      %v4837 = vpop.f32.mrb[0].mxu0
      %4838 = vmatprep.mubr.bf16.mxu0 0
      %4839 = vmatmul.mubr.bf16.gmra.mrb[0].mxu0 %v4437
      %v4840 = vpop.f32.mrb[0].mxu0
      %v4841 = vadd.f32 0.0, %v4840
      %v4842 = vpop.f32.mrb[0].mxu0
      %v4843 = vpop.f32.mrb[0].mxu0
      %v4844 = vadd.f32 0.0, %v4843
      %v4845 = vpop.f32.mrb[0].mxu0
      %4846 = vmatprep.mubr.bf16.mxu0 0
      %4847 = vmatmul.mubr.bf16.gmra.mrb[0].mxu0 %v4440
      %v4848 = vpop.f32.mrb[0].mxu0
      %v4849 = vpop.f32.mrb[0].mxu0
      %v4850 = vpop.f32.mrb[0].mxu0
      %v4851 = vadd.f32 0.0, %v4850
      %v4852 = vpop.f32.mrb[0].mxu0
      %4853 = vmatprep.mubr.bf16.mxu0 0
      %4854 = vmatmul.mubr.bf16.gmra.mrb[0].mxu0 %v4443
      %v4855 = vpop.f32.mrb[0].mxu0
      %v4856 = vadd.f32 0.0, %v4855
      %v4857 = vpop.f32.mrb[0].mxu0
      %v4858 = vpop.f32.mrb[0].mxu0
      %v4859 = vpop.f32.mrb[0].mxu0
      %4860 = vmatprep.mubr.bf16.mxu0 0
      %4861 = vmatmul.mubr.bf16.gmra.mrb[0].mxu0 %v4663
      %v4862 = vpop.f32.mrb[0].mxu0
      %v4863 = vadd.f32 0.0, %v4862
      %v4864 = vpop.f32.mrb[0].mxu0
      %v4865 = vpop.f32.mrb[0].mxu0
      %v4866 = vadd.f32 0.0, %v4865
      %v4867 = vpop.f32.mrb[0].mxu0
      %4868 = vmatprep.mubr.bf16.mxu0 0
      %4869 = vmatmul.mubr.bf16.gmra.mrb[0].mxu0 %v4666
      %v4870 = vpop.f32.mrb[0].mxu0
      %v4871 = vpop.f32.mrb[0].mxu0
      %v4872 = vpop.f32.mrb[0].mxu0
      %v4873 = vadd.f32 0.0, %v4872
      %v4874 = vpop.f32.mrb[0].mxu0
      %4875 = vmatprep.mubr.bf16.mxu0 0
      %4876 = vmatmul.mubr.bf16.gmra.mrb[0].mxu0 %v4669
      %v4877 = vpop.f32.mrb[0].mxu0
      %v4878 = vadd.f32 0.0, %v4877
      %v4879 = vpop.f32.mrb[0].mxu0
      %v4880 = vpop.f32.mrb[0].mxu0
      %v4881 = vpop.f32.mrb[0].mxu0
      %4882 = vdwg.mxu0
      %v4883 = vadd.f32 %v4483, %v4709
      %v4884 = vadd.f32 %v4486, %v4712
      %v4885 = vadd.f32 %v4493, %v4719
      %v4886 = vadd.f32 %v4498, %v4724
      %v4887 = vadd.f32 %v4505, %v4731
      %v4888 = vadd.f32 %v4508, %v4734
      %v4889 = vadd.f32 %v4515, %v4741
      %v4890 = vadd.f32 %v4520, %v4746
      %v4891 = vadd.f32 %v4527, %v4753
      %v4892 = vadd.f32 %v4530, %v4756
      %v4893 = vadd.f32 %v4537, %v4763
      %v4894 = vadd.f32 %v4542, %v4768
      %v4895 = vadd.f32 %v4549, %v4775
      %v4896 = vadd.f32 %v4552, %v4778
      %v4897 = vadd.f32 %v4559, %v4785
      %v4898 = vadd.f32 %v4564, %v4790
      %v4899 = vadd.f32 %v4571, %v4797
      %v4900 = vadd.f32 %v4574, %v4800
      %v4901 = vadd.f32 %v4581, %v4807
      %v4902 = vadd.f32 %v4586, %v4812
      %v4903 = vadd.f32 %v4593, %v4819
      %v4904 = vadd.f32 %v4596, %v4822
      %v4905 = vadd.f32 %v4603, %v4829
      %v4906 = vadd.f32 %v4608, %v4834
      %v4907 = vadd.f32 %v4615, %v4841
      %v4908 = vadd.f32 %v4618, %v4844
      %v4909 = vadd.f32 %v4625, %v4851
      %v4910 = vadd.f32 %v4630, %v4856
      %v4911 = vadd.f32 %v4637, %v4863
      %v4912 = vadd.f32 %v4640, %v4866
      %v4913 = vadd.f32 %v4647, %v4873
      %v4914 = vadd.f32 %v4652, %v4878
      %v4915 = vpack.c.bf16 %v4031, %v4031
      %s4916 = scalar_lea.vmem %s2, 2
      %v4917 = vld [vmem:[%s4916] sm:$0x3]
      %v4918 = vshrl.u32 %v4038, 16
      %v4920 = vshll.u32 %v4038, 16
      %v4922 = vrot.slane %v4920, 1
      %v4923 = vor.u32 %v4918, %v4922
      %v4924 = vshll.u32 %v4039, 16
      %v4926 = vrot.slane %v4924, 1
      %v4927 = vsel %vm1280, %v4923, %v4926
      %v4928 = vshrl.u32 %v4039, 16
      %v4930 = vor.u32 %v4928, %v4926
      %v4931 = vshll.u32 %v4040, 16
      %v4933 = vrot.slane %v4931, 1
      %v4934 = vsel %vm1280, %v4930, %v4933
      %v4935 = vshrl.u32 %v4040, 16
      %v4937 = vor.u32 %v4935, %v4933
      %v4938 = vshll.u32 %v4041, 16
      %v4940 = vrot.slane %v4938, 1
      %v4941 = vsel %vm1280, %v4937, %v4940
      %v4942 = vshrl.u32 %v4041, 16
      %v4944 = vor.u32 %v4942, %v4940
      %v4945 = vshll.u32 %v4042, 16
      %v4947 = vrot.slane %v4945, 1
      %v4948 = vsel %vm1280, %v4944, %v4947
      %v4949 = vshrl.u32 %v4042, 16
      %v4951 = vor.u32 %v4949, %v4947
      %v4952 = vshll.u32 %v4043, 16
      %v4954 = vrot.slane %v4952, 1
      %v4955 = vsel %vm1280, %v4951, %v4954
      %v4956 = vshrl.u32 %v4043, 16
      %v4958 = vor.u32 %v4956, %v4954
      %v4959 = vshll.u32 %v4044, 16
      %v4961 = vrot.slane %v4959, 1
      %v4962 = vsel %vm1280, %v4958, %v4961
      %v4963 = vshrl.u32 %v4044, 16
      %v4965 = vor.u32 %v4963, %v4961
      %v4966 = vshll.u32 %v4045, 16
      %v4968 = vrot.slane %v4966, 1
      %v4969 = vsel %vm1280, %v4965, %v4968
      %v4970 = vshrl.u32 %v4045, 16
      %v4972 = vor.u32 %v4970, %v4968
      %v4973 = vshll.u32 %v4046, 16
      %v4975 = vrot.slane %v4973, 1
      %v4976 = vsel %vm1280, %v4972, %v4975
      %v4977 = vshrl.u32 %v4046, 16
      %v4979 = vor.u32 %v4977, %v4975
      %v4980 = vshll.u32 %v4047, 16
      %v4982 = vrot.slane %v4980, 1
      %v4983 = vsel %vm1280, %v4979, %v4982
      %v4984 = vshrl.u32 %v4047, 16
      %v4986 = vor.u32 %v4984, %v4982
      %v4987 = vshll.u32 %v4048, 16
      %v4989 = vrot.slane %v4987, 1
      %v4990 = vsel %vm1280, %v4986, %v4989
      %v4991 = vshrl.u32 %v4048, 16
      %v4993 = vor.u32 %v4991, %v4989
      %v4994 = vshll.u32 %v4049, 16
      %v4996 = vrot.slane %v4994, 1
      %v4997 = vsel %vm1280, %v4993, %v4996
      %v4998 = vshrl.u32 %v4049, 16
      %v5000 = vor.u32 %v4998, %v4996
      %v5001 = vshll.u32 %v4050, 16
      %v5003 = vrot.slane %v5001, 1
      %v5004 = vsel %vm1280, %v5000, %v5003
      %v5005 = vshrl.u32 %v4050, 16
      %v5007 = vor.u32 %v5005, %v5003
      %v5008 = vshll.u32 %v4051, 16
      %v5010 = vrot.slane %v5008, 1
      %v5011 = vsel %vm1280, %v5007, %v5010
      %v5012 = vshrl.u32 %v4051, 16
      %v5014 = vor.u32 %v5012, %v5010
      %v5015 = vshll.u32 %v4052, 16
      %v5017 = vrot.slane %v5015, 1
      %v5018 = vsel %vm1280, %v5014, %v5017
      %v5019 = vshrl.u32 %v4052, 16
      %v5021 = vor.u32 %v5019, %v5017
      %v5022 = vshll.u32 %v4053, 16
      %v5024 = vrot.slane %v5022, 1
      %v5025 = vsel %vm1280, %v5021, %v5024
      %v5026 = vshrl.u32 %v4053, 16
      %v5028 = vor.u32 %v5026, %v5024
      %v5029 = vshll.u32 %v4054, 16
      %v5031 = vrot.slane %v5029, 1
      %v5032 = vsel %vm1280, %v5028, %v5031
      %v5033 = vshrl.u32 %v4054, 16
      %v5035 = vor.u32 %v5033, %v5031
      %v5036 = vshll.u32 %v4055, 16
      %v5038 = vrot.slane %v5036, 1
      %v5039 = vsel %vm1280, %v5035, %v5038
      %v5040 = vshrl.u32 %v4055, 16
      %v5042 = vor.u32 %v5040, %v5038
      %v5043 = vshll.u32 %v4056, 16
      %v5045 = vrot.slane %v5043, 1
      %v5046 = vsel %vm1280, %v5042, %v5045
      %v5047 = vshrl.u32 %v4056, 16
      %v5049 = vor.u32 %v5047, %v5045
      %v5050 = vshll.u32 %v4057, 16
      %v5052 = vrot.slane %v5050, 1
      %v5053 = vsel %vm1280, %v5049, %v5052
      %v5054 = vshrl.u32 %v4057, 16
      %v5056 = vor.u32 %v5054, %v5052
      %v5057 = vshll.u32 %v4058, 16
      %v5059 = vrot.slane %v5057, 1
      %v5060 = vsel %vm1280, %v5056, %v5059
      %v5061 = vshrl.u32 %v4058, 16
      %v5063 = vor.u32 %v5061, %v5059
      %v5064 = vshll.u32 %v4059, 16
      %v5066 = vrot.slane %v5064, 1
      %v5067 = vsel %vm1280, %v5063, %v5066
      %v5068 = vshrl.u32 %v4059, 16
      %v5070 = vor.u32 %v5068, %v5066
      %v5071 = vshll.u32 %v4060, 16
      %v5073 = vrot.slane %v5071, 1
      %v5074 = vsel %vm1280, %v5070, %v5073
      %v5075 = vshrl.u32 %v4060, 16
      %v5077 = vor.u32 %v5075, %v5073
      %v5078 = vshll.u32 %v4061, 16
      %v5080 = vrot.slane %v5078, 1
      %v5081 = vsel %vm1280, %v5077, %v5080
      %v5082 = vshrl.u32 %v4061, 16
      %v5084 = vor.u32 %v5082, %v5080
      %v5086 = vshll.u32 %v4915, 16
      %v5088 = vrot.slane %v5086, 1
      %v5089 = vsel %vm1280, %v5084, %v5088
      %v5091 = vsel %vm225, %v4927, 0
      %v5094 = vsel %vm225, %v4934, 0
      %v5097 = vsel %vm225, %v4941, 0
      %v5100 = vsel %vm225, %v4948, 0
      %v5103 = vsel %vm225, %v4955, 0
      %v5106 = vsel %vm225, %v4962, 0
      %v5109 = vsel %vm225, %v4969, 0
      %v5112 = vsel %vm225, %v4976, 0
      %v5115 = vsel %vm225, %v4983, 0
      %v5118 = vsel %vm225, %v4990, 0
      %v5121 = vsel %vm225, %v4997, 0
      %v5124 = vsel %vm225, %v5004, 0
      %v5127 = vsel %vm225, %v5011, 0
      %v5130 = vsel %vm225, %v5018, 0
      %v5133 = vsel %vm225, %v5025, 0
      %v5136 = vsel %vm225, %v5032, 0
      %v5139 = vsel %vm225, %v5039, 0
      %v5142 = vsel %vm225, %v5046, 0
      %v5145 = vsel %vm225, %v5053, 0
      %v5148 = vsel %vm225, %v5060, 0
      %v5151 = vsel %vm225, %v5067, 0
      %v5154 = vsel %vm225, %v5074, 0
      %v5157 = vsel %vm225, %v5081, 0
      %v5160 = vsel %vm225, %v5089, 0
      %v5163 = vsel %vm522, %v4917, 0
      %5165 = vmatprep.subr.bf16.mxu0 0
      %5166 = vmatpush1.bf16.msra.mxu0 %v5163
      %5167 = vmatprep.subr.bf16.mxu0 0
      %5168 = vmatpush1.bf16.msra.mxu0 0
      %5169 = vmatprep.subr.bf16.mxu0 0
      %5170 = vmatpush1.bf16.msra.mxu0 0
      %5171 = vmatprep.subr.bf16.mxu0 0
      %5172 = vmatpush1.bf16.msra.mxu0 0
      %5173 = vmatprep.subr.bf16.mxu0 0
      %5174 = vmatpush1.bf16.msra.mxu0 0
      %5175 = vmatprep.subr.bf16.mxu0 0
      %5176 = vmatpush1.bf16.msra.mxu0 0
      %5177 = vmatprep.subr.bf16.mxu0 0
      %5178 = vmatpush1.bf16.msra.mxu0 0
      %5179 = vmatprep.subr.bf16.mxu0 0
      %5180 = vmatpush1.bf16.msra.mxu0 0
      %5181 = vmatprep.subr.bf16.mxu0 0
      %5182 = vmatpush1.bf16.msra.mxu0 0
      %5183 = vmatprep.subr.bf16.mxu0 0
      %5184 = vmatpush1.bf16.msra.mxu0 0
      %5185 = vmatprep.subr.bf16.mxu0 0
      %5186 = vmatpush1.bf16.msra.mxu0 0
      %5187 = vmatprep.subr.bf16.mxu0 0
      %5188 = vmatpush1.bf16.msra.mxu0 0
      %5189 = vmatprep.subr.bf16.mxu0 0
      %5190 = vmatpush1.bf16.msra.mxu0 0
      %5191 = vmatprep.subr.bf16.mxu0 0
      %5192 = vmatpush1.bf16.msra.mxu0 0
      %5193 = vmatprep.subr.bf16.mxu0 0
      %5194 = vmatpush1.bf16.msra.mxu0 0
      %5195 = vmatprep.subr.bf16.mxu0 0
      %5196 = vmatpush1.bf16.msra.mxu0 0
      %5197 = vmatprep.mubr.bf16.mxu0 0
      %5198 = vmatmul.mubr.bf16.gmra.mrb[0].mxu0 %v5091
      %v5199 = vpop.f32.mrb[0].mxu0
      %v5200 = vadd.f32 0.0, %v5199
      %v5201 = vpop.f32.mrb[0].mxu0
      %v5202 = vpop.f32.mrb[0].mxu0
      %v5203 = vadd.f32 0.0, %v5202
      %v5204 = vpop.f32.mrb[0].mxu0
      %5205 = vmatprep.mubr.bf16.mxu0 0
      %5206 = vmatmul.mubr.bf16.gmra.mrb[0].mxu0 %v5094
      %v5207 = vpop.f32.mrb[0].mxu0
      %v5208 = vpop.f32.mrb[0].mxu0
      %v5209 = vpop.f32.mrb[0].mxu0
      %v5210 = vadd.f32 0.0, %v5209
      %v5211 = vpop.f32.mrb[0].mxu0
      %5212 = vmatprep.mubr.bf16.mxu0 0
      %5213 = vmatmul.mubr.bf16.gmra.mrb[0].mxu0 %v5097
      %v5214 = vpop.f32.mrb[0].mxu0
      %v5215 = vadd.f32 0.0, %v5214
      %v5216 = vpop.f32.mrb[0].mxu0
      %v5217 = vpop.f32.mrb[0].mxu0
      %v5218 = vpop.f32.mrb[0].mxu0
      %5219 = vmatprep.mubr.bf16.mxu0 0
      %5220 = vmatmul.mubr.bf16.gmra.mrb[0].mxu0 %v5100
      %v5221 = vpop.f32.mrb[0].mxu0
      %v5222 = vadd.f32 0.0, %v5221
      %v5223 = vpop.f32.mrb[0].mxu0
      %v5224 = vpop.f32.mrb[0].mxu0
      %v5225 = vadd.f32 0.0, %v5224
      %v5226 = vpop.f32.mrb[0].mxu0
      %5227 = vmatprep.mubr.bf16.mxu0 0
      %5228 = vmatmul.mubr.bf16.gmra.mrb[0].mxu0 %v5103
      %v5229 = vpop.f32.mrb[0].mxu0
      %v5230 = vpop.f32.mrb[0].mxu0
      %v5231 = vpop.f32.mrb[0].mxu0
      %v5232 = vadd.f32 0.0, %v5231
      %v5233 = vpop.f32.mrb[0].mxu0
      %5234 = vmatprep.mubr.bf16.mxu0 0
      %5235 = vmatmul.mubr.bf16.gmra.mrb[0].mxu0 %v5106
      %v5236 = vpop.f32.mrb[0].mxu0
      %v5237 = vadd.f32 0.0, %v5236
      %v5238 = vpop.f32.mrb[0].mxu0
      %v5239 = vpop.f32.mrb[0].mxu0
      %v5240 = vpop.f32.mrb[0].mxu0
      %5241 = vmatprep.mubr.bf16.mxu0 0
      %5242 = vmatmul.mubr.bf16.gmra.mrb[0].mxu0 %v5109
      %v5243 = vpop.f32.mrb[0].mxu0
      %v5244 = vadd.f32 0.0, %v5243
      %v5245 = vpop.f32.mrb[0].mxu0
      %v5246 = vpop.f32.mrb[0].mxu0
      %v5247 = vadd.f32 0.0, %v5246
      %v5248 = vpop.f32.mrb[0].mxu0
      %5249 = vmatprep.mubr.bf16.mxu0 0
      %5250 = vmatmul.mubr.bf16.gmra.mrb[0].mxu0 %v5112
      %v5251 = vpop.f32.mrb[0].mxu0
      %v5252 = vpop.f32.mrb[0].mxu0
      %v5253 = vpop.f32.mrb[0].mxu0
      %v5254 = vadd.f32 0.0, %v5253
      %v5255 = vpop.f32.mrb[0].mxu0
      %5256 = vmatprep.mubr.bf16.mxu0 0
      %5257 = vmatmul.mubr.bf16.gmra.mrb[0].mxu0 %v5115
      %v5258 = vpop.f32.mrb[0].mxu0
      %v5259 = vadd.f32 0.0, %v5258
      %v5260 = vpop.f32.mrb[0].mxu0
      %v5261 = vpop.f32.mrb[0].mxu0
      %v5262 = vpop.f32.mrb[0].mxu0
      %5263 = vmatprep.mubr.bf16.mxu0 0
      %5264 = vmatmul.mubr.bf16.gmra.mrb[0].mxu0 %v5118
      %v5265 = vpop.f32.mrb[0].mxu0
      %v5266 = vadd.f32 0.0, %v5265
      %v5267 = vpop.f32.mrb[0].mxu0
      %v5268 = vpop.f32.mrb[0].mxu0
      %v5269 = vadd.f32 0.0, %v5268
      %v5270 = vpop.f32.mrb[0].mxu0
      %5271 = vmatprep.mubr.bf16.mxu0 0
      %5272 = vmatmul.mubr.bf16.gmra.mrb[0].mxu0 %v5121
      %v5273 = vpop.f32.mrb[0].mxu0
      %v5274 = vpop.f32.mrb[0].mxu0
      %v5275 = vpop.f32.mrb[0].mxu0
      %v5276 = vadd.f32 0.0, %v5275
      %v5277 = vpop.f32.mrb[0].mxu0
      %5278 = vmatprep.mubr.bf16.mxu0 0
      %5279 = vmatmul.mubr.bf16.gmra.mrb[0].mxu0 %v5124
      %v5280 = vpop.f32.mrb[0].mxu0
      %v5281 = vadd.f32 0.0, %v5280
      %v5282 = vpop.f32.mrb[0].mxu0
      %v5283 = vpop.f32.mrb[0].mxu0
      %v5284 = vpop.f32.mrb[0].mxu0
      %5285 = vmatprep.mubr.bf16.mxu0 0
      %5286 = vmatmul.mubr.bf16.gmra.mrb[0].mxu0 %v5127
      %v5287 = vpop.f32.mrb[0].mxu0
      %v5288 = vadd.f32 0.0, %v5287
      %v5289 = vpop.f32.mrb[0].mxu0
      %v5290 = vpop.f32.mrb[0].mxu0
      %v5291 = vadd.f32 0.0, %v5290
      %v5292 = vpop.f32.mrb[0].mxu0
      %5293 = vmatprep.mubr.bf16.mxu0 0
      %5294 = vmatmul.mubr.bf16.gmra.mrb[0].mxu0 %v5130
      %v5295 = vpop.f32.mrb[0].mxu0
      %v5296 = vpop.f32.mrb[0].mxu0
      %v5297 = vpop.f32.mrb[0].mxu0
      %v5298 = vadd.f32 0.0, %v5297
      %v5299 = vpop.f32.mrb[0].mxu0
      %5300 = vmatprep.mubr.bf16.mxu0 0
      %5301 = vmatmul.mubr.bf16.gmra.mrb[0].mxu0 %v5133
      %v5302 = vpop.f32.mrb[0].mxu0
      %v5303 = vadd.f32 0.0, %v5302
      %v5304 = vpop.f32.mrb[0].mxu0
      %v5305 = vpop.f32.mrb[0].mxu0
      %v5306 = vpop.f32.mrb[0].mxu0
      %5307 = vmatprep.mubr.bf16.mxu0 0
      %5308 = vmatmul.mubr.bf16.gmra.mrb[0].mxu0 %v5136
      %v5309 = vpop.f32.mrb[0].mxu0
      %v5310 = vadd.f32 0.0, %v5309
      %v5311 = vpop.f32.mrb[0].mxu0
      %v5312 = vpop.f32.mrb[0].mxu0
      %v5313 = vadd.f32 0.0, %v5312
      %v5314 = vpop.f32.mrb[0].mxu0
      %5315 = vmatprep.mubr.bf16.mxu0 0
      %5316 = vmatmul.mubr.bf16.gmra.mrb[0].mxu0 %v5139
      %v5317 = vpop.f32.mrb[0].mxu0
      %v5318 = vpop.f32.mrb[0].mxu0
      %v5319 = vpop.f32.mrb[0].mxu0
      %v5320 = vadd.f32 0.0, %v5319
      %v5321 = vpop.f32.mrb[0].mxu0
      %5322 = vmatprep.mubr.bf16.mxu0 0
      %5323 = vmatmul.mubr.bf16.gmra.mrb[0].mxu0 %v5142
      %v5324 = vpop.f32.mrb[0].mxu0
      %v5325 = vadd.f32 0.0, %v5324
      %v5326 = vpop.f32.mrb[0].mxu0
      %v5327 = vpop.f32.mrb[0].mxu0
      %v5328 = vpop.f32.mrb[0].mxu0
      %5329 = vmatprep.mubr.bf16.mxu0 0
      %5330 = vmatmul.mubr.bf16.gmra.mrb[0].mxu0 %v5145
      %v5331 = vpop.f32.mrb[0].mxu0
      %v5332 = vadd.f32 0.0, %v5331
      %v5333 = vpop.f32.mrb[0].mxu0
      %v5334 = vpop.f32.mrb[0].mxu0
      %v5335 = vadd.f32 0.0, %v5334
      %v5336 = vpop.f32.mrb[0].mxu0
      %5337 = vmatprep.mubr.bf16.mxu0 0
      %5338 = vmatmul.mubr.bf16.gmra.mrb[0].mxu0 %v5148
      %v5339 = vpop.f32.mrb[0].mxu0
      %v5340 = vpop.f32.mrb[0].mxu0
      %v5341 = vpop.f32.mrb[0].mxu0
      %v5342 = vadd.f32 0.0, %v5341
      %v5343 = vpop.f32.mrb[0].mxu0
      %5344 = vmatprep.mubr.bf16.mxu0 0
      %5345 = vmatmul.mubr.bf16.gmra.mrb[0].mxu0 %v5151
      %v5346 = vpop.f32.mrb[0].mxu0
      %v5347 = vadd.f32 0.0, %v5346
      %v5348 = vpop.f32.mrb[0].mxu0
      %v5349 = vpop.f32.mrb[0].mxu0
      %v5350 = vpop.f32.mrb[0].mxu0
      %5351 = vmatprep.mubr.bf16.mxu0 0
      %5352 = vmatmul.mubr.bf16.gmra.mrb[0].mxu0 %v5154
      %v5353 = vpop.f32.mrb[0].mxu0
      %v5354 = vadd.f32 0.0, %v5353
      %v5355 = vpop.f32.mrb[0].mxu0
      %v5356 = vpop.f32.mrb[0].mxu0
      %v5357 = vadd.f32 0.0, %v5356
      %v5358 = vpop.f32.mrb[0].mxu0
      %5359 = vmatprep.mubr.bf16.mxu0 0
      %5360 = vmatmul.mubr.bf16.gmra.mrb[0].mxu0 %v5157
      %v5361 = vpop.f32.mrb[0].mxu0
      %v5362 = vpop.f32.mrb[0].mxu0
      %v5363 = vpop.f32.mrb[0].mxu0
      %v5364 = vadd.f32 0.0, %v5363
      %v5365 = vpop.f32.mrb[0].mxu0
      %5366 = vmatprep.mubr.bf16.mxu0 0
      %5367 = vmatmul.mubr.bf16.gmra.mrb[0].mxu0 %v5160
      %v5368 = vpop.f32.mrb[0].mxu0
      %v5369 = vadd.f32 0.0, %v5368
      %v5370 = vpop.f32.mrb[0].mxu0
      %v5371 = vpop.f32.mrb[0].mxu0
      %v5372 = vpop.f32.mrb[0].mxu0
      %5373 = vdwg.mxu0
      %v5374 = vadd.f32 %v4883, %v5200
      %v5375 = vadd.f32 %v4884, %v5203
      %v5376 = vadd.f32 %v4885, %v5210
      %v5377 = vadd.f32 %v4886, %v5215
      %v5378 = vadd.f32 %v4887, %v5222
      %v5379 = vadd.f32 %v4888, %v5225
      %v5380 = vadd.f32 %v4889, %v5232
      %v5381 = vadd.f32 %v4890, %v5237
      %v5382 = vadd.f32 %v4891, %v5244
      %v5383 = vadd.f32 %v4892, %v5247
      %v5384 = vadd.f32 %v4893, %v5254
      %v5385 = vadd.f32 %v4894, %v5259
      %v5386 = vadd.f32 %v4895, %v5266
      %v5387 = vadd.f32 %v4896, %v5269
      %v5388 = vadd.f32 %v4897, %v5276
      %v5389 = vadd.f32 %v4898, %v5281
      %v5390 = vadd.f32 %v4899, %v5288
      %v5391 = vadd.f32 %v4900, %v5291
      %v5392 = vadd.f32 %v4901, %v5298
      %v5393 = vadd.f32 %v4902, %v5303
      %v5394 = vadd.f32 %v4903, %v5310
      %v5395 = vadd.f32 %v4904, %v5313
      %v5396 = vadd.f32 %v4905, %v5320
      %v5397 = vadd.f32 %v4906, %v5325
      %v5398 = vadd.f32 %v4907, %v5332
      %v5399 = vadd.f32 %v4908, %v5335
      %v5400 = vadd.f32 %v4909, %v5342
      %v5401 = vadd.f32 %v4910, %v5347
      %v5402 = vadd.f32 %v4911, %v5354
      %v5403 = vadd.f32 %v4912, %v5357
      %v5404 = vadd.f32 %v4913, %v5364
      %v5405 = vadd.f32 %v4914, %v5369
      %v5406 = vpack.c.bf16 %v4034, %v4034
      %s5407 = scalar_lea.vmem %s2, 8
      %v5408 = vld [vmem:[%s5407] sm:$0x3]
      %v5409 = vshrl.u32 %v4063, 16
      %v5411 = vshll.u32 %v4063, 16
      %v5413 = vrot.slane %v5411, 1
      %v5414 = vor.u32 %v5409, %v5413
      %v5415 = vshll.u32 %v4064, 16
      %v5417 = vrot.slane %v5415, 1
      %v5418 = vsel %vm1280, %v5414, %v5417
      %v5419 = vshrl.u32 %v4064, 16
      %v5421 = vor.u32 %v5419, %v5417
      %v5422 = vshll.u32 %v4065, 16
      %v5424 = vrot.slane %v5422, 1
      %v5425 = vsel %vm1280, %v5421, %v5424
      %v5426 = vshrl.u32 %v4065, 16
      %v5428 = vor.u32 %v5426, %v5424
      %v5429 = vshll.u32 %v4066, 16
      %v5431 = vrot.slane %v5429, 1
      %v5432 = vsel %vm1280, %v5428, %v5431
      %v5433 = vshrl.u32 %v4066, 16
      %v5435 = vor.u32 %v5433, %v5431
      %v5436 = vshll.u32 %v4067, 16
      %v5438 = vrot.slane %v5436, 1
      %v5439 = vsel %vm1280, %v5435, %v5438
      %v5440 = vshrl.u32 %v4067, 16
      %v5442 = vor.u32 %v5440, %v5438
      %v5443 = vshll.u32 %v4068, 16
      %v5445 = vrot.slane %v5443, 1
      %v5446 = vsel %vm1280, %v5442, %v5445
      %v5447 = vshrl.u32 %v4068, 16
      %v5449 = vor.u32 %v5447, %v5445
      %v5450 = vshll.u32 %v4069, 16
      %v5452 = vrot.slane %v5450, 1
      %v5453 = vsel %vm1280, %v5449, %v5452
      %v5454 = vshrl.u32 %v4069, 16
      %v5456 = vor.u32 %v5454, %v5452
      %v5457 = vshll.u32 %v4070, 16
      %v5459 = vrot.slane %v5457, 1
      %v5460 = vsel %vm1280, %v5456, %v5459
      %v5461 = vshrl.u32 %v4070, 16
      %v5463 = vor.u32 %v5461, %v5459
      %v5464 = vshll.u32 %v4071, 16
      %v5466 = vrot.slane %v5464, 1
      %v5467 = vsel %vm1280, %v5463, %v5466
      %v5468 = vshrl.u32 %v4071, 16
      %v5470 = vor.u32 %v5468, %v5466
      %v5471 = vshll.u32 %v4072, 16
      %v5473 = vrot.slane %v5471, 1
      %v5474 = vsel %vm1280, %v5470, %v5473
      %v5475 = vshrl.u32 %v4072, 16
      %v5477 = vor.u32 %v5475, %v5473
      %v5478 = vshll.u32 %v4073, 16
      %v5480 = vrot.slane %v5478, 1
      %v5481 = vsel %vm1280, %v5477, %v5480
      %v5482 = vshrl.u32 %v4073, 16
      %v5484 = vor.u32 %v5482, %v5480
      %v5485 = vshll.u32 %v4074, 16
      %v5487 = vrot.slane %v5485, 1
      %v5488 = vsel %vm1280, %v5484, %v5487
      %v5489 = vshrl.u32 %v4074, 16
      %v5491 = vor.u32 %v5489, %v5487
      %v5492 = vshll.u32 %v4075, 16
      %v5494 = vrot.slane %v5492, 1
      %v5495 = vsel %vm1280, %v5491, %v5494
      %v5496 = vshrl.u32 %v4075, 16
      %v5498 = vor.u32 %v5496, %v5494
      %v5499 = vshll.u32 %v4076, 16
      %v5501 = vrot.slane %v5499, 1
      %v5502 = vsel %vm1280, %v5498, %v5501
      %v5503 = vshrl.u32 %v4076, 16
      %v5505 = vor.u32 %v5503, %v5501
      %v5506 = vshll.u32 %v4077, 16
      %v5508 = vrot.slane %v5506, 1
      %v5509 = vsel %vm1280, %v5505, %v5508
      %v5510 = vshrl.u32 %v4077, 16
      %v5512 = vor.u32 %v5510, %v5508
      %v5513 = vshll.u32 %v4078, 16
      %v5515 = vrot.slane %v5513, 1
      %v5516 = vsel %vm1280, %v5512, %v5515
      %v5517 = vshrl.u32 %v4078, 16
      %v5519 = vor.u32 %v5517, %v5515
      %v5520 = vshll.u32 %v4079, 16
      %v5522 = vrot.slane %v5520, 1
      %v5523 = vsel %vm1280, %v5519, %v5522
      %v5524 = vshrl.u32 %v4079, 16
      %v5526 = vor.u32 %v5524, %v5522
      %v5527 = vshll.u32 %v4080, 16
      %v5529 = vrot.slane %v5527, 1
      %v5530 = vsel %vm1280, %v5526, %v5529
      %v5531 = vshrl.u32 %v4080, 16
      %v5533 = vor.u32 %v5531, %v5529
      %v5534 = vshll.u32 %v4081, 16
      %v5536 = vrot.slane %v5534, 1
      %v5537 = vsel %vm1280, %v5533, %v5536
      %v5538 = vshrl.u32 %v4081, 16
      %v5540 = vor.u32 %v5538, %v5536
      %v5541 = vshll.u32 %v4082, 16
      %v5543 = vrot.slane %v5541, 1
      %v5544 = vsel %vm1280, %v5540, %v5543
      %v5545 = vshrl.u32 %v4082, 16
      %v5547 = vor.u32 %v5545, %v5543
      %v5548 = vshll.u32 %v4083, 16
      %v5550 = vrot.slane %v5548, 1
      %v5551 = vsel %vm1280, %v5547, %v5550
      %v5552 = vshrl.u32 %v4083, 16
      %v5554 = vor.u32 %v5552, %v5550
      %v5555 = vshll.u32 %v4084, 16
      %v5557 = vrot.slane %v5555, 1
      %v5558 = vsel %vm1280, %v5554, %v5557
      %v5559 = vshrl.u32 %v4084, 16
      %v5561 = vor.u32 %v5559, %v5557
      %v5562 = vshll.u32 %v4085, 16
      %v5564 = vrot.slane %v5562, 1
      %v5565 = vsel %vm1280, %v5561, %v5564
      %v5566 = vshrl.u32 %v4085, 16
      %v5568 = vor.u32 %v5566, %v5564
      %v5569 = vshll.u32 %v4086, 16
      %v5571 = vrot.slane %v5569, 1
      %v5572 = vsel %vm1280, %v5568, %v5571
      %v5573 = vshrl.u32 %v4086, 16
      %v5575 = vor.u32 %v5573, %v5571
      %v5577 = vshll.u32 %v5406, 16
      %v5579 = vrot.slane %v5577, 1
      %v5580 = vsel %vm1280, %v5575, %v5579
      %v5582 = vsel %vm225, %v5418, 0
      %v5585 = vsel %vm225, %v5425, 0
      %v5588 = vsel %vm225, %v5432, 0
      %v5591 = vsel %vm225, %v5439, 0
      %v5594 = vsel %vm225, %v5446, 0
      %v5597 = vsel %vm225, %v5453, 0
      %v5600 = vsel %vm225, %v5460, 0
      %v5603 = vsel %vm225, %v5467, 0
      %v5606 = vsel %vm225, %v5474, 0
      %v5609 = vsel %vm225, %v5481, 0
      %v5612 = vsel %vm225, %v5488, 0
      %v5615 = vsel %vm225, %v5495, 0
      %v5618 = vsel %vm225, %v5502, 0
      %v5621 = vsel %vm225, %v5509, 0
      %v5624 = vsel %vm225, %v5516, 0
      %v5627 = vsel %vm225, %v5523, 0
      %v5630 = vsel %vm225, %v5530, 0
      %v5633 = vsel %vm225, %v5537, 0
      %v5636 = vsel %vm225, %v5544, 0
      %v5639 = vsel %vm225, %v5551, 0
      %v5642 = vsel %vm225, %v5558, 0
      %v5645 = vsel %vm225, %v5565, 0
      %v5648 = vsel %vm225, %v5572, 0
      %v5651 = vsel %vm225, %v5580, 0
      %v5654 = vsel %vm522, %v5408, 0
      %5656 = vmatprep.subr.bf16.mxu0 0
      %5657 = vmatpush1.bf16.msra.mxu0 %v5654
      %5658 = vmatprep.subr.bf16.mxu0 0
      %5659 = vmatpush1.bf16.msra.mxu0 0
      %5660 = vmatprep.subr.bf16.mxu0 0
      %5661 = vmatpush1.bf16.msra.mxu0 0
      %5662 = vmatprep.subr.bf16.mxu0 0
      %5663 = vmatpush1.bf16.msra.mxu0 0
      %5664 = vmatprep.subr.bf16.mxu0 0
      %5665 = vmatpush1.bf16.msra.mxu0 0
      %5666 = vmatprep.subr.bf16.mxu0 0
      %5667 = vmatpush1.bf16.msra.mxu0 0
      %5668 = vmatprep.subr.bf16.mxu0 0
      %5669 = vmatpush1.bf16.msra.mxu0 0
      %5670 = vmatprep.subr.bf16.mxu0 0
      %5671 = vmatpush1.bf16.msra.mxu0 0
      %5672 = vmatprep.subr.bf16.mxu0 0
      %5673 = vmatpush1.bf16.msra.mxu0 0
      %5674 = vmatprep.subr.bf16.mxu0 0
      %5675 = vmatpush1.bf16.msra.mxu0 0
      %5676 = vmatprep.subr.bf16.mxu0 0
      %5677 = vmatpush1.bf16.msra.mxu0 0
      %5678 = vmatprep.subr.bf16.mxu0 0
      %5679 = vmatpush1.bf16.msra.mxu0 0
      %5680 = vmatprep.subr.bf16.mxu0 0
      %5681 = vmatpush1.bf16.msra.mxu0 0
      %5682 = vmatprep.subr.bf16.mxu0 0
      %5683 = vmatpush1.bf16.msra.mxu0 0
      %5684 = vmatprep.subr.bf16.mxu0 0
      %5685 = vmatpush1.bf16.msra.mxu0 0
      %5686 = vmatprep.subr.bf16.mxu0 0
      %5687 = vmatpush1.bf16.msra.mxu0 0
      %5688 = vmatprep.mubr.bf16.mxu0 0
      %5689 = vmatmul.mubr.bf16.gmra.mrb[0].mxu0 %v5582
      %v5690 = vpop.f32.mrb[0].mxu0
      %v5691 = vadd.f32 0.0, %v5690
      %v5692 = vpop.f32.mrb[0].mxu0
      %v5693 = vpop.f32.mrb[0].mxu0
      %v5694 = vadd.f32 0.0, %v5693
      %v5695 = vpop.f32.mrb[0].mxu0
      %5696 = vmatprep.mubr.bf16.mxu0 0
      %5697 = vmatmul.mubr.bf16.gmra.mrb[0].mxu0 %v5585
      %v5698 = vpop.f32.mrb[0].mxu0
      %v5699 = vpop.f32.mrb[0].mxu0
      %v5700 = vpop.f32.mrb[0].mxu0
      %v5701 = vadd.f32 0.0, %v5700
      %v5702 = vpop.f32.mrb[0].mxu0
      %5703 = vmatprep.mubr.bf16.mxu0 0
      %5704 = vmatmul.mubr.bf16.gmra.mrb[0].mxu0 %v5588
      %v5705 = vpop.f32.mrb[0].mxu0
      %v5706 = vadd.f32 0.0, %v5705
      %v5707 = vpop.f32.mrb[0].mxu0
      %v5708 = vpop.f32.mrb[0].mxu0
      %v5709 = vpop.f32.mrb[0].mxu0
      %5710 = vmatprep.mubr.bf16.mxu0 0
      %5711 = vmatmul.mubr.bf16.gmra.mrb[0].mxu0 %v5591
      %v5712 = vpop.f32.mrb[0].mxu0
      %v5713 = vadd.f32 0.0, %v5712
      %v5714 = vpop.f32.mrb[0].mxu0
      %v5715 = vpop.f32.mrb[0].mxu0
      %v5716 = vadd.f32 0.0, %v5715
      %v5717 = vpop.f32.mrb[0].mxu0
      %5718 = vmatprep.mubr.bf16.mxu0 0
      %5719 = vmatmul.mubr.bf16.gmra.mrb[0].mxu0 %v5594
      %v5720 = vpop.f32.mrb[0].mxu0
      %v5721 = vpop.f32.mrb[0].mxu0
      %v5722 = vpop.f32.mrb[0].mxu0
      %v5723 = vadd.f32 0.0, %v5722
      %v5724 = vpop.f32.mrb[0].mxu0
      %5725 = vmatprep.mubr.bf16.mxu0 0
      %5726 = vmatmul.mubr.bf16.gmra.mrb[0].mxu0 %v5597
      %v5727 = vpop.f32.mrb[0].mxu0
      %v5728 = vadd.f32 0.0, %v5727
      %v5729 = vpop.f32.mrb[0].mxu0
      %v5730 = vpop.f32.mrb[0].mxu0
      %v5731 = vpop.f32.mrb[0].mxu0
      %5732 = vmatprep.mubr.bf16.mxu0 0
      %5733 = vmatmul.mubr.bf16.gmra.mrb[0].mxu0 %v5600
      %v5734 = vpop.f32.mrb[0].mxu0
      %v5735 = vadd.f32 0.0, %v5734
      %v5736 = vpop.f32.mrb[0].mxu0
      %v5737 = vpop.f32.mrb[0].mxu0
      %v5738 = vadd.f32 0.0, %v5737
      %v5739 = vpop.f32.mrb[0].mxu0
      %5740 = vmatprep.mubr.bf16.mxu0 0
      %5741 = vmatmul.mubr.bf16.gmra.mrb[0].mxu0 %v5603
      %v5742 = vpop.f32.mrb[0].mxu0
      %v5743 = vpop.f32.mrb[0].mxu0
      %v5744 = vpop.f32.mrb[0].mxu0
      %v5745 = vadd.f32 0.0, %v5744
      %v5746 = vpop.f32.mrb[0].mxu0
      %5747 = vmatprep.mubr.bf16.mxu0 0
      %5748 = vmatmul.mubr.bf16.gmra.mrb[0].mxu0 %v5606
      %v5749 = vpop.f32.mrb[0].mxu0
      %v5750 = vadd.f32 0.0, %v5749
      %v5751 = vpop.f32.mrb[0].mxu0
      %v5752 = vpop.f32.mrb[0].mxu0
      %v5753 = vpop.f32.mrb[0].mxu0
      %5754 = vmatprep.mubr.bf16.mxu0 0
      %5755 = vmatmul.mubr.bf16.gmra.mrb[0].mxu0 %v5609
      %v5756 = vpop.f32.mrb[0].mxu0
      %v5757 = vadd.f32 0.0, %v5756
      %v5758 = vpop.f32.mrb[0].mxu0
      %v5759 = vpop.f32.mrb[0].mxu0
      %v5760 = vadd.f32 0.0, %v5759
      %v5761 = vpop.f32.mrb[0].mxu0
      %5762 = vmatprep.mubr.bf16.mxu0 0
      %5763 = vmatmul.mubr.bf16.gmra.mrb[0].mxu0 %v5612
      %v5764 = vpop.f32.mrb[0].mxu0
      %v5765 = vpop.f32.mrb[0].mxu0
      %v5766 = vpop.f32.mrb[0].mxu0
      %v5767 = vadd.f32 0.0, %v5766
      %v5768 = vpop.f32.mrb[0].mxu0
      %5769 = vmatprep.mubr.bf16.mxu0 0
      %5770 = vmatmul.mubr.bf16.gmra.mrb[0].mxu0 %v5615
      %v5771 = vpop.f32.mrb[0].mxu0
      %v5772 = vadd.f32 0.0, %v5771
      %v5773 = vpop.f32.mrb[0].mxu0
      %v5774 = vpop.f32.mrb[0].mxu0
      %v5775 = vpop.f32.mrb[0].mxu0
      %5776 = vmatprep.mubr.bf16.mxu0 0
      %5777 = vmatmul.mubr.bf16.gmra.mrb[0].mxu0 %v5618
      %v5778 = vpop.f32.mrb[0].mxu0
      %v5779 = vadd.f32 0.0, %v5778
      %v5780 = vpop.f32.mrb[0].mxu0
      %v5781 = vpop.f32.mrb[0].mxu0
      %v5782 = vadd.f32 0.0, %v5781
      %v5783 = vpop.f32.mrb[0].mxu0
      %5784 = vmatprep.mubr.bf16.mxu0 0
      %5785 = vmatmul.mubr.bf16.gmra.mrb[0].mxu0 %v5621
      %v5786 = vpop.f32.mrb[0].mxu0
      %v5787 = vpop.f32.mrb[0].mxu0
      %v5788 = vpop.f32.mrb[0].mxu0
      %v5789 = vadd.f32 0.0, %v5788
      %v5790 = vpop.f32.mrb[0].mxu0
      %5791 = vmatprep.mubr.bf16.mxu0 0
      %5792 = vmatmul.mubr.bf16.gmra.mrb[0].mxu0 %v5624
      %v5793 = vpop.f32.mrb[0].mxu0
      %v5794 = vadd.f32 0.0, %v5793
      %v5795 = vpop.f32.mrb[0].mxu0
      %v5796 = vpop.f32.mrb[0].mxu0
      %v5797 = vpop.f32.mrb[0].mxu0
      %5798 = vmatprep.mubr.bf16.mxu0 0
      %5799 = vmatmul.mubr.bf16.gmra.mrb[0].mxu0 %v5627
      %v5800 = vpop.f32.mrb[0].mxu0
      %v5801 = vadd.f32 0.0, %v5800
      %v5802 = vpop.f32.mrb[0].mxu0
      %v5803 = vpop.f32.mrb[0].mxu0
      %v5804 = vadd.f32 0.0, %v5803
      %v5805 = vpop.f32.mrb[0].mxu0
      %5806 = vmatprep.mubr.bf16.mxu0 0
      %5807 = vmatmul.mubr.bf16.gmra.mrb[0].mxu0 %v5630
      %v5808 = vpop.f32.mrb[0].mxu0
      %v5809 = vpop.f32.mrb[0].mxu0
      %v5810 = vpop.f32.mrb[0].mxu0
      %v5811 = vadd.f32 0.0, %v5810
      %v5812 = vpop.f32.mrb[0].mxu0
      %5813 = vmatprep.mubr.bf16.mxu0 0
      %5814 = vmatmul.mubr.bf16.gmra.mrb[0].mxu0 %v5633
      %v5815 = vpop.f32.mrb[0].mxu0
      %v5816 = vadd.f32 0.0, %v5815
      %v5817 = vpop.f32.mrb[0].mxu0
      %v5818 = vpop.f32.mrb[0].mxu0
      %v5819 = vpop.f32.mrb[0].mxu0
      %5820 = vmatprep.mubr.bf16.mxu0 0
      %5821 = vmatmul.mubr.bf16.gmra.mrb[0].mxu0 %v5636
      %v5822 = vpop.f32.mrb[0].mxu0
      %v5823 = vadd.f32 0.0, %v5822
      %v5824 = vpop.f32.mrb[0].mxu0
      %v5825 = vpop.f32.mrb[0].mxu0
      %v5826 = vadd.f32 0.0, %v5825
      %v5827 = vpop.f32.mrb[0].mxu0
      %5828 = vmatprep.mubr.bf16.mxu0 0
      %5829 = vmatmul.mubr.bf16.gmra.mrb[0].mxu0 %v5639
      %v5830 = vpop.f32.mrb[0].mxu0
      %v5831 = vpop.f32.mrb[0].mxu0
      %v5832 = vpop.f32.mrb[0].mxu0
      %v5833 = vadd.f32 0.0, %v5832
      %v5834 = vpop.f32.mrb[0].mxu0
      %5835 = vmatprep.mubr.bf16.mxu0 0
      %5836 = vmatmul.mubr.bf16.gmra.mrb[0].mxu0 %v5642
      %v5837 = vpop.f32.mrb[0].mxu0
      %v5838 = vadd.f32 0.0, %v5837
      %v5839 = vpop.f32.mrb[0].mxu0
      %v5840 = vpop.f32.mrb[0].mxu0
      %v5841 = vpop.f32.mrb[0].mxu0
      %5842 = vmatprep.mubr.bf16.mxu0 0
      %5843 = vmatmul.mubr.bf16.gmra.mrb[0].mxu0 %v5645
      %v5844 = vpop.f32.mrb[0].mxu0
      %v5845 = vadd.f32 0.0, %v5844
      %v5846 = vpop.f32.mrb[0].mxu0
      %v5847 = vpop.f32.mrb[0].mxu0
      %v5848 = vadd.f32 0.0, %v5847
      %v5849 = vpop.f32.mrb[0].mxu0
      %5850 = vmatprep.mubr.bf16.mxu0 0
      %5851 = vmatmul.mubr.bf16.gmra.mrb[0].mxu0 %v5648
      %v5852 = vpop.f32.mrb[0].mxu0
      %v5853 = vpop.f32.mrb[0].mxu0
      %v5854 = vpop.f32.mrb[0].mxu0
      %v5855 = vadd.f32 0.0, %v5854
      %v5856 = vpop.f32.mrb[0].mxu0
      %5857 = vmatprep.mubr.bf16.mxu0 0
      %5858 = vmatmul.mubr.bf16.gmra.mrb[0].mxu0 %v5651
      %v5859 = vpop.f32.mrb[0].mxu0
      %v5860 = vadd.f32 0.0, %v5859
      %v5861 = vpop.f32.mrb[0].mxu0
      %v5862 = vpop.f32.mrb[0].mxu0
      %v5863 = vpop.f32.mrb[0].mxu0
      %5864 = vdwg.mxu0
      %v5865 = vadd.f32 %v5374, %v5691
      %v5866 = vadd.f32 %v5375, %v5694
      %v5867 = vadd.f32 %v5376, %v5701
      %v5868 = vadd.f32 %v5377, %v5706
      %v5869 = vadd.f32 %v5378, %v5713
      %v5870 = vadd.f32 %v5379, %v5716
      %v5871 = vadd.f32 %v5380, %v5723
      %v5872 = vadd.f32 %v5381, %v5728
      %v5873 = vadd.f32 %v5382, %v5735
      %v5874 = vadd.f32 %v5383, %v5738
      %v5875 = vadd.f32 %v5384, %v5745
      %v5876 = vadd.f32 %v5385, %v5750
      %v5877 = vadd.f32 %v5386, %v5757
      %v5878 = vadd.f32 %v5387, %v5760
      %v5879 = vadd.f32 %v5388, %v5767
      %v5880 = vadd.f32 %v5389, %v5772
      %v5881 = vadd.f32 %v5390, %v5779
      %v5882 = vadd.f32 %v5391, %v5782
      %v5883 = vadd.f32 %v5392, %v5789
      %v5884 = vadd.f32 %v5393, %v5794
      %v5885 = vadd.f32 %v5394, %v5801
      %v5886 = vadd.f32 %v5395, %v5804
      %v5887 = vadd.f32 %v5396, %v5811
      %v5888 = vadd.f32 %v5397, %v5816
      %v5889 = vadd.f32 %v5398, %v5823
      %v5890 = vadd.f32 %v5399, %v5826
      %v5891 = vadd.f32 %v5400, %v5833
      %v5892 = vadd.f32 %v5401, %v5838
      %v5893 = vadd.f32 %v5402, %v5845
      %v5894 = vadd.f32 %v5403, %v5848
      %v5895 = vadd.f32 %v5404, %v5855
      %v5896 = vadd.f32 %v5405, %v5860
      %v5897 = vpack.c.bf16 %v4037, %v4037
      %s5898 = scalar_lea.vmem %s2, 14
      %v5899 = vld [vmem:[%s5898] sm:$0x3]
      %v5900 = vshll.u32 %v4657, 16
      %v5902 = vrot.slane %v5900, 1
      %v5903 = vsel %vm1280, %v5084, %v5902
      %v5904 = vshrl.u32 %v4657, 16
      %v5906 = vor.u32 %v5904, %v5902
      %v5907 = vshll.u32 %v4658, 16
      %v5909 = vrot.slane %v5907, 1
      %v5910 = vsel %vm1280, %v5906, %v5909
      %v5911 = vshrl.u32 %v4658, 16
      %v5913 = vor.u32 %v5911, %v5909
      %v5914 = vshll.u32 %v4659, 16
      %v5916 = vrot.slane %v5914, 1
      %v5917 = vsel %vm1280, %v5913, %v5916
      %v5918 = vshrl.u32 %v4659, 16
      %v5920 = vor.u32 %v5918, %v5916
      %v5922 = vshll.u32 %v5897, 16
      %v5924 = vrot.slane %v5922, 1
      %v5925 = vsel %vm1280, %v5920, %v5924
      %v5927 = vsel %vm225, %v5903, 0
      %v5930 = vsel %vm225, %v5910, 0
      %v5933 = vsel %vm225, %v5917, 0
      %v5936 = vsel %vm225, %v5925, 0
      %v5939 = vsel %vm522, %v5899, 0
      %5941 = vmatprep.subr.bf16.mxu0 0
      %5942 = vmatpush1.bf16.msra.mxu0 %v5939
      %5943 = vmatprep.subr.bf16.mxu0 0
      %5944 = vmatpush1.bf16.msra.mxu0 0
      %5945 = vmatprep.subr.bf16.mxu0 0
      %5946 = vmatpush1.bf16.msra.mxu0 0
      %5947 = vmatprep.subr.bf16.mxu0 0
      %5948 = vmatpush1.bf16.msra.mxu0 0
      %5949 = vmatprep.subr.bf16.mxu0 0
      %5950 = vmatpush1.bf16.msra.mxu0 0
      %5951 = vmatprep.subr.bf16.mxu0 0
      %5952 = vmatpush1.bf16.msra.mxu0 0
      %5953 = vmatprep.subr.bf16.mxu0 0
      %5954 = vmatpush1.bf16.msra.mxu0 0
      %5955 = vmatprep.subr.bf16.mxu0 0
      %5956 = vmatpush1.bf16.msra.mxu0 0
      %5957 = vmatprep.subr.bf16.mxu0 0
      %5958 = vmatpush1.bf16.msra.mxu0 0
      %5959 = vmatprep.subr.bf16.mxu0 0
      %5960 = vmatpush1.bf16.msra.mxu0 0
      %5961 = vmatprep.subr.bf16.mxu0 0
      %5962 = vmatpush1.bf16.msra.mxu0 0
      %5963 = vmatprep.subr.bf16.mxu0 0
      %5964 = vmatpush1.bf16.msra.mxu0 0
      %5965 = vmatprep.subr.bf16.mxu0 0
      %5966 = vmatpush1.bf16.msra.mxu0 0
      %5967 = vmatprep.subr.bf16.mxu0 0
      %5968 = vmatpush1.bf16.msra.mxu0 0
      %5969 = vmatprep.subr.bf16.mxu0 0
      %5970 = vmatpush1.bf16.msra.mxu0 0
      %5971 = vmatprep.subr.bf16.mxu0 0
      %5972 = vmatpush1.bf16.msra.mxu0 0
      %5973 = vmatprep.mubr.bf16.mxu0 0
      %5974 = vmatmul.mubr.bf16.gmra.mrb[0].mxu0 %v5100
      %v5975 = vpop.f32.mrb[0].mxu0
      %v5976 = vadd.f32 0.0, %v5975
      %v5977 = vpop.f32.mrb[0].mxu0
      %v5978 = vpop.f32.mrb[0].mxu0
      %v5979 = vadd.f32 0.0, %v5978
      %v5980 = vpop.f32.mrb[0].mxu0
      %5981 = vmatprep.mubr.bf16.mxu0 0
      %5982 = vmatmul.mubr.bf16.gmra.mrb[0].mxu0 %v5103
      %v5983 = vpop.f32.mrb[0].mxu0
      %v5984 = vpop.f32.mrb[0].mxu0
      %v5985 = vpop.f32.mrb[0].mxu0
      %v5986 = vadd.f32 0.0, %v5985
      %v5987 = vpop.f32.mrb[0].mxu0
      %5988 = vmatprep.mubr.bf16.mxu0 0
      %5989 = vmatmul.mubr.bf16.gmra.mrb[0].mxu0 %v5106
      %v5990 = vpop.f32.mrb[0].mxu0
      %v5991 = vadd.f32 0.0, %v5990
      %v5992 = vpop.f32.mrb[0].mxu0
      %v5993 = vpop.f32.mrb[0].mxu0
      %v5994 = vpop.f32.mrb[0].mxu0
      %5995 = vmatprep.mubr.bf16.mxu0 0
      %5996 = vmatmul.mubr.bf16.gmra.mrb[0].mxu0 %v5109
      %v5997 = vpop.f32.mrb[0].mxu0
      %v5998 = vadd.f32 0.0, %v5997
      %v5999 = vpop.f32.mrb[0].mxu0
      %v6000 = vpop.f32.mrb[0].mxu0
      %v6001 = vadd.f32 0.0, %v6000
      %v6002 = vpop.f32.mrb[0].mxu0
      %6003 = vmatprep.mubr.bf16.mxu0 0
      %6004 = vmatmul.mubr.bf16.gmra.mrb[0].mxu0 %v5112
      %v6005 = vpop.f32.mrb[0].mxu0
      %v6006 = vpop.f32.mrb[0].mxu0
      %v6007 = vpop.f32.mrb[0].mxu0
      %v6008 = vadd.f32 0.0, %v6007
      %v6009 = vpop.f32.mrb[0].mxu0
      %6010 = vmatprep.mubr.bf16.mxu0 0
      %6011 = vmatmul.mubr.bf16.gmra.mrb[0].mxu0 %v5115
      %v6012 = vpop.f32.mrb[0].mxu0
      %v6013 = vadd.f32 0.0, %v6012
      %v6014 = vpop.f32.mrb[0].mxu0
      %v6015 = vpop.f32.mrb[0].mxu0
      %v6016 = vpop.f32.mrb[0].mxu0
      %6017 = vmatprep.mubr.bf16.mxu0 0
      %6018 = vmatmul.mubr.bf16.gmra.mrb[0].mxu0 %v5118
      %v6019 = vpop.f32.mrb[0].mxu0
      %v6020 = vadd.f32 0.0, %v6019
      %v6021 = vpop.f32.mrb[0].mxu0
      %v6022 = vpop.f32.mrb[0].mxu0
      %v6023 = vadd.f32 0.0, %v6022
      %v6024 = vpop.f32.mrb[0].mxu0
      %6025 = vmatprep.mubr.bf16.mxu0 0
      %6026 = vmatmul.mubr.bf16.gmra.mrb[0].mxu0 %v5121
      %v6027 = vpop.f32.mrb[0].mxu0
      %v6028 = vpop.f32.mrb[0].mxu0
      %v6029 = vpop.f32.mrb[0].mxu0
      %v6030 = vadd.f32 0.0, %v6029
      %v6031 = vpop.f32.mrb[0].mxu0
      %6032 = vmatprep.mubr.bf16.mxu0 0
      %6033 = vmatmul.mubr.bf16.gmra.mrb[0].mxu0 %v5124
      %v6034 = vpop.f32.mrb[0].mxu0
      %v6035 = vadd.f32 0.0, %v6034
      %v6036 = vpop.f32.mrb[0].mxu0
      %v6037 = vpop.f32.mrb[0].mxu0
      %v6038 = vpop.f32.mrb[0].mxu0
      %6039 = vmatprep.mubr.bf16.mxu0 0
      %6040 = vmatmul.mubr.bf16.gmra.mrb[0].mxu0 %v5127
      %v6041 = vpop.f32.mrb[0].mxu0
      %v6042 = vadd.f32 0.0, %v6041
      %v6043 = vpop.f32.mrb[0].mxu0
      %v6044 = vpop.f32.mrb[0].mxu0
      %v6045 = vadd.f32 0.0, %v6044
      %v6046 = vpop.f32.mrb[0].mxu0
      %6047 = vmatprep.mubr.bf16.mxu0 0
      %6048 = vmatmul.mubr.bf16.gmra.mrb[0].mxu0 %v5130
      %v6049 = vpop.f32.mrb[0].mxu0
      %v6050 = vpop.f32.mrb[0].mxu0
      %v6051 = vpop.f32.mrb[0].mxu0
      %v6052 = vadd.f32 0.0, %v6051
      %v6053 = vpop.f32.mrb[0].mxu0
      %6054 = vmatprep.mubr.bf16.mxu0 0
      %6055 = vmatmul.mubr.bf16.gmra.mrb[0].mxu0 %v5133
      %v6056 = vpop.f32.mrb[0].mxu0
      %v6057 = vadd.f32 0.0, %v6056
      %v6058 = vpop.f32.mrb[0].mxu0
      %v6059 = vpop.f32.mrb[0].mxu0
      %v6060 = vpop.f32.mrb[0].mxu0
      %6061 = vmatprep.mubr.bf16.mxu0 0
      %6062 = vmatmul.mubr.bf16.gmra.mrb[0].mxu0 %v5136
      %v6063 = vpop.f32.mrb[0].mxu0
      %v6064 = vadd.f32 0.0, %v6063
      %v6065 = vpop.f32.mrb[0].mxu0
      %v6066 = vpop.f32.mrb[0].mxu0
      %v6067 = vadd.f32 0.0, %v6066
      %v6068 = vpop.f32.mrb[0].mxu0
      %6069 = vmatprep.mubr.bf16.mxu0 0
      %6070 = vmatmul.mubr.bf16.gmra.mrb[0].mxu0 %v5139
      %v6071 = vpop.f32.mrb[0].mxu0
      %v6072 = vpop.f32.mrb[0].mxu0
      %v6073 = vpop.f32.mrb[0].mxu0
      %v6074 = vadd.f32 0.0, %v6073
      %v6075 = vpop.f32.mrb[0].mxu0
      %6076 = vmatprep.mubr.bf16.mxu0 0
      %6077 = vmatmul.mubr.bf16.gmra.mrb[0].mxu0 %v5142
      %v6078 = vpop.f32.mrb[0].mxu0
      %v6079 = vadd.f32 0.0, %v6078
      %v6080 = vpop.f32.mrb[0].mxu0
      %v6081 = vpop.f32.mrb[0].mxu0
      %v6082 = vpop.f32.mrb[0].mxu0
      %6083 = vmatprep.mubr.bf16.mxu0 0
      %6084 = vmatmul.mubr.bf16.gmra.mrb[0].mxu0 %v5145
      %v6085 = vpop.f32.mrb[0].mxu0
      %v6086 = vadd.f32 0.0, %v6085
      %v6087 = vpop.f32.mrb[0].mxu0
      %v6088 = vpop.f32.mrb[0].mxu0
      %v6089 = vadd.f32 0.0, %v6088
      %v6090 = vpop.f32.mrb[0].mxu0
      %6091 = vmatprep.mubr.bf16.mxu0 0
      %6092 = vmatmul.mubr.bf16.gmra.mrb[0].mxu0 %v5148
      %v6093 = vpop.f32.mrb[0].mxu0
      %v6094 = vpop.f32.mrb[0].mxu0
      %v6095 = vpop.f32.mrb[0].mxu0
      %v6096 = vadd.f32 0.0, %v6095
      %v6097 = vpop.f32.mrb[0].mxu0
      %6098 = vmatprep.mubr.bf16.mxu0 0
      %6099 = vmatmul.mubr.bf16.gmra.mrb[0].mxu0 %v5151
      %v6100 = vpop.f32.mrb[0].mxu0
      %v6101 = vadd.f32 0.0, %v6100
      %v6102 = vpop.f32.mrb[0].mxu0
      %v6103 = vpop.f32.mrb[0].mxu0
      %v6104 = vpop.f32.mrb[0].mxu0
      %6105 = vmatprep.mubr.bf16.mxu0 0
      %6106 = vmatmul.mubr.bf16.gmra.mrb[0].mxu0 %v5154
      %v6107 = vpop.f32.mrb[0].mxu0
      %v6108 = vadd.f32 0.0, %v6107
      %v6109 = vpop.f32.mrb[0].mxu0
      %v6110 = vpop.f32.mrb[0].mxu0
      %v6111 = vadd.f32 0.0, %v6110
      %v6112 = vpop.f32.mrb[0].mxu0
      %6113 = vmatprep.mubr.bf16.mxu0 0
      %6114 = vmatmul.mubr.bf16.gmra.mrb[0].mxu0 %v5157
      %v6115 = vpop.f32.mrb[0].mxu0
      %v6116 = vpop.f32.mrb[0].mxu0
      %v6117 = vpop.f32.mrb[0].mxu0
      %v6118 = vadd.f32 0.0, %v6117
      %v6119 = vpop.f32.mrb[0].mxu0
      %6120 = vmatprep.mubr.bf16.mxu0 0
      %6121 = vmatmul.mubr.bf16.gmra.mrb[0].mxu0 %v5927
      %v6122 = vpop.f32.mrb[0].mxu0
      %v6123 = vadd.f32 0.0, %v6122
      %v6124 = vpop.f32.mrb[0].mxu0
      %v6125 = vpop.f32.mrb[0].mxu0
      %v6126 = vpop.f32.mrb[0].mxu0
      %6127 = vmatprep.mubr.bf16.mxu0 0
      %6128 = vmatmul.mubr.bf16.gmra.mrb[0].mxu0 %v5930
      %v6129 = vpop.f32.mrb[0].mxu0
      %v6130 = vadd.f32 0.0, %v6129
      %v6131 = vpop.f32.mrb[0].mxu0
      %v6132 = vpop.f32.mrb[0].mxu0
      %v6133 = vadd.f32 0.0, %v6132
      %v6134 = vpop.f32.mrb[0].mxu0
      %6135 = vmatprep.mubr.bf16.mxu0 0
      %6136 = vmatmul.mubr.bf16.gmra.mrb[0].mxu0 %v5933
      %v6137 = vpop.f32.mrb[0].mxu0
      %v6138 = vpop.f32.mrb[0].mxu0
      %v6139 = vpop.f32.mrb[0].mxu0
      %v6140 = vadd.f32 0.0, %v6139
      %v6141 = vpop.f32.mrb[0].mxu0
      %6142 = vmatprep.mubr.bf16.mxu0 0
      %6143 = vmatmul.mubr.bf16.gmra.mrb[0].mxu0 %v5936
      %v6144 = vpop.f32.mrb[0].mxu0
      %v6145 = vadd.f32 0.0, %v6144
      %v6146 = vpop.f32.mrb[0].mxu0
      %v6147 = vpop.f32.mrb[0].mxu0
      %v6148 = vpop.f32.mrb[0].mxu0
      %6149 = vdwg.mxu0
      %v6150 = vadd.f32 %v5865, %v5976
      %v6151 = vadd.f32 %v5866, %v5979
      %v6152 = vadd.f32 %v5867, %v5986
      %v6153 = vadd.f32 %v5868, %v5991
      %v6154 = vadd.f32 %v5869, %v5998
      %v6155 = vadd.f32 %v5870, %v6001
      %v6156 = vadd.f32 %v5871, %v6008
      %v6157 = vadd.f32 %v5872, %v6013
      %v6158 = vadd.f32 %v5873, %v6020
      %v6159 = vadd.f32 %v5874, %v6023
      %v6160 = vadd.f32 %v5875, %v6030
      %v6161 = vadd.f32 %v5876, %v6035
      %v6162 = vadd.f32 %v5877, %v6042
      %v6163 = vadd.f32 %v5878, %v6045
      %v6164 = vadd.f32 %v5879, %v6052
      %v6165 = vadd.f32 %v5880, %v6057
      %v6166 = vadd.f32 %v5881, %v6064
      %v6167 = vadd.f32 %v5882, %v6067
      %v6168 = vadd.f32 %v5883, %v6074
      %v6169 = vadd.f32 %v5884, %v6079
      %v6170 = vadd.f32 %v5885, %v6086
      %v6171 = vadd.f32 %v5886, %v6089
      %v6172 = vadd.f32 %v5887, %v6096
      %v6173 = vadd.f32 %v5888, %v6101
      %v6174 = vadd.f32 %v5889, %v6108
      %v6175 = vadd.f32 %v5890, %v6111
      %v6176 = vadd.f32 %v5891, %v6118
      %v6177 = vadd.f32 %v5892, %v6123
      %v6178 = vadd.f32 %v5893, %v6130
      %v6179 = vadd.f32 %v5894, %v6133
      %v6180 = vadd.f32 %v5895, %v6140
      %v6181 = vadd.f32 %v5896, %v6145
      %s6182 = scalar_lea.vmem %s2, 4
      %v6183 = vld [vmem:[%s6182] sm:$0x3]
      %v6209 = vrot.slane %v4038, 1
      %v6210 = vrot.slane %v4039, 1
      %v6211 = vsel %vm2572, %v6209, %v6210
      %v6212 = vrot.slane %v4040, 1
      %v6213 = vsel %vm2572, %v6210, %v6212
      %v6214 = vrot.slane %v4041, 1
      %v6215 = vsel %vm2572, %v6212, %v6214
      %v6216 = vrot.slane %v4042, 1
      %v6217 = vsel %vm2572, %v6214, %v6216
      %v6218 = vrot.slane %v4043, 1
      %v6219 = vsel %vm2572, %v6216, %v6218
      %v6220 = vrot.slane %v4044, 1
      %v6221 = vsel %vm2572, %v6218, %v6220
      %v6222 = vrot.slane %v4045, 1
      %v6223 = vsel %vm2572, %v6220, %v6222
      %v6224 = vrot.slane %v4046, 1
      %v6225 = vsel %vm2572, %v6222, %v6224
      %v6226 = vrot.slane %v4047, 1
      %v6227 = vsel %vm2572, %v6224, %v6226
      %v6228 = vrot.slane %v4048, 1
      %v6229 = vsel %vm2572, %v6226, %v6228
      %v6230 = vrot.slane %v4049, 1
      %v6231 = vsel %vm2572, %v6228, %v6230
      %v6232 = vrot.slane %v4050, 1
      %v6233 = vsel %vm2572, %v6230, %v6232
      %v6234 = vrot.slane %v4051, 1
      %v6235 = vsel %vm2572, %v6232, %v6234
      %v6236 = vrot.slane %v4052, 1
      %v6237 = vsel %vm2572, %v6234, %v6236
      %v6238 = vrot.slane %v4053, 1
      %v6239 = vsel %vm2572, %v6236, %v6238
      %v6240 = vrot.slane %v4054, 1
      %v6241 = vsel %vm2572, %v6238, %v6240
      %v6242 = vrot.slane %v4055, 1
      %v6243 = vsel %vm2572, %v6240, %v6242
      %v6244 = vrot.slane %v4056, 1
      %v6245 = vsel %vm2572, %v6242, %v6244
      %v6246 = vrot.slane %v4057, 1
      %v6247 = vsel %vm2572, %v6244, %v6246
      %v6248 = vrot.slane %v4058, 1
      %v6249 = vsel %vm2572, %v6246, %v6248
      %v6250 = vrot.slane %v4059, 1
      %v6251 = vsel %vm2572, %v6248, %v6250
      %v6252 = vrot.slane %v4060, 1
      %v6253 = vsel %vm2572, %v6250, %v6252
      %v6254 = vrot.slane %v4061, 1
      %v6255 = vsel %vm2572, %v6252, %v6254
      %v6256 = vrot.slane %v4915, 1
      %v6257 = vsel %vm2572, %v6254, %v6256
      %v6259 = vsel %vm225, %v6211, 0
      %v6262 = vsel %vm225, %v6213, 0
      %v6265 = vsel %vm225, %v6215, 0
      %v6268 = vsel %vm225, %v6217, 0
      %v6271 = vsel %vm225, %v6219, 0
      %v6274 = vsel %vm225, %v6221, 0
      %v6277 = vsel %vm225, %v6223, 0
      %v6280 = vsel %vm225, %v6225, 0
      %v6283 = vsel %vm225, %v6227, 0
      %v6286 = vsel %vm225, %v6229, 0
      %v6289 = vsel %vm225, %v6231, 0
      %v6292 = vsel %vm225, %v6233, 0
      %v6295 = vsel %vm225, %v6235, 0
      %v6298 = vsel %vm225, %v6237, 0
      %v6301 = vsel %vm225, %v6239, 0
      %v6304 = vsel %vm225, %v6241, 0
      %v6307 = vsel %vm225, %v6243, 0
      %v6310 = vsel %vm225, %v6245, 0
      %v6313 = vsel %vm225, %v6247, 0
      %v6316 = vsel %vm225, %v6249, 0
      %v6319 = vsel %vm225, %v6251, 0
      %v6322 = vsel %vm225, %v6253, 0
      %v6325 = vsel %vm225, %v6255, 0
      %v6328 = vsel %vm225, %v6257, 0
      %v6331 = vsel %vm522, %v6183, 0
      %6333 = vmatprep.subr.bf16.mxu0 0
      %6334 = vmatpush1.bf16.msra.mxu0 %v6331
      %6335 = vmatprep.subr.bf16.mxu0 0
      %6336 = vmatpush1.bf16.msra.mxu0 0
      %6337 = vmatprep.subr.bf16.mxu0 0
      %6338 = vmatpush1.bf16.msra.mxu0 0
      %6339 = vmatprep.subr.bf16.mxu0 0
      %6340 = vmatpush1.bf16.msra.mxu0 0
      %6341 = vmatprep.subr.bf16.mxu0 0
      %6342 = vmatpush1.bf16.msra.mxu0 0
      %6343 = vmatprep.subr.bf16.mxu0 0
      %6344 = vmatpush1.bf16.msra.mxu0 0
      %6345 = vmatprep.subr.bf16.mxu0 0
      %6346 = vmatpush1.bf16.msra.mxu0 0
      %6347 = vmatprep.subr.bf16.mxu0 0
      %6348 = vmatpush1.bf16.msra.mxu0 0
      %6349 = vmatprep.subr.bf16.mxu0 0
      %6350 = vmatpush1.bf16.msra.mxu0 0
      %6351 = vmatprep.subr.bf16.mxu0 0
      %6352 = vmatpush1.bf16.msra.mxu0 0
      %6353 = vmatprep.subr.bf16.mxu0 0
      %6354 = vmatpush1.bf16.msra.mxu0 0
      %6355 = vmatprep.subr.bf16.mxu0 0
      %6356 = vmatpush1.bf16.msra.mxu0 0
      %6357 = vmatprep.subr.bf16.mxu0 0
      %6358 = vmatpush1.bf16.msra.mxu0 0
      %6359 = vmatprep.subr.bf16.mxu0 0
      %6360 = vmatpush1.bf16.msra.mxu0 0
      %6361 = vmatprep.subr.bf16.mxu0 0
      %6362 = vmatpush1.bf16.msra.mxu0 0
      %6363 = vmatprep.subr.bf16.mxu0 0
      %6364 = vmatpush1.bf16.msra.mxu0 0
      %6365 = vmatprep.mubr.bf16.mxu0 0
      %6366 = vmatmul.mubr.bf16.gmra.mrb[0].mxu0 %v6259
      %v6367 = vpop.f32.mrb[0].mxu0
      %v6368 = vadd.f32 0.0, %v6367
      %v6369 = vpop.f32.mrb[0].mxu0
      %v6370 = vpop.f32.mrb[0].mxu0
      %v6371 = vadd.f32 0.0, %v6370
      %v6372 = vpop.f32.mrb[0].mxu0
      %6373 = vmatprep.mubr.bf16.mxu0 0
      %6374 = vmatmul.mubr.bf16.gmra.mrb[0].mxu0 %v6262
      %v6375 = vpop.f32.mrb[0].mxu0
      %v6376 = vpop.f32.mrb[0].mxu0
      %v6377 = vpop.f32.mrb[0].mxu0
      %v6378 = vadd.f32 0.0, %v6377
      %v6379 = vpop.f32.mrb[0].mxu0
      %6380 = vmatprep.mubr.bf16.mxu0 0
      %6381 = vmatmul.mubr.bf16.gmra.mrb[0].mxu0 %v6265
      %v6382 = vpop.f32.mrb[0].mxu0
      %v6383 = vadd.f32 0.0, %v6382
      %v6384 = vpop.f32.mrb[0].mxu0
      %v6385 = vpop.f32.mrb[0].mxu0
      %v6386 = vpop.f32.mrb[0].mxu0
      %6387 = vmatprep.mubr.bf16.mxu0 0
      %6388 = vmatmul.mubr.bf16.gmra.mrb[0].mxu0 %v6268
      %v6389 = vpop.f32.mrb[0].mxu0
      %v6390 = vadd.f32 0.0, %v6389
      %v6391 = vpop.f32.mrb[0].mxu0
      %v6392 = vpop.f32.mrb[0].mxu0
      %v6393 = vadd.f32 0.0, %v6392
      %v6394 = vpop.f32.mrb[0].mxu0
      %6395 = vmatprep.mubr.bf16.mxu0 0
      %6396 = vmatmul.mubr.bf16.gmra.mrb[0].mxu0 %v6271
      %v6397 = vpop.f32.mrb[0].mxu0
      %v6398 = vpop.f32.mrb[0].mxu0
      %v6399 = vpop.f32.mrb[0].mxu0
      %v6400 = vadd.f32 0.0, %v6399
      %v6401 = vpop.f32.mrb[0].mxu0
      %6402 = vmatprep.mubr.bf16.mxu0 0
      %6403 = vmatmul.mubr.bf16.gmra.mrb[0].mxu0 %v6274
      %v6404 = vpop.f32.mrb[0].mxu0
      %v6405 = vadd.f32 0.0, %v6404
      %v6406 = vpop.f32.mrb[0].mxu0
      %v6407 = vpop.f32.mrb[0].mxu0
      %v6408 = vpop.f32.mrb[0].mxu0
      %6409 = vmatprep.mubr.bf16.mxu0 0
      %6410 = vmatmul.mubr.bf16.gmra.mrb[0].mxu0 %v6277
      %v6411 = vpop.f32.mrb[0].mxu0
      %v6412 = vadd.f32 0.0, %v6411
      %v6413 = vpop.f32.mrb[0].mxu0
      %v6414 = vpop.f32.mrb[0].mxu0
      %v6415 = vadd.f32 0.0, %v6414
      %v6416 = vpop.f32.mrb[0].mxu0
      %6417 = vmatprep.mubr.bf16.mxu0 0
      %6418 = vmatmul.mubr.bf16.gmra.mrb[0].mxu0 %v6280
      %v6419 = vpop.f32.mrb[0].mxu0
      %v6420 = vpop.f32.mrb[0].mxu0
      %v6421 = vpop.f32.mrb[0].mxu0
      %v6422 = vadd.f32 0.0, %v6421
      %v6423 = vpop.f32.mrb[0].mxu0
      %6424 = vmatprep.mubr.bf16.mxu0 0
      %6425 = vmatmul.mubr.bf16.gmra.mrb[0].mxu0 %v6283
      %v6426 = vpop.f32.mrb[0].mxu0
      %v6427 = vadd.f32 0.0, %v6426
      %v6428 = vpop.f32.mrb[0].mxu0
      %v6429 = vpop.f32.mrb[0].mxu0
      %v6430 = vpop.f32.mrb[0].mxu0
      %6431 = vmatprep.mubr.bf16.mxu0 0
      %6432 = vmatmul.mubr.bf16.gmra.mrb[0].mxu0 %v6286
      %v6433 = vpop.f32.mrb[0].mxu0
      %v6434 = vadd.f32 0.0, %v6433
      %v6435 = vpop.f32.mrb[0].mxu0
      %v6436 = vpop.f32.mrb[0].mxu0
      %v6437 = vadd.f32 0.0, %v6436
      %v6438 = vpop.f32.mrb[0].mxu0
      %6439 = vmatprep.mubr.bf16.mxu0 0
      %6440 = vmatmul.mubr.bf16.gmra.mrb[0].mxu0 %v6289
      %v6441 = vpop.f32.mrb[0].mxu0
      %v6442 = vpop.f32.mrb[0].mxu0
      %v6443 = vpop.f32.mrb[0].mxu0
      %v6444 = vadd.f32 0.0, %v6443
      %v6445 = vpop.f32.mrb[0].mxu0
      %6446 = vmatprep.mubr.bf16.mxu0 0
      %6447 = vmatmul.mubr.bf16.gmra.mrb[0].mxu0 %v6292
      %v6448 = vpop.f32.mrb[0].mxu0
      %v6449 = vadd.f32 0.0, %v6448
      %v6450 = vpop.f32.mrb[0].mxu0
      %v6451 = vpop.f32.mrb[0].mxu0
      %v6452 = vpop.f32.mrb[0].mxu0
      %6453 = vmatprep.mubr.bf16.mxu0 0
      %6454 = vmatmul.mubr.bf16.gmra.mrb[0].mxu0 %v6295
      %v6455 = vpop.f32.mrb[0].mxu0
      %v6456 = vadd.f32 0.0, %v6455
      %v6457 = vpop.f32.mrb[0].mxu0
      %v6458 = vpop.f32.mrb[0].mxu0
      %v6459 = vadd.f32 0.0, %v6458
      %v6460 = vpop.f32.mrb[0].mxu0
      %6461 = vmatprep.mubr.bf16.mxu0 0
      %6462 = vmatmul.mubr.bf16.gmra.mrb[0].mxu0 %v6298
      %v6463 = vpop.f32.mrb[0].mxu0
      %v6464 = vpop.f32.mrb[0].mxu0
      %v6465 = vpop.f32.mrb[0].mxu0
      %v6466 = vadd.f32 0.0, %v6465
      %v6467 = vpop.f32.mrb[0].mxu0
      %6468 = vmatprep.mubr.bf16.mxu0 0
      %6469 = vmatmul.mubr.bf16.gmra.mrb[0].mxu0 %v6301
      %v6470 = vpop.f32.mrb[0].mxu0
      %v6471 = vadd.f32 0.0, %v6470
      %v6472 = vpop.f32.mrb[0].mxu0
      %v6473 = vpop.f32.mrb[0].mxu0
      %v6474 = vpop.f32.mrb[0].mxu0
      %6475 = vmatprep.mubr.bf16.mxu0 0
      %6476 = vmatmul.mubr.bf16.gmra.mrb[0].mxu0 %v6304
      %v6477 = vpop.f32.mrb[0].mxu0
      %v6478 = vadd.f32 0.0, %v6477
      %v6479 = vpop.f32.mrb[0].mxu0
      %v6480 = vpop.f32.mrb[0].mxu0
      %v6481 = vadd.f32 0.0, %v6480
      %v6482 = vpop.f32.mrb[0].mxu0
      %6483 = vmatprep.mubr.bf16.mxu0 0
      %6484 = vmatmul.mubr.bf16.gmra.mrb[0].mxu0 %v6307
      %v6485 = vpop.f32.mrb[0].mxu0
      %v6486 = vpop.f32.mrb[0].mxu0
      %v6487 = vpop.f32.mrb[0].mxu0
      %v6488 = vadd.f32 0.0, %v6487
      %v6489 = vpop.f32.mrb[0].mxu0
      %6490 = vmatprep.mubr.bf16.mxu0 0
      %6491 = vmatmul.mubr.bf16.gmra.mrb[0].mxu0 %v6310
      %v6492 = vpop.f32.mrb[0].mxu0
      %v6493 = vadd.f32 0.0, %v6492
      %v6494 = vpop.f32.mrb[0].mxu0
      %v6495 = vpop.f32.mrb[0].mxu0
      %v6496 = vpop.f32.mrb[0].mxu0
      %6497 = vmatprep.mubr.bf16.mxu0 0
      %6498 = vmatmul.mubr.bf16.gmra.mrb[0].mxu0 %v6313
      %v6499 = vpop.f32.mrb[0].mxu0
      %v6500 = vadd.f32 0.0, %v6499
      %v6501 = vpop.f32.mrb[0].mxu0
      %v6502 = vpop.f32.mrb[0].mxu0
      %v6503 = vadd.f32 0.0, %v6502
      %v6504 = vpop.f32.mrb[0].mxu0
      %6505 = vmatprep.mubr.bf16.mxu0 0
      %6506 = vmatmul.mubr.bf16.gmra.mrb[0].mxu0 %v6316
      %v6507 = vpop.f32.mrb[0].mxu0
      %v6508 = vpop.f32.mrb[0].mxu0
      %v6509 = vpop.f32.mrb[0].mxu0
      %v6510 = vadd.f32 0.0, %v6509
      %v6511 = vpop.f32.mrb[0].mxu0
      %6512 = vmatprep.mubr.bf16.mxu0 0
      %6513 = vmatmul.mubr.bf16.gmra.mrb[0].mxu0 %v6319
      %v6514 = vpop.f32.mrb[0].mxu0
      %v6515 = vadd.f32 0.0, %v6514
      %v6516 = vpop.f32.mrb[0].mxu0
      %v6517 = vpop.f32.mrb[0].mxu0
      %v6518 = vpop.f32.mrb[0].mxu0
      %6519 = vmatprep.mubr.bf16.mxu0 0
      %6520 = vmatmul.mubr.bf16.gmra.mrb[0].mxu0 %v6322
      %v6521 = vpop.f32.mrb[0].mxu0
      %v6522 = vadd.f32 0.0, %v6521
      %v6523 = vpop.f32.mrb[0].mxu0
      %v6524 = vpop.f32.mrb[0].mxu0
      %v6525 = vadd.f32 0.0, %v6524
      %v6526 = vpop.f32.mrb[0].mxu0
      %6527 = vmatprep.mubr.bf16.mxu0 0
      %6528 = vmatmul.mubr.bf16.gmra.mrb[0].mxu0 %v6325
      %v6529 = vpop.f32.mrb[0].mxu0
      %v6530 = vpop.f32.mrb[0].mxu0
      %v6531 = vpop.f32.mrb[0].mxu0
      %v6532 = vadd.f32 0.0, %v6531
      %v6533 = vpop.f32.mrb[0].mxu0
      %6534 = vmatprep.mubr.bf16.mxu0 0
      %6535 = vmatmul.mubr.bf16.gmra.mrb[0].mxu0 %v6328
      %v6536 = vpop.f32.mrb[0].mxu0
      %v6537 = vadd.f32 0.0, %v6536
      %v6538 = vpop.f32.mrb[0].mxu0
      %v6539 = vpop.f32.mrb[0].mxu0
      %v6540 = vpop.f32.mrb[0].mxu0
      %6541 = vdwg.mxu0
      %v6542 = vadd.f32 %v6150, %v6368
      %v6543 = vadd.f32 %v6151, %v6371
      %v6544 = vadd.f32 %v6152, %v6378
      %v6545 = vadd.f32 %v6153, %v6383
      %v6546 = vadd.f32 %v6154, %v6390
      %v6547 = vadd.f32 %v6155, %v6393
      %v6548 = vadd.f32 %v6156, %v6400
      %v6549 = vadd.f32 %v6157, %v6405
      %v6550 = vadd.f32 %v6158, %v6412
      %v6551 = vadd.f32 %v6159, %v6415
      %v6552 = vadd.f32 %v6160, %v6422
      %v6553 = vadd.f32 %v6161, %v6427
      %v6554 = vadd.f32 %v6162, %v6434
      %v6555 = vadd.f32 %v6163, %v6437
      %v6556 = vadd.f32 %v6164, %v6444
      %v6557 = vadd.f32 %v6165, %v6449
      %v6558 = vadd.f32 %v6166, %v6456
      %v6559 = vadd.f32 %v6167, %v6459
      %v6560 = vadd.f32 %v6168, %v6466
      %v6561 = vadd.f32 %v6169, %v6471
      %v6562 = vadd.f32 %v6170, %v6478
      %v6563 = vadd.f32 %v6171, %v6481
      %v6564 = vadd.f32 %v6172, %v6488
      %v6565 = vadd.f32 %v6173, %v6493
      %v6566 = vadd.f32 %v6174, %v6500
      %v6567 = vadd.f32 %v6175, %v6503
      %v6568 = vadd.f32 %v6176, %v6510
      %v6569 = vadd.f32 %v6177, %v6515
      %v6570 = vadd.f32 %v6178, %v6522
      %v6571 = vadd.f32 %v6179, %v6525
      %v6572 = vadd.f32 %v6180, %v6532
      %v6573 = vadd.f32 %v6181, %v6537
      %s6574 = scalar_lea.vmem %s2, 10
      %v6575 = vld [vmem:[%s6574] sm:$0x3]
      %v6601 = vrot.slane %v4063, 1
      %v6602 = vrot.slane %v4064, 1
      %v6603 = vsel %vm2572, %v6601, %v6602
      %v6604 = vrot.slane %v4065, 1
      %v6605 = vsel %vm2572, %v6602, %v6604
      %v6606 = vrot.slane %v4066, 1
      %v6607 = vsel %vm2572, %v6604, %v6606
      %v6608 = vrot.slane %v4067, 1
      %v6609 = vsel %vm2572, %v6606, %v6608
      %v6610 = vrot.slane %v4068, 1
      %v6611 = vsel %vm2572, %v6608, %v6610
      %v6612 = vrot.slane %v4069, 1
      %v6613 = vsel %vm2572, %v6610, %v6612
      %v6614 = vrot.slane %v4070, 1
      %v6615 = vsel %vm2572, %v6612, %v6614
      %v6616 = vrot.slane %v4071, 1
      %v6617 = vsel %vm2572, %v6614, %v6616
      %v6618 = vrot.slane %v4072, 1
      %v6619 = vsel %vm2572, %v6616, %v6618
      %v6620 = vrot.slane %v4073, 1
      %v6621 = vsel %vm2572, %v6618, %v6620
      %v6622 = vrot.slane %v4074, 1
      %v6623 = vsel %vm2572, %v6620, %v6622
      %v6624 = vrot.slane %v4075, 1
      %v6625 = vsel %vm2572, %v6622, %v6624
      %v6626 = vrot.slane %v4076, 1
      %v6627 = vsel %vm2572, %v6624, %v6626
      %v6628 = vrot.slane %v4077, 1
      %v6629 = vsel %vm2572, %v6626, %v6628
      %v6630 = vrot.slane %v4078, 1
      %v6631 = vsel %vm2572, %v6628, %v6630
      %v6632 = vrot.slane %v4079, 1
      %v6633 = vsel %vm2572, %v6630, %v6632
      %v6634 = vrot.slane %v4080, 1
      %v6635 = vsel %vm2572, %v6632, %v6634
      %v6636 = vrot.slane %v4081, 1
      %v6637 = vsel %vm2572, %v6634, %v6636
      %v6638 = vrot.slane %v4082, 1
      %v6639 = vsel %vm2572, %v6636, %v6638
      %v6640 = vrot.slane %v4083, 1
      %v6641 = vsel %vm2572, %v6638, %v6640
      %v6642 = vrot.slane %v4084, 1
      %v6643 = vsel %vm2572, %v6640, %v6642
      %v6644 = vrot.slane %v4085, 1
      %v6645 = vsel %vm2572, %v6642, %v6644
      %v6646 = vrot.slane %v4086, 1
      %v6647 = vsel %vm2572, %v6644, %v6646
      %v6648 = vrot.slane %v5406, 1
      %v6649 = vsel %vm2572, %v6646, %v6648
      %v6651 = vsel %vm225, %v6603, 0
      %v6654 = vsel %vm225, %v6605, 0
      %v6657 = vsel %vm225, %v6607, 0
      %v6660 = vsel %vm225, %v6609, 0
      %v6663 = vsel %vm225, %v6611, 0
      %v6666 = vsel %vm225, %v6613, 0
      %v6669 = vsel %vm225, %v6615, 0
      %v6672 = vsel %vm225, %v6617, 0
      %v6675 = vsel %vm225, %v6619, 0
      %v6678 = vsel %vm225, %v6621, 0
      %v6681 = vsel %vm225, %v6623, 0
      %v6684 = vsel %vm225, %v6625, 0
      %v6687 = vsel %vm225, %v6627, 0
      %v6690 = vsel %vm225, %v6629, 0
      %v6693 = vsel %vm225, %v6631, 0
      %v6696 = vsel %vm225, %v6633, 0
      %v6699 = vsel %vm225, %v6635, 0
      %v6702 = vsel %vm225, %v6637, 0
      %v6705 = vsel %vm225, %v6639, 0
      %v6708 = vsel %vm225, %v6641, 0
      %v6711 = vsel %vm225, %v6643, 0
      %v6714 = vsel %vm225, %v6645, 0
      %v6717 = vsel %vm225, %v6647, 0
      %v6720 = vsel %vm225, %v6649, 0
      %v6723 = vsel %vm522, %v6575, 0
      %6725 = vmatprep.subr.bf16.mxu0 0
      %6726 = vmatpush1.bf16.msra.mxu0 %v6723
      %6727 = vmatprep.subr.bf16.mxu0 0
      %6728 = vmatpush1.bf16.msra.mxu0 0
      %6729 = vmatprep.subr.bf16.mxu0 0
      %6730 = vmatpush1.bf16.msra.mxu0 0
      %6731 = vmatprep.subr.bf16.mxu0 0
      %6732 = vmatpush1.bf16.msra.mxu0 0
      %6733 = vmatprep.subr.bf16.mxu0 0
      %6734 = vmatpush1.bf16.msra.mxu0 0
      %6735 = vmatprep.subr.bf16.mxu0 0
      %6736 = vmatpush1.bf16.msra.mxu0 0
      %6737 = vmatprep.subr.bf16.mxu0 0
      %6738 = vmatpush1.bf16.msra.mxu0 0
      %6739 = vmatprep.subr.bf16.mxu0 0
      %6740 = vmatpush1.bf16.msra.mxu0 0
      %6741 = vmatprep.subr.bf16.mxu0 0
      %6742 = vmatpush1.bf16.msra.mxu0 0
      %6743 = vmatprep.subr.bf16.mxu0 0
      %6744 = vmatpush1.bf16.msra.mxu0 0
      %6745 = vmatprep.subr.bf16.mxu0 0
      %6746 = vmatpush1.bf16.msra.mxu0 0
      %6747 = vmatprep.subr.bf16.mxu0 0
      %6748 = vmatpush1.bf16.msra.mxu0 0
      %6749 = vmatprep.subr.bf16.mxu0 0
      %6750 = vmatpush1.bf16.msra.mxu0 0
      %6751 = vmatprep.subr.bf16.mxu0 0
      %6752 = vmatpush1.bf16.msra.mxu0 0
      %6753 = vmatprep.subr.bf16.mxu0 0
      %6754 = vmatpush1.bf16.msra.mxu0 0
      %6755 = vmatprep.subr.bf16.mxu0 0
      %6756 = vmatpush1.bf16.msra.mxu0 0
      %6757 = vmatprep.mubr.bf16.mxu0 0
      %6758 = vmatmul.mubr.bf16.gmra.mrb[0].mxu0 %v6651
      %v6759 = vpop.f32.mrb[0].mxu0
      %v6760 = vadd.f32 0.0, %v6759
      %v6761 = vpop.f32.mrb[0].mxu0
      %v6762 = vpop.f32.mrb[0].mxu0
      %v6763 = vadd.f32 0.0, %v6762
      %v6764 = vpop.f32.mrb[0].mxu0
      %6765 = vmatprep.mubr.bf16.mxu0 0
      %6766 = vmatmul.mubr.bf16.gmra.mrb[0].mxu0 %v6654
      %v6767 = vpop.f32.mrb[0].mxu0
      %v6768 = vpop.f32.mrb[0].mxu0
      %v6769 = vpop.f32.mrb[0].mxu0
      %v6770 = vadd.f32 0.0, %v6769
      %v6771 = vpop.f32.mrb[0].mxu0
      %6772 = vmatprep.mubr.bf16.mxu0 0
      %6773 = vmatmul.mubr.bf16.gmra.mrb[0].mxu0 %v6657
      %v6774 = vpop.f32.mrb[0].mxu0
      %v6775 = vadd.f32 0.0, %v6774
      %v6776 = vpop.f32.mrb[0].mxu0
      %v6777 = vpop.f32.mrb[0].mxu0
      %v6778 = vpop.f32.mrb[0].mxu0
      %6779 = vmatprep.mubr.bf16.mxu0 0
      %6780 = vmatmul.mubr.bf16.gmra.mrb[0].mxu0 %v6660
      %v6781 = vpop.f32.mrb[0].mxu0
      %v6782 = vadd.f32 0.0, %v6781
      %v6783 = vpop.f32.mrb[0].mxu0
      %v6784 = vpop.f32.mrb[0].mxu0
      %v6785 = vadd.f32 0.0, %v6784
      %v6786 = vpop.f32.mrb[0].mxu0
      %6787 = vmatprep.mubr.bf16.mxu0 0
      %6788 = vmatmul.mubr.bf16.gmra.mrb[0].mxu0 %v6663
      %v6789 = vpop.f32.mrb[0].mxu0
      %v6790 = vpop.f32.mrb[0].mxu0
      %v6791 = vpop.f32.mrb[0].mxu0
      %v6792 = vadd.f32 0.0, %v6791
      %v6793 = vpop.f32.mrb[0].mxu0
      %6794 = vmatprep.mubr.bf16.mxu0 0
      %6795 = vmatmul.mubr.bf16.gmra.mrb[0].mxu0 %v6666
      %v6796 = vpop.f32.mrb[0].mxu0
      %v6797 = vadd.f32 0.0, %v6796
      %v6798 = vpop.f32.mrb[0].mxu0
      %v6799 = vpop.f32.mrb[0].mxu0
      %v6800 = vpop.f32.mrb[0].mxu0
      %6801 = vmatprep.mubr.bf16.mxu0 0
      %6802 = vmatmul.mubr.bf16.gmra.mrb[0].mxu0 %v6669
      %v6803 = vpop.f32.mrb[0].mxu0
      %v6804 = vadd.f32 0.0, %v6803
      %v6805 = vpop.f32.mrb[0].mxu0
      %v6806 = vpop.f32.mrb[0].mxu0
      %v6807 = vadd.f32 0.0, %v6806
      %v6808 = vpop.f32.mrb[0].mxu0
      %6809 = vmatprep.mubr.bf16.mxu0 0
      %6810 = vmatmul.mubr.bf16.gmra.mrb[0].mxu0 %v6672
      %v6811 = vpop.f32.mrb[0].mxu0
      %v6812 = vpop.f32.mrb[0].mxu0
      %v6813 = vpop.f32.mrb[0].mxu0
      %v6814 = vadd.f32 0.0, %v6813
      %v6815 = vpop.f32.mrb[0].mxu0
      %6816 = vmatprep.mubr.bf16.mxu0 0
      %6817 = vmatmul.mubr.bf16.gmra.mrb[0].mxu0 %v6675
      %v6818 = vpop.f32.mrb[0].mxu0
      %v6819 = vadd.f32 0.0, %v6818
      %v6820 = vpop.f32.mrb[0].mxu0
      %v6821 = vpop.f32.mrb[0].mxu0
      %v6822 = vpop.f32.mrb[0].mxu0
      %6823 = vmatprep.mubr.bf16.mxu0 0
      %6824 = vmatmul.mubr.bf16.gmra.mrb[0].mxu0 %v6678
      %v6825 = vpop.f32.mrb[0].mxu0
      %v6826 = vadd.f32 0.0, %v6825
      %v6827 = vpop.f32.mrb[0].mxu0
      %v6828 = vpop.f32.mrb[0].mxu0
      %v6829 = vadd.f32 0.0, %v6828
      %v6830 = vpop.f32.mrb[0].mxu0
      %6831 = vmatprep.mubr.bf16.mxu0 0
      %6832 = vmatmul.mubr.bf16.gmra.mrb[0].mxu0 %v6681
      %v6833 = vpop.f32.mrb[0].mxu0
      %v6834 = vpop.f32.mrb[0].mxu0
      %v6835 = vpop.f32.mrb[0].mxu0
      %v6836 = vadd.f32 0.0, %v6835
      %v6837 = vpop.f32.mrb[0].mxu0
      %6838 = vmatprep.mubr.bf16.mxu0 0
      %6839 = vmatmul.mubr.bf16.gmra.mrb[0].mxu0 %v6684
      %v6840 = vpop.f32.mrb[0].mxu0
      %v6841 = vadd.f32 0.0, %v6840
      %v6842 = vpop.f32.mrb[0].mxu0
      %v6843 = vpop.f32.mrb[0].mxu0
      %v6844 = vpop.f32.mrb[0].mxu0
      %6845 = vmatprep.mubr.bf16.mxu0 0
      %6846 = vmatmul.mubr.bf16.gmra.mrb[0].mxu0 %v6687
      %v6847 = vpop.f32.mrb[0].mxu0
      %v6848 = vadd.f32 0.0, %v6847
      %v6849 = vpop.f32.mrb[0].mxu0
      %v6850 = vpop.f32.mrb[0].mxu0
      %v6851 = vadd.f32 0.0, %v6850
      %v6852 = vpop.f32.mrb[0].mxu0
      %6853 = vmatprep.mubr.bf16.mxu0 0
      %6854 = vmatmul.mubr.bf16.gmra.mrb[0].mxu0 %v6690
      %v6855 = vpop.f32.mrb[0].mxu0
      %v6856 = vpop.f32.mrb[0].mxu0
      %v6857 = vpop.f32.mrb[0].mxu0
      %v6858 = vadd.f32 0.0, %v6857
      %v6859 = vpop.f32.mrb[0].mxu0
      %6860 = vmatprep.mubr.bf16.mxu0 0
      %6861 = vmatmul.mubr.bf16.gmra.mrb[0].mxu0 %v6693
      %v6862 = vpop.f32.mrb[0].mxu0
      %v6863 = vadd.f32 0.0, %v6862
      %v6864 = vpop.f32.mrb[0].mxu0
      %v6865 = vpop.f32.mrb[0].mxu0
      %v6866 = vpop.f32.mrb[0].mxu0
      %6867 = vmatprep.mubr.bf16.mxu0 0
      %6868 = vmatmul.mubr.bf16.gmra.mrb[0].mxu0 %v6696
      %v6869 = vpop.f32.mrb[0].mxu0
      %v6870 = vadd.f32 0.0, %v6869
      %v6871 = vpop.f32.mrb[0].mxu0
      %v6872 = vpop.f32.mrb[0].mxu0
      %v6873 = vadd.f32 0.0, %v6872
      %v6874 = vpop.f32.mrb[0].mxu0
      %6875 = vmatprep.mubr.bf16.mxu0 0
      %6876 = vmatmul.mubr.bf16.gmra.mrb[0].mxu0 %v6699
      %v6877 = vpop.f32.mrb[0].mxu0
      %v6878 = vpop.f32.mrb[0].mxu0
      %v6879 = vpop.f32.mrb[0].mxu0
      %v6880 = vadd.f32 0.0, %v6879
      %v6881 = vpop.f32.mrb[0].mxu0
      %6882 = vmatprep.mubr.bf16.mxu0 0
      %6883 = vmatmul.mubr.bf16.gmra.mrb[0].mxu0 %v6702
      %v6884 = vpop.f32.mrb[0].mxu0
      %v6885 = vadd.f32 0.0, %v6884
      %v6886 = vpop.f32.mrb[0].mxu0
      %v6887 = vpop.f32.mrb[0].mxu0
      %v6888 = vpop.f32.mrb[0].mxu0
      %6889 = vmatprep.mubr.bf16.mxu0 0
      %6890 = vmatmul.mubr.bf16.gmra.mrb[0].mxu0 %v6705
      %v6891 = vpop.f32.mrb[0].mxu0
      %v6892 = vadd.f32 0.0, %v6891
      %v6893 = vpop.f32.mrb[0].mxu0
      %v6894 = vpop.f32.mrb[0].mxu0
      %v6895 = vadd.f32 0.0, %v6894
      %v6896 = vpop.f32.mrb[0].mxu0
      %6897 = vmatprep.mubr.bf16.mxu0 0
      %6898 = vmatmul.mubr.bf16.gmra.mrb[0].mxu0 %v6708
      %v6899 = vpop.f32.mrb[0].mxu0
      %v6900 = vpop.f32.mrb[0].mxu0
      %v6901 = vpop.f32.mrb[0].mxu0
      %v6902 = vadd.f32 0.0, %v6901
      %v6903 = vpop.f32.mrb[0].mxu0
      %6904 = vmatprep.mubr.bf16.mxu0 0
      %6905 = vmatmul.mubr.bf16.gmra.mrb[0].mxu0 %v6711
      %v6906 = vpop.f32.mrb[0].mxu0
      %v6907 = vadd.f32 0.0, %v6906
      %v6908 = vpop.f32.mrb[0].mxu0
      %v6909 = vpop.f32.mrb[0].mxu0
      %v6910 = vpop.f32.mrb[0].mxu0
      %6911 = vmatprep.mubr.bf16.mxu0 0
      %6912 = vmatmul.mubr.bf16.gmra.mrb[0].mxu0 %v6714
      %v6913 = vpop.f32.mrb[0].mxu0
      %v6914 = vadd.f32 0.0, %v6913
      %v6915 = vpop.f32.mrb[0].mxu0
      %v6916 = vpop.f32.mrb[0].mxu0
      %v6917 = vadd.f32 0.0, %v6916
      %v6918 = vpop.f32.mrb[0].mxu0
      %6919 = vmatprep.mubr.bf16.mxu0 0
      %6920 = vmatmul.mubr.bf16.gmra.mrb[0].mxu0 %v6717
      %v6921 = vpop.f32.mrb[0].mxu0
      %v6922 = vpop.f32.mrb[0].mxu0
      %v6923 = vpop.f32.mrb[0].mxu0
      %v6924 = vadd.f32 0.0, %v6923
      %v6925 = vpop.f32.mrb[0].mxu0
      %6926 = vmatprep.mubr.bf16.mxu0 0
      %6927 = vmatmul.mubr.bf16.gmra.mrb[0].mxu0 %v6720
      %v6928 = vpop.f32.mrb[0].mxu0
      %v6929 = vadd.f32 0.0, %v6928
      %v6930 = vpop.f32.mrb[0].mxu0
      %v6931 = vpop.f32.mrb[0].mxu0
      %v6932 = vpop.f32.mrb[0].mxu0
      %6933 = vdwg.mxu0
      %v6934 = vadd.f32 %v6542, %v6760
      %v6935 = vadd.f32 %v6543, %v6763
      %v6936 = vadd.f32 %v6544, %v6770
      %v6937 = vadd.f32 %v6545, %v6775
      %v6938 = vadd.f32 %v6546, %v6782
      %v6939 = vadd.f32 %v6547, %v6785
      %v6940 = vadd.f32 %v6548, %v6792
      %v6941 = vadd.f32 %v6549, %v6797
      %v6942 = vadd.f32 %v6550, %v6804
      %v6943 = vadd.f32 %v6551, %v6807
      %v6944 = vadd.f32 %v6552, %v6814
      %v6945 = vadd.f32 %v6553, %v6819
      %v6946 = vadd.f32 %v6554, %v6826
      %v6947 = vadd.f32 %v6555, %v6829
      %v6948 = vadd.f32 %v6556, %v6836
      %v6949 = vadd.f32 %v6557, %v6841
      %v6950 = vadd.f32 %v6558, %v6848
      %v6951 = vadd.f32 %v6559, %v6851
      %v6952 = vadd.f32 %v6560, %v6858
      %v6953 = vadd.f32 %v6561, %v6863
      %v6954 = vadd.f32 %v6562, %v6870
      %v6955 = vadd.f32 %v6563, %v6873
      %v6956 = vadd.f32 %v6564, %v6880
      %v6957 = vadd.f32 %v6565, %v6885
      %v6958 = vadd.f32 %v6566, %v6892
      %v6959 = vadd.f32 %v6567, %v6895
      %v6960 = vadd.f32 %v6568, %v6902
      %v6961 = vadd.f32 %v6569, %v6907
      %v6962 = vadd.f32 %v6570, %v6914
      %v6963 = vadd.f32 %v6571, %v6917
      %v6964 = vadd.f32 %v6572, %v6924
      %v6965 = vadd.f32 %v6573, %v6929
      %s6966 = scalar_lea.vmem %s2, 16
      %v6967 = vld [vmem:[%s6966] sm:$0x3]
      %v6972 = vrot.slane %v4657, 1
      %v6973 = vsel %vm2572, %v6254, %v6972
      %v6974 = vrot.slane %v4658, 1
      %v6975 = vsel %vm2572, %v6972, %v6974
      %v6976 = vrot.slane %v4659, 1
      %v6977 = vsel %vm2572, %v6974, %v6976
      %v6978 = vrot.slane %v5897, 1
      %v6979 = vsel %vm2572, %v6976, %v6978
      %v6981 = vsel %vm225, %v6973, 0
      %v6984 = vsel %vm225, %v6975, 0
      %v6987 = vsel %vm225, %v6977, 0
      %v6990 = vsel %vm225, %v6979, 0
      %v6993 = vsel %vm522, %v6967, 0
      %6995 = vmatprep.subr.bf16.mxu0 0
      %6996 = vmatpush1.bf16.msra.mxu0 %v6993
      %6997 = vmatprep.subr.bf16.mxu0 0
      %6998 = vmatpush1.bf16.msra.mxu0 0
      %6999 = vmatprep.subr.bf16.mxu0 0
      %7000 = vmatpush1.bf16.msra.mxu0 0
      %7001 = vmatprep.subr.bf16.mxu0 0
      %7002 = vmatpush1.bf16.msra.mxu0 0
      %7003 = vmatprep.subr.bf16.mxu0 0
      %7004 = vmatpush1.bf16.msra.mxu0 0
      %7005 = vmatprep.subr.bf16.mxu0 0
      %7006 = vmatpush1.bf16.msra.mxu0 0
      %7007 = vmatprep.subr.bf16.mxu0 0
      %7008 = vmatpush1.bf16.msra.mxu0 0
      %7009 = vmatprep.subr.bf16.mxu0 0
      %7010 = vmatpush1.bf16.msra.mxu0 0
      %7011 = vmatprep.subr.bf16.mxu0 0
      %7012 = vmatpush1.bf16.msra.mxu0 0
      %7013 = vmatprep.subr.bf16.mxu0 0
      %7014 = vmatpush1.bf16.msra.mxu0 0
      %7015 = vmatprep.subr.bf16.mxu0 0
      %7016 = vmatpush1.bf16.msra.mxu0 0
      %7017 = vmatprep.subr.bf16.mxu0 0
      %7018 = vmatpush1.bf16.msra.mxu0 0
      %7019 = vmatprep.subr.bf16.mxu0 0
      %7020 = vmatpush1.bf16.msra.mxu0 0
      %7021 = vmatprep.subr.bf16.mxu0 0
      %7022 = vmatpush1.bf16.msra.mxu0 0
      %7023 = vmatprep.subr.bf16.mxu0 0
      %7024 = vmatpush1.bf16.msra.mxu0 0
      %7025 = vmatprep.subr.bf16.mxu0 0
      %7026 = vmatpush1.bf16.msra.mxu0 0
      %7027 = vmatprep.mubr.bf16.mxu0 0
      %7028 = vmatmul.mubr.bf16.gmra.mrb[0].mxu0 %v6268
      %v7029 = vpop.f32.mrb[0].mxu0
      %v7030 = vadd.f32 0.0, %v7029
      %v7031 = vpop.f32.mrb[0].mxu0
      %v7032 = vpop.f32.mrb[0].mxu0
      %v7033 = vadd.f32 0.0, %v7032
      %v7034 = vpop.f32.mrb[0].mxu0
      %7035 = vmatprep.mubr.bf16.mxu0 0
      %7036 = vmatmul.mubr.bf16.gmra.mrb[0].mxu0 %v6271
      %v7037 = vpop.f32.mrb[0].mxu0
      %v7038 = vpop.f32.mrb[0].mxu0
      %v7039 = vpop.f32.mrb[0].mxu0
      %v7040 = vadd.f32 0.0, %v7039
      %v7041 = vpop.f32.mrb[0].mxu0
      %7042 = vmatprep.mubr.bf16.mxu0 0
      %7043 = vmatmul.mubr.bf16.gmra.mrb[0].mxu0 %v6274
      %v7044 = vpop.f32.mrb[0].mxu0
      %v7045 = vadd.f32 0.0, %v7044
      %v7046 = vpop.f32.mrb[0].mxu0
      %v7047 = vpop.f32.mrb[0].mxu0
      %v7048 = vpop.f32.mrb[0].mxu0
      %7049 = vmatprep.mubr.bf16.mxu0 0
      %7050 = vmatmul.mubr.bf16.gmra.mrb[0].mxu0 %v6277
      %v7051 = vpop.f32.mrb[0].mxu0
      %v7052 = vadd.f32 0.0, %v7051
      %v7053 = vpop.f32.mrb[0].mxu0
      %v7054 = vpop.f32.mrb[0].mxu0
      %v7055 = vadd.f32 0.0, %v7054
      %v7056 = vpop.f32.mrb[0].mxu0
      %7057 = vmatprep.mubr.bf16.mxu0 0
      %7058 = vmatmul.mubr.bf16.gmra.mrb[0].mxu0 %v6280
      %v7059 = vpop.f32.mrb[0].mxu0
      %v7060 = vpop.f32.mrb[0].mxu0
      %v7061 = vpop.f32.mrb[0].mxu0
      %v7062 = vadd.f32 0.0, %v7061
      %v7063 = vpop.f32.mrb[0].mxu0
      %7064 = vmatprep.mubr.bf16.mxu0 0
      %7065 = vmatmul.mubr.bf16.gmra.mrb[0].mxu0 %v6283
      %v7066 = vpop.f32.mrb[0].mxu0
      %v7067 = vadd.f32 0.0, %v7066
      %v7068 = vpop.f32.mrb[0].mxu0
      %v7069 = vpop.f32.mrb[0].mxu0
      %v7070 = vpop.f32.mrb[0].mxu0
      %7071 = vmatprep.mubr.bf16.mxu0 0
      %7072 = vmatmul.mubr.bf16.gmra.mrb[0].mxu0 %v6286
      %v7073 = vpop.f32.mrb[0].mxu0
      %v7074 = vadd.f32 0.0, %v7073
      %v7075 = vpop.f32.mrb[0].mxu0
      %v7076 = vpop.f32.mrb[0].mxu0
      %v7077 = vadd.f32 0.0, %v7076
      %v7078 = vpop.f32.mrb[0].mxu0
      %7079 = vmatprep.mubr.bf16.mxu0 0
      %7080 = vmatmul.mubr.bf16.gmra.mrb[0].mxu0 %v6289
      %v7081 = vpop.f32.mrb[0].mxu0
      %v7082 = vpop.f32.mrb[0].mxu0
      %v7083 = vpop.f32.mrb[0].mxu0
      %v7084 = vadd.f32 0.0, %v7083
      %v7085 = vpop.f32.mrb[0].mxu0
      %7086 = vmatprep.mubr.bf16.mxu0 0
      %7087 = vmatmul.mubr.bf16.gmra.mrb[0].mxu0 %v6292
      %v7088 = vpop.f32.mrb[0].mxu0
      %v7089 = vadd.f32 0.0, %v7088
      %v7090 = vpop.f32.mrb[0].mxu0
      %v7091 = vpop.f32.mrb[0].mxu0
      %v7092 = vpop.f32.mrb[0].mxu0
      %7093 = vmatprep.mubr.bf16.mxu0 0
      %7094 = vmatmul.mubr.bf16.gmra.mrb[0].mxu0 %v6295
      %v7095 = vpop.f32.mrb[0].mxu0
      %v7096 = vadd.f32 0.0, %v7095
      %v7097 = vpop.f32.mrb[0].mxu0
      %v7098 = vpop.f32.mrb[0].mxu0
      %v7099 = vadd.f32 0.0, %v7098
      %v7100 = vpop.f32.mrb[0].mxu0
      %7101 = vmatprep.mubr.bf16.mxu0 0
      %7102 = vmatmul.mubr.bf16.gmra.mrb[0].mxu0 %v6298
      %v7103 = vpop.f32.mrb[0].mxu0
      %v7104 = vpop.f32.mrb[0].mxu0
      %v7105 = vpop.f32.mrb[0].mxu0
      %v7106 = vadd.f32 0.0, %v7105
      %v7107 = vpop.f32.mrb[0].mxu0
      %7108 = vmatprep.mubr.bf16.mxu0 0
      %7109 = vmatmul.mubr.bf16.gmra.mrb[0].mxu0 %v6301
      %v7110 = vpop.f32.mrb[0].mxu0
      %v7111 = vadd.f32 0.0, %v7110
      %v7112 = vpop.f32.mrb[0].mxu0
      %v7113 = vpop.f32.mrb[0].mxu0
      %v7114 = vpop.f32.mrb[0].mxu0
      %7115 = vmatprep.mubr.bf16.mxu0 0
      %7116 = vmatmul.mubr.bf16.gmra.mrb[0].mxu0 %v6304
      %v7117 = vpop.f32.mrb[0].mxu0
      %v7118 = vadd.f32 0.0, %v7117
      %v7119 = vpop.f32.mrb[0].mxu0
      %v7120 = vpop.f32.mrb[0].mxu0
      %v7121 = vadd.f32 0.0, %v7120
      %v7122 = vpop.f32.mrb[0].mxu0
      %7123 = vmatprep.mubr.bf16.mxu0 0
      %7124 = vmatmul.mubr.bf16.gmra.mrb[0].mxu0 %v6307
      %v7125 = vpop.f32.mrb[0].mxu0
      %v7126 = vpop.f32.mrb[0].mxu0
      %v7127 = vpop.f32.mrb[0].mxu0
      %v7128 = vadd.f32 0.0, %v7127
      %v7129 = vpop.f32.mrb[0].mxu0
      %7130 = vmatprep.mubr.bf16.mxu0 0
      %7131 = vmatmul.mubr.bf16.gmra.mrb[0].mxu0 %v6310
      %v7132 = vpop.f32.mrb[0].mxu0
      %v7133 = vadd.f32 0.0, %v7132
      %v7134 = vpop.f32.mrb[0].mxu0
      %v7135 = vpop.f32.mrb[0].mxu0
      %v7136 = vpop.f32.mrb[0].mxu0
      %7137 = vmatprep.mubr.bf16.mxu0 0
      %7138 = vmatmul.mubr.bf16.gmra.mrb[0].mxu0 %v6313
      %v7139 = vpop.f32.mrb[0].mxu0
      %v7140 = vadd.f32 0.0, %v7139
      %v7141 = vpop.f32.mrb[0].mxu0
      %v7142 = vpop.f32.mrb[0].mxu0
      %v7143 = vadd.f32 0.0, %v7142
      %v7144 = vpop.f32.mrb[0].mxu0
      %7145 = vmatprep.mubr.bf16.mxu0 0
      %7146 = vmatmul.mubr.bf16.gmra.mrb[0].mxu0 %v6316
      %v7147 = vpop.f32.mrb[0].mxu0
      %v7148 = vpop.f32.mrb[0].mxu0
      %v7149 = vpop.f32.mrb[0].mxu0
      %v7150 = vadd.f32 0.0, %v7149
      %v7151 = vpop.f32.mrb[0].mxu0
      %7152 = vmatprep.mubr.bf16.mxu0 0
      %7153 = vmatmul.mubr.bf16.gmra.mrb[0].mxu0 %v6319
      %v7154 = vpop.f32.mrb[0].mxu0
      %v7155 = vadd.f32 0.0, %v7154
      %v7156 = vpop.f32.mrb[0].mxu0
      %v7157 = vpop.f32.mrb[0].mxu0
      %v7158 = vpop.f32.mrb[0].mxu0
      %7159 = vmatprep.mubr.bf16.mxu0 0
      %7160 = vmatmul.mubr.bf16.gmra.mrb[0].mxu0 %v6322
      %v7161 = vpop.f32.mrb[0].mxu0
      %v7162 = vadd.f32 0.0, %v7161
      %v7163 = vpop.f32.mrb[0].mxu0
      %v7164 = vpop.f32.mrb[0].mxu0
      %v7165 = vadd.f32 0.0, %v7164
      %v7166 = vpop.f32.mrb[0].mxu0
      %7167 = vmatprep.mubr.bf16.mxu0 0
      %7168 = vmatmul.mubr.bf16.gmra.mrb[0].mxu0 %v6325
      %v7169 = vpop.f32.mrb[0].mxu0
      %v7170 = vpop.f32.mrb[0].mxu0
      %v7171 = vpop.f32.mrb[0].mxu0
      %v7172 = vadd.f32 0.0, %v7171
      %v7173 = vpop.f32.mrb[0].mxu0
      %7174 = vmatprep.mubr.bf16.mxu0 0
      %7175 = vmatmul.mubr.bf16.gmra.mrb[0].mxu0 %v6981
      %v7176 = vpop.f32.mrb[0].mxu0
      %v7177 = vadd.f32 0.0, %v7176
      %v7178 = vpop.f32.mrb[0].mxu0
      %v7179 = vpop.f32.mrb[0].mxu0
      %v7180 = vpop.f32.mrb[0].mxu0
      %7181 = vmatprep.mubr.bf16.mxu0 0
      %7182 = vmatmul.mubr.bf16.gmra.mrb[0].mxu0 %v6984
      %v7183 = vpop.f32.mrb[0].mxu0
      %v7184 = vadd.f32 0.0, %v7183
      %v7185 = vpop.f32.mrb[0].mxu0
      %v7186 = vpop.f32.mrb[0].mxu0
      %v7187 = vadd.f32 0.0, %v7186
      %v7188 = vpop.f32.mrb[0].mxu0
      %7189 = vmatprep.mubr.bf16.mxu0 0
      %7190 = vmatmul.mubr.bf16.gmra.mrb[0].mxu0 %v6987
      %v7191 = vpop.f32.mrb[0].mxu0
      %v7192 = vpop.f32.mrb[0].mxu0
      %v7193 = vpop.f32.mrb[0].mxu0
      %v7194 = vadd.f32 0.0, %v7193
      %v7195 = vpop.f32.mrb[0].mxu0
      %7196 = vmatprep.mubr.bf16.mxu0 0
      %7197 = vmatmul.mubr.bf16.gmra.mrb[0].mxu0 %v6990
      %v7198 = vpop.f32.mrb[0].mxu0
      %v7199 = vadd.f32 0.0, %v7198
      %v7200 = vpop.f32.mrb[0].mxu0
      %v7201 = vpop.f32.mrb[0].mxu0
      %v7202 = vpop.f32.mrb[0].mxu0
      %7203 = vdwg.mxu0
      %v7204 = vadd.f32 %v6934, %v7030
      %v7205 = vadd.f32 %v6935, %v7033
      %v7206 = vadd.f32 %v6936, %v7040
      %v7207 = vadd.f32 %v6937, %v7045
      %v7208 = vadd.f32 %v6938, %v7052
      %v7209 = vadd.f32 %v6939, %v7055
      %v7210 = vadd.f32 %v6940, %v7062
      %v7211 = vadd.f32 %v6941, %v7067
      %v7212 = vadd.f32 %v6942, %v7074
      %v7213 = vadd.f32 %v6943, %v7077
      %v7214 = vadd.f32 %v6944, %v7084
      %v7215 = vadd.f32 %v6945, %v7089
      %v7216 = vadd.f32 %v6946, %v7096
      %v7217 = vadd.f32 %v6947, %v7099
      %v7218 = vadd.f32 %v6948, %v7106
      %v7219 = vadd.f32 %v6949, %v7111
      %v7220 = vadd.f32 %v6950, %v7118
      %v7221 = vadd.f32 %v6951, %v7121
      %v7222 = vadd.f32 %v6952, %v7128
      %v7223 = vadd.f32 %v6953, %v7133
      %v7224 = vadd.f32 %v6954, %v7140
      %v7225 = vadd.f32 %v6955, %v7143
      %v7226 = vadd.f32 %v6956, %v7150
      %v7227 = vadd.f32 %v6957, %v7155
      %v7228 = vadd.f32 %v6958, %v7162
      %v7229 = vadd.f32 %v6959, %v7165
      %v7230 = vadd.f32 %v6960, %v7172
      %v7231 = vadd.f32 %v6961, %v7177
      %v7232 = vadd.f32 %v6962, %v7184
      %v7233 = vadd.f32 %v6963, %v7187
      %v7234 = vadd.f32 %v6964, %v7194
      %v7235 = vadd.f32 %v6965, %v7199
      %v7236 = vsel %vm225, %v7204, 0.0
      %v7237 = vsel %vm225, %v7205, 0.0
      %v7238 = vadd.f32 %v7236, %v7237
      %v7239 = vsel %vm225, %v7206, 0.0
      %v7240 = vadd.f32 %v7238, %v7239
      %v7241 = vsel %vm225, %v7207, 0.0
      %v7242 = vadd.f32 %v7240, %v7241
      %v7243 = vsel %vm225, %v7208, 0.0
      %v7244 = vadd.f32 %v7242, %v7243
      %v7245 = vsel %vm225, %v7209, 0.0
      %v7246 = vadd.f32 %v7244, %v7245
      %v7247 = vsel %vm225, %v7210, 0.0
      %v7248 = vadd.f32 %v7246, %v7247
      %v7249 = vsel %vm225, %v7211, 0.0
      %v7250 = vadd.f32 %v7248, %v7249
      %v7251 = vsel %vm225, %v7212, 0.0
      %v7252 = vadd.f32 %v7250, %v7251
      %v7253 = vsel %vm225, %v7213, 0.0
      %v7254 = vadd.f32 %v7252, %v7253
      %v7255 = vsel %vm225, %v7214, 0.0
      %v7256 = vadd.f32 %v7254, %v7255
      %v7257 = vsel %vm225, %v7215, 0.0
      %v7258 = vadd.f32 %v7256, %v7257
      %v7259 = vsel %vm225, %v7216, 0.0
      %v7260 = vadd.f32 %v7258, %v7259
      %v7261 = vsel %vm225, %v7217, 0.0
      %v7262 = vadd.f32 %v7260, %v7261
      %v7263 = vsel %vm225, %v7218, 0.0
      %v7264 = vadd.f32 %v7262, %v7263
      %v7265 = vsel %vm225, %v7219, 0.0
      %v7266 = vadd.f32 %v7264, %v7265
      %v7267 = vsel %vm225, %v7220, 0.0
      %v7268 = vadd.f32 %v7266, %v7267
      %v7269 = vsel %vm225, %v7221, 0.0
      %v7270 = vadd.f32 %v7268, %v7269
      %v7271 = vsel %vm225, %v7222, 0.0
      %v7272 = vadd.f32 %v7270, %v7271
      %v7273 = vsel %vm225, %v7223, 0.0
      %v7274 = vadd.f32 %v7272, %v7273
      %v7275 = vsel %vm225, %v7224, 0.0
      %v7276 = vadd.f32 %v7274, %v7275
      %v7277 = vsel %vm225, %v7225, 0.0
      %v7278 = vadd.f32 %v7276, %v7277
      %v7279 = vsel %vm225, %v7226, 0.0
      %v7280 = vadd.f32 %v7278, %v7279
      %v7281 = vsel %vm225, %v7227, 0.0
      %v7282 = vadd.f32 %v7280, %v7281
      %v7283 = vsel %vm225, %v7228, 0.0
      %v7284 = vadd.f32 %v7282, %v7283
      %v7285 = vsel %vm225, %v7229, 0.0
      %v7286 = vadd.f32 %v7284, %v7285
      %v7287 = vsel %vm225, %v7230, 0.0
      %v7288 = vadd.f32 %v7286, %v7287
      %v7289 = vsel %vm225, %v7231, 0.0
      %v7290 = vadd.f32 %v7288, %v7289
      %v7291 = vsel %vm225, %v7232, 0.0
      %v7292 = vadd.f32 %v7290, %v7291
      %v7293 = vsel %vm225, %v7233, 0.0
      %v7294 = vadd.f32 %v7292, %v7293
      %v7295 = vsel %vm225, %v7234, 0.0
      %v7296 = vadd.f32 %v7294, %v7295
      %v7297 = vsel %vm225, %v7235, 0.0
      %v7298 = vadd.f32 %v7296, %v7297
      %v7299 = vrot.slane %v7298, 4
      %v7300 = vadd.f32 %v7298, %v7299
      %v7301 = vrot.slane %v7300, 2
      %v7302 = vadd.f32 %v7300, %v7301
      %v7303 = vrot.slane %v7302, 1
      %v7304 = vadd.f32 %v7302, %v7303
      %v7305 = vmul.f32 %v7304, %v3669
      %v7306 = vsub.f32 %v7204, %v7305
      %v7307 = vsub.f32 %v7205, %v7305
      %v7308 = vsub.f32 %v7206, %v7305
      %v7309 = vsub.f32 %v7207, %v7305
      %v7310 = vsub.f32 %v7208, %v7305
      %v7311 = vsub.f32 %v7209, %v7305
      %v7312 = vsub.f32 %v7210, %v7305
      %v7313 = vsub.f32 %v7211, %v7305
      %v7314 = vsub.f32 %v7212, %v7305
      %v7315 = vsub.f32 %v7213, %v7305
      %v7316 = vsub.f32 %v7214, %v7305
      %v7317 = vsub.f32 %v7215, %v7305
      %v7318 = vsub.f32 %v7216, %v7305
      %v7319 = vsub.f32 %v7217, %v7305
      %v7320 = vsub.f32 %v7218, %v7305
      %v7321 = vsub.f32 %v7219, %v7305
      %v7322 = vsub.f32 %v7220, %v7305
      %v7323 = vsub.f32 %v7221, %v7305
      %v7324 = vsub.f32 %v7222, %v7305
      %v7325 = vsub.f32 %v7223, %v7305
      %v7326 = vsub.f32 %v7224, %v7305
      %v7327 = vsub.f32 %v7225, %v7305
      %v7328 = vsub.f32 %v7226, %v7305
      %v7329 = vsub.f32 %v7227, %v7305
      %v7330 = vsub.f32 %v7228, %v7305
      %v7331 = vsub.f32 %v7229, %v7305
      %v7332 = vsub.f32 %v7230, %v7305
      %v7333 = vsub.f32 %v7231, %v7305
      %v7334 = vsub.f32 %v7232, %v7305
      %v7335 = vsub.f32 %v7233, %v7305
      %v7336 = vsub.f32 %v7234, %v7305
      %v7337 = vsub.f32 %v7235, %v7305
      %v7338 = vmul.f32 %v7306, %v7306
      %v7339 = vmul.f32 %v7307, %v7307
      %v7340 = vmul.f32 %v7308, %v7308
      %v7341 = vmul.f32 %v7309, %v7309
      %v7342 = vmul.f32 %v7310, %v7310
      %v7343 = vmul.f32 %v7311, %v7311
      %v7344 = vmul.f32 %v7312, %v7312
      %v7345 = vmul.f32 %v7313, %v7313
      %v7346 = vmul.f32 %v7314, %v7314
      %v7347 = vmul.f32 %v7315, %v7315
      %v7348 = vmul.f32 %v7316, %v7316
      %v7349 = vmul.f32 %v7317, %v7317
      %v7350 = vmul.f32 %v7318, %v7318
      %v7351 = vmul.f32 %v7319, %v7319
      %v7352 = vmul.f32 %v7320, %v7320
      %v7353 = vmul.f32 %v7321, %v7321
      %v7354 = vmul.f32 %v7322, %v7322
      %v7355 = vmul.f32 %v7323, %v7323
      %v7356 = vmul.f32 %v7324, %v7324
      %v7357 = vmul.f32 %v7325, %v7325
      %v7358 = vmul.f32 %v7326, %v7326
      %v7359 = vmul.f32 %v7327, %v7327
      %v7360 = vmul.f32 %v7328, %v7328
      %v7361 = vmul.f32 %v7329, %v7329
      %v7362 = vmul.f32 %v7330, %v7330
      %v7363 = vmul.f32 %v7331, %v7331
      %v7364 = vmul.f32 %v7332, %v7332
      %v7365 = vmul.f32 %v7333, %v7333
      %v7366 = vmul.f32 %v7334, %v7334
      %v7367 = vmul.f32 %v7335, %v7335
      %v7368 = vmul.f32 %v7336, %v7336
      %v7369 = vmul.f32 %v7337, %v7337
      %v7370 = vsel %vm225, %v7338, 0.0
      %v7371 = vsel %vm225, %v7339, 0.0
      %v7372 = vadd.f32 %v7370, %v7371
      %v7373 = vsel %vm225, %v7340, 0.0
      %v7374 = vadd.f32 %v7372, %v7373
      %v7375 = vsel %vm225, %v7341, 0.0
      %v7376 = vadd.f32 %v7374, %v7375
      %v7377 = vsel %vm225, %v7342, 0.0
      %v7378 = vadd.f32 %v7376, %v7377
      %v7379 = vsel %vm225, %v7343, 0.0
      %v7380 = vadd.f32 %v7378, %v7379
      %v7381 = vsel %vm225, %v7344, 0.0
      %v7382 = vadd.f32 %v7380, %v7381
      %v7383 = vsel %vm225, %v7345, 0.0
      %v7384 = vadd.f32 %v7382, %v7383
      %v7385 = vsel %vm225, %v7346, 0.0
      %v7386 = vadd.f32 %v7384, %v7385
      %v7387 = vsel %vm225, %v7347, 0.0
      %v7388 = vadd.f32 %v7386, %v7387
      %v7389 = vsel %vm225, %v7348, 0.0
      %v7390 = vadd.f32 %v7388, %v7389
      %v7391 = vsel %vm225, %v7349, 0.0
      %v7392 = vadd.f32 %v7390, %v7391
      %v7393 = vsel %vm225, %v7350, 0.0
      %v7394 = vadd.f32 %v7392, %v7393
      %v7395 = vsel %vm225, %v7351, 0.0
      %v7396 = vadd.f32 %v7394, %v7395
      %v7397 = vsel %vm225, %v7352, 0.0
      %v7398 = vadd.f32 %v7396, %v7397
      %v7399 = vsel %vm225, %v7353, 0.0
      %v7400 = vadd.f32 %v7398, %v7399
      %v7401 = vsel %vm225, %v7354, 0.0
      %v7402 = vadd.f32 %v7400, %v7401
      %v7403 = vsel %vm225, %v7355, 0.0
      %v7404 = vadd.f32 %v7402, %v7403
      %v7405 = vsel %vm225, %v7356, 0.0
      %v7406 = vadd.f32 %v7404, %v7405
      %v7407 = vsel %vm225, %v7357, 0.0
      %v7408 = vadd.f32 %v7406, %v7407
      %v7409 = vsel %vm225, %v7358, 0.0
      %v7410 = vadd.f32 %v7408, %v7409
      %v7411 = vsel %vm225, %v7359, 0.0
      %v7412 = vadd.f32 %v7410, %v7411
      %v7413 = vsel %vm225, %v7360, 0.0
      %v7414 = vadd.f32 %v7412, %v7413
      %v7415 = vsel %vm225, %v7361, 0.0
      %v7416 = vadd.f32 %v7414, %v7415
      %v7417 = vsel %vm225, %v7362, 0.0
      %v7418 = vadd.f32 %v7416, %v7417
      %v7419 = vsel %vm225, %v7363, 0.0
      %v7420 = vadd.f32 %v7418, %v7419
      %v7421 = vsel %vm225, %v7364, 0.0
      %v7422 = vadd.f32 %v7420, %v7421
      %v7423 = vsel %vm225, %v7365, 0.0
      %v7424 = vadd.f32 %v7422, %v7423
      %v7425 = vsel %vm225, %v7366, 0.0
      %v7426 = vadd.f32 %v7424, %v7425
      %v7427 = vsel %vm225, %v7367, 0.0
      %v7428 = vadd.f32 %v7426, %v7427
      %v7429 = vsel %vm225, %v7368, 0.0
      %v7430 = vadd.f32 %v7428, %v7429
      %v7431 = vsel %vm225, %v7369, 0.0
      %v7432 = vadd.f32 %v7430, %v7431
      %v7433 = vrot.slane %v7432, 4
      %v7434 = vadd.f32 %v7432, %v7433
      %v7435 = vrot.slane %v7434, 2
      %v7436 = vadd.f32 %v7434, %v7435
      %v7437 = vrot.slane %v7436, 1
      %v7438 = vadd.f32 %v7436, %v7437
      %v7439 = vmul.f32 %v7438, %v3669
      %v7440 = vadd.f32 %v7439, 1e-05
      %v7441 = vrsqrt.pop %v7440
      %v7442 = vmul.f32 %v7306, %v7441
      %v7443 = vmul.f32 %v7307, %v7441
      %v7444 = vmul.f32 %v7308, %v7441
      %v7445 = vmul.f32 %v7309, %v7441
      %v7446 = vmul.f32 %v7310, %v7441
      %v7447 = vmul.f32 %v7311, %v7441
      %v7448 = vmul.f32 %v7312, %v7441
      %v7449 = vmul.f32 %v7313, %v7441
      %v7450 = vmul.f32 %v7314, %v7441
      %v7451 = vmul.f32 %v7315, %v7441
      %v7452 = vmul.f32 %v7316, %v7441
      %v7453 = vmul.f32 %v7317, %v7441
      %v7454 = vmul.f32 %v7318, %v7441
      %v7455 = vmul.f32 %v7319, %v7441
      %v7456 = vmul.f32 %v7320, %v7441
      %v7457 = vmul.f32 %v7321, %v7441
      %v7458 = vmul.f32 %v7322, %v7441
      %v7459 = vmul.f32 %v7323, %v7441
      %v7460 = vmul.f32 %v7324, %v7441
      %v7461 = vmul.f32 %v7325, %v7441
      %v7462 = vmul.f32 %v7326, %v7441
      %v7463 = vmul.f32 %v7327, %v7441
      %v7464 = vmul.f32 %v7328, %v7441
      %v7465 = vmul.f32 %v7329, %v7441
      %v7466 = vmul.f32 %v7330, %v7441
      %v7467 = vmul.f32 %v7331, %v7441
      %v7468 = vmul.f32 %v7332, %v7441
      %v7469 = vmul.f32 %v7333, %v7441
      %v7470 = vmul.f32 %v7334, %v7441
      %v7471 = vmul.f32 %v7335, %v7441
      %v7472 = vmul.f32 %v7336, %v7441
      %v7473 = vmul.f32 %v7337, %v7441
      %v7474 = vadd.f32 %v172, %v7442
      %v7475 = vadd.f32 %v173, %v7443
      %v7476 = vadd.f32 %v174, %v7444
      %v7477 = vadd.f32 %v175, %v7445
      %v7478 = vadd.f32 %v176, %v7446
      %v7479 = vadd.f32 %v177, %v7447
      %v7480 = vadd.f32 %v178, %v7448
      %v7481 = vadd.f32 %v179, %v7449
      %v7482 = vadd.f32 %v180, %v7450
      %v7483 = vadd.f32 %v181, %v7451
      %v7484 = vadd.f32 %v182, %v7452
      %v7485 = vadd.f32 %v183, %v7453
      %v7486 = vadd.f32 %v184, %v7454
      %v7487 = vadd.f32 %v185, %v7455
      %v7488 = vadd.f32 %v186, %v7456
      %v7489 = vadd.f32 %v187, %v7457
      %v7490 = vadd.f32 %v188, %v7458
      %v7491 = vadd.f32 %v189, %v7459
      %v7492 = vadd.f32 %v190, %v7460
      %v7493 = vadd.f32 %v191, %v7461
      %v7494 = vadd.f32 %v192, %v7462
      %v7495 = vadd.f32 %v193, %v7463
      %v7496 = vadd.f32 %v194, %v7464
      %v7497 = vadd.f32 %v195, %v7465
      %v7498 = vadd.f32 %v196, %v7466
      %v7499 = vadd.f32 %v197, %v7467
      %v7500 = vadd.f32 %v198, %v7468
      %v7501 = vadd.f32 %v199, %v7469
      %v7502 = vadd.f32 %v200, %v7470
      %v7503 = vadd.f32 %v201, %v7471
      %v7504 = vadd.f32 %v202, %v7472
      %v7505 = vadd.f32 %v203, %v7473
      %7506 = vst.msk [vmem:[%s170] sm:$0xff] %vm225, %v7474
      %7507 = vst.msk [vmem:[%s170 + $0x8] sm:$0xff] %vm225, %v7475
      %7508 = vst.msk [vmem:[%s170 + $0x10] sm:$0xff] %vm225, %v7476
      %7509 = vst.msk [vmem:[%s170 + $0x18] sm:$0xff] %vm225, %v7477
      %7510 = vst.msk [vmem:[%s170 + $0x20] sm:$0xff] %vm225, %v7478
      %7511 = vst.msk [vmem:[%s170 + $0x28] sm:$0xff] %vm225, %v7479
      %7512 = vst.msk [vmem:[%s170 + $0x30] sm:$0xff] %vm225, %v7480
      %7513 = vst.msk [vmem:[%s170 + $0x38] sm:$0xff] %vm225, %v7481
      %7514 = vst.msk [vmem:[%s170 + $0x40] sm:$0xff] %vm225, %v7482
      %7515 = vst.msk [vmem:[%s170 + $0x48] sm:$0xff] %vm225, %v7483
      %7516 = vst.msk [vmem:[%s170 + $0x50] sm:$0xff] %vm225, %v7484
      %7517 = vst.msk [vmem:[%s170 + $0x58] sm:$0xff] %vm225, %v7485
      %7518 = vst.msk [vmem:[%s170 + $0x60] sm:$0xff] %vm225, %v7486
      %7519 = vst.msk [vmem:[%s170 + $0x68] sm:$0xff] %vm225, %v7487
      %7520 = vst.msk [vmem:[%s170 + $0x70] sm:$0xff] %vm225, %v7488
      %7521 = vst.msk [vmem:[%s170 + $0x78] sm:$0xff] %vm225, %v7489
      %7522 = vst.msk [vmem:[%s170 + $0x80] sm:$0xff] %vm225, %v7490
      %7523 = vst.msk [vmem:[%s170 + $0x88] sm:$0xff] %vm225, %v7491
      %7524 = vst.msk [vmem:[%s170 + $0x90] sm:$0xff] %vm225, %v7492
      %7525 = vst.msk [vmem:[%s170 + $0x98] sm:$0xff] %vm225, %v7493
      %7526 = vst.msk [vmem:[%s170 + $0xa0] sm:$0xff] %vm225, %v7494
      %7527 = vst.msk [vmem:[%s170 + $0xa8] sm:$0xff] %vm225, %v7495
      %7528 = vst.msk [vmem:[%s170 + $0xb0] sm:$0xff] %vm225, %v7496
      %7529 = vst.msk [vmem:[%s170 + $0xb8] sm:$0xff] %vm225, %v7497
      %7530 = vst.msk [vmem:[%s170 + $0xc0] sm:$0xff] %vm225, %v7498
      %7531 = vst.msk [vmem:[%s170 + $0xc8] sm:$0xff] %vm225, %v7499
      %7532 = vst.msk [vmem:[%s170 + $0xd0] sm:$0xff] %vm225, %v7500
      %7533 = vst.msk [vmem:[%s170 + $0xd8] sm:$0xff] %vm225, %v7501
      %7534 = vst.msk [vmem:[%s170 + $0xe0] sm:$0xff] %vm225, %v7502
      %7535 = vst.msk [vmem:[%s170 + $0xe8] sm:$0xff] %vm225, %v7503
      %7536 = vst.msk [vmem:[%s170 + $0xf0] sm:$0xff] %vm225, %v7504
      %7537 = vst.msk [vmem:[%s170 + $0xf8] sm:$0xff] %vm225, %v7505
      %p7538 = scmp.lt.s32.totalorder %s14, 1
      %s7539 = scalar_select %p7538, %s14, 1
      %s7540 = smul.addr %s7539, 32
      %s7541 = smul.addr %s7540, 8
      %s7542 = scalar_lea.vmem %s3, %s7541
      // Predicated region
      $region33: #{resnet_block_forward.1} parent=31 // pred_check
        %p7543 = pneg %p100
      $region34: #{resnet_block_forward.1} parent=31 // pred_check_branch
        %7545 = sbr.rel (%p7543) target = $region36
      $region35: #{resnet_block_forward.1} parent=31 // pred_region
        _
      $region36: #{resnet_block_forward.1} parent=31 // pred_fallthru
        _
    $region32: #{resnet_block_forward.1} parent=5 // pred_fallthru
      _
    %p7546 = scmp.le.s32.totalorder 2, %s9
    // Predicated region
    $region37: #{resnet_block_forward.1} parent=5 // pred_check
      %p7547 = pneg %p7546
    $region38: #{resnet_block_forward.1} parent=5 // pred_check_branch
      %7549 = sbr.rel (%p7547) target = $region40
    $region39: #{resnet_block_forward.1} parent=5 // pred_region
      %s7550 = ssub.s32 %s9, 2
      // Predicated region
      $region41: #{resnet_block_forward.1} parent=39 // pred_check
        %p7551 = pneg %p106
      $region42: #{resnet_block_forward.1} parent=39 // pred_check_branch
        %7553 = sbr.rel (%p7551) target = $region44
      $region43: #{resnet_block_forward.1} parent=39 // pred_region
        %p7554 = scmp.lt.s32.totalorder %s15, 1
        %s7555 = scalar_select %p7554, %s15, 1
        %s7556 = smul.addr %s7555, 32
        %s7557 = smul.addr %s7556, 8
        %s7558 = scalar_lea.vmem %s3, %s7557
      $region44: #{resnet_block_forward.1} parent=39 // pred_fallthru
        _
    $region40: #{resnet_block_forward.1} parent=5 // pred_fallthru
      _
  $region6: #{resnet_block_forward.1} parent=0 // loop_footer
    %s13 = sadd.s32 1, %s9
  $region7: #{resnet_block_forward.1} parent=0 // loop_footer_branch
    %8 = sbr.rel target = $region3
  $region8: #{resnet_block_forward.1} parent=0 // loop_exit
    _

</llo_original>
